<compile_context>
chip_gen: v6e
topology: v6e:2x2x1
jax: 0.10.0
libtpu: 0.0.40
codegen_flags: <defaults>
</compile_context>

<pallas_src>
import jax
import jax.numpy as jnp
from jax.experimental import pallas as pl
from jax.experimental.pallas import tpu as pltpu

_BN_EPS = 1e-5
_LANE = 128
_COMPUTE_DTYPE = jnp.bfloat16   # MXU input dtype


def _cpad(c):
    return ((c + _LANE - 1) // _LANE) * _LANE


def _vmem_limit_bytes():
    # Re-derive per generation: v7x has 64 MiB/TC VMEM vs 128 MiB on v5e/v6e.
    try:
        cap = pltpu.get_tpu_info().vmem_capacity_bytes
    except Exception:
        cap = 64 * 1024 * 1024
    return int(min(cap // 2, 64 * 1024 * 1024))


# ----------------------------- Pallas kernel ------------------------------- #

def _make_conv_kernel(*, H, W, Wo, stride, band_rows, has_shortcut,
                      has_residual):
    """Fused [BN+ReLU prologue] + 3x3 conv (+1x1 shortcut) (+residual add)."""
    Rb = band_rows
    n_bands = H // Rb

    def kernel(*args):
        i = 0
        x_ref = args[i]; i += 1           # (1, H, W, Ci)
        s_ref = args[i]; i += 1           # (1, Ci)   BN scale
        t_ref = args[i]; i += 1           # (1, Ci)   BN shift
        w_ref = args[i]; i += 1           # (9, Ci, TN)
        wsc_ref = None
        if has_shortcut:
            wsc_ref = args[i]; i += 1     # (Ci, TN)
        res_ref = None
        if has_residual:
            res_ref = args[i]; i += 1     # (1, Ho, Wo, TN)
        y_ref = args[i]; i += 1           # (1, Ho, Wo, TN)
        sc_ref = None
        if has_shortcut:
            sc_ref = args[i]; i += 1      # (1, Ho, Wo, TN)
        a_scr = args[i]                   # VMEM (H+2, W+2, Ci), compute dtype

        Ci = a_scr.shape[-1]
        cdt = a_scr.dtype

        # --- prologue: BN(affine) + ReLU into a zero-halo VMEM tile ---------
        # Only the 1-pixel halo is (re)zeroed; the interior is overwritten
        # every step so nothing is carried across grid iterations.
        act = jnp.maximum(x_ref[0] * s_ref[0] + t_ref[0], 0.0).astype(cdt)
        zrow = jnp.zeros((1, W + 2, Ci), cdt)
        a_scr[0:1, :, :] = zrow
        a_scr[H + 1:H + 2, :, :] = zrow
        zcol = jnp.zeros((H, 1, Ci), cdt)
        a_scr[1:H + 1, 0:1, :] = zcol
        a_scr[1:H + 1, W + 1:W + 2, :] = zcol
        a_scr[1:H + 1, 1:W + 1, :] = act

        def subsample(v):
            # dense (rows, W, tn) -> strided (rows//stride, Wo, tn) by taking
            # every `stride`-th dense row/col at value level (no f32 matmul).
            if stride == 1:
                return v
            rows, _, tn = v.shape
            v5 = v.reshape(rows // stride, stride, Wo, stride, tn)
            return v5[:, 0, :, 0, :]

        # --- 3x3 conv: per-band tap accumulation on the MXU -----------------
        # Band size keeps the f32 accumulator (~Rb*W x tn) register-resident.
        for b in range(n_bands):
            r0 = b * Rb
            acc = None
            for ky in range(3):
                for kx in range(3):
                    tap = a_scr[r0 + ky:r0 + ky + Rb, kx:kx + W, :]
                    tap = tap.reshape(Rb * W, Ci)
                    d = jnp.dot(tap, w_ref[3 * ky + kx],
                                preferred_element_type=jnp.float32)
                    acc = d if acc is None else acc + d

            o0 = r0 // stride
            ro = Rb // stride
            tn = acc.shape[-1]
            y = subsample(acc.reshape(Rb, W, tn))
            if has_residual:
                y = y + res_ref[0, o0:o0 + ro].astype(jnp.float32)
            y_ref[0, o0:o0 + ro] = y.astype(y_ref.dtype)

            if has_shortcut:
                # 1x1 shortcut conv on the same activated band (no halo).
                o_band = a_scr[r0 + 1:r0 + 1 + Rb, 1:W + 1, :]
                acc_sc = jnp.dot(o_band.reshape(Rb * W, Ci), wsc_ref[...],
                                 preferred_element_type=jnp.float32)
                sc = subsample(acc_sc.reshape(Rb, W, tn))
                sc_ref[0, o0:o0 + ro] = sc.astype(sc_ref.dtype)

    return kernel


# ----------------------------- Pallas wrapper ------------------------------ #

def _fused_conv(x, scale, shift, w_taps, *, stride, wsc=None, residual=None,
                out_dtype=jnp.float32):
    """Fused BN+ReLU -> 3x3 conv (padding=1) [+1x1 shortcut] [+residual add].

    x:        (N, H, W, Ci)   channels already lane-padded (zeros in pads).
    scale/shift: (1, Ci) f32  BN affine (from running stats).
    w_taps:   (9, Ci, Co) bf16 tap-major 3x3 weights (Ci/Co lane-padded).
    wsc:      (Ci, Co) bf16   1x1 shortcut weights, or None.
    residual: (N, Ho, Wo, Co) added to the conv output, or None.
    """
    N, H, W, Ci = x.shape
    assert w_taps.shape[1] == Ci
    Cop = w_taps.shape[2]
    if stride > 1:
        assert H % stride == 0 and W % stride == 0
    Ho, Wo = H // stride, W // stride
    # NOTE: W / Wo are assumed to be multiples of 8 (true for WRN: 8/16/32).

    has_shortcut = wsc is not None
    has_residual = residual is not None

    # Output-channel tile: lane-dense, prefer 256-wide for 256x256 MXUs.
    tn = Cop if Cop <= 256 else (256 if Cop % 256 == 0 else 128)
    nj = Cop // tn
    grid = (nj, N)  # cout tiles outer -> weight tile stays resident across n

    # Row-band size: ~128 dense rows per band keeps the f32 acc in vregs;
    # must divide H and be a multiple of the stride.
    Rb = max(stride, min(H, max(1, 128 // W)))
    while H % Rb != 0 or Rb % stride != 0:
        Rb -= 1

    in_specs = [
        pl.BlockSpec((1, H, W, Ci), lambda j, n: (n, 0, 0, 0)),
        pl.BlockSpec((1, Ci), lambda j, n: (0, 0)),
        pl.BlockSpec((1, Ci), lambda j, n: (0, 0)),
        pl.BlockSpec((9, Ci, tn), lambda j, n: (0, 0, j)),
    ]
    args = [x, scale, shift, w_taps]
    if has_shortcut:
        in_specs.append(pl.BlockSpec((Ci, tn), lambda j, n: (0, j)))
        args.append(wsc)
    if has_residual:
        in_specs.append(pl.BlockSpec((1, Ho, Wo, tn), lambda j, n: (n, 0, 0, j)))
        args.append(residual)

    out_block = pl.BlockSpec((1, Ho, Wo, tn), lambda j, n: (n, 0, 0, j))
    if has_shortcut:
        out_shape = (jax.ShapeDtypeStruct((N, Ho, Wo, Cop), out_dtype),
                     jax.ShapeDtypeStruct((N, Ho, Wo, Cop), out_dtype))
        out_specs = (out_block, out_block)
    else:
        out_shape = jax.ShapeDtypeStruct((N, Ho, Wo, Cop), out_dtype)
        out_specs = out_block

    kernel = _make_conv_kernel(H=H, W=W, Wo=Wo, stride=stride, band_rows=Rb,
                               has_shortcut=has_shortcut,
                               has_residual=has_residual)

    outs = pl.pallas_call(
        kernel,
        out_shape=out_shape,
        grid=grid,
        in_specs=in_specs,
        out_specs=out_specs,
        scratch_shapes=[pltpu.VMEM((H + 2, W + 2, Ci), _COMPUTE_DTYPE)],
        compiler_params=pltpu.CompilerParams(
            dimension_semantics=("parallel", "parallel"),
            vmem_limit_bytes=_vmem_limit_bytes()),
    )(*args)

    if has_shortcut:
        return outs[0], outs[1]
    return outs


# ------------------------ Parameter init / prep ----------------------------- #

def _init_bn(keys, planes):
    gamma = jax.random.uniform(keys[0], (planes,), jnp.float32, 0.5, 1.5)
    beta = 0.1 * jax.random.normal(keys[1], (planes,), jnp.float32)
    mean = 0.1 * jax.random.normal(keys[2], (planes,), jnp.float32)
    var = jax.random.uniform(keys[3], (planes,), jnp.float32, 0.5, 1.5)
    scale = gamma / jnp.sqrt(var + _BN_EPS)
    shift = beta - mean * scale
    return scale, shift


def _init_conv(key, kh, kw, cin, cout):
    fan = kh * kw * cout  # matches WideResNet's kaiming init convention
    return jax.random.normal(key, (kh, kw, cin, cout), jnp.float32) * jnp.sqrt(2.0 / fan)


def init_basic_block(key, in_planes, out_planes, stride):
    ks = jax.random.split(key, 11)
    p = {"stride": int(stride), "equal": in_planes == out_planes,
         "in_planes": int(in_planes), "out_planes": int(out_planes)}
    p["bn1_scale"], p["bn1_shift"] = _init_bn(ks[0:4], in_planes)
    p["conv1_w"] = _init_conv(ks[4], 3, 3, in_planes, out_planes)
    p["bn2_scale"], p["bn2_shift"] = _init_bn(ks[5:9], out_planes)
    p["conv2_w"] = _init_conv(ks[9], 3, 3, out_planes, out_planes)
    p["conv_sc_w"] = None if p["equal"] else _init_conv(ks[10], 1, 1, in_planes, out_planes)
    return p


def init_network_block(key, nb_layers, in_planes, out_planes, stride):
    keys = jax.random.split(key, nb_layers)
    params = []
    for i in range(int(nb_layers)):
        params.append(init_basic_block(
            keys[i],
            in_planes if i == 0 else out_planes,
            out_planes,
            stride if i == 0 else 1,
        ))
    return params


def _prep_taps(w_hwio, cip, cop):
    kh, kw, ci, co = w_hwio.shape
    w = w_hwio.reshape(kh * kw, ci, co)
    w = jnp.pad(w, ((0, 0), (0, cip - ci), (0, cop - co)))
    return w.astype(_COMPUTE_DTYPE)


def _prep_vec(v, cp):
    return jnp.pad(v, (0, cp - v.shape[0])).reshape(1, cp).astype(jnp.float32)


# -------------------------------- Forward ----------------------------------- #

def basic_block_forward(x, p):
    # x: (N, H, W, Cip) with lane-padded channels (zeros in the pad lanes).
    cip = x.shape[-1]
    cop = _cpad(p["out_planes"])
    s1, t1 = _prep_vec(p["bn1_scale"], cip), _prep_vec(p["bn1_shift"], cip)
    s2, t2 = _prep_vec(p["bn2_scale"], cop), _prep_vec(p["bn2_shift"], cop)
    w1 = _prep_taps(p["conv1_w"], cip, cop)
    w2 = _prep_taps(p["conv2_w"], cop, cop)

    if p["equal"]:
        # conv1 fused with bn1+relu prologue; identity skip uses raw x.
        y1 = _fused_conv(x, s1, t1, w1, stride=p["stride"],
                         out_dtype=_COMPUTE_DTYPE)
        residual = x
    else:
        # conv1 + 1x1 shortcut share the same activated VMEM tile; both
        # intermediates are stored bf16 (re-cast to bf16 downstream anyway).
        wsc = _prep_taps(p["conv_sc_w"], cip, cop)[0]
        y1, residual = _fused_conv(x, s1, t1, w1, stride=p["stride"], wsc=wsc,
                                   out_dtype=_COMPUTE_DTYPE)

    # dropRate = 0.0 -> dropout is a no-op
    # conv2 fused with bn2+relu prologue and the residual-add epilogue.
    out = _fused_conv(y1, s2, t2, w2, stride=1, residual=residual,
                      out_dtype=jnp.float32)
    return out


def network_block_forward(x_nhwc, params):
    cin = x_nhwc.shape[-1]
    cip = _cpad(cin)
    x = jnp.pad(x_nhwc.astype(jnp.float32),
                ((0, 0), (0, 0), (0, 0), (0, cip - cin)))
    for p in params:
        x = basic_block_forward(x, p)
    return x[..., :params[-1]["out_planes"]]


# ------------------------------- Reference ---------------------------------- #

def _ref_basic_block(x, p):
    # Matches the kernel's numerics: bf16 matmul operands, f32 accumulation,
    # bf16 storage of the inter-conv intermediates.
    def conv(inp, w, s, pad):
        return jax.lax.conv_general_dilated(
            inp.astype(jnp.bfloat16), w.astype(jnp.bfloat16), (s, s),
            [(pad, pad), (pad, pad)],
            dimension_numbers=("NHWC", "HWIO", "NHWC"),
            preferred_element_type=jnp.float32)

    o = jnp.maximum(x * p["bn1_scale"] + p["bn1_shift"], 0.0)
    y1 = conv(o, p["conv1_w"], p["stride"], 1).astype(jnp.bfloat16)
    y = jnp.maximum(y1.astype(jnp.float32) * p["bn2_scale"] + p["bn2_shift"], 0.0)
    y = conv(y, p["conv2_w"], 1, 1)
    if p["equal"]:
        res = x
    else:
        res = conv(o, p["conv_sc_w"], p["stride"], 0)
        res = res.astype(jnp.bfloat16).astype(jnp.float32)
    return res + y


def _ref_network_block(x, params):
    for p in params:
        x = _ref_basic_block(x, p)
    return x


# ---------------------------------- Main ------------------------------------ #

if __name__ == "__main__":
    key = jax.random.PRNGKey(0)
    k_x, k_p = jax.random.split(key)

    # NetworkBlock(nb_layers=2, in_planes=4, out_planes=8, block=BasicBlock, stride=2)
    N, C_in, H, W = 2, 4, 16, 16
    nb_layers, out_planes, stride = 2, 8, 2

    x_nchw = jax.random.normal(k_x, (N, C_in, H, W), jnp.float32)
    params = init_network_block(k_p, nb_layers, C_in, out_planes, stride)

    # NCHW (PyTorch) -> NHWC (kernel layout)
    x_nhwc = jnp.transpose(x_nchw, (0, 2, 3, 1))

    y_nhwc = network_block_forward(x_nhwc, params)
    y_nchw = jnp.transpose(y_nhwc, (0, 3, 1, 2))
    jax.block_until_ready(y_nchw)

    # Correctness check against a pure-JAX reference with matched precision.
    y_ref = jnp.transpose(_ref_network_block(x_nhwc, params), (0, 3, 1, 2))
    assert y_nchw.shape == (N, out_planes, H // stride, W // stride)
    max_err = float(jnp.max(jnp.abs(y_nchw - y_ref)))
    assert jnp.allclose(y_nchw, y_ref, rtol=2e-2, atol=2e-2), (
        f"mismatch vs reference (max abs err {max_err})")

    print("KERNEL_OK")
</pallas_src>

<mosaic_0001>
module attributes {stable_mosaic.version = 11 : i64} {
  func.func @kernel(%arg0: i32, %arg1: i32, %arg2: memref<1x16x16x128xf32, #tpu.memory_space<vmem>>, %arg3: memref<1x128xf32, #tpu.memory_space<vmem>>, %arg4: memref<1x128xf32, #tpu.memory_space<vmem>>, %arg5: memref<9x128x128xbf16, #tpu.memory_space<vmem>>, %arg6: memref<128x128xbf16, #tpu.memory_space<vmem>>, %arg7: memref<1x8x8x128xbf16, #tpu.memory_space<vmem>>, %arg8: memref<1x8x8x128xbf16, #tpu.memory_space<vmem>>, %arg9: memref<18x18x128xbf16, #tpu.memory_space<vmem>>) attributes {dimension_semantics = [#tpu.dimension_semantics<parallel>, #tpu.dimension_semantics<parallel>], iteration_bounds = array<i64: 1, 2>, scalar_prefetch = 0 : i64, scratch_operands = 1 : i64, tpu.core_type = #tpu.core_type<tc>, window_params = [{transform_indices = @transform_0, window_bounds = array<i64: 1, 16, 16, 128>}, {pipeline_mode = #tpu.pipeline_mode<synchronous>, transform_indices = @transform_1, window_bounds = array<i64: 1, 128>}, {pipeline_mode = #tpu.pipeline_mode<synchronous>, transform_indices = @transform_2, window_bounds = array<i64: 1, 128>}, {transform_indices = @transform_3, window_bounds = array<i64: 9, 128, 128>}, {transform_indices = @transform_4, window_bounds = array<i64: 128, 128>}, {transform_indices = @transform_5, window_bounds = array<i64: 1, 8, 8, 128>}, {transform_indices = @transform_6, window_bounds = array<i64: 1, 8, 8, 128>}]} {
    %c0 = arith.constant 0 : index
    %c0_0 = arith.constant 0 : index
    %c0_1 = arith.constant 0 : index
    %c0_2 = arith.constant 0 : index
    %0 = vector.load %arg2[%c0, %c0_0, %c0_1, %c0_2] : memref<1x16x16x128xf32, #tpu.memory_space<vmem>>, vector<1x16x16x128xf32>
    %1 = vector.shape_cast %0 : vector<1x16x16x128xf32> to vector<16x16x128xf32>
    %c0_3 = arith.constant 0 : index
    %c0_4 = arith.constant 0 : index
    %2 = vector.load %arg3[%c0_3, %c0_4] : memref<1x128xf32, #tpu.memory_space<vmem>>, vector<1x128xf32>
    %3 = vector.shape_cast %2 : vector<1x128xf32> to vector<128xf32>
    %4 = vector.shape_cast %3 : vector<128xf32> to vector<1x1x128xf32>
    %5 = vector.broadcast %4 : vector<1x1x128xf32> to vector<16x16x128xf32>
    %6 = arith.mulf %1, %5 : vector<16x16x128xf32>
    %c0_5 = arith.constant 0 : index
    %c0_6 = arith.constant 0 : index
    %7 = vector.load %arg4[%c0_5, %c0_6] : memref<1x128xf32, #tpu.memory_space<vmem>>, vector<1x128xf32>
    %8 = vector.shape_cast %7 : vector<1x128xf32> to vector<128xf32>
    %9 = vector.shape_cast %8 : vector<128xf32> to vector<1x1x128xf32>
    %10 = vector.broadcast %9 : vector<1x1x128xf32> to vector<16x16x128xf32>
    %11 = arith.addf %6, %10 : vector<16x16x128xf32>
    %cst = arith.constant 0.000000e+00 : f32
    %12 = vector.broadcast %cst : f32 to vector<16x16x128xf32>
    %13 = arith.maximumf %11, %12 : vector<16x16x128xf32>
    %14 = arith.truncf %13 : vector<16x16x128xf32> to vector<16x16x128xbf16>
    %cst_7 = arith.constant 0.000000e+00 : bf16
    %15 = vector.broadcast %cst_7 : bf16 to vector<1x18x128xbf16>
    %c0_8 = arith.constant 0 : index
    %c0_9 = arith.constant 0 : index
    %c0_10 = arith.constant 0 : index
    %16 = vector.load %arg9[%c0_8, %c0_9, %c0_10] : memref<18x18x128xbf16, #tpu.memory_space<vmem>>, vector<1x18x128xbf16>
    tpu.vector_store %arg9[%c0_8, %c0_9, %c0_10], %15 {strides = array<i32>} : memref<18x18x128xbf16, #tpu.memory_space<vmem>>, vector<1x18x128xbf16>,
    %c17 = arith.constant 17 : index
    %c0_11 = arith.constant 0 : index
    %c0_12 = arith.constant 0 : index
    %17 = vector.load %arg9[%c17, %c0_11, %c0_12] : memref<18x18x128xbf16, #tpu.memory_space<vmem>>, vector<1x18x128xbf16>
    tpu.vector_store %arg9[%c17, %c0_11, %c0_12], %15 {strides = array<i32>} : memref<18x18x128xbf16, #tpu.memory_space<vmem>>, vector<1x18x128xbf16>,
    %cst_13 = arith.constant 0.000000e+00 : bf16
    %18 = vector.broadcast %cst_13 : bf16 to vector<16x1x128xbf16>
    %c1 = arith.constant 1 : index
    %c0_14 = arith.constant 0 : index
    %c0_15 = arith.constant 0 : index
    %19 = vector.load %arg9[%c1, %c0_14, %c0_15] : memref<18x18x128xbf16, #tpu.memory_space<vmem>>, vector<16x1x128xbf16>
    tpu.vector_store %arg9[%c1, %c0_14, %c0_15], %18 {strides = array<i32>} : memref<18x18x128xbf16, #tpu.memory_space<vmem>>, vector<16x1x128xbf16>,
    %c1_16 = arith.constant 1 : index
    %c17_17 = arith.constant 17 : index
    %c0_18 = arith.constant 0 : index
    %20 = vector.load %arg9[%c1_16, %c17_17, %c0_18] : memref<18x18x128xbf16, #tpu.memory_space<vmem>>, vector<16x1x128xbf16>
    tpu.vector_store %arg9[%c1_16, %c17_17, %c0_18], %18 {strides = array<i32>} : memref<18x18x128xbf16, #tpu.memory_space<vmem>>, vector<16x1x128xbf16>,
    %c1_19 = arith.constant 1 : index
    %c1_20 = arith.constant 1 : index
    %c0_21 = arith.constant 0 : index
    %21 = vector.load %arg9[%c1_19, %c1_20, %c0_21] : memref<18x18x128xbf16, #tpu.memory_space<vmem>>, vector<16x16x128xbf16>
    tpu.vector_store %arg9[%c1_19, %c1_20, %c0_21], %14 {strides = array<i32>} : memref<18x18x128xbf16, #tpu.memory_space<vmem>>, vector<16x16x128xbf16>,
    %c0_22 = arith.constant 0 : index
    %c0_23 = arith.constant 0 : index
    %c0_24 = arith.constant 0 : index
    %22 = vector.load %arg9[%c0_22, %c0_23, %c0_24] : memref<18x18x128xbf16, #tpu.memory_space<vmem>>, vector<8x16x128xbf16>
    %23 = vector.shape_cast %22 : vector<8x16x128xbf16> to vector<128x128xbf16>
    %c0_25 = arith.constant 0 : index
    %c0_26 = arith.constant 0 : index
    %c0_27 = arith.constant 0 : index
    %24 = vector.load %arg5[%c0_25, %c0_26, %c0_27] : memref<9x128x128xbf16, #tpu.memory_space<vmem>>, vector<1x128x128xbf16>
    %25 = vector.shape_cast %24 : vector<1x128x128xbf16> to vector<128x128xbf16>
    %cst_28 = arith.constant dense<0.000000e+00> : vector<128x128xf32>
    %26 = tpu.matmul %23, %25, %cst_28 {dimension_numbers = #tpu.dot_dimension_numbers<[1], [0], [0], [1], [0, 0, 1, 1], [], []>} : vector<128x128xbf16>, vector<128x128xbf16>, vector<128x128xf32> -> vector<128x128xf32>
    %c0_29 = arith.constant 0 : index
    %c1_30 = arith.constant 1 : index
    %c0_31 = arith.constant 0 : index
    %27 = vector.load %arg9[%c0_29, %c1_30, %c0_31] : memref<18x18x128xbf16, #tpu.memory_space<vmem>>, vector<8x16x128xbf16>
    %28 = vector.shape_cast %27 : vector<8x16x128xbf16> to vector<128x128xbf16>
    %c1_32 = arith.constant 1 : index
    %c0_33 = arith.constant 0 : index
    %c0_34 = arith.constant 0 : index
    %29 = vector.load %arg5[%c1_32, %c0_33, %c0_34] : memref<9x128x128xbf16, #tpu.memory_space<vmem>>, vector<1x128x128xbf16>
    %30 = vector.shape_cast %29 : vector<1x128x128xbf16> to vector<128x128xbf16>
    %cst_35 = arith.constant dense<0.000000e+00> : vector<128x128xf32>
    %31 = tpu.matmul %28, %30, %cst_35 {dimension_numbers = #tpu.dot_dimension_numbers<[1], [0], [0], [1], [0, 0, 1, 1], [], []>} : vector<128x128xbf16>, vector<128x128xbf16>, vector<128x128xf32> -> vector<128x128xf32>
    %32 = arith.addf %26, %31 : vector<128x128xf32>
    %c0_36 = arith.constant 0 : index
    %c2 = arith.constant 2 : index
    %c0_37 = arith.constant 0 : index
    %33 = vector.load %arg9[%c0_36, %c2, %c0_37] : memref<18x18x128xbf16, #tpu.memory_space<vmem>>, vector<8x16x128xbf16>
    %34 = vector.shape_cast %33 : vector<8x16x128xbf16> to vector<128x128xbf16>
    %c2_38 = arith.constant 2 : index
    %c0_39 = arith.constant 0 : index
    %c0_40 = arith.constant 0 : index
    %35 = vector.load %arg5[%c2_38, %c0_39, %c0_40] : memref<9x128x128xbf16, #tpu.memory_space<vmem>>, vector<1x128x128xbf16>
    %36 = vector.shape_cast %35 : vector<1x128x128xbf16> to vector<128x128xbf16>
    %cst_41 = arith.constant dense<0.000000e+00> : vector<128x128xf32>
    %37 = tpu.matmul %34, %36, %cst_41 {dimension_numbers = #tpu.dot_dimension_numbers<[1], [0], [0], [1], [0, 0, 1, 1], [], []>} : vector<128x128xbf16>, vector<128x128xbf16>, vector<128x128xf32> -> vector<128x128xf32>
    %38 = arith.addf %32, %37 : vector<128x128xf32>
    %c1_42 = arith.constant 1 : index
    %c0_43 = arith.constant 0 : index
    %c0_44 = arith.constant 0 : index
    %39 = vector.load %arg9[%c1_42, %c0_43, %c0_44] : memref<18x18x128xbf16, #tpu.memory_space<vmem>>, vector<8x16x128xbf16>
    %40 = vector.shape_cast %39 : vector<8x16x128xbf16> to vector<128x128xbf16>
    %c3 = arith.constant 3 : index
    %c0_45 = arith.constant 0 : index
    %c0_46 = arith.constant 0 : index
    %41 = vector.load %arg5[%c3, %c0_45, %c0_46] : memref<9x128x128xbf16, #tpu.memory_space<vmem>>, vector<1x128x128xbf16>
    %42 = vector.shape_cast %41 : vector<1x128x128xbf16> to vector<128x128xbf16>
    %cst_47 = arith.constant dense<0.000000e+00> : vector<128x128xf32>
    %43 = tpu.matmul %40, %42, %cst_47 {dimension_numbers = #tpu.dot_dimension_numbers<[1], [0], [0], [1], [0, 0, 1, 1], [], []>} : vector<128x128xbf16>, vector<128x128xbf16>, vector<128x128xf32> -> vector<128x128xf32>
    %44 = arith.addf %38, %43 : vector<128x128xf32>
    %c1_48 = arith.constant 1 : index
    %c1_49 = arith.constant 1 : index
    %c0_50 = arith.constant 0 : index
    %45 = vector.load %arg9[%c1_48, %c1_49, %c0_50] : memref<18x18x128xbf16, #tpu.memory_space<vmem>>, vector<8x16x128xbf16>
    %46 = vector.shape_cast %45 : vector<8x16x128xbf16> to vector<128x128xbf16>
    %c4 = arith.constant 4 : index
    %c0_51 = arith.constant 0 : index
    %c0_52 = arith.constant 0 : index
    %47 = vector.load %arg5[%c4, %c0_51, %c0_52] : memref<9x128x128xbf16, #tpu.memory_space<vmem>>, vector<1x128x128xbf16>
    %48 = vector.shape_cast %47 : vector<1x128x128xbf16> to vector<128x128xbf16>
    %cst_53 = arith.constant dense<0.000000e+00> : vector<128x128xf32>
    %49 = tpu.matmul %46, %48, %cst_53 {dimension_numbers = #tpu.dot_dimension_numbers<[1], [0], [0], [1], [0, 0, 1, 1], [], []>} : vector<128x128xbf16>, vector<128x128xbf16>, vector<128x128xf32> -> vector<128x128xf32>
    %50 = arith.addf %44, %49 : vector<128x128xf32>
    %c1_54 = arith.constant 1 : index
    %c2_55 = arith.constant 2 : index
    %c0_56 = arith.constant 0 : index
    %51 = vector.load %arg9[%c1_54, %c2_55, %c0_56] : memref<18x18x128xbf16, #tpu.memory_space<vmem>>, vector<8x16x128xbf16>
    %52 = vector.shape_cast %51 : vector<8x16x128xbf16> to vector<128x128xbf16>
    %c5 = arith.constant 5 : index
    %c0_57 = arith.constant 0 : index
    %c0_58 = arith.constant 0 : index
    %53 = vector.load %arg5[%c5, %c0_57, %c0_58] : memref<9x128x128xbf16, #tpu.memory_space<vmem>>, vector<1x128x128xbf16>
    %54 = vector.shape_cast %53 : vector<1x128x128xbf16> to vector<128x128xbf16>
    %cst_59 = arith.constant dense<0.000000e+00> : vector<128x128xf32>
    %55 = tpu.matmul %52, %54, %cst_59 {dimension_numbers = #tpu.dot_dimension_numbers<[1], [0], [0], [1], [0, 0, 1, 1], [], []>} : vector<128x128xbf16>, vector<128x128xbf16>, vector<128x128xf32> -> vector<128x128xf32>
    %56 = arith.addf %50, %55 : vector<128x128xf32>
    %c2_60 = arith.constant 2 : index
    %c0_61 = arith.constant 0 : index
    %c0_62 = arith.constant 0 : index
    %57 = vector.load %arg9[%c2_60, %c0_61, %c0_62] : memref<18x18x128xbf16, #tpu.memory_space<vmem>>, vector<8x16x128xbf16>
    %58 = vector.shape_cast %57 : vector<8x16x128xbf16> to vector<128x128xbf16>
    %c6 = arith.constant 6 : index
    %c0_63 = arith.constant 0 : index
    %c0_64 = arith.constant 0 : index
    %59 = vector.load %arg5[%c6, %c0_63, %c0_64] : memref<9x128x128xbf16, #tpu.memory_space<vmem>>, vector<1x128x128xbf16>
    %60 = vector.shape_cast %59 : vector<1x128x128xbf16> to vector<128x128xbf16>
    %cst_65 = arith.constant dense<0.000000e+00> : vector<128x128xf32>
    %61 = tpu.matmul %58, %60, %cst_65 {dimension_numbers = #tpu.dot_dimension_numbers<[1], [0], [0], [1], [0, 0, 1, 1], [], []>} : vector<128x128xbf16>, vector<128x128xbf16>, vector<128x128xf32> -> vector<128x128xf32>
    %62 = arith.addf %56, %61 : vector<128x128xf32>
    %c2_66 = arith.constant 2 : index
    %c1_67 = arith.constant 1 : index
    %c0_68 = arith.constant 0 : index
    %63 = vector.load %arg9[%c2_66, %c1_67, %c0_68] : memref<18x18x128xbf16, #tpu.memory_space<vmem>>, vector<8x16x128xbf16>
    %64 = vector.shape_cast %63 : vector<8x16x128xbf16> to vector<128x128xbf16>
    %c7 = arith.constant 7 : index
    %c0_69 = arith.constant 0 : index
    %c0_70 = arith.constant 0 : index
    %65 = vector.load %arg5[%c7, %c0_69, %c0_70] : memref<9x128x128xbf16, #tpu.memory_space<vmem>>, vector<1x128x128xbf16>
    %66 = vector.shape_cast %65 : vector<1x128x128xbf16> to vector<128x128xbf16>
    %cst_71 = arith.constant dense<0.000000e+00> : vector<128x128xf32>
    %67 = tpu.matmul %64, %66, %cst_71 {dimension_numbers = #tpu.dot_dimension_numbers<[1], [0], [0], [1], [0, 0, 1, 1], [], []>} : vector<128x128xbf16>, vector<128x128xbf16>, vector<128x128xf32> -> vector<128x128xf32>
    %68 = arith.addf %62, %67 : vector<128x128xf32>
    %c2_72 = arith.constant 2 : index
    %c2_73 = arith.constant 2 : index
    %c0_74 = arith.constant 0 : index
    %69 = vector.load %arg9[%c2_72, %c2_73, %c0_74] : memref<18x18x128xbf16, #tpu.memory_space<vmem>>, vector<8x16x128xbf16>
    %70 = vector.shape_cast %69 : vector<8x16x128xbf16> to vector<128x128xbf16>
    %c8 = arith.constant 8 : index
    %c0_75 = arith.constant 0 : index
    %c0_76 = arith.constant 0 : index
    %71 = vector.load %arg5[%c8, %c0_75, %c0_76] : memref<9x128x128xbf16, #tpu.memory_space<vmem>>, vector<1x128x128xbf16>
    %72 = vector.shape_cast %71 : vector<1x128x128xbf16> to vector<128x128xbf16>
    %cst_77 = arith.constant dense<0.000000e+00> : vector<128x128xf32>
    %73 = tpu.matmul %70, %72, %cst_77 {dimension_numbers = #tpu.dot_dimension_numbers<[1], [0], [0], [1], [0, 0, 1, 1], [], []>} : vector<128x128xbf16>, vector<128x128xbf16>, vector<128x128xf32> -> vector<128x128xf32>
    %74 = arith.addf %68, %73 : vector<128x128xf32>
    %75 = vector.shape_cast %74 : vector<128x128xf32> to vector<8x16x128xf32>
    %76 = vector.shape_cast %75 : vector<8x16x128xf32> to vector<4x2x8x2x128xf32>
    %77 = vector.extract_strided_slice %76 {offsets = [0, 0, 0, 0, 0], sizes = [4, 1, 8, 1, 128], strides = [1, 1, 1, 1, 1]} : vector<4x2x8x2x128xf32> to vector<4x1x8x1x128xf32>
    %78 = vector.shape_cast %77 : vector<4x1x8x1x128xf32> to vector<4x8x128xf32>
    %79 = arith.truncf %78 : vector<4x8x128xf32> to vector<4x8x128xbf16>
    %c0_78 = arith.constant 0 : index
    %c0_79 = arith.constant 0 : index
    %c0_80 = arith.constant 0 : index
    %c0_81 = arith.constant 0 : index
    %80 = vector.load %arg7[%c0_78, %c0_79, %c0_80, %c0_81] : memref<1x8x8x128xbf16, #tpu.memory_space<vmem>>, vector<1x4x8x128xbf16>
    %81 = vector.shape_cast %80 : vector<1x4x8x128xbf16> to vector<4x8x128xbf16>
    %82 = vector.shape_cast %79 : vector<4x8x128xbf16> to vector<1x4x8x128xbf16>
    tpu.vector_store %arg7[%c0_78, %c0_79, %c0_80, %c0_81], %82 {strides = array<i32>} : memref<1x8x8x128xbf16, #tpu.memory_space<vmem>>, vector<1x4x8x128xbf16>,
    %c1_82 = arith.constant 1 : index
    %c1_83 = arith.constant 1 : index
    %c0_84 = arith.constant 0 : index
    %83 = vector.load %arg9[%c1_82, %c1_83, %c0_84] : memref<18x18x128xbf16, #tpu.memory_space<vmem>>, vector<8x16x128xbf16>
    %84 = vector.shape_cast %83 : vector<8x16x128xbf16> to vector<128x128xbf16>
    %c0_85 = arith.constant 0 : index
    %c0_86 = arith.constant 0 : index
    %85 = vector.load %arg6[%c0_85, %c0_86] : memref<128x128xbf16, #tpu.memory_space<vmem>>, vector<128x128xbf16>
    %cst_87 = arith.constant dense<0.000000e+00> : vector<128x128xf32>
    %86 = tpu.matmul %84, %85, %cst_87 {dimension_numbers = #tpu.dot_dimension_numbers<[1], [0], [0], [1], [0, 0, 1, 1], [], []>} : vector<128x128xbf16>, vector<128x128xbf16>, vector<128x128xf32> -> vector<128x128xf32>
    %87 = vector.shape_cast %86 : vector<128x128xf32> to vector<8x16x128xf32>
    %88 = vector.shape_cast %87 : vector<8x16x128xf32> to vector<4x2x8x2x128xf32>
    %89 = vector.extract_strided_slice %88 {offsets = [0, 0, 0, 0, 0], sizes = [4, 1, 8, 1, 128], strides = [1, 1, 1, 1, 1]} : vector<4x2x8x2x128xf32> to vector<4x1x8x1x128xf32>
    %90 = vector.shape_cast %89 : vector<4x1x8x1x128xf32> to vector<4x8x128xf32>
    %91 = arith.truncf %90 : vector<4x8x128xf32> to vector<4x8x128xbf16>
    %c0_88 = arith.constant 0 : index
    %c0_89 = arith.constant 0 : index
    %c0_90 = arith.constant 0 : index
    %c0_91 = arith.constant 0 : index
    %92 = vector.load %arg8[%c0_88, %c0_89, %c0_90, %c0_91] : memref<1x8x8x128xbf16, #tpu.memory_space<vmem>>, vector<1x4x8x128xbf16>
    %93 = vector.shape_cast %92 : vector<1x4x8x128xbf16> to vector<4x8x128xbf16>
    %94 = vector.shape_cast %91 : vector<4x8x128xbf16> to vector<1x4x8x128xbf16>
    tpu.vector_store %arg8[%c0_88, %c0_89, %c0_90, %c0_91], %94 {strides = array<i32>} : memref<1x8x8x128xbf16, #tpu.memory_space<vmem>>, vector<1x4x8x128xbf16>,
    %c8_92 = arith.constant 8 : index
    %c0_93 = arith.constant 0 : index
    %c0_94 = arith.constant 0 : index
    %95 = vector.load %arg9[%c8_92, %c0_93, %c0_94] : memref<18x18x128xbf16, #tpu.memory_space<vmem>>, vector<8x16x128xbf16>
    %96 = vector.shape_cast %95 : vector<8x16x128xbf16> to vector<128x128xbf16>
    %c0_95 = arith.constant 0 : index
    %c0_96 = arith.constant 0 : index
    %c0_97 = arith.constant 0 : index
    %97 = vector.load %arg5[%c0_95, %c0_96, %c0_97] : memref<9x128x128xbf16, #tpu.memory_space<vmem>>, vector<1x128x128xbf16>
    %98 = vector.shape_cast %97 : vector<1x128x128xbf16> to vector<128x128xbf16>
    %cst_98 = arith.constant dense<0.000000e+00> : vector<128x128xf32>
    %99 = tpu.matmul %96, %98, %cst_98 {dimension_numbers = #tpu.dot_dimension_numbers<[1], [0], [0], [1], [0, 0, 1, 1], [], []>} : vector<128x128xbf16>, vector<128x128xbf16>, vector<128x128xf32> -> vector<128x128xf32>
    %c8_99 = arith.constant 8 : index
    %c1_100 = arith.constant 1 : index
    %c0_101 = arith.constant 0 : index
    %100 = vector.load %arg9[%c8_99, %c1_100, %c0_101] : memref<18x18x128xbf16, #tpu.memory_space<vmem>>, vector<8x16x128xbf16>
    %101 = vector.shape_cast %100 : vector<8x16x128xbf16> to vector<128x128xbf16>
    %c1_102 = arith.constant 1 : index
    %c0_103 = arith.constant 0 : index
    %c0_104 = arith.constant 0 : index
    %102 = vector.load %arg5[%c1_102, %c0_103, %c0_104] : memref<9x128x128xbf16, #tpu.memory_space<vmem>>, vector<1x128x128xbf16>
    %103 = vector.shape_cast %102 : vector<1x128x128xbf16> to vector<128x128xbf16>
    %cst_105 = arith.constant dense<0.000000e+00> : vector<128x128xf32>
    %104 = tpu.matmul %101, %103, %cst_105 {dimension_numbers = #tpu.dot_dimension_numbers<[1], [0], [0], [1], [0, 0, 1, 1], [], []>} : vector<128x128xbf16>, vector<128x128xbf16>, vector<128x128xf32> -> vector<128x128xf32>
    %105 = arith.addf %99, %104 : vector<128x128xf32>
    %c8_106 = arith.constant 8 : index
    %c2_107 = arith.constant 2 : index
    %c0_108 = arith.constant 0 : index
    %106 = vector.load %arg9[%c8_106, %c2_107, %c0_108] : memref<18x18x128xbf16, #tpu.memory_space<vmem>>, vector<8x16x128xbf16>
    %107 = vector.shape_cast %106 : vector<8x16x128xbf16> to vector<128x128xbf16>
    %c2_109 = arith.constant 2 : index
    %c0_110 = arith.constant 0 : index
    %c0_111 = arith.constant 0 : index
    %108 = vector.load %arg5[%c2_109, %c0_110, %c0_111] : memref<9x128x128xbf16, #tpu.memory_space<vmem>>, vector<1x128x128xbf16>
    %109 = vector.shape_cast %108 : vector<1x128x128xbf16> to vector<128x128xbf16>
    %cst_112 = arith.constant dense<0.000000e+00> : vector<128x128xf32>
    %110 = tpu.matmul %107, %109, %cst_112 {dimension_numbers = #tpu.dot_dimension_numbers<[1], [0], [0], [1], [0, 0, 1, 1], [], []>} : vector<128x128xbf16>, vector<128x128xbf16>, vector<128x128xf32> -> vector<128x128xf32>
    %111 = arith.addf %105, %110 : vector<128x128xf32>
    %c9 = arith.constant 9 : index
    %c0_113 = arith.constant 0 : index
    %c0_114 = arith.constant 0 : index
    %112 = vector.load %arg9[%c9, %c0_113, %c0_114] : memref<18x18x128xbf16, #tpu.memory_space<vmem>>, vector<8x16x128xbf16>
    %113 = vector.shape_cast %112 : vector<8x16x128xbf16> to vector<128x128xbf16>
    %c3_115 = arith.constant 3 : index
    %c0_116 = arith.constant 0 : index
    %c0_117 = arith.constant 0 : index
    %114 = vector.load %arg5[%c3_115, %c0_116, %c0_117] : memref<9x128x128xbf16, #tpu.memory_space<vmem>>, vector<1x128x128xbf16>
    %115 = vector.shape_cast %114 : vector<1x128x128xbf16> to vector<128x128xbf16>
    %cst_118 = arith.constant dense<0.000000e+00> : vector<128x128xf32>
    %116 = tpu.matmul %113, %115, %cst_118 {dimension_numbers = #tpu.dot_dimension_numbers<[1], [0], [0], [1], [0, 0, 1, 1], [], []>} : vector<128x128xbf16>, vector<128x128xbf16>, vector<128x128xf32> -> vector<128x128xf32>
    %117 = arith.addf %111, %116 : vector<128x128xf32>
    %c9_119 = arith.constant 9 : index
    %c1_120 = arith.constant 1 : index
    %c0_121 = arith.constant 0 : index
    %118 = vector.load %arg9[%c9_119, %c1_120, %c0_121] : memref<18x18x128xbf16, #tpu.memory_space<vmem>>, vector<8x16x128xbf16>
    %119 = vector.shape_cast %118 : vector<8x16x128xbf16> to vector<128x128xbf16>
    %c4_122 = arith.constant 4 : index
    %c0_123 = arith.constant 0 : index
    %c0_124 = arith.constant 0 : index
    %120 = vector.load %arg5[%c4_122, %c0_123, %c0_124] : memref<9x128x128xbf16, #tpu.memory_space<vmem>>, vector<1x128x128xbf16>
    %121 = vector.shape_cast %120 : vector<1x128x128xbf16> to vector<128x128xbf16>
    %cst_125 = arith.constant dense<0.000000e+00> : vector<128x128xf32>
    %122 = tpu.matmul %119, %121, %cst_125 {dimension_numbers = #tpu.dot_dimension_numbers<[1], [0], [0], [1], [0, 0, 1, 1], [], []>} : vector<128x128xbf16>, vector<128x128xbf16>, vector<128x128xf32> -> vector<128x128xf32>
    %123 = arith.addf %117, %122 : vector<128x128xf32>
    %c9_126 = arith.constant 9 : index
    %c2_127 = arith.constant 2 : index
    %c0_128 = arith.constant 0 : index
    %124 = vector.load %arg9[%c9_126, %c2_127, %c0_128] : memref<18x18x128xbf16, #tpu.memory_space<vmem>>, vector<8x16x128xbf16>
    %125 = vector.shape_cast %124 : vector<8x16x128xbf16> to vector<128x128xbf16>
    %c5_129 = arith.constant 5 : index
    %c0_130 = arith.constant 0 : index
    %c0_131 = arith.constant 0 : index
    %126 = vector.load %arg5[%c5_129, %c0_130, %c0_131] : memref<9x128x128xbf16, #tpu.memory_space<vmem>>, vector<1x128x128xbf16>
    %127 = vector.shape_cast %126 : vector<1x128x128xbf16> to vector<128x128xbf16>
    %cst_132 = arith.constant dense<0.000000e+00> : vector<128x128xf32>
    %128 = tpu.matmul %125, %127, %cst_132 {dimension_numbers = #tpu.dot_dimension_numbers<[1], [0], [0], [1], [0, 0, 1, 1], [], []>} : vector<128x128xbf16>, vector<128x128xbf16>, vector<128x128xf32> -> vector<128x128xf32>
    %129 = arith.addf %123, %128 : vector<128x128xf32>
    %c10 = arith.constant 10 : index
    %c0_133 = arith.constant 0 : index
    %c0_134 = arith.constant 0 : index
    %130 = vector.load %arg9[%c10, %c0_133, %c0_134] : memref<18x18x128xbf16, #tpu.memory_space<vmem>>, vector<8x16x128xbf16>
    %131 = vector.shape_cast %130 : vector<8x16x128xbf16> to vector<128x128xbf16>
    %c6_135 = arith.constant 6 : index
    %c0_136 = arith.constant 0 : index
    %c0_137 = arith.constant 0 : index
    %132 = vector.load %arg5[%c6_135, %c0_136, %c0_137] : memref<9x128x128xbf16, #tpu.memory_space<vmem>>, vector<1x128x128xbf16>
    %133 = vector.shape_cast %132 : vector<1x128x128xbf16> to vector<128x128xbf16>
    %cst_138 = arith.constant dense<0.000000e+00> : vector<128x128xf32>
    %134 = tpu.matmul %131, %133, %cst_138 {dimension_numbers = #tpu.dot_dimension_numbers<[1], [0], [0], [1], [0, 0, 1, 1], [], []>} : vector<128x128xbf16>, vector<128x128xbf16>, vector<128x128xf32> -> vector<128x128xf32>
    %135 = arith.addf %129, %134 : vector<128x128xf32>
    %c10_139 = arith.constant 10 : index
    %c1_140 = arith.constant 1 : index
    %c0_141 = arith.constant 0 : index
    %136 = vector.load %arg9[%c10_139, %c1_140, %c0_141] : memref<18x18x128xbf16, #tpu.memory_space<vmem>>, vector<8x16x128xbf16>
    %137 = vector.shape_cast %136 : vector<8x16x128xbf16> to vector<128x128xbf16>
    %c7_142 = arith.constant 7 : index
    %c0_143 = arith.constant 0 : index
    %c0_144 = arith.constant 0 : index
    %138 = vector.load %arg5[%c7_142, %c0_143, %c0_144] : memref<9x128x128xbf16, #tpu.memory_space<vmem>>, vector<1x128x128xbf16>
    %139 = vector.shape_cast %138 : vector<1x128x128xbf16> to vector<128x128xbf16>
    %cst_145 = arith.constant dense<0.000000e+00> : vector<128x128xf32>
    %140 = tpu.matmul %137, %139, %cst_145 {dimension_numbers = #tpu.dot_dimension_numbers<[1], [0], [0], [1], [0, 0, 1, 1], [], []>} : vector<128x128xbf16>, vector<128x128xbf16>, vector<128x128xf32> -> vector<128x128xf32>
    %141 = arith.addf %135, %140 : vector<128x128xf32>
    %c10_146 = arith.constant 10 : index
    %c2_147 = arith.constant 2 : index
    %c0_148 = arith.constant 0 : index
    %142 = vector.load %arg9[%c10_146, %c2_147, %c0_148] : memref<18x18x128xbf16, #tpu.memory_space<vmem>>, vector<8x16x128xbf16>
    %143 = vector.shape_cast %142 : vector<8x16x128xbf16> to vector<128x128xbf16>
    %c8_149 = arith.constant 8 : index
    %c0_150 = arith.constant 0 : index
    %c0_151 = arith.constant 0 : index
    %144 = vector.load %arg5[%c8_149, %c0_150, %c0_151] : memref<9x128x128xbf16, #tpu.memory_space<vmem>>, vector<1x128x128xbf16>
    %145 = vector.shape_cast %144 : vector<1x128x128xbf16> to vector<128x128xbf16>
    %cst_152 = arith.constant dense<0.000000e+00> : vector<128x128xf32>
    %146 = tpu.matmul %143, %145, %cst_152 {dimension_numbers = #tpu.dot_dimension_numbers<[1], [0], [0], [1], [0, 0, 1, 1], [], []>} : vector<128x128xbf16>, vector<128x128xbf16>, vector<128x128xf32> -> vector<128x128xf32>
    %147 = arith.addf %141, %146 : vector<128x128xf32>
    %148 = vector.shape_cast %147 : vector<128x128xf32> to vector<8x16x128xf32>
    %149 = vector.shape_cast %148 : vector<8x16x128xf32> to vector<4x2x8x2x128xf32>
    %150 = vector.extract_strided_slice %149 {offsets = [0, 0, 0, 0, 0], sizes = [4, 1, 8, 1, 128], strides = [1, 1, 1, 1, 1]} : vector<4x2x8x2x128xf32> to vector<4x1x8x1x128xf32>
    %151 = vector.shape_cast %150 : vector<4x1x8x1x128xf32> to vector<4x8x128xf32>
    %152 = arith.truncf %151 : vector<4x8x128xf32> to vector<4x8x128xbf16>
    %c0_153 = arith.constant 0 : index
    %c4_154 = arith.constant 4 : index
    %c0_155 = arith.constant 0 : index
    %c0_156 = arith.constant 0 : index
    %153 = vector.load %arg7[%c0_153, %c4_154, %c0_155, %c0_156] : memref<1x8x8x128xbf16, #tpu.memory_space<vmem>>, vector<1x4x8x128xbf16>
    %154 = vector.shape_cast %153 : vector<1x4x8x128xbf16> to vector<4x8x128xbf16>
    %155 = vector.shape_cast %152 : vector<4x8x128xbf16> to vector<1x4x8x128xbf16>
    tpu.vector_store %arg7[%c0_153, %c4_154, %c0_155, %c0_156], %155 {strides = array<i32>} : memref<1x8x8x128xbf16, #tpu.memory_space<vmem>>, vector<1x4x8x128xbf16>,
    %c9_157 = arith.constant 9 : index
    %c1_158 = arith.constant 1 : index
    %c0_159 = arith.constant 0 : index
    %156 = vector.load %arg9[%c9_157, %c1_158, %c0_159] : memref<18x18x128xbf16, #tpu.memory_space<vmem>>, vector<8x16x128xbf16>
    %157 = vector.shape_cast %156 : vector<8x16x128xbf16> to vector<128x128xbf16>
    %c0_160 = arith.constant 0 : index
    %c0_161 = arith.constant 0 : index
    %158 = vector.load %arg6[%c0_160, %c0_161] : memref<128x128xbf16, #tpu.memory_space<vmem>>, vector<128x128xbf16>
    %cst_162 = arith.constant dense<0.000000e+00> : vector<128x128xf32>
    %159 = tpu.matmul %157, %158, %cst_162 {dimension_numbers = #tpu.dot_dimension_numbers<[1], [0], [0], [1], [0, 0, 1, 1], [], []>} : vector<128x128xbf16>, vector<128x128xbf16>, vector<128x128xf32> -> vector<128x128xf32>
    %160 = vector.shape_cast %159 : vector<128x128xf32> to vector<8x16x128xf32>
    %161 = vector.shape_cast %160 : vector<8x16x128xf32> to vector<4x2x8x2x128xf32>
    %162 = vector.extract_strided_slice %161 {offsets = [0, 0, 0, 0, 0], sizes = [4, 1, 8, 1, 128], strides = [1, 1, 1, 1, 1]} : vector<4x2x8x2x128xf32> to vector<4x1x8x1x128xf32>
    %163 = vector.shape_cast %162 : vector<4x1x8x1x128xf32> to vector<4x8x128xf32>
    %164 = arith.truncf %163 : vector<4x8x128xf32> to vector<4x8x128xbf16>
    %c0_163 = arith.constant 0 : index
    %c4_164 = arith.constant 4 : index
    %c0_165 = arith.constant 0 : index
    %c0_166 = arith.constant 0 : index
    %165 = vector.load %arg8[%c0_163, %c4_164, %c0_165, %c0_166] : memref<1x8x8x128xbf16, #tpu.memory_space<vmem>>, vector<1x4x8x128xbf16>
    %166 = vector.shape_cast %165 : vector<1x4x8x128xbf16> to vector<4x8x128xbf16>
    %167 = vector.shape_cast %164 : vector<4x8x128xbf16> to vector<1x4x8x128xbf16>
    tpu.vector_store %arg8[%c0_163, %c4_164, %c0_165, %c0_166], %167 {strides = array<i32>} : memref<1x8x8x128xbf16, #tpu.memory_space<vmem>>, vector<1x4x8x128xbf16>,
    return
  }
  func.func @transform_0(%arg0: i32, %arg1: i32) -> (i32, i32, i32, i32) {
    %c0_i32 = arith.constant 0 : i32
    %c0_i32_0 = arith.constant 0 : i32
    %c0_i32_1 = arith.constant 0 : i32
    %c0_i32_2 = arith.constant 0 : i32
    return %arg1, %c0_i32, %c0_i32_0, %c0_i32_1 : i32, i32, i32, i32
  }
  func.func @transform_1(%arg0: i32, %arg1: i32) -> (i32, i32) {
    %c0_i32 = arith.constant 0 : i32
    %c0_i32_0 = arith.constant 0 : i32
    %c0_i32_1 = arith.constant 0 : i32
    return %c0_i32, %c0_i32_0 : i32, i32
  }
  func.func @transform_2(%arg0: i32, %arg1: i32) -> (i32, i32) {
    %c0_i32 = arith.constant 0 : i32
    %c0_i32_0 = arith.constant 0 : i32
    %c0_i32_1 = arith.constant 0 : i32
    return %c0_i32, %c0_i32_0 : i32, i32
  }
  func.func @transform_3(%arg0: i32, %arg1: i32) -> (i32, i32, i32) {
    %c0_i32 = arith.constant 0 : i32
    %c0_i32_0 = arith.constant 0 : i32
    %c0_i32_1 = arith.constant 0 : i32
    return %c0_i32, %c0_i32_0, %arg0 : i32, i32, i32
  }
  func.func @transform_4(%arg0: i32, %arg1: i32) -> (i32, i32) {
    %c0_i32 = arith.constant 0 : i32
    %c0_i32_0 = arith.constant 0 : i32
    return %c0_i32, %arg0 : i32, i32
  }
  func.func @transform_5(%arg0: i32, %arg1: i32) -> (i32, i32, i32, i32) {
    %c0_i32 = arith.constant 0 : i32
    %c0_i32_0 = arith.constant 0 : i32
    %c0_i32_1 = arith.constant 0 : i32
    return %arg1, %c0_i32, %c0_i32_0, %arg0 : i32, i32, i32, i32
  }
  func.func @transform_6(%arg0: i32, %arg1: i32) -> (i32, i32, i32, i32) {
    %c0_i32 = arith.constant 0 : i32
    %c0_i32_0 = arith.constant 0 : i32
    %c0_i32_1 = arith.constant 0 : i32
    return %arg1, %c0_i32, %c0_i32_0, %arg0 : i32, i32, i32, i32
  }
}

</mosaic_0001>

<llo_original>
// kernel: tpu_custom_call.1
$region0: #{tpu_custom_call.1}
  #allocation0 [shape = 'u32[]', space=smem, size = 0x4, offset = 0x4, fixed_abs, tag = 'smem constant byte address 0x4 - core index']
  #allocation1 [shape = 'u32[144,128]{1,0:T(1,128)}', space=vmem, size = 0x12000, scoped, tag = 'internal scratch']
  #allocation2 [shape = 'bf16[18,18,128]{2,1,0:T(8,128)(2,1)}', space=vmem, size = 0x1b000, scoped, tag = 'scratch operand']
  %s0 = inlined_call_operand.hbm [shape: f32[2,16,16,128], index: 0, kind: input, shape index: {}]
  %s1 = inlined_call_operand.vmem [shape: f32[1,128], index: 1, kind: input, shape index: {}]
  %s2 = inlined_call_operand.vmem [shape: f32[1,128], index: 2, kind: input, shape index: {}]
  %s3 = inlined_call_operand.hbm [shape: bf16[9,128,128], index: 3, kind: input, shape index: {}]
  %s4 = inlined_call_operand.hbm [shape: bf16[128,128], index: 4, kind: input, shape index: {}]
  %s5 = inlined_call_operand.hbm [shape: bf16[2,8,8,128], index: 5, kind: output, shape index: {0}]
  %s6 = inlined_call_operand.hbm [shape: bf16[2,8,8,128], index: 6, kind: output, shape index: {1}]
  %7 = xla_tuple %s5, %s6
  %s8 = sld [smem:[#allocation0]]
  $region73: #{tpu_custom_call.1} parent=0
    _
  %s10 = ssub.s32 1, %s8
  %s11 = scalar_select 0, %s10, %s8
  $region1: #{tpu_custom_call.1} parent=0
    #allocation3 [shape = 'u8[262144]{0}', space=vmem, size = 0x40000, scoped, tag = 'input window, operand 0']
    #allocation4 [shape = 's32[2]{0}', space=sflag, size = 0x8, scoped, tag = 'scoped memory for tpu_custom_call.1']
    #allocation5 [shape = 's32[2]{0}', space=sflag, size = 0x8, scoped, tag = 'scoped memory for tpu_custom_call.1']
    #allocation6 [shape = 'u8[294912]{0}', space=vmem, size = 0x48000, scoped, tag = 'input window, operand 3, single buffered']
    #allocation7 [shape = 's32[1]{0}', space=sflag, size = 0x4, scoped, tag = 'scoped memory for tpu_custom_call.1']
    #allocation8 [shape = 'u8[32768]{0}', space=vmem, size = 0x8000, scoped, tag = 'input window, operand 4, single buffered']
    #allocation9 [shape = 'u8[32768]{0}', space=vmem, size = 0x8000, scoped, tag = 'output window, operand 0']
    #allocation10 [shape = 'u8[32768]{0}', space=vmem, size = 0x8000, scoped, tag = 'output window, operand 1']
    #allocation11 [shape = 's32[2]{0}', space=sflag, size = 0x8, scoped, tag = 'scoped memory for tpu_custom_call.1']
    %12 = vsyncpa [#allocation4], 0
    %s13 = scalar_lea.sflag [#allocation4], 1
    %14 = vsyncpa %s13, 0
    %15 = vsyncpa [#allocation7], 0
    %16 = vsyncpa [#allocation5], 0
    %s17 = scalar_lea.sflag [#allocation5], 1
    %18 = vsyncpa %s17, 0
    %19 = vsyncpa [#allocation11], 0
    %s20 = scalar_lea.sflag [#allocation11], 1
    %21 = vsyncpa %s20, 0
    loop: start=0, step=1, limit=4
    $region2: #{tpu_custom_call.1} parent=1 // loop_pre_header
      _
    $region3: #{tpu_custom_call.1} parent=1 // loop_header
      %s23 = sphi 0, %s27
      %p24 = scmp.ge.s32.totalorder %s23, 4
      %s30 = sphi 0, %s42
      %s31 = sphi 0, %s38
      %s32 = sphi 0, %s30
      %s33 = sphi 0, %s31
      %s34 = sphi 0, %s32
      %s35 = sphi 0, %s33
      %s45 = sphi 0, %s47
      %s48 = sphi 0, %s45
      %s49 = sphi 0, %s48
      %s65 = sphi 0, %s49
      %s69 = sphi 0, %s69
      %s71 = sphi 0, %s69
      %s72 = sphi 0, %s71
      %s86 = sphi 0, %s72
      %s90 = sphi 0, %s90
      %s92 = sphi 0, %s90
      %s93 = sphi 0, %s92
      %s107 = sphi 0, %s93
      %s113 = sphi 0, %s115
      %s116 = sphi 0, %s113
      %s117 = sphi 0, %s116
      %s133 = sphi 0, %s117
      %s139 = sphi 0, %s141
      %s142 = sphi 0, %s139
      %s143 = sphi 0, %s142
      %s159 = sphi 0, %s143
      %s167 = sphi 0, %s169
      %s170 = sphi 0, %s167
      %s171 = sphi 0, %s170
      %s187 = sphi 0, %s171
      %s195 = sphi 0, %s197
      %s198 = sphi 0, %s195
      %s199 = sphi 0, %s198
      %s215 = sphi 0, %s199
    $region4: #{tpu_custom_call.1} parent=1 // loop_header_branch
      %26 = sbr.rel (%p24) target = $region8
    $region5: #{tpu_custom_call.1} parent=1 // loop_body
      %s28 = ssub.s32 %s23, 1
      %s29 = ssub.s32 %s23, 2
      %s36 = sadd.s32 1, %s31
      %p37 = scmp.ge.s32.totalorder %s36, 2
      %s38 = scalar_select %p37, 0, %s36
      %s39 = sadd.s32 1, %s30
      %s40 = scalar_select %p37, %s39, %s30
      %p41 = scmp.ge.s32.totalorder %s40, 1
      %s42 = scalar_select %p41, 0, %s40
      %s43 = ssub.s32 %s31, %s38
      %p44 = scmp.eq.s32.totalorder %s43, 0
      %s46 = sadd.s32 %s45, 1
      %s47 = scalar_select %p44, %s45, %s46
      %p50 = pneg %p44
      %p51 = scmp.eq.s32.totalorder %s23, 1
      %p52 = por %p50, %p51
      %p53 = scmp.ne.s32.totalorder %s45, %s48
      %p54 = scmp.eq.s32.totalorder %s23, 0
      %p55 = por %p53, %p54
      %p56 = scmp.ne.s32.totalorder %s45, %s48
      %p57 = scmp.eq.s32.totalorder %s28, 1
      %p58 = por %p56, %p57
      %p59 = scmp.ne.s32.totalorder %s48, %s49
      %p60 = scmp.eq.s32.totalorder %s28, 0
      %p61 = por %p59, %p60
      %p62 = scmp.ne.s32.totalorder %s48, %s49
      %p63 = scmp.eq.s32.totalorder %s29, 1
      %p64 = por %p62, %p63
      %p66 = scmp.ne.s32.totalorder %s49, %s65
      %p67 = scmp.eq.s32.totalorder %s29, 0
      %p68 = por %p66, %p67
      %s70 = sadd.s32 %s69, 1
      %p73 = scmp.eq.s32.totalorder %s23, 1
      %p74 = scmp.ne.s32.totalorder %s69, %s71
      %p75 = scmp.eq.s32.totalorder %s23, 0
      %p76 = por %p74, %p75
      %p77 = scmp.ne.s32.totalorder %s69, %s71
      %p78 = scmp.eq.s32.totalorder %s28, 1
      %p79 = por %p77, %p78
      %p80 = scmp.ne.s32.totalorder %s71, %s72
      %p81 = scmp.eq.s32.totalorder %s28, 0
      %p82 = por %p80, %p81
      %p83 = scmp.ne.s32.totalorder %s71, %s72
      %p84 = scmp.eq.s32.totalorder %s29, 1
      %p85 = por %p83, %p84
      %p87 = scmp.ne.s32.totalorder %s72, %s86
      %p88 = scmp.eq.s32.totalorder %s29, 0
      %p89 = por %p87, %p88
      %s91 = sadd.s32 %s90, 1
      %p94 = scmp.eq.s32.totalorder %s23, 1
      %p95 = scmp.ne.s32.totalorder %s90, %s92
      %p96 = scmp.eq.s32.totalorder %s23, 0
      %p97 = por %p95, %p96
      %p98 = scmp.ne.s32.totalorder %s90, %s92
      %p99 = scmp.eq.s32.totalorder %s28, 1
      %p100 = por %p98, %p99
      %p101 = scmp.ne.s32.totalorder %s92, %s93
      %p102 = scmp.eq.s32.totalorder %s28, 0
      %p103 = por %p101, %p102
      %p104 = scmp.ne.s32.totalorder %s92, %s93
      %p105 = scmp.eq.s32.totalorder %s29, 1
      %p106 = por %p104, %p105
      %p108 = scmp.ne.s32.totalorder %s93, %s107
      %p109 = scmp.eq.s32.totalorder %s29, 0
      %p110 = por %p108, %p109
      %s111 = ssub.s32 %s30, %s42
      %p112 = scmp.eq.s32.totalorder %s111, 0
      %s114 = sadd.s32 %s113, 1
      %s115 = scalar_select %p112, %s113, %s114
      %p118 = pneg %p112
      %p119 = scmp.eq.s32.totalorder %s23, 1
      %p120 = por %p118, %p119
      %p121 = scmp.ne.s32.totalorder %s113, %s116
      %p122 = scmp.eq.s32.totalorder %s23, 0
      %p123 = por %p121, %p122
      %p124 = scmp.ne.s32.totalorder %s113, %s116
      %p125 = scmp.eq.s32.totalorder %s28, 1
      %p126 = por %p124, %p125
      %p127 = scmp.ne.s32.totalorder %s116, %s117
      %p128 = scmp.eq.s32.totalorder %s28, 0
      %p129 = por %p127, %p128
      %p130 = scmp.ne.s32.totalorder %s116, %s117
      %p131 = scmp.eq.s32.totalorder %s29, 1
      %p132 = por %p130, %p131
      %p134 = scmp.ne.s32.totalorder %s117, %s133
      %p135 = scmp.eq.s32.totalorder %s29, 0
      %p136 = por %p134, %p135
      %s137 = ssub.s32 %s30, %s42
      %p138 = scmp.eq.s32.totalorder %s137, 0
      %s140 = sadd.s32 %s139, 1
      %s141 = scalar_select %p138, %s139, %s140
      %p144 = pneg %p138
      %p145 = scmp.eq.s32.totalorder %s23, 1
      %p146 = por %p144, %p145
      %p147 = scmp.ne.s32.totalorder %s139, %s142
      %p148 = scmp.eq.s32.totalorder %s23, 0
      %p149 = por %p147, %p148
      %p150 = scmp.ne.s32.totalorder %s139, %s142
      %p151 = scmp.eq.s32.totalorder %s28, 1
      %p152 = por %p150, %p151
      %p153 = scmp.ne.s32.totalorder %s142, %s143
      %p154 = scmp.eq.s32.totalorder %s28, 0
      %p155 = por %p153, %p154
      %p156 = scmp.ne.s32.totalorder %s142, %s143
      %p157 = scmp.eq.s32.totalorder %s29, 1
      %p158 = por %p156, %p157
      %p160 = scmp.ne.s32.totalorder %s143, %s159
      %p161 = scmp.eq.s32.totalorder %s29, 0
      %p162 = por %p160, %p161
      %s163 = ssub.s32 %s31, %s38
      %s164 = ssub.s32 %s30, %s42
      %s165 = sor.u32 %s163, %s164
      %p166 = scmp.eq.s32.totalorder %s165, 0
      %s168 = sadd.s32 %s167, 1
      %s169 = scalar_select %p166, %s167, %s168
      %p172 = pneg %p166
      %p173 = scmp.eq.s32.totalorder %s23, 1
      %p174 = por %p172, %p173
      %p175 = scmp.ne.s32.totalorder %s167, %s170
      %p176 = scmp.eq.s32.totalorder %s23, 0
      %p177 = por %p175, %p176
      %p178 = scmp.ne.s32.totalorder %s167, %s170
      %p179 = scmp.eq.s32.totalorder %s28, 1
      %p180 = por %p178, %p179
      %p181 = scmp.ne.s32.totalorder %s170, %s171
      %p182 = scmp.eq.s32.totalorder %s28, 0
      %p183 = por %p181, %p182
      %p184 = scmp.ne.s32.totalorder %s170, %s171
      %p185 = scmp.eq.s32.totalorder %s29, 1
      %p186 = por %p184, %p185
      %p188 = scmp.ne.s32.totalorder %s171, %s187
      %p189 = scmp.eq.s32.totalorder %s29, 0
      %p190 = por %p188, %p189
      %s191 = ssub.s32 %s31, %s38
      %s192 = ssub.s32 %s30, %s42
      %s193 = sor.u32 %s191, %s192
      %p194 = scmp.eq.s32.totalorder %s193, 0
      %s196 = sadd.s32 %s195, 1
      %s197 = scalar_select %p194, %s195, %s196
      %p200 = pneg %p194
      %p201 = scmp.eq.s32.totalorder %s23, 1
      %p202 = por %p200, %p201
      %p203 = scmp.ne.s32.totalorder %s195, %s198
      %p204 = scmp.eq.s32.totalorder %s23, 0
      %p205 = por %p203, %p204
      %p206 = scmp.ne.s32.totalorder %s195, %s198
      %p207 = scmp.eq.s32.totalorder %s28, 1
      %p208 = por %p206, %p207
      %p209 = scmp.ne.s32.totalorder %s198, %s199
      %p210 = scmp.eq.s32.totalorder %s28, 0
      %p211 = por %p209, %p210
      %p212 = scmp.ne.s32.totalorder %s198, %s199
      %p213 = scmp.eq.s32.totalorder %s29, 1
      %p214 = por %p212, %p213
      %p216 = scmp.ne.s32.totalorder %s199, %s215
      %p217 = scmp.eq.s32.totalorder %s29, 0
      %p218 = por %p216, %p217
      %p219 = scmp.le.s32.totalorder 1, %s23
      %p220 = scmp.lt.s32.totalorder %s23, 3
      %p221 = pnand %p219, %p220
      %p222 = pneg %p221
      // Predicated region
      $region9: #{tpu_custom_call.1} parent=5 // pred_check
        _
      $region10: #{tpu_custom_call.1} parent=5 // pred_check_branch
        %224 = sbr.rel (%p221) target = $region12
      $region11: #{tpu_custom_call.1} parent=5 // pred_region
        %s225 = ssub.s32 %s23, 1
        // Predicated region
        $region13: #{tpu_custom_call.1} parent=11 // pred_check
          %p226 = pneg %p82
        $region14: #{tpu_custom_call.1} parent=11 // pred_check_branch
          %228 = sbr.rel (%p226) target = $region16
        $region15: #{tpu_custom_call.1} parent=11 // pred_region
          _
        $region16: #{tpu_custom_call.1} parent=11 // pred_fallthru
          _
        // Predicated region
        $region17: #{tpu_custom_call.1} parent=11 // pred_check
          %p229 = pneg %p103
        $region18: #{tpu_custom_call.1} parent=11 // pred_check_branch
          %231 = sbr.rel (%p229) target = $region20
        $region19: #{tpu_custom_call.1} parent=11 // pred_region
          _
        $region20: #{tpu_custom_call.1} parent=11 // pred_fallthru
          _
        // Predicated region
        $region21: #{tpu_custom_call.1} parent=11 // pred_check
          %p232 = pneg %p129
        $region22: #{tpu_custom_call.1} parent=11 // pred_check_branch
          %234 = sbr.rel (%p232) target = $region24
        $region23: #{tpu_custom_call.1} parent=11 // pred_region
          %s236 = ssub.s32 9216, 9216
          %237 = vsyncadd [#allocation7], %s236
          %s238 = smul.addr %s32, 64
          %s239 = scalar_lea.hbm %s3, %s238
          %s240 = sshll.u32 [#allocation6], 4
          %s241 = int_to_ptr.vmem [resolvable:$true] %s240
          %246 = dma.hbm_to_vmem [thread:$0]  %s239, 9216, %s241, [#allocation7], 64, 64, 4
        $region24: #{tpu_custom_call.1} parent=11 // pred_fallthru
          _
        // Predicated region
        $region25: #{tpu_custom_call.1} parent=11 // pred_check
          %p247 = pneg %p155
        $region26: #{tpu_custom_call.1} parent=11 // pred_check_branch
          %249 = sbr.rel (%p247) target = $region28
        $region27: #{tpu_custom_call.1} parent=11 // pred_region
          %s251 = ssub.s32 1024, 1024
          %252 = vsyncadd [#allocation7], %s251
          %s253 = smul.addr %s32, 64
          %s254 = scalar_lea.hbm %s4, %s253
          %s255 = sshll.u32 [#allocation8], 4
          %s256 = int_to_ptr.vmem [resolvable:$true] %s255
          %261 = dma.hbm_to_vmem [thread:$0]  %s254, 1024, %s256, [#allocation7], 64, 64, 4
        $region28: #{tpu_custom_call.1} parent=11 // pred_fallthru
          _
      $region12: #{tpu_custom_call.1} parent=5 // pred_fallthru
        _
      %p262 = scmp.lt.s32.totalorder %s23, 2
      // Predicated region
      $region29: #{tpu_custom_call.1} parent=5 // pred_check
        %p263 = pneg %p262
      $region30: #{tpu_custom_call.1} parent=5 // pred_check_branch
        %265 = sbr.rel (%p263) target = $region32
      $region31: #{tpu_custom_call.1} parent=5 // pred_region
        // Predicated region
        $region33: #{tpu_custom_call.1} parent=31 // pred_check
          %p266 = pneg %p55
        $region34: #{tpu_custom_call.1} parent=31 // pred_check_branch
          %268 = sbr.rel (%p266) target = $region36
        $region35: #{tpu_custom_call.1} parent=31 // pred_region
          %s269 = sand.u32 %s45, 1
          %s270 = scalar_lea.sflag [#allocation4], %s269
          %s271 = sand.u32 %s45, 1
          %s272 = smul.addr %s271, 256
          %s273 = scalar_lea.vmem [#allocation3], %s272
          %s275 = ssub.s32 4096, 4096
          %276 = vsyncadd %s270, %s275
          %s277 = smul.addr %s31, 32
          %s278 = smul.addr %s277, 128
          %s279 = scalar_lea.hbm %s0, %s278
          %s280 = sshll.u32 %s273, 4
          %s281 = int_to_ptr.vmem [resolvable:$true] %s280
          %286 = dma.hbm_to_vmem [thread:$0]  %s279, 4096, %s281, %s270, 128, 128, 8
        $region36: #{tpu_custom_call.1} parent=31 // pred_fallthru
          _
      $region32: #{tpu_custom_call.1} parent=5 // pred_fallthru
        _
      %p287 = scmp.le.s32.totalorder 1, %s23
      %p288 = scmp.lt.s32.totalorder %s23, 3
      %p289 = pnand %p287, %p288
      %p290 = pneg %p289
      // Predicated region
      $region37: #{tpu_custom_call.1} parent=5 // pred_check
        _
      $region38: #{tpu_custom_call.1} parent=5 // pred_check_branch
        %292 = sbr.rel (%p289) target = $region40
      $region39: #{tpu_custom_call.1} parent=5 // pred_region
        %s293 = ssub.s32 %s23, 1
        %s294 = sand.u32 %s48, 1
        %s295 = scalar_lea.sflag [#allocation4], %s294
        %s296 = sand.u32 %s48, 1
        %s297 = smul.addr %s296, 256
        %s298 = scalar_lea.vmem [#allocation3], %s297
        // Predicated region
        $region41: #{tpu_custom_call.1} parent=39 // pred_check
          %p299 = pneg %p61
        $region42: #{tpu_custom_call.1} parent=39 // pred_check_branch
          %301 = sbr.rel (%p299) target = $region44
        $region43: #{tpu_custom_call.1} parent=39 // pred_region
          %302 = dma.done %s295, 4096
        $region44: #{tpu_custom_call.1} parent=39 // pred_fallthru
          _
        // Predicated region
        $region45: #{tpu_custom_call.1} parent=39 // pred_check
          %p303 = pneg %p129
        $region46: #{tpu_custom_call.1} parent=39 // pred_check_branch
          %305 = sbr.rel (%p303) target = $region48
        $region47: #{tpu_custom_call.1} parent=39 // pred_region
          %306 = dma.done [#allocation7], 9216
        $region48: #{tpu_custom_call.1} parent=39 // pred_fallthru
          _
        // Predicated region
        $region49: #{tpu_custom_call.1} parent=39 // pred_check
          %p307 = pneg %p155
        $region50: #{tpu_custom_call.1} parent=39 // pred_check_branch
          %309 = sbr.rel (%p307) target = $region52
        $region51: #{tpu_custom_call.1} parent=39 // pred_region
          %310 = dma.done [#allocation7], 1024
        $region52: #{tpu_custom_call.1} parent=39 // pred_fallthru
          _
        %s311 = sand.u32 %s48, 1
        %s312 = scalar_lea.sflag [#allocation4], %s311
        %s313 = sand.u32 %s48, 1
        %s314 = smul.addr %s313, 256
        %s315 = scalar_lea.vmem [#allocation3], %s314
        %p316 = pneg %p61
        %p317 = pneg %p58
        %p318 = pneg %p82
        %p319 = pneg %p79
        %p320 = pneg %p103
        %p321 = pneg %p100
        %p322 = pneg %p129
        %p323 = pneg %p126
        %p324 = pneg %p155
        %p325 = pneg %p152
        %p326 = pneg %p183
        %p327 = pneg %p180
        %s328 = sand.u32 %s170, 1
        %s329 = scalar_lea.sflag [#allocation5], %s328
        %s330 = sand.u32 %s170, 1
        %s331 = smul.addr %s330, 32
        %s332 = scalar_lea.vmem [#allocation9], %s331
        %p333 = pneg %p211
        %p334 = pneg %p208
        %s335 = sand.u32 %s198, 1
        %s336 = scalar_lea.sflag [#allocation11], %s335
        %s337 = sand.u32 %s198, 1
        %s338 = smul.addr %s337, 32
        %s339 = scalar_lea.vmem [#allocation10], %s338
        %v341 = vld [vmem:[%s298] sm:$0xff]
        %v342 = vld [vmem:[%s298 + $0x8] sm:$0xff]
        %v343 = vld [vmem:[%s298 + $0x10] sm:$0xff]
        %v344 = vld [vmem:[%s298 + $0x18] sm:$0xff]
        %v345 = vld [vmem:[%s298 + $0x20] sm:$0xff]
        %v346 = vld [vmem:[%s298 + $0x28] sm:$0xff]
        %v347 = vld [vmem:[%s298 + $0x30] sm:$0xff]
        %v348 = vld [vmem:[%s298 + $0x38] sm:$0xff]
        %v349 = vld [vmem:[%s298 + $0x40] sm:$0xff]
        %v350 = vld [vmem:[%s298 + $0x48] sm:$0xff]
        %v351 = vld [vmem:[%s298 + $0x50] sm:$0xff]
        %v352 = vld [vmem:[%s298 + $0x58] sm:$0xff]
        %v353 = vld [vmem:[%s298 + $0x60] sm:$0xff]
        %v354 = vld [vmem:[%s298 + $0x68] sm:$0xff]
        %v355 = vld [vmem:[%s298 + $0x70] sm:$0xff]
        %v356 = vld [vmem:[%s298 + $0x78] sm:$0xff]
        %v357 = vld [vmem:[%s298 + $0x80] sm:$0xff]
        %v358 = vld [vmem:[%s298 + $0x88] sm:$0xff]
        %v359 = vld [vmem:[%s298 + $0x90] sm:$0xff]
        %v360 = vld [vmem:[%s298 + $0x98] sm:$0xff]
        %v361 = vld [vmem:[%s298 + $0xa0] sm:$0xff]
        %v362 = vld [vmem:[%s298 + $0xa8] sm:$0xff]
        %v363 = vld [vmem:[%s298 + $0xb0] sm:$0xff]
        %v364 = vld [vmem:[%s298 + $0xb8] sm:$0xff]
        %v365 = vld [vmem:[%s298 + $0xc0] sm:$0xff]
        %v366 = vld [vmem:[%s298 + $0xc8] sm:$0xff]
        %v367 = vld [vmem:[%s298 + $0xd0] sm:$0xff]
        %v368 = vld [vmem:[%s298 + $0xd8] sm:$0xff]
        %v369 = vld [vmem:[%s298 + $0xe0] sm:$0xff]
        %v370 = vld [vmem:[%s298 + $0xe8] sm:$0xff]
        %v371 = vld [vmem:[%s298 + $0xf0] sm:$0xff]
        %v372 = vld [vmem:[%s298 + $0xf8] sm:$0xff]
        %v373 = vld [vmem:[%s1] sm:$0x1]
        %v375 = vlaneseq
        %v376 = vshrl.u32 %v375, 7
        %v377 = vsub.s32 0, %v376
        %v378 = vrot.slane %v373, %v377
        %v380 = vmul.f32 %v341, %v378
        %v381 = vmul.f32 %v342, %v378
        %v382 = vmul.f32 %v343, %v378
        %v383 = vmul.f32 %v344, %v378
        %v384 = vmul.f32 %v345, %v378
        %v385 = vmul.f32 %v346, %v378
        %v386 = vmul.f32 %v347, %v378
        %v387 = vmul.f32 %v348, %v378
        %v388 = vmul.f32 %v349, %v378
        %v389 = vmul.f32 %v350, %v378
        %v390 = vmul.f32 %v351, %v378
        %v391 = vmul.f32 %v352, %v378
        %v392 = vmul.f32 %v353, %v378
        %v393 = vmul.f32 %v354, %v378
        %v394 = vmul.f32 %v355, %v378
        %v395 = vmul.f32 %v356, %v378
        %v396 = vmul.f32 %v357, %v378
        %v397 = vmul.f32 %v358, %v378
        %v398 = vmul.f32 %v359, %v378
        %v399 = vmul.f32 %v360, %v378
        %v400 = vmul.f32 %v361, %v378
        %v401 = vmul.f32 %v362, %v378
        %v402 = vmul.f32 %v363, %v378
        %v403 = vmul.f32 %v364, %v378
        %v404 = vmul.f32 %v365, %v378
        %v405 = vmul.f32 %v366, %v378
        %v406 = vmul.f32 %v367, %v378
        %v407 = vmul.f32 %v368, %v378
        %v408 = vmul.f32 %v369, %v378
        %v409 = vmul.f32 %v370, %v378
        %v410 = vmul.f32 %v371, %v378
        %v411 = vmul.f32 %v372, %v378
        %v412 = vld [vmem:[%s2] sm:$0x1]
        %v414 = vlaneseq
        %v415 = vshrl.u32 %v414, 7
        %v416 = vsub.s32 0, %v415
        %v417 = vrot.slane %v412, %v416
        %v419 = vadd.f32 %v380, %v417
        %v420 = vadd.f32 %v381, %v417
        %v421 = vadd.f32 %v382, %v417
        %v422 = vadd.f32 %v383, %v417
        %v423 = vadd.f32 %v384, %v417
        %v424 = vadd.f32 %v385, %v417
        %v425 = vadd.f32 %v386, %v417
        %v426 = vadd.f32 %v387, %v417
        %v427 = vadd.f32 %v388, %v417
        %v428 = vadd.f32 %v389, %v417
        %v429 = vadd.f32 %v390, %v417
        %v430 = vadd.f32 %v391, %v417
        %v431 = vadd.f32 %v392, %v417
        %v432 = vadd.f32 %v393, %v417
        %v433 = vadd.f32 %v394, %v417
        %v434 = vadd.f32 %v395, %v417
        %v435 = vadd.f32 %v396, %v417
        %v436 = vadd.f32 %v397, %v417
        %v437 = vadd.f32 %v398, %v417
        %v438 = vadd.f32 %v399, %v417
        %v439 = vadd.f32 %v400, %v417
        %v440 = vadd.f32 %v401, %v417
        %v441 = vadd.f32 %v402, %v417
        %v442 = vadd.f32 %v403, %v417
        %v443 = vadd.f32 %v404, %v417
        %v444 = vadd.f32 %v405, %v417
        %v445 = vadd.f32 %v406, %v417
        %v446 = vadd.f32 %v407, %v417
        %v447 = vadd.f32 %v408, %v417
        %v448 = vadd.f32 %v409, %v417
        %v449 = vadd.f32 %v410, %v417
        %v450 = vadd.f32 %v411, %v417
        %v451 = vmax.f32 %v419, 0.0
        %v452 = vmax.f32 %v420, 0.0
        %v453 = vmax.f32 %v421, 0.0
        %v454 = vmax.f32 %v422, 0.0
        %v455 = vmax.f32 %v423, 0.0
        %v456 = vmax.f32 %v424, 0.0
        %v457 = vmax.f32 %v425, 0.0
        %v458 = vmax.f32 %v426, 0.0
        %v459 = vmax.f32 %v427, 0.0
        %v460 = vmax.f32 %v428, 0.0
        %v461 = vmax.f32 %v429, 0.0
        %v462 = vmax.f32 %v430, 0.0
        %v463 = vmax.f32 %v431, 0.0
        %v464 = vmax.f32 %v432, 0.0
        %v465 = vmax.f32 %v433, 0.0
        %v466 = vmax.f32 %v434, 0.0
        %v467 = vmax.f32 %v435, 0.0
        %v468 = vmax.f32 %v436, 0.0
        %v469 = vmax.f32 %v437, 0.0
        %v470 = vmax.f32 %v438, 0.0
        %v471 = vmax.f32 %v439, 0.0
        %v472 = vmax.f32 %v440, 0.0
        %v473 = vmax.f32 %v441, 0.0
        %v474 = vmax.f32 %v442, 0.0
        %v475 = vmax.f32 %v443, 0.0
        %v476 = vmax.f32 %v444, 0.0
        %v477 = vmax.f32 %v445, 0.0
        %v478 = vmax.f32 %v446, 0.0
        %v479 = vmax.f32 %v447, 0.0
        %v480 = vmax.f32 %v448, 0.0
        %v481 = vmax.f32 %v449, 0.0
        %v482 = vmax.f32 %v450, 0.0
        %v483 = vpack.c.bf16 %v452, %v451
        %v484 = vpack.c.bf16 %v454, %v453
        %v485 = vpack.c.bf16 %v456, %v455
        %v486 = vpack.c.bf16 %v458, %v457
        %v487 = vpack.c.bf16 %v460, %v459
        %v488 = vpack.c.bf16 %v462, %v461
        %v489 = vpack.c.bf16 %v464, %v463
        %v490 = vpack.c.bf16 %v466, %v465
        %v491 = vpack.c.bf16 %v468, %v467
        %v492 = vpack.c.bf16 %v470, %v469
        %v493 = vpack.c.bf16 %v472, %v471
        %v494 = vpack.c.bf16 %v474, %v473
        %v495 = vpack.c.bf16 %v476, %v475
        %v496 = vpack.c.bf16 %v478, %v477
        %v497 = vpack.c.bf16 %v480, %v479
        %v498 = vpack.c.bf16 %v482, %v481
        %499 = vst [vmem:[#allocation2] sm:$0xf] 0
        %500 = vst [vmem:[#allocation2 + $0x4] sm:$0xf] 0
        %501 = vst [vmem:[#allocation2 + $0x8] sm:$0x1] 0
        %s502 = scalar_lea.vmem [#allocation2], 204
        %503 = vst [vmem:[%s502] sm:$0xf] 0
        %504 = vst [vmem:[%s502 + $0x4] sm:$0xf] 0
        %505 = vst [vmem:[%s502 + $0x8] sm:$0x1] 0
        %s506 = scalar_lea.vmem [#allocation2], 12
        %vm507 = vcmask 1040384
        %vm508 = vsmask.f32 256
        %vm509 = vmand %vm507, %vm508
        %v510 = vld [vmem:[%s506] sm:$0x1]
        %v511 = vsel %vm509, 0, %v510
        %512 = vst [vmem:[%s506] sm:$0x1] %v511
        %v513 = vld [vmem:[%s506 + $0xc] sm:$0x1]
        %v514 = vsel %vm509, 0, %v513
        %515 = vst [vmem:[%s506 + $0xc] sm:$0x1] %v514
        %v516 = vld [vmem:[%s506 + $0x18] sm:$0x1]
        %v517 = vsel %vm509, 0, %v516
        %518 = vst [vmem:[%s506 + $0x18] sm:$0x1] %v517
        %v519 = vld [vmem:[%s506 + $0x24] sm:$0x1]
        %v520 = vsel %vm509, 0, %v519
        %521 = vst [vmem:[%s506 + $0x24] sm:$0x1] %v520
        %v522 = vld [vmem:[%s506 + $0x30] sm:$0x1]
        %v523 = vsel %vm509, 0, %v522
        %524 = vst [vmem:[%s506 + $0x30] sm:$0x1] %v523
        %v525 = vld [vmem:[%s506 + $0x3c] sm:$0x1]
        %v526 = vsel %vm509, 0, %v525
        %527 = vst [vmem:[%s506 + $0x3c] sm:$0x1] %v526
        %v528 = vld [vmem:[%s506 + $0x48] sm:$0x1]
        %v529 = vsel %vm509, 0, %v528
        %530 = vst [vmem:[%s506 + $0x48] sm:$0x1] %v529
        %v531 = vld [vmem:[%s506 + $0x54] sm:$0x1]
        %v532 = vsel %vm509, 0, %v531
        %533 = vst [vmem:[%s506 + $0x54] sm:$0x1] %v532
        %v534 = vld [vmem:[%s506 + $0x60] sm:$0x1]
        %v535 = vsel %vm509, 0, %v534
        %536 = vst [vmem:[%s506 + $0x60] sm:$0x1] %v535
        %v537 = vld [vmem:[%s506 + $0x6c] sm:$0x1]
        %v538 = vsel %vm509, 0, %v537
        %539 = vst [vmem:[%s506 + $0x6c] sm:$0x1] %v538
        %v540 = vld [vmem:[%s506 + $0x78] sm:$0x1]
        %v541 = vsel %vm509, 0, %v540
        %542 = vst [vmem:[%s506 + $0x78] sm:$0x1] %v541
        %v543 = vld [vmem:[%s506 + $0x84] sm:$0x1]
        %v544 = vsel %vm509, 0, %v543
        %545 = vst [vmem:[%s506 + $0x84] sm:$0x1] %v544
        %v546 = vld [vmem:[%s506 + $0x90] sm:$0x1]
        %v547 = vsel %vm509, 0, %v546
        %548 = vst [vmem:[%s506 + $0x90] sm:$0x1] %v547
        %v549 = vld [vmem:[%s506 + $0x9c] sm:$0x1]
        %v550 = vsel %vm509, 0, %v549
        %551 = vst [vmem:[%s506 + $0x9c] sm:$0x1] %v550
        %v552 = vld [vmem:[%s506 + $0xa8] sm:$0x1]
        %v553 = vsel %vm509, 0, %v552
        %554 = vst [vmem:[%s506 + $0xa8] sm:$0x1] %v553
        %v555 = vld [vmem:[%s506 + $0xb4] sm:$0x1]
        %v556 = vsel %vm509, 0, %v555
        %557 = vst [vmem:[%s506 + $0xb4] sm:$0x1] %v556
        %vm558 = vsmask.f32 7938
        %vm559 = vmand %vm507, %vm558
        %v560 = vld [vmem:[%s506 + $0x8] sm:$0x1]
        %v561 = vsel %vm559, 0, %v560
        %562 = vst [vmem:[%s506 + $0x8] sm:$0x1] %v561
        %v563 = vld [vmem:[%s506 + $0x14] sm:$0x1]
        %v564 = vsel %vm559, 0, %v563
        %565 = vst [vmem:[%s506 + $0x14] sm:$0x1] %v564
        %v566 = vld [vmem:[%s506 + $0x20] sm:$0x1]
        %v567 = vsel %vm559, 0, %v566
        %568 = vst [vmem:[%s506 + $0x20] sm:$0x1] %v567
        %v569 = vld [vmem:[%s506 + $0x2c] sm:$0x1]
        %v570 = vsel %vm559, 0, %v569
        %571 = vst [vmem:[%s506 + $0x2c] sm:$0x1] %v570
        %v572 = vld [vmem:[%s506 + $0x38] sm:$0x1]
        %v573 = vsel %vm559, 0, %v572
        %574 = vst [vmem:[%s506 + $0x38] sm:$0x1] %v573
        %v575 = vld [vmem:[%s506 + $0x44] sm:$0x1]
        %v576 = vsel %vm559, 0, %v575
        %577 = vst [vmem:[%s506 + $0x44] sm:$0x1] %v576
        %v578 = vld [vmem:[%s506 + $0x50] sm:$0x1]
        %v579 = vsel %vm559, 0, %v578
        %580 = vst [vmem:[%s506 + $0x50] sm:$0x1] %v579
        %v581 = vld [vmem:[%s506 + $0x5c] sm:$0x1]
        %v582 = vsel %vm559, 0, %v581
        %583 = vst [vmem:[%s506 + $0x5c] sm:$0x1] %v582
        %v584 = vld [vmem:[%s506 + $0x68] sm:$0x1]
        %v585 = vsel %vm559, 0, %v584
        %586 = vst [vmem:[%s506 + $0x68] sm:$0x1] %v585
        %v587 = vld [vmem:[%s506 + $0x74] sm:$0x1]
        %v588 = vsel %vm559, 0, %v587
        %589 = vst [vmem:[%s506 + $0x74] sm:$0x1] %v588
        %v590 = vld [vmem:[%s506 + $0x80] sm:$0x1]
        %v591 = vsel %vm559, 0, %v590
        %592 = vst [vmem:[%s506 + $0x80] sm:$0x1] %v591
        %v593 = vld [vmem:[%s506 + $0x8c] sm:$0x1]
        %v594 = vsel %vm559, 0, %v593
        %595 = vst [vmem:[%s506 + $0x8c] sm:$0x1] %v594
        %v596 = vld [vmem:[%s506 + $0x98] sm:$0x1]
        %v597 = vsel %vm559, 0, %v596
        %598 = vst [vmem:[%s506 + $0x98] sm:$0x1] %v597
        %v599 = vld [vmem:[%s506 + $0xa4] sm:$0x1]
        %v600 = vsel %vm559, 0, %v599
        %601 = vst [vmem:[%s506 + $0xa4] sm:$0x1] %v600
        %v602 = vld [vmem:[%s506 + $0xb0] sm:$0x1]
        %v603 = vsel %vm559, 0, %v602
        %604 = vst [vmem:[%s506 + $0xb0] sm:$0x1] %v603
        %v605 = vld [vmem:[%s506 + $0xbc] sm:$0x1]
        %v606 = vsel %vm559, 0, %v605
        %607 = vst [vmem:[%s506 + $0xbc] sm:$0x1] %v606
        %v624 = vunpack.c.l.b16 %v483
        %v625 = vunpack.c.h.b16 %v483
        %v626 = vunpack.c.l.b16 %v484
        %v627 = vunpack.c.h.b16 %v484
        %v628 = vunpack.c.l.b16 %v485
        %v629 = vunpack.c.h.b16 %v485
        %v630 = vunpack.c.l.b16 %v486
        %v631 = vunpack.c.h.b16 %v486
        %v632 = vunpack.c.l.b16 %v487
        %v633 = vunpack.c.h.b16 %v487
        %v634 = vunpack.c.l.b16 %v488
        %v635 = vunpack.c.h.b16 %v488
        %v636 = vunpack.c.l.b16 %v489
        %v637 = vunpack.c.h.b16 %v489
        %v638 = vunpack.c.l.b16 %v490
        %v639 = vunpack.c.h.b16 %v490
        %v640 = vunpack.c.l.b16 %v491
        %v641 = vunpack.c.h.b16 %v491
        %v642 = vunpack.c.l.b16 %v492
        %v643 = vunpack.c.h.b16 %v492
        %v644 = vunpack.c.l.b16 %v493
        %v645 = vunpack.c.h.b16 %v493
        %v646 = vunpack.c.l.b16 %v494
        %v647 = vunpack.c.h.b16 %v494
        %v648 = vunpack.c.l.b16 %v495
        %v649 = vunpack.c.h.b16 %v495
        %v650 = vunpack.c.l.b16 %v496
        %v651 = vunpack.c.h.b16 %v496
        %v652 = vunpack.c.l.b16 %v497
        %v653 = vunpack.c.h.b16 %v497
        %v654 = vunpack.c.l.b16 %v498
        %v655 = vunpack.c.h.b16 %v498
        %v656 = vpack.c.b16 %v624, %v624
        %v657 = vpack.c.b16 %v625, %v625
        %v658 = vpack.c.b16 %v626, %v626
        %v659 = vpack.c.b16 %v627, %v627
        %v660 = vpack.c.b16 %v628, %v628
        %v661 = vpack.c.b16 %v629, %v629
        %v662 = vpack.c.b16 %v630, %v630
        %v663 = vpack.c.b16 %v631, %v631
        %v664 = vpack.c.b16 %v632, %v632
        %v665 = vpack.c.b16 %v633, %v633
        %v666 = vpack.c.b16 %v634, %v634
        %v667 = vpack.c.b16 %v635, %v635
        %v668 = vpack.c.b16 %v636, %v636
        %v669 = vpack.c.b16 %v637, %v637
        %v670 = vpack.c.b16 %v638, %v638
        %v671 = vpack.c.b16 %v639, %v639
        %v672 = vpack.c.b16 %v640, %v640
        %v673 = vpack.c.b16 %v641, %v641
        %v674 = vpack.c.b16 %v642, %v642
        %v675 = vpack.c.b16 %v643, %v643
        %v676 = vpack.c.b16 %v644, %v644
        %v677 = vpack.c.b16 %v645, %v645
        %v678 = vpack.c.b16 %v646, %v646
        %v679 = vpack.c.b16 %v647, %v647
        %v680 = vpack.c.b16 %v648, %v648
        %v681 = vpack.c.b16 %v649, %v649
        %v682 = vpack.c.b16 %v650, %v650
        %v683 = vpack.c.b16 %v651, %v651
        %v684 = vpack.c.b16 %v652, %v652
        %v685 = vpack.c.b16 %v653, %v653
        %v686 = vpack.c.b16 %v654, %v654
        %v687 = vpack.c.b16 %v655, %v655
        %vm688 = vsmask.f32 4368
        %vm689 = vmor %vm508, %vm688
        %v691 = vshrl.u32 %v656, 16
        %v693 = vrot.slane %v691, 7
        %v694 = vshll.u32 %v656, 16
        %v696 = vor.u32 %v693, %v694
        %v697 = vrot.slane %v693, 4
        %v699 = vshrl.u32 %v657, 16
        %v701 = vrot.slane %v699, 7
        %v702 = vshll.u32 %v657, 16
        %v704 = vor.u32 %v701, %v702
        %v705 = vsel %vm689, %v697, %v704
        %v706 = vrot.slane %v701, 4
        %v708 = vshrl.u32 %v658, 16
        %v710 = vrot.slane %v708, 7
        %v711 = vshll.u32 %v658, 16
        %v713 = vor.u32 %v710, %v711
        %v714 = vrot.slane %v710, 4
        %v716 = vshrl.u32 %v659, 16
        %v718 = vrot.slane %v716, 7
        %v719 = vshll.u32 %v659, 16
        %v721 = vor.u32 %v718, %v719
        %v722 = vsel %vm689, %v714, %v721
        %v723 = vrot.slane %v718, 4
        %v725 = vshrl.u32 %v660, 16
        %v727 = vrot.slane %v725, 7
        %v728 = vshll.u32 %v660, 16
        %v730 = vor.u32 %v727, %v728
        %v731 = vrot.slane %v727, 4
        %v733 = vshrl.u32 %v661, 16
        %v735 = vrot.slane %v733, 7
        %v736 = vshll.u32 %v661, 16
        %v738 = vor.u32 %v735, %v736
        %v739 = vsel %vm689, %v731, %v738
        %v740 = vrot.slane %v735, 4
        %v742 = vshrl.u32 %v662, 16
        %v744 = vrot.slane %v742, 7
        %v745 = vshll.u32 %v662, 16
        %v747 = vor.u32 %v744, %v745
        %v748 = vrot.slane %v744, 4
        %v750 = vshrl.u32 %v663, 16
        %v752 = vrot.slane %v750, 7
        %v753 = vshll.u32 %v663, 16
        %v755 = vor.u32 %v752, %v753
        %v756 = vsel %vm689, %v748, %v755
        %v757 = vrot.slane %v752, 4
        %v759 = vshrl.u32 %v664, 16
        %v761 = vrot.slane %v759, 7
        %v762 = vshll.u32 %v664, 16
        %v764 = vor.u32 %v761, %v762
        %v765 = vrot.slane %v761, 4
        %v767 = vshrl.u32 %v665, 16
        %v769 = vrot.slane %v767, 7
        %v770 = vshll.u32 %v665, 16
        %v772 = vor.u32 %v769, %v770
        %v773 = vsel %vm689, %v765, %v772
        %v774 = vrot.slane %v769, 4
        %v776 = vshrl.u32 %v666, 16
        %v778 = vrot.slane %v776, 7
        %v779 = vshll.u32 %v666, 16
        %v781 = vor.u32 %v778, %v779
        %v782 = vrot.slane %v778, 4
        %v784 = vshrl.u32 %v667, 16
        %v786 = vrot.slane %v784, 7
        %v787 = vshll.u32 %v667, 16
        %v789 = vor.u32 %v786, %v787
        %v790 = vsel %vm689, %v782, %v789
        %v791 = vrot.slane %v786, 4
        %v793 = vshrl.u32 %v668, 16
        %v795 = vrot.slane %v793, 7
        %v796 = vshll.u32 %v668, 16
        %v798 = vor.u32 %v795, %v796
        %v799 = vrot.slane %v795, 4
        %v801 = vshrl.u32 %v669, 16
        %v803 = vrot.slane %v801, 7
        %v804 = vshll.u32 %v669, 16
        %v806 = vor.u32 %v803, %v804
        %v807 = vsel %vm689, %v799, %v806
        %v808 = vrot.slane %v803, 4
        %v810 = vshrl.u32 %v670, 16
        %v812 = vrot.slane %v810, 7
        %v813 = vshll.u32 %v670, 16
        %v815 = vor.u32 %v812, %v813
        %v816 = vrot.slane %v812, 4
        %v818 = vshrl.u32 %v671, 16
        %v820 = vrot.slane %v818, 7
        %v821 = vshll.u32 %v671, 16
        %v823 = vor.u32 %v820, %v821
        %v824 = vsel %vm689, %v816, %v823
        %v825 = vrot.slane %v820, 4
        %v827 = vshrl.u32 %v672, 16
        %v829 = vrot.slane %v827, 7
        %v830 = vshll.u32 %v672, 16
        %v832 = vor.u32 %v829, %v830
        %v833 = vrot.slane %v829, 4
        %v835 = vshrl.u32 %v673, 16
        %v837 = vrot.slane %v835, 7
        %v838 = vshll.u32 %v673, 16
        %v840 = vor.u32 %v837, %v838
        %v841 = vsel %vm689, %v833, %v840
        %v842 = vrot.slane %v837, 4
        %v844 = vshrl.u32 %v674, 16
        %v846 = vrot.slane %v844, 7
        %v847 = vshll.u32 %v674, 16
        %v849 = vor.u32 %v846, %v847
        %v850 = vrot.slane %v846, 4
        %v852 = vshrl.u32 %v675, 16
        %v854 = vrot.slane %v852, 7
        %v855 = vshll.u32 %v675, 16
        %v857 = vor.u32 %v854, %v855
        %v858 = vsel %vm689, %v850, %v857
        %v859 = vrot.slane %v854, 4
        %v861 = vshrl.u32 %v676, 16
        %v863 = vrot.slane %v861, 7
        %v864 = vshll.u32 %v676, 16
        %v866 = vor.u32 %v863, %v864
        %v867 = vrot.slane %v863, 4
        %v869 = vshrl.u32 %v677, 16
        %v871 = vrot.slane %v869, 7
        %v872 = vshll.u32 %v677, 16
        %v874 = vor.u32 %v871, %v872
        %v875 = vsel %vm689, %v867, %v874
        %v876 = vrot.slane %v871, 4
        %v878 = vshrl.u32 %v678, 16
        %v880 = vrot.slane %v878, 7
        %v881 = vshll.u32 %v678, 16
        %v883 = vor.u32 %v880, %v881
        %v884 = vrot.slane %v880, 4
        %v886 = vshrl.u32 %v679, 16
        %v888 = vrot.slane %v886, 7
        %v889 = vshll.u32 %v679, 16
        %v891 = vor.u32 %v888, %v889
        %v892 = vsel %vm689, %v884, %v891
        %v893 = vrot.slane %v888, 4
        %v895 = vshrl.u32 %v680, 16
        %v897 = vrot.slane %v895, 7
        %v898 = vshll.u32 %v680, 16
        %v900 = vor.u32 %v897, %v898
        %v901 = vrot.slane %v897, 4
        %v903 = vshrl.u32 %v681, 16
        %v905 = vrot.slane %v903, 7
        %v906 = vshll.u32 %v681, 16
        %v908 = vor.u32 %v905, %v906
        %v909 = vsel %vm689, %v901, %v908
        %v910 = vrot.slane %v905, 4
        %v912 = vshrl.u32 %v682, 16
        %v914 = vrot.slane %v912, 7
        %v915 = vshll.u32 %v682, 16
        %v917 = vor.u32 %v914, %v915
        %v918 = vrot.slane %v914, 4
        %v920 = vshrl.u32 %v683, 16
        %v922 = vrot.slane %v920, 7
        %v923 = vshll.u32 %v683, 16
        %v925 = vor.u32 %v922, %v923
        %v926 = vsel %vm689, %v918, %v925
        %v927 = vrot.slane %v922, 4
        %v929 = vshrl.u32 %v684, 16
        %v931 = vrot.slane %v929, 7
        %v932 = vshll.u32 %v684, 16
        %v934 = vor.u32 %v931, %v932
        %v935 = vrot.slane %v931, 4
        %v937 = vshrl.u32 %v685, 16
        %v939 = vrot.slane %v937, 7
        %v940 = vshll.u32 %v685, 16
        %v942 = vor.u32 %v939, %v940
        %v943 = vsel %vm689, %v935, %v942
        %v944 = vrot.slane %v939, 4
        %v946 = vshrl.u32 %v686, 16
        %v948 = vrot.slane %v946, 7
        %v949 = vshll.u32 %v686, 16
        %v951 = vor.u32 %v948, %v949
        %v952 = vrot.slane %v948, 4
        %v954 = vshrl.u32 %v687, 16
        %v956 = vrot.slane %v954, 7
        %v957 = vshll.u32 %v687, 16
        %v959 = vor.u32 %v956, %v957
        %v960 = vsel %vm689, %v952, %v959
        %v961 = vrot.slane %v956, 4
        %vm1010 = vcmask 1043456
        %vm1011 = vmand %vm1010, %vm558
        %v1012 = vld [vmem:[%s506] sm:$0xf]
        %v1013 = vsel %vm1011, %v696, %v1012
        %1014 = vst [vmem:[%s506] sm:$0xf] %v1013
        %1015 = vst [vmem:[%s506 + $0x4] sm:$0xf] %v705
        %v1016 = vld [vmem:[%s506 + $0x8] sm:$0x1]
        %v1017 = vsel %vm509, %v706, %v1016
        %1018 = vst [vmem:[%s506 + $0x8] sm:$0x1] %v1017
        %v1019 = vld [vmem:[%s506 + $0xc] sm:$0xf]
        %v1020 = vsel %vm1011, %v713, %v1019
        %1021 = vst [vmem:[%s506 + $0xc] sm:$0xf] %v1020
        %1022 = vst [vmem:[%s506 + $0x10] sm:$0xf] %v722
        %v1023 = vld [vmem:[%s506 + $0x14] sm:$0x1]
        %v1024 = vsel %vm509, %v723, %v1023
        %1025 = vst [vmem:[%s506 + $0x14] sm:$0x1] %v1024
        %v1026 = vld [vmem:[%s506 + $0x18] sm:$0xf]
        %v1027 = vsel %vm1011, %v730, %v1026
        %1028 = vst [vmem:[%s506 + $0x18] sm:$0xf] %v1027
        %1029 = vst [vmem:[%s506 + $0x1c] sm:$0xf] %v739
        %v1030 = vld [vmem:[%s506 + $0x20] sm:$0x1]
        %v1031 = vsel %vm509, %v740, %v1030
        %1032 = vst [vmem:[%s506 + $0x20] sm:$0x1] %v1031
        %v1033 = vld [vmem:[%s506 + $0x24] sm:$0xf]
        %v1034 = vsel %vm1011, %v747, %v1033
        %1035 = vst [vmem:[%s506 + $0x24] sm:$0xf] %v1034
        %1036 = vst [vmem:[%s506 + $0x28] sm:$0xf] %v756
        %v1037 = vld [vmem:[%s506 + $0x2c] sm:$0x1]
        %v1038 = vsel %vm509, %v757, %v1037
        %1039 = vst [vmem:[%s506 + $0x2c] sm:$0x1] %v1038
        %v1040 = vld [vmem:[%s506 + $0x30] sm:$0xf]
        %v1041 = vsel %vm1011, %v764, %v1040
        %1042 = vst [vmem:[%s506 + $0x30] sm:$0xf] %v1041
        %1043 = vst [vmem:[%s506 + $0x34] sm:$0xf] %v773
        %v1044 = vld [vmem:[%s506 + $0x38] sm:$0x1]
        %v1045 = vsel %vm509, %v774, %v1044
        %1046 = vst [vmem:[%s506 + $0x38] sm:$0x1] %v1045
        %v1047 = vld [vmem:[%s506 + $0x3c] sm:$0xf]
        %v1048 = vsel %vm1011, %v781, %v1047
        %1049 = vst [vmem:[%s506 + $0x3c] sm:$0xf] %v1048
        %1050 = vst [vmem:[%s506 + $0x40] sm:$0xf] %v790
        %v1051 = vld [vmem:[%s506 + $0x44] sm:$0x1]
        %v1052 = vsel %vm509, %v791, %v1051
        %1053 = vst [vmem:[%s506 + $0x44] sm:$0x1] %v1052
        %v1054 = vld [vmem:[%s506 + $0x48] sm:$0xf]
        %v1055 = vsel %vm1011, %v798, %v1054
        %1056 = vst [vmem:[%s506 + $0x48] sm:$0xf] %v1055
        %1057 = vst [vmem:[%s506 + $0x4c] sm:$0xf] %v807
        %v1058 = vld [vmem:[%s506 + $0x50] sm:$0x1]
        %v1059 = vsel %vm509, %v808, %v1058
        %1060 = vst [vmem:[%s506 + $0x50] sm:$0x1] %v1059
        %v1061 = vld [vmem:[%s506 + $0x54] sm:$0xf]
        %v1062 = vsel %vm1011, %v815, %v1061
        %1063 = vst [vmem:[%s506 + $0x54] sm:$0xf] %v1062
        %1064 = vst [vmem:[%s506 + $0x58] sm:$0xf] %v824
        %v1065 = vld [vmem:[%s506 + $0x5c] sm:$0x1]
        %v1066 = vsel %vm509, %v825, %v1065
        %1067 = vst [vmem:[%s506 + $0x5c] sm:$0x1] %v1066
        %v1068 = vld [vmem:[%s506 + $0x60] sm:$0xf]
        %v1069 = vsel %vm1011, %v832, %v1068
        %1070 = vst [vmem:[%s506 + $0x60] sm:$0xf] %v1069
        %1071 = vst [vmem:[%s506 + $0x64] sm:$0xf] %v841
        %v1072 = vld [vmem:[%s506 + $0x68] sm:$0x1]
        %v1073 = vsel %vm509, %v842, %v1072
        %1074 = vst [vmem:[%s506 + $0x68] sm:$0x1] %v1073
        %v1075 = vld [vmem:[%s506 + $0x6c] sm:$0xf]
        %v1076 = vsel %vm1011, %v849, %v1075
        %1077 = vst [vmem:[%s506 + $0x6c] sm:$0xf] %v1076
        %1078 = vst [vmem:[%s506 + $0x70] sm:$0xf] %v858
        %v1079 = vld [vmem:[%s506 + $0x74] sm:$0x1]
        %v1080 = vsel %vm509, %v859, %v1079
        %1081 = vst [vmem:[%s506 + $0x74] sm:$0x1] %v1080
        %v1082 = vld [vmem:[%s506 + $0x78] sm:$0xf]
        %v1083 = vsel %vm1011, %v866, %v1082
        %1084 = vst [vmem:[%s506 + $0x78] sm:$0xf] %v1083
        %1085 = vst [vmem:[%s506 + $0x7c] sm:$0xf] %v875
        %v1086 = vld [vmem:[%s506 + $0x80] sm:$0x1]
        %v1087 = vsel %vm509, %v876, %v1086
        %1088 = vst [vmem:[%s506 + $0x80] sm:$0x1] %v1087
        %v1089 = vld [vmem:[%s506 + $0x84] sm:$0xf]
        %v1090 = vsel %vm1011, %v883, %v1089
        %1091 = vst [vmem:[%s506 + $0x84] sm:$0xf] %v1090
        %1092 = vst [vmem:[%s506 + $0x88] sm:$0xf] %v892
        %v1093 = vld [vmem:[%s506 + $0x8c] sm:$0x1]
        %v1094 = vsel %vm509, %v893, %v1093
        %1095 = vst [vmem:[%s506 + $0x8c] sm:$0x1] %v1094
        %v1096 = vld [vmem:[%s506 + $0x90] sm:$0xf]
        %v1097 = vsel %vm1011, %v900, %v1096
        %1098 = vst [vmem:[%s506 + $0x90] sm:$0xf] %v1097
        %1099 = vst [vmem:[%s506 + $0x94] sm:$0xf] %v909
        %v1100 = vld [vmem:[%s506 + $0x98] sm:$0x1]
        %v1101 = vsel %vm509, %v910, %v1100
        %1102 = vst [vmem:[%s506 + $0x98] sm:$0x1] %v1101
        %v1103 = vld [vmem:[%s506 + $0x9c] sm:$0xf]
        %v1104 = vsel %vm1011, %v917, %v1103
        %1105 = vst [vmem:[%s506 + $0x9c] sm:$0xf] %v1104
        %1106 = vst [vmem:[%s506 + $0xa0] sm:$0xf] %v926
        %v1107 = vld [vmem:[%s506 + $0xa4] sm:$0x1]
        %v1108 = vsel %vm509, %v927, %v1107
        %1109 = vst [vmem:[%s506 + $0xa4] sm:$0x1] %v1108
        %v1110 = vld [vmem:[%s506 + $0xa8] sm:$0xf]
        %v1111 = vsel %vm1011, %v934, %v1110
        %1112 = vst [vmem:[%s506 + $0xa8] sm:$0xf] %v1111
        %1113 = vst [vmem:[%s506 + $0xac] sm:$0xf] %v943
        %v1114 = vld [vmem:[%s506 + $0xb0] sm:$0x1]
        %v1115 = vsel %vm509, %v944, %v1114
        %1116 = vst [vmem:[%s506 + $0xb0] sm:$0x1] %v1115
        %v1117 = vld [vmem:[%s506 + $0xb4] sm:$0xf]
        %v1118 = vsel %vm1011, %v951, %v1117
        %1119 = vst [vmem:[%s506 + $0xb4] sm:$0xf] %v1118
        %1120 = vst [vmem:[%s506 + $0xb8] sm:$0xf] %v960
        %v1121 = vld [vmem:[%s506 + $0xbc] sm:$0x1]
        %v1122 = vsel %vm509, %v961, %v1121
        %1123 = vst [vmem:[%s506 + $0xbc] sm:$0x1] %v1122
        %v1124 = vld [vmem:[#allocation2] sm:$0xf]
        %v1125 = vld [vmem:[#allocation2 + $0x4] sm:$0xf]
        %v1126 = vld [vmem:[#allocation2 + $0xc] sm:$0xf]
        %v1127 = vld [vmem:[#allocation2 + $0x10] sm:$0xf]
        %v1128 = vld [vmem:[#allocation2 + $0x18] sm:$0xf]
        %v1129 = vld [vmem:[#allocation2 + $0x1c] sm:$0xf]
        %v1130 = vld [vmem:[#allocation2 + $0x24] sm:$0xf]
        %v1131 = vld [vmem:[#allocation2 + $0x28] sm:$0xf]
        %v1132 = vld [vmem:[#allocation2 + $0x30] sm:$0xf]
        %v1133 = vld [vmem:[#allocation2 + $0x34] sm:$0xf]
        %v1134 = vld [vmem:[#allocation2 + $0x3c] sm:$0xf]
        %v1135 = vld [vmem:[#allocation2 + $0x40] sm:$0xf]
        %v1136 = vld [vmem:[#allocation2 + $0x48] sm:$0xf]
        %v1137 = vld [vmem:[#allocation2 + $0x4c] sm:$0xf]
        %v1138 = vld [vmem:[#allocation2 + $0x54] sm:$0xf]
        %v1139 = vld [vmem:[#allocation2 + $0x58] sm:$0xf]
        %v1140 = vld [vmem:[#allocation6] sm:$0xf]
        %v1141 = vld [vmem:[#allocation6 + $0x4] sm:$0xf]
        %v1142 = vld [vmem:[#allocation6 + $0x8] sm:$0xf]
        %v1143 = vld [vmem:[#allocation6 + $0xc] sm:$0xf]
        %v1144 = vld [vmem:[#allocation6 + $0x10] sm:$0xf]
        %v1145 = vld [vmem:[#allocation6 + $0x14] sm:$0xf]
        %v1146 = vld [vmem:[#allocation6 + $0x18] sm:$0xf]
        %v1147 = vld [vmem:[#allocation6 + $0x1c] sm:$0xf]
        %v1148 = vld [vmem:[#allocation6 + $0x20] sm:$0xf]
        %v1149 = vld [vmem:[#allocation6 + $0x24] sm:$0xf]
        %v1150 = vld [vmem:[#allocation6 + $0x28] sm:$0xf]
        %v1151 = vld [vmem:[#allocation6 + $0x2c] sm:$0xf]
        %v1152 = vld [vmem:[#allocation6 + $0x30] sm:$0xf]
        %v1153 = vld [vmem:[#allocation6 + $0x34] sm:$0xf]
        %v1154 = vld [vmem:[#allocation6 + $0x38] sm:$0xf]
        %v1155 = vld [vmem:[#allocation6 + $0x3c] sm:$0xf]
        %v1156 = vld [vmem:[#allocation2 + $0x8] sm:$0x1]
        %v1157 = vld [vmem:[#allocation2 + $0x14] sm:$0x1]
        %v1158 = vld [vmem:[#allocation2 + $0x20] sm:$0x1]
        %v1159 = vld [vmem:[#allocation2 + $0x2c] sm:$0x1]
        %v1160 = vld [vmem:[#allocation2 + $0x38] sm:$0x1]
        %v1161 = vld [vmem:[#allocation2 + $0x44] sm:$0x1]
        %v1162 = vld [vmem:[#allocation2 + $0x50] sm:$0x1]
        %v1163 = vld [vmem:[#allocation2 + $0x5c] sm:$0x1]
        %vm1164 = vsmask.f32 3328
        %vm1165 = vsmask.f32 7440
        %vm1166 = vmor %vm1164, %vm1165
        %v1168 = vshrl.u32 %v1124, 16
        %v1170 = vrot.slane %v1168, 4
        %v1171 = vshll.u32 %v1124, 16
        %v1173 = vrot.slane %v1171, 5
        %v1174 = vor.u32 %v1170, %v1173
        %v1175 = vrot.slane %v1174, 4
        %v1177 = vshll.u32 %v1125, 16
        %v1179 = vrot.slane %v1177, 5
        %v1180 = vsel %vm1166, %v1175, %v1179
        %v1181 = vshrl.u32 %v1125, 16
        %v1183 = vrot.slane %v1181, 4
        %v1184 = vor.u32 %v1183, %v1179
        %v1185 = vrot.slane %v1184, 4
        %v1187 = vshll.u32 %v1156, 16
        %v1189 = vrot.slane %v1187, 5
        %v1190 = vsel %vm1166, %v1185, %v1189
        %v1192 = vshrl.u32 %v1126, 16
        %v1194 = vrot.slane %v1192, 4
        %v1195 = vshll.u32 %v1126, 16
        %v1197 = vrot.slane %v1195, 5
        %v1198 = vor.u32 %v1194, %v1197
        %v1199 = vrot.slane %v1198, 4
        %v1201 = vshll.u32 %v1127, 16
        %v1203 = vrot.slane %v1201, 5
        %v1204 = vsel %vm1166, %v1199, %v1203
        %v1205 = vshrl.u32 %v1127, 16
        %v1207 = vrot.slane %v1205, 4
        %v1208 = vor.u32 %v1207, %v1203
        %v1209 = vrot.slane %v1208, 4
        %v1211 = vshll.u32 %v1157, 16
        %v1213 = vrot.slane %v1211, 5
        %v1214 = vsel %vm1166, %v1209, %v1213
        %v1216 = vshrl.u32 %v1128, 16
        %v1218 = vrot.slane %v1216, 4
        %v1219 = vshll.u32 %v1128, 16
        %v1221 = vrot.slane %v1219, 5
        %v1222 = vor.u32 %v1218, %v1221
        %v1223 = vrot.slane %v1222, 4
        %v1225 = vshll.u32 %v1129, 16
        %v1227 = vrot.slane %v1225, 5
        %v1228 = vsel %vm1166, %v1223, %v1227
        %v1229 = vshrl.u32 %v1129, 16
        %v1231 = vrot.slane %v1229, 4
        %v1232 = vor.u32 %v1231, %v1227
        %v1233 = vrot.slane %v1232, 4
        %v1235 = vshll.u32 %v1158, 16
        %v1237 = vrot.slane %v1235, 5
        %v1238 = vsel %vm1166, %v1233, %v1237
        %v1240 = vshrl.u32 %v1130, 16
        %v1242 = vrot.slane %v1240, 4
        %v1243 = vshll.u32 %v1130, 16
        %v1245 = vrot.slane %v1243, 5
        %v1246 = vor.u32 %v1242, %v1245
        %v1247 = vrot.slane %v1246, 4
        %v1249 = vshll.u32 %v1131, 16
        %v1251 = vrot.slane %v1249, 5
        %v1252 = vsel %vm1166, %v1247, %v1251
        %v1253 = vshrl.u32 %v1131, 16
        %v1255 = vrot.slane %v1253, 4
        %v1256 = vor.u32 %v1255, %v1251
        %v1257 = vrot.slane %v1256, 4
        %v1259 = vshll.u32 %v1159, 16
        %v1261 = vrot.slane %v1259, 5
        %v1262 = vsel %vm1166, %v1257, %v1261
        %v1264 = vshrl.u32 %v1132, 16
        %v1266 = vrot.slane %v1264, 4
        %v1267 = vshll.u32 %v1132, 16
        %v1269 = vrot.slane %v1267, 5
        %v1270 = vor.u32 %v1266, %v1269
        %v1271 = vrot.slane %v1270, 4
        %v1273 = vshll.u32 %v1133, 16
        %v1275 = vrot.slane %v1273, 5
        %v1276 = vsel %vm1166, %v1271, %v1275
        %v1277 = vshrl.u32 %v1133, 16
        %v1279 = vrot.slane %v1277, 4
        %v1280 = vor.u32 %v1279, %v1275
        %v1281 = vrot.slane %v1280, 4
        %v1283 = vshll.u32 %v1160, 16
        %v1285 = vrot.slane %v1283, 5
        %v1286 = vsel %vm1166, %v1281, %v1285
        %v1288 = vshrl.u32 %v1134, 16
        %v1290 = vrot.slane %v1288, 4
        %v1291 = vshll.u32 %v1134, 16
        %v1293 = vrot.slane %v1291, 5
        %v1294 = vor.u32 %v1290, %v1293
        %v1295 = vrot.slane %v1294, 4
        %v1297 = vshll.u32 %v1135, 16
        %v1299 = vrot.slane %v1297, 5
        %v1300 = vsel %vm1166, %v1295, %v1299
        %v1301 = vshrl.u32 %v1135, 16
        %v1303 = vrot.slane %v1301, 4
        %v1304 = vor.u32 %v1303, %v1299
        %v1305 = vrot.slane %v1304, 4
        %v1307 = vshll.u32 %v1161, 16
        %v1309 = vrot.slane %v1307, 5
        %v1310 = vsel %vm1166, %v1305, %v1309
        %v1312 = vshrl.u32 %v1136, 16
        %v1314 = vrot.slane %v1312, 4
        %v1315 = vshll.u32 %v1136, 16
        %v1317 = vrot.slane %v1315, 5
        %v1318 = vor.u32 %v1314, %v1317
        %v1319 = vrot.slane %v1318, 4
        %v1321 = vshll.u32 %v1137, 16
        %v1323 = vrot.slane %v1321, 5
        %v1324 = vsel %vm1166, %v1319, %v1323
        %v1325 = vshrl.u32 %v1137, 16
        %v1327 = vrot.slane %v1325, 4
        %v1328 = vor.u32 %v1327, %v1323
        %v1329 = vrot.slane %v1328, 4
        %v1331 = vshll.u32 %v1162, 16
        %v1333 = vrot.slane %v1331, 5
        %v1334 = vsel %vm1166, %v1329, %v1333
        %v1336 = vshrl.u32 %v1138, 16
        %v1338 = vrot.slane %v1336, 4
        %v1339 = vshll.u32 %v1138, 16
        %v1341 = vrot.slane %v1339, 5
        %v1342 = vor.u32 %v1338, %v1341
        %v1343 = vrot.slane %v1342, 4
        %v1345 = vshll.u32 %v1139, 16
        %v1347 = vrot.slane %v1345, 5
        %v1348 = vsel %vm1166, %v1343, %v1347
        %v1349 = vshrl.u32 %v1139, 16
        %v1351 = vrot.slane %v1349, 4
        %v1352 = vor.u32 %v1351, %v1347
        %v1353 = vrot.slane %v1352, 4
        %v1355 = vshll.u32 %v1163, 16
        %v1357 = vrot.slane %v1355, 5
        %v1358 = vsel %vm1166, %v1353, %v1357
        %s1359 = scalar_lea.vmem [#allocation6], 64
        %v1360 = vld [vmem:[%s1359] sm:$0xf]
        %v1361 = vld [vmem:[%s1359 + $0x4] sm:$0xf]
        %v1362 = vld [vmem:[%s1359 + $0x8] sm:$0xf]
        %v1363 = vld [vmem:[%s1359 + $0xc] sm:$0xf]
        %v1364 = vld [vmem:[%s1359 + $0x10] sm:$0xf]
        %v1365 = vld [vmem:[%s1359 + $0x14] sm:$0xf]
        %v1366 = vld [vmem:[%s1359 + $0x18] sm:$0xf]
        %v1367 = vld [vmem:[%s1359 + $0x1c] sm:$0xf]
        %v1368 = vld [vmem:[%s1359 + $0x20] sm:$0xf]
        %v1369 = vld [vmem:[%s1359 + $0x24] sm:$0xf]
        %v1370 = vld [vmem:[%s1359 + $0x28] sm:$0xf]
        %v1371 = vld [vmem:[%s1359 + $0x2c] sm:$0xf]
        %v1372 = vld [vmem:[%s1359 + $0x30] sm:$0xf]
        %v1373 = vld [vmem:[%s1359 + $0x34] sm:$0xf]
        %v1374 = vld [vmem:[%s1359 + $0x38] sm:$0xf]
        %v1375 = vld [vmem:[%s1359 + $0x3c] sm:$0xf]
        %v1376 = vunpack.c.l.b16 %v1180
        %v1377 = vunpack.c.l.b16 %v1190
        %v1378 = vunpack.c.l.b16 %v1204
        %v1379 = vunpack.c.l.b16 %v1214
        %v1380 = vunpack.c.l.b16 %v1228
        %v1381 = vunpack.c.l.b16 %v1238
        %v1382 = vunpack.c.l.b16 %v1252
        %v1383 = vunpack.c.l.b16 %v1262
        %v1384 = vunpack.c.l.b16 %v1276
        %v1385 = vunpack.c.l.b16 %v1286
        %v1386 = vunpack.c.l.b16 %v1300
        %v1387 = vunpack.c.l.b16 %v1310
        %v1388 = vunpack.c.l.b16 %v1324
        %v1389 = vunpack.c.l.b16 %v1334
        %v1390 = vunpack.c.l.b16 %v1348
        %v1391 = vunpack.c.l.b16 %v1358
        %v1392 = vpack.c.b16 %v1377, %v1376
        %v1393 = vpack.c.b16 %v1379, %v1378
        %v1394 = vpack.c.b16 %v1381, %v1380
        %v1395 = vpack.c.b16 %v1383, %v1382
        %v1396 = vpack.c.b16 %v1385, %v1384
        %v1397 = vpack.c.b16 %v1387, %v1386
        %v1398 = vpack.c.b16 %v1389, %v1388
        %v1399 = vpack.c.b16 %v1391, %v1390
        %v1424 = vunpack.c.l.b16 %v1360
        %v1425 = vunpack.c.l.b16 %v1361
        %v1426 = vunpack.c.l.b16 %v1362
        %v1427 = vunpack.c.l.b16 %v1363
        %v1428 = vunpack.c.l.b16 %v1364
        %v1429 = vunpack.c.l.b16 %v1365
        %v1430 = vunpack.c.l.b16 %v1366
        %v1431 = vunpack.c.l.b16 %v1367
        %v1432 = vunpack.c.l.b16 %v1368
        %v1433 = vunpack.c.l.b16 %v1369
        %v1434 = vunpack.c.l.b16 %v1370
        %v1435 = vunpack.c.l.b16 %v1371
        %v1436 = vunpack.c.l.b16 %v1372
        %v1437 = vunpack.c.l.b16 %v1373
        %v1438 = vunpack.c.l.b16 %v1374
        %v1439 = vunpack.c.l.b16 %v1375
        %v1440 = vpack.c.b16 %v1425, %v1424
        %v1441 = vpack.c.b16 %v1427, %v1426
        %v1442 = vpack.c.b16 %v1429, %v1428
        %v1443 = vpack.c.b16 %v1431, %v1430
        %v1444 = vpack.c.b16 %v1433, %v1432
        %v1445 = vpack.c.b16 %v1435, %v1434
        %v1446 = vpack.c.b16 %v1437, %v1436
        %v1447 = vpack.c.b16 %v1439, %v1438
        %1456 = vmatprep.subr.bf16.mxu0 0
        %1457 = vmatpush1.bf16.msra.mxu0 %v1447
        %1458 = vmatprep.subr.bf16.mxu0 0
        %1459 = vmatpush1.bf16.msra.mxu0 %v1446
        %1460 = vmatprep.subr.bf16.mxu0 0
        %1461 = vmatpush1.bf16.msra.mxu0 %v1445
        %1462 = vmatprep.subr.bf16.mxu0 0
        %1463 = vmatpush1.bf16.msra.mxu0 %v1444
        %1464 = vmatprep.subr.bf16.mxu0 0
        %1465 = vmatpush1.bf16.msra.mxu0 %v1443
        %1466 = vmatprep.subr.bf16.mxu0 0
        %1467 = vmatpush1.bf16.msra.mxu0 %v1442
        %1468 = vmatprep.subr.bf16.mxu0 0
        %1469 = vmatpush1.bf16.msra.mxu0 %v1441
        %1470 = vmatprep.subr.bf16.mxu0 0
        %1471 = vmatpush1.bf16.msra.mxu0 %v1440
        %1472 = vmatprep.subr.bf16.mxu0 0
        %1473 = vmatpush2.bf16.msra.mxu0 0
        %1474 = vmatprep.subr.bf16.mxu0 0
        %1475 = vmatpush2.bf16.msra.mxu0 0
        %1476 = vmatprep.subr.bf16.mxu0 0
        %1477 = vmatpush2.bf16.msra.mxu0 0
        %1478 = vmatprep.subr.bf16.mxu0 0
        %1479 = vmatpush2.bf16.msra.mxu0 0
        %1480 = vmatprep.subr.bf16.mxu0 0
        %1481 = vmatpush2.bf16.msra.mxu0 0
        %1482 = vmatprep.subr.bf16.mxu0 0
        %1483 = vmatpush2.bf16.msra.mxu0 0
        %1484 = vmatprep.subr.bf16.mxu0 0
        %1485 = vmatpush2.bf16.msra.mxu0 0
        %1486 = vmatprep.subr.bf16.mxu0 0
        %1487 = vmatpush2.bf16.msra.mxu0 0
        %1488 = vmatprep.mubr.bf16.mxu0 0
        %1489 = vmatmul.mubr.bf16.gmra.mxu0 %v1392
        %v1490 = vpop.f32.mrf.mxu0
        %v1491 = vadd.f32 0.0, %v1490
        %v1492 = vpop.f32.mrf.mxu0
        %v1493 = vpop.f32.mrf.mxu0
        %v1494 = vadd.f32 0.0, %v1493
        %v1495 = vpop.f32.mrf.mxu0
        %1496 = vmatprep.mubr.bf16.mxu0 0
        %1497 = vmatmul.mubr.bf16.gmra.mxu0 %v1393
        %v1498 = vpop.f32.mrf.mxu0
        %v1499 = vpop.f32.mrf.mxu0
        %v1500 = vpop.f32.mrf.mxu0
        %v1501 = vpop.f32.mrf.mxu0
        %1502 = vmatprep.mubr.bf16.mxu0 0
        %1503 = vmatmul.mubr.bf16.gmra.mxu0 %v1394
        %v1504 = vpop.f32.mrf.mxu0
        %v1505 = vadd.f32 0.0, %v1504
        %v1506 = vpop.f32.mrf.mxu0
        %v1507 = vpop.f32.mrf.mxu0
        %v1508 = vadd.f32 0.0, %v1507
        %v1509 = vpop.f32.mrf.mxu0
        %1510 = vmatprep.mubr.bf16.mxu0 0
        %1511 = vmatmul.mubr.bf16.gmra.mxu0 %v1395
        %v1512 = vpop.f32.mrf.mxu0
        %v1513 = vpop.f32.mrf.mxu0
        %v1514 = vpop.f32.mrf.mxu0
        %v1515 = vpop.f32.mrf.mxu0
        %1516 = vmatprep.mubr.bf16.mxu0 0
        %1517 = vmatmul.mubr.bf16.gmra.mxu0 %v1396
        %v1518 = vpop.f32.mrf.mxu0
        %v1519 = vadd.f32 0.0, %v1518
        %v1520 = vpop.f32.mrf.mxu0
        %v1521 = vpop.f32.mrf.mxu0
        %v1522 = vadd.f32 0.0, %v1521
        %v1523 = vpop.f32.mrf.mxu0
        %1524 = vmatprep.mubr.bf16.mxu0 0
        %1525 = vmatmul.mubr.bf16.gmra.mxu0 %v1397
        %v1526 = vpop.f32.mrf.mxu0
        %v1527 = vpop.f32.mrf.mxu0
        %v1528 = vpop.f32.mrf.mxu0
        %v1529 = vpop.f32.mrf.mxu0
        %1530 = vmatprep.mubr.bf16.mxu0 0
        %1531 = vmatmul.mubr.bf16.gmra.mxu0 %v1398
        %v1532 = vpop.f32.mrf.mxu0
        %v1533 = vadd.f32 0.0, %v1532
        %v1534 = vpop.f32.mrf.mxu0
        %v1535 = vpop.f32.mrf.mxu0
        %v1536 = vadd.f32 0.0, %v1535
        %v1537 = vpop.f32.mrf.mxu0
        %1538 = vmatprep.mubr.bf16.mxu0 0
        %1539 = vmatmul.mubr.bf16.gmra.mxu0 %v1399
        %v1540 = vpop.f32.mrf.mxu0
        %v1541 = vpop.f32.mrf.mxu0
        %v1542 = vpop.f32.mrf.mxu0
        %v1543 = vpop.f32.mrf.mxu0
        %1544 = vdwg.mxu0
        %v1561 = vunpack.c.l.b16 %v1124
        %v1562 = vunpack.c.l.b16 %v1125
        %v1563 = vunpack.c.l.b16 %v1126
        %v1564 = vunpack.c.l.b16 %v1127
        %v1565 = vunpack.c.l.b16 %v1128
        %v1566 = vunpack.c.l.b16 %v1129
        %v1567 = vunpack.c.l.b16 %v1130
        %v1568 = vunpack.c.l.b16 %v1131
        %v1569 = vunpack.c.l.b16 %v1132
        %v1570 = vunpack.c.l.b16 %v1133
        %v1571 = vunpack.c.l.b16 %v1134
        %v1572 = vunpack.c.l.b16 %v1135
        %v1573 = vunpack.c.l.b16 %v1136
        %v1574 = vunpack.c.l.b16 %v1137
        %v1575 = vunpack.c.l.b16 %v1138
        %v1576 = vunpack.c.l.b16 %v1139
        %v1577 = vpack.c.b16 %v1562, %v1561
        %v1578 = vpack.c.b16 %v1564, %v1563
        %v1579 = vpack.c.b16 %v1566, %v1565
        %v1580 = vpack.c.b16 %v1568, %v1567
        %v1581 = vpack.c.b16 %v1570, %v1569
        %v1582 = vpack.c.b16 %v1572, %v1571
        %v1583 = vpack.c.b16 %v1574, %v1573
        %v1584 = vpack.c.b16 %v1576, %v1575
        %v1609 = vunpack.c.l.b16 %v1140
        %v1610 = vunpack.c.l.b16 %v1141
        %v1611 = vunpack.c.l.b16 %v1142
        %v1612 = vunpack.c.l.b16 %v1143
        %v1613 = vunpack.c.l.b16 %v1144
        %v1614 = vunpack.c.l.b16 %v1145
        %v1615 = vunpack.c.l.b16 %v1146
        %v1616 = vunpack.c.l.b16 %v1147
        %v1617 = vunpack.c.l.b16 %v1148
        %v1618 = vunpack.c.l.b16 %v1149
        %v1619 = vunpack.c.l.b16 %v1150
        %v1620 = vunpack.c.l.b16 %v1151
        %v1621 = vunpack.c.l.b16 %v1152
        %v1622 = vunpack.c.l.b16 %v1153
        %v1623 = vunpack.c.l.b16 %v1154
        %v1624 = vunpack.c.l.b16 %v1155
        %v1625 = vpack.c.b16 %v1610, %v1609
        %v1626 = vpack.c.b16 %v1612, %v1611
        %v1627 = vpack.c.b16 %v1614, %v1613
        %v1628 = vpack.c.b16 %v1616, %v1615
        %v1629 = vpack.c.b16 %v1618, %v1617
        %v1630 = vpack.c.b16 %v1620, %v1619
        %v1631 = vpack.c.b16 %v1622, %v1621
        %v1632 = vpack.c.b16 %v1624, %v1623
        %1641 = vmatprep.subr.bf16.mxu0 0
        %1642 = vmatpush1.bf16.msra.mxu0 %v1632
        %1643 = vmatprep.subr.bf16.mxu0 0
        %1644 = vmatpush1.bf16.msra.mxu0 %v1631
        %1645 = vmatprep.subr.bf16.mxu0 0
        %1646 = vmatpush1.bf16.msra.mxu0 %v1630
        %1647 = vmatprep.subr.bf16.mxu0 0
        %1648 = vmatpush1.bf16.msra.mxu0 %v1629
        %1649 = vmatprep.subr.bf16.mxu0 0
        %1650 = vmatpush1.bf16.msra.mxu0 %v1628
        %1651 = vmatprep.subr.bf16.mxu0 0
        %1652 = vmatpush1.bf16.msra.mxu0 %v1627
        %1653 = vmatprep.subr.bf16.mxu0 0
        %1654 = vmatpush1.bf16.msra.mxu0 %v1626
        %1655 = vmatprep.subr.bf16.mxu0 0
        %1656 = vmatpush1.bf16.msra.mxu0 %v1625
        %1657 = vmatprep.subr.bf16.mxu0 0
        %1658 = vmatpush2.bf16.msra.mxu0 0
        %1659 = vmatprep.subr.bf16.mxu0 0
        %1660 = vmatpush2.bf16.msra.mxu0 0
        %1661 = vmatprep.subr.bf16.mxu0 0
        %1662 = vmatpush2.bf16.msra.mxu0 0
        %1663 = vmatprep.subr.bf16.mxu0 0
        %1664 = vmatpush2.bf16.msra.mxu0 0
        %1665 = vmatprep.subr.bf16.mxu0 0
        %1666 = vmatpush2.bf16.msra.mxu0 0
        %1667 = vmatprep.subr.bf16.mxu0 0
        %1668 = vmatpush2.bf16.msra.mxu0 0
        %1669 = vmatprep.subr.bf16.mxu0 0
        %1670 = vmatpush2.bf16.msra.mxu0 0
        %1671 = vmatprep.subr.bf16.mxu0 0
        %1672 = vmatpush2.bf16.msra.mxu0 0
        %1673 = vmatprep.mubr.bf16.mxu0 0
        %1674 = vmatmul.mubr.bf16.gmra.mxu0 %v1577
        %v1675 = vpop.f32.mrf.mxu0
        %v1676 = vadd.f32 %v1491, %v1675
        %v1677 = vpop.f32.mrf.mxu0
        %v1678 = vpop.f32.mrf.mxu0
        %v1679 = vadd.f32 %v1494, %v1678
        %v1680 = vpop.f32.mrf.mxu0
        %1681 = vmatprep.mubr.bf16.mxu0 0
        %1682 = vmatmul.mubr.bf16.gmra.mxu0 %v1578
        %v1683 = vpop.f32.mrf.mxu0
        %v1684 = vpop.f32.mrf.mxu0
        %v1685 = vpop.f32.mrf.mxu0
        %v1686 = vpop.f32.mrf.mxu0
        %1687 = vmatprep.mubr.bf16.mxu0 0
        %1688 = vmatmul.mubr.bf16.gmra.mxu0 %v1579
        %v1689 = vpop.f32.mrf.mxu0
        %v1690 = vadd.f32 %v1505, %v1689
        %v1691 = vpop.f32.mrf.mxu0
        %v1692 = vpop.f32.mrf.mxu0
        %v1693 = vadd.f32 %v1508, %v1692
        %v1694 = vpop.f32.mrf.mxu0
        %1695 = vmatprep.mubr.bf16.mxu0 0
        %1696 = vmatmul.mubr.bf16.gmra.mxu0 %v1580
        %v1697 = vpop.f32.mrf.mxu0
        %v1698 = vpop.f32.mrf.mxu0
        %v1699 = vpop.f32.mrf.mxu0
        %v1700 = vpop.f32.mrf.mxu0
        %1701 = vmatprep.mubr.bf16.mxu0 0
        %1702 = vmatmul.mubr.bf16.gmra.mxu0 %v1581
        %v1703 = vpop.f32.mrf.mxu0
        %v1704 = vadd.f32 %v1519, %v1703
        %v1705 = vpop.f32.mrf.mxu0
        %v1706 = vpop.f32.mrf.mxu0
        %v1707 = vadd.f32 %v1522, %v1706
        %v1708 = vpop.f32.mrf.mxu0
        %1709 = vmatprep.mubr.bf16.mxu0 0
        %1710 = vmatmul.mubr.bf16.gmra.mxu0 %v1582
        %v1711 = vpop.f32.mrf.mxu0
        %v1712 = vpop.f32.mrf.mxu0
        %v1713 = vpop.f32.mrf.mxu0
        %v1714 = vpop.f32.mrf.mxu0
        %1715 = vmatprep.mubr.bf16.mxu0 0
        %1716 = vmatmul.mubr.bf16.gmra.mxu0 %v1583
        %v1717 = vpop.f32.mrf.mxu0
        %v1718 = vadd.f32 %v1533, %v1717
        %v1719 = vpop.f32.mrf.mxu0
        %v1720 = vpop.f32.mrf.mxu0
        %v1721 = vadd.f32 %v1536, %v1720
        %v1722 = vpop.f32.mrf.mxu0
        %1723 = vmatprep.mubr.bf16.mxu0 0
        %1724 = vmatmul.mubr.bf16.gmra.mxu0 %v1584
        %v1725 = vpop.f32.mrf.mxu0
        %v1726 = vpop.f32.mrf.mxu0
        %v1727 = vpop.f32.mrf.mxu0
        %v1728 = vpop.f32.mrf.mxu0
        %1729 = vdwg.mxu0
        %v1730 = vld [vmem:[#allocation2] sm:$0xe]
        %v1731 = vld [vmem:[#allocation2 + $0xc] sm:$0xe]
        %v1732 = vld [vmem:[#allocation2 + $0x18] sm:$0xe]
        %v1733 = vld [vmem:[#allocation2 + $0x24] sm:$0xe]
        %v1734 = vld [vmem:[#allocation2 + $0x30] sm:$0xe]
        %v1735 = vld [vmem:[#allocation2 + $0x3c] sm:$0xe]
        %v1736 = vld [vmem:[#allocation2 + $0x48] sm:$0xe]
        %v1737 = vld [vmem:[#allocation2 + $0x54] sm:$0xe]
        %vm1754 = vcmask 1042432
        %vm1755 = vcmask 1046532
        %vm1756 = vmor %vm1754, %vm1755
        %v1757 = vrot.slane %v1730, 5
        %v1758 = vrot.slane %v1757, 4
        %v1759 = vrot.slane %v1125, 5
        %v1760 = vsel %vm1756, %v1758, %v1759
        %v1761 = vrot.slane %v1759, 4
        %v1762 = vrot.slane %v1156, 5
        %v1763 = vsel %vm1756, %v1761, %v1762
        %v1764 = vrot.slane %v1731, 5
        %v1765 = vrot.slane %v1764, 4
        %v1766 = vrot.slane %v1127, 5
        %v1767 = vsel %vm1756, %v1765, %v1766
        %v1768 = vrot.slane %v1766, 4
        %v1769 = vrot.slane %v1157, 5
        %v1770 = vsel %vm1756, %v1768, %v1769
        %v1771 = vrot.slane %v1732, 5
        %v1772 = vrot.slane %v1771, 4
        %v1773 = vrot.slane %v1129, 5
        %v1774 = vsel %vm1756, %v1772, %v1773
        %v1775 = vrot.slane %v1773, 4
        %v1776 = vrot.slane %v1158, 5
        %v1777 = vsel %vm1756, %v1775, %v1776
        %v1778 = vrot.slane %v1733, 5
        %v1779 = vrot.slane %v1778, 4
        %v1780 = vrot.slane %v1131, 5
        %v1781 = vsel %vm1756, %v1779, %v1780
        %v1782 = vrot.slane %v1780, 4
        %v1783 = vrot.slane %v1159, 5
        %v1784 = vsel %vm1756, %v1782, %v1783
        %v1785 = vrot.slane %v1734, 5
        %v1786 = vrot.slane %v1785, 4
        %v1787 = vrot.slane %v1133, 5
        %v1788 = vsel %vm1756, %v1786, %v1787
        %v1789 = vrot.slane %v1787, 4
        %v1790 = vrot.slane %v1160, 5
        %v1791 = vsel %vm1756, %v1789, %v1790
        %v1792 = vrot.slane %v1735, 5
        %v1793 = vrot.slane %v1792, 4
        %v1794 = vrot.slane %v1135, 5
        %v1795 = vsel %vm1756, %v1793, %v1794
        %v1796 = vrot.slane %v1794, 4
        %v1797 = vrot.slane %v1161, 5
        %v1798 = vsel %vm1756, %v1796, %v1797
        %v1799 = vrot.slane %v1736, 5
        %v1800 = vrot.slane %v1799, 4
        %v1801 = vrot.slane %v1137, 5
        %v1802 = vsel %vm1756, %v1800, %v1801
        %v1803 = vrot.slane %v1801, 4
        %v1804 = vrot.slane %v1162, 5
        %v1805 = vsel %vm1756, %v1803, %v1804
        %v1806 = vrot.slane %v1737, 5
        %v1807 = vrot.slane %v1806, 4
        %v1808 = vrot.slane %v1139, 5
        %v1809 = vsel %vm1756, %v1807, %v1808
        %v1810 = vrot.slane %v1808, 4
        %v1811 = vrot.slane %v1163, 5
        %v1812 = vsel %vm1756, %v1810, %v1811
        %s1813 = scalar_lea.vmem [#allocation6], 128
        %v1814 = vld [vmem:[%s1813] sm:$0xf]
        %v1815 = vld [vmem:[%s1813 + $0x4] sm:$0xf]
        %v1816 = vld [vmem:[%s1813 + $0x8] sm:$0xf]
        %v1817 = vld [vmem:[%s1813 + $0xc] sm:$0xf]
        %v1818 = vld [vmem:[%s1813 + $0x10] sm:$0xf]
        %v1819 = vld [vmem:[%s1813 + $0x14] sm:$0xf]
        %v1820 = vld [vmem:[%s1813 + $0x18] sm:$0xf]
        %v1821 = vld [vmem:[%s1813 + $0x1c] sm:$0xf]
        %v1822 = vld [vmem:[%s1813 + $0x20] sm:$0xf]
        %v1823 = vld [vmem:[%s1813 + $0x24] sm:$0xf]
        %v1824 = vld [vmem:[%s1813 + $0x28] sm:$0xf]
        %v1825 = vld [vmem:[%s1813 + $0x2c] sm:$0xf]
        %v1826 = vld [vmem:[%s1813 + $0x30] sm:$0xf]
        %v1827 = vld [vmem:[%s1813 + $0x34] sm:$0xf]
        %v1828 = vld [vmem:[%s1813 + $0x38] sm:$0xf]
        %v1829 = vld [vmem:[%s1813 + $0x3c] sm:$0xf]
        %v1830 = vunpack.c.l.b16 %v1760
        %v1831 = vunpack.c.l.b16 %v1763
        %v1832 = vunpack.c.l.b16 %v1767
        %v1833 = vunpack.c.l.b16 %v1770
        %v1834 = vunpack.c.l.b16 %v1774
        %v1835 = vunpack.c.l.b16 %v1777
        %v1836 = vunpack.c.l.b16 %v1781
        %v1837 = vunpack.c.l.b16 %v1784
        %v1838 = vunpack.c.l.b16 %v1788
        %v1839 = vunpack.c.l.b16 %v1791
        %v1840 = vunpack.c.l.b16 %v1795
        %v1841 = vunpack.c.l.b16 %v1798
        %v1842 = vunpack.c.l.b16 %v1802
        %v1843 = vunpack.c.l.b16 %v1805
        %v1844 = vunpack.c.l.b16 %v1809
        %v1845 = vunpack.c.l.b16 %v1812
        %v1846 = vpack.c.b16 %v1831, %v1830
        %v1847 = vpack.c.b16 %v1833, %v1832
        %v1848 = vpack.c.b16 %v1835, %v1834
        %v1849 = vpack.c.b16 %v1837, %v1836
        %v1850 = vpack.c.b16 %v1839, %v1838
        %v1851 = vpack.c.b16 %v1841, %v1840
        %v1852 = vpack.c.b16 %v1843, %v1842
        %v1853 = vpack.c.b16 %v1845, %v1844
        %v1878 = vunpack.c.l.b16 %v1814
        %v1879 = vunpack.c.l.b16 %v1815
        %v1880 = vunpack.c.l.b16 %v1816
        %v1881 = vunpack.c.l.b16 %v1817
        %v1882 = vunpack.c.l.b16 %v1818
        %v1883 = vunpack.c.l.b16 %v1819
        %v1884 = vunpack.c.l.b16 %v1820
        %v1885 = vunpack.c.l.b16 %v1821
        %v1886 = vunpack.c.l.b16 %v1822
        %v1887 = vunpack.c.l.b16 %v1823
        %v1888 = vunpack.c.l.b16 %v1824
        %v1889 = vunpack.c.l.b16 %v1825
        %v1890 = vunpack.c.l.b16 %v1826
        %v1891 = vunpack.c.l.b16 %v1827
        %v1892 = vunpack.c.l.b16 %v1828
        %v1893 = vunpack.c.l.b16 %v1829
        %v1894 = vpack.c.b16 %v1879, %v1878
        %v1895 = vpack.c.b16 %v1881, %v1880
        %v1896 = vpack.c.b16 %v1883, %v1882
        %v1897 = vpack.c.b16 %v1885, %v1884
        %v1898 = vpack.c.b16 %v1887, %v1886
        %v1899 = vpack.c.b16 %v1889, %v1888
        %v1900 = vpack.c.b16 %v1891, %v1890
        %v1901 = vpack.c.b16 %v1893, %v1892
        %1910 = vmatprep.subr.bf16.mxu0 0
        %1911 = vmatpush1.bf16.msra.mxu0 %v1901
        %1912 = vmatprep.subr.bf16.mxu0 0
        %1913 = vmatpush1.bf16.msra.mxu0 %v1900
        %1914 = vmatprep.subr.bf16.mxu0 0
        %1915 = vmatpush1.bf16.msra.mxu0 %v1899
        %1916 = vmatprep.subr.bf16.mxu0 0
        %1917 = vmatpush1.bf16.msra.mxu0 %v1898
        %1918 = vmatprep.subr.bf16.mxu0 0
        %1919 = vmatpush1.bf16.msra.mxu0 %v1897
        %1920 = vmatprep.subr.bf16.mxu0 0
        %1921 = vmatpush1.bf16.msra.mxu0 %v1896
        %1922 = vmatprep.subr.bf16.mxu0 0
        %1923 = vmatpush1.bf16.msra.mxu0 %v1895
        %1924 = vmatprep.subr.bf16.mxu0 0
        %1925 = vmatpush1.bf16.msra.mxu0 %v1894
        %1926 = vmatprep.subr.bf16.mxu0 0
        %1927 = vmatpush2.bf16.msra.mxu0 0
        %1928 = vmatprep.subr.bf16.mxu0 0
        %1929 = vmatpush2.bf16.msra.mxu0 0
        %1930 = vmatprep.subr.bf16.mxu0 0
        %1931 = vmatpush2.bf16.msra.mxu0 0
        %1932 = vmatprep.subr.bf16.mxu0 0
        %1933 = vmatpush2.bf16.msra.mxu0 0
        %1934 = vmatprep.subr.bf16.mxu0 0
        %1935 = vmatpush2.bf16.msra.mxu0 0
        %1936 = vmatprep.subr.bf16.mxu0 0
        %1937 = vmatpush2.bf16.msra.mxu0 0
        %1938 = vmatprep.subr.bf16.mxu0 0
        %1939 = vmatpush2.bf16.msra.mxu0 0
        %1940 = vmatprep.subr.bf16.mxu0 0
        %1941 = vmatpush2.bf16.msra.mxu0 0
        %1942 = vmatprep.mubr.bf16.mxu0 0
        %1943 = vmatmul.mubr.bf16.gmra.mxu0 %v1846
        %v1944 = vpop.f32.mrf.mxu0
        %v1945 = vadd.f32 0.0, %v1944
        %v1946 = vpop.f32.mrf.mxu0
        %v1947 = vpop.f32.mrf.mxu0
        %v1948 = vadd.f32 0.0, %v1947
        %v1949 = vpop.f32.mrf.mxu0
        %1950 = vmatprep.mubr.bf16.mxu0 0
        %1951 = vmatmul.mubr.bf16.gmra.mxu0 %v1847
        %v1952 = vpop.f32.mrf.mxu0
        %v1953 = vpop.f32.mrf.mxu0
        %v1954 = vpop.f32.mrf.mxu0
        %v1955 = vpop.f32.mrf.mxu0
        %1956 = vmatprep.mubr.bf16.mxu0 0
        %1957 = vmatmul.mubr.bf16.gmra.mxu0 %v1848
        %v1958 = vpop.f32.mrf.mxu0
        %v1959 = vadd.f32 0.0, %v1958
        %v1960 = vpop.f32.mrf.mxu0
        %v1961 = vpop.f32.mrf.mxu0
        %v1962 = vadd.f32 0.0, %v1961
        %v1963 = vpop.f32.mrf.mxu0
        %1964 = vmatprep.mubr.bf16.mxu0 0
        %1965 = vmatmul.mubr.bf16.gmra.mxu0 %v1849
        %v1966 = vpop.f32.mrf.mxu0
        %v1967 = vpop.f32.mrf.mxu0
        %v1968 = vpop.f32.mrf.mxu0
        %v1969 = vpop.f32.mrf.mxu0
        %1970 = vmatprep.mubr.bf16.mxu0 0
        %1971 = vmatmul.mubr.bf16.gmra.mxu0 %v1850
        %v1972 = vpop.f32.mrf.mxu0
        %v1973 = vadd.f32 0.0, %v1972
        %v1974 = vpop.f32.mrf.mxu0
        %v1975 = vpop.f32.mrf.mxu0
        %v1976 = vadd.f32 0.0, %v1975
        %v1977 = vpop.f32.mrf.mxu0
        %1978 = vmatprep.mubr.bf16.mxu0 0
        %1979 = vmatmul.mubr.bf16.gmra.mxu0 %v1851
        %v1980 = vpop.f32.mrf.mxu0
        %v1981 = vpop.f32.mrf.mxu0
        %v1982 = vpop.f32.mrf.mxu0
        %v1983 = vpop.f32.mrf.mxu0
        %1984 = vmatprep.mubr.bf16.mxu0 0
        %1985 = vmatmul.mubr.bf16.gmra.mxu0 %v1852
        %v1986 = vpop.f32.mrf.mxu0
        %v1987 = vadd.f32 0.0, %v1986
        %v1988 = vpop.f32.mrf.mxu0
        %v1989 = vpop.f32.mrf.mxu0
        %v1990 = vadd.f32 0.0, %v1989
        %v1991 = vpop.f32.mrf.mxu0
        %1992 = vmatprep.mubr.bf16.mxu0 0
        %1993 = vmatmul.mubr.bf16.gmra.mxu0 %v1853
        %v1994 = vpop.f32.mrf.mxu0
        %v1995 = vpop.f32.mrf.mxu0
        %v1996 = vpop.f32.mrf.mxu0
        %v1997 = vpop.f32.mrf.mxu0
        %1998 = vdwg.mxu0
        %v1999 = vadd.f32 %v1676, %v1945
        %v2000 = vadd.f32 %v1679, %v1948
        %v2001 = vadd.f32 %v1690, %v1959
        %v2002 = vadd.f32 %v1693, %v1962
        %v2003 = vadd.f32 %v1704, %v1973
        %v2004 = vadd.f32 %v1707, %v1976
        %v2005 = vadd.f32 %v1718, %v1987
        %v2006 = vadd.f32 %v1721, %v1990
        %v2007 = vld [vmem:[%s506] sm:$0xf]
        %v2008 = vld [vmem:[%s506 + $0x4] sm:$0xf]
        %v2009 = vld [vmem:[%s506 + $0xc] sm:$0xf]
        %v2010 = vld [vmem:[%s506 + $0x10] sm:$0xf]
        %v2011 = vld [vmem:[%s506 + $0x18] sm:$0xf]
        %v2012 = vld [vmem:[%s506 + $0x1c] sm:$0xf]
        %v2013 = vld [vmem:[%s506 + $0x24] sm:$0xf]
        %v2014 = vld [vmem:[%s506 + $0x28] sm:$0xf]
        %v2015 = vld [vmem:[%s506 + $0x30] sm:$0xf]
        %v2016 = vld [vmem:[%s506 + $0x34] sm:$0xf]
        %v2017 = vld [vmem:[%s506 + $0x3c] sm:$0xf]
        %v2018 = vld [vmem:[%s506 + $0x40] sm:$0xf]
        %v2019 = vld [vmem:[%s506 + $0x48] sm:$0xf]
        %v2020 = vld [vmem:[%s506 + $0x4c] sm:$0xf]
        %v2021 = vld [vmem:[%s506 + $0x54] sm:$0xf]
        %v2022 = vld [vmem:[%s506 + $0x58] sm:$0xf]
        %s2023 = scalar_lea.vmem [#allocation6], 192
        %v2024 = vld [vmem:[%s2023] sm:$0xf]
        %v2025 = vld [vmem:[%s2023 + $0x4] sm:$0xf]
        %v2026 = vld [vmem:[%s2023 + $0x8] sm:$0xf]
        %v2027 = vld [vmem:[%s2023 + $0xc] sm:$0xf]
        %v2028 = vld [vmem:[%s2023 + $0x10] sm:$0xf]
        %v2029 = vld [vmem:[%s2023 + $0x14] sm:$0xf]
        %v2030 = vld [vmem:[%s2023 + $0x18] sm:$0xf]
        %v2031 = vld [vmem:[%s2023 + $0x1c] sm:$0xf]
        %v2032 = vld [vmem:[%s2023 + $0x20] sm:$0xf]
        %v2033 = vld [vmem:[%s2023 + $0x24] sm:$0xf]
        %v2034 = vld [vmem:[%s2023 + $0x28] sm:$0xf]
        %v2035 = vld [vmem:[%s2023 + $0x2c] sm:$0xf]
        %v2036 = vld [vmem:[%s2023 + $0x30] sm:$0xf]
        %v2037 = vld [vmem:[%s2023 + $0x34] sm:$0xf]
        %v2038 = vld [vmem:[%s2023 + $0x38] sm:$0xf]
        %v2039 = vld [vmem:[%s2023 + $0x3c] sm:$0xf]
        %v2056 = vunpack.c.l.b16 %v2007
        %v2057 = vunpack.c.l.b16 %v2008
        %v2058 = vunpack.c.l.b16 %v2009
        %v2059 = vunpack.c.l.b16 %v2010
        %v2060 = vunpack.c.l.b16 %v2011
        %v2061 = vunpack.c.l.b16 %v2012
        %v2062 = vunpack.c.l.b16 %v2013
        %v2063 = vunpack.c.l.b16 %v2014
        %v2064 = vunpack.c.l.b16 %v2015
        %v2065 = vunpack.c.l.b16 %v2016
        %v2066 = vunpack.c.l.b16 %v2017
        %v2067 = vunpack.c.l.b16 %v2018
        %v2068 = vunpack.c.l.b16 %v2019
        %v2069 = vunpack.c.l.b16 %v2020
        %v2070 = vunpack.c.l.b16 %v2021
        %v2071 = vunpack.c.l.b16 %v2022
        %v2072 = vpack.c.b16 %v2057, %v2056
        %v2073 = vpack.c.b16 %v2059, %v2058
        %v2074 = vpack.c.b16 %v2061, %v2060
        %v2075 = vpack.c.b16 %v2063, %v2062
        %v2076 = vpack.c.b16 %v2065, %v2064
        %v2077 = vpack.c.b16 %v2067, %v2066
        %v2078 = vpack.c.b16 %v2069, %v2068
        %v2079 = vpack.c.b16 %v2071, %v2070
        %v2104 = vunpack.c.l.b16 %v2024
        %v2105 = vunpack.c.l.b16 %v2025
        %v2106 = vunpack.c.l.b16 %v2026
        %v2107 = vunpack.c.l.b16 %v2027
        %v2108 = vunpack.c.l.b16 %v2028
        %v2109 = vunpack.c.l.b16 %v2029
        %v2110 = vunpack.c.l.b16 %v2030
        %v2111 = vunpack.c.l.b16 %v2031
        %v2112 = vunpack.c.l.b16 %v2032
        %v2113 = vunpack.c.l.b16 %v2033
        %v2114 = vunpack.c.l.b16 %v2034
        %v2115 = vunpack.c.l.b16 %v2035
        %v2116 = vunpack.c.l.b16 %v2036
        %v2117 = vunpack.c.l.b16 %v2037
        %v2118 = vunpack.c.l.b16 %v2038
        %v2119 = vunpack.c.l.b16 %v2039
        %v2120 = vpack.c.b16 %v2105, %v2104
        %v2121 = vpack.c.b16 %v2107, %v2106
        %v2122 = vpack.c.b16 %v2109, %v2108
        %v2123 = vpack.c.b16 %v2111, %v2110
        %v2124 = vpack.c.b16 %v2113, %v2112
        %v2125 = vpack.c.b16 %v2115, %v2114
        %v2126 = vpack.c.b16 %v2117, %v2116
        %v2127 = vpack.c.b16 %v2119, %v2118
        %2136 = vmatprep.subr.bf16.mxu0 0
        %2137 = vmatpush1.bf16.msra.mxu0 %v2127
        %2138 = vmatprep.subr.bf16.mxu0 0
        %2139 = vmatpush1.bf16.msra.mxu0 %v2126
        %2140 = vmatprep.subr.bf16.mxu0 0
        %2141 = vmatpush1.bf16.msra.mxu0 %v2125
        %2142 = vmatprep.subr.bf16.mxu0 0
        %2143 = vmatpush1.bf16.msra.mxu0 %v2124
        %2144 = vmatprep.subr.bf16.mxu0 0
        %2145 = vmatpush1.bf16.msra.mxu0 %v2123
        %2146 = vmatprep.subr.bf16.mxu0 0
        %2147 = vmatpush1.bf16.msra.mxu0 %v2122
        %2148 = vmatprep.subr.bf16.mxu0 0
        %2149 = vmatpush1.bf16.msra.mxu0 %v2121
        %2150 = vmatprep.subr.bf16.mxu0 0
        %2151 = vmatpush1.bf16.msra.mxu0 %v2120
        %2152 = vmatprep.subr.bf16.mxu0 0
        %2153 = vmatpush2.bf16.msra.mxu0 0
        %2154 = vmatprep.subr.bf16.mxu0 0
        %2155 = vmatpush2.bf16.msra.mxu0 0
        %2156 = vmatprep.subr.bf16.mxu0 0
        %2157 = vmatpush2.bf16.msra.mxu0 0
        %2158 = vmatprep.subr.bf16.mxu0 0
        %2159 = vmatpush2.bf16.msra.mxu0 0
        %2160 = vmatprep.subr.bf16.mxu0 0
        %2161 = vmatpush2.bf16.msra.mxu0 0
        %2162 = vmatprep.subr.bf16.mxu0 0
        %2163 = vmatpush2.bf16.msra.mxu0 0
        %2164 = vmatprep.subr.bf16.mxu0 0
        %2165 = vmatpush2.bf16.msra.mxu0 0
        %2166 = vmatprep.subr.bf16.mxu0 0
        %2167 = vmatpush2.bf16.msra.mxu0 0
        %2168 = vmatprep.mubr.bf16.mxu0 0
        %2169 = vmatmul.mubr.bf16.gmra.mxu0 %v2072
        %v2170 = vpop.f32.mrf.mxu0
        %v2171 = vadd.f32 0.0, %v2170
        %v2172 = vpop.f32.mrf.mxu0
        %v2173 = vpop.f32.mrf.mxu0
        %v2174 = vadd.f32 0.0, %v2173
        %v2175 = vpop.f32.mrf.mxu0
        %2176 = vmatprep.mubr.bf16.mxu0 0
        %2177 = vmatmul.mubr.bf16.gmra.mxu0 %v2073
        %v2178 = vpop.f32.mrf.mxu0
        %v2179 = vpop.f32.mrf.mxu0
        %v2180 = vpop.f32.mrf.mxu0
        %v2181 = vpop.f32.mrf.mxu0
        %2182 = vmatprep.mubr.bf16.mxu0 0
        %2183 = vmatmul.mubr.bf16.gmra.mxu0 %v2074
        %v2184 = vpop.f32.mrf.mxu0
        %v2185 = vadd.f32 0.0, %v2184
        %v2186 = vpop.f32.mrf.mxu0
        %v2187 = vpop.f32.mrf.mxu0
        %v2188 = vadd.f32 0.0, %v2187
        %v2189 = vpop.f32.mrf.mxu0
        %2190 = vmatprep.mubr.bf16.mxu0 0
        %2191 = vmatmul.mubr.bf16.gmra.mxu0 %v2075
        %v2192 = vpop.f32.mrf.mxu0
        %v2193 = vpop.f32.mrf.mxu0
        %v2194 = vpop.f32.mrf.mxu0
        %v2195 = vpop.f32.mrf.mxu0
        %2196 = vmatprep.mubr.bf16.mxu0 0
        %2197 = vmatmul.mubr.bf16.gmra.mxu0 %v2076
        %v2198 = vpop.f32.mrf.mxu0
        %v2199 = vadd.f32 0.0, %v2198
        %v2200 = vpop.f32.mrf.mxu0
        %v2201 = vpop.f32.mrf.mxu0
        %v2202 = vadd.f32 0.0, %v2201
        %v2203 = vpop.f32.mrf.mxu0
        %2204 = vmatprep.mubr.bf16.mxu0 0
        %2205 = vmatmul.mubr.bf16.gmra.mxu0 %v2077
        %v2206 = vpop.f32.mrf.mxu0
        %v2207 = vpop.f32.mrf.mxu0
        %v2208 = vpop.f32.mrf.mxu0
        %v2209 = vpop.f32.mrf.mxu0
        %2210 = vmatprep.mubr.bf16.mxu0 0
        %2211 = vmatmul.mubr.bf16.gmra.mxu0 %v2078
        %v2212 = vpop.f32.mrf.mxu0
        %v2213 = vadd.f32 0.0, %v2212
        %v2214 = vpop.f32.mrf.mxu0
        %v2215 = vpop.f32.mrf.mxu0
        %v2216 = vadd.f32 0.0, %v2215
        %v2217 = vpop.f32.mrf.mxu0
        %2218 = vmatprep.mubr.bf16.mxu0 0
        %2219 = vmatmul.mubr.bf16.gmra.mxu0 %v2079
        %v2220 = vpop.f32.mrf.mxu0
        %v2221 = vpop.f32.mrf.mxu0
        %v2222 = vpop.f32.mrf.mxu0
        %v2223 = vpop.f32.mrf.mxu0
        %2224 = vdwg.mxu0
        %v2225 = vadd.f32 %v1999, %v2171
        %v2226 = vadd.f32 %v2000, %v2174
        %v2227 = vadd.f32 %v2001, %v2185
        %v2228 = vadd.f32 %v2002, %v2188
        %v2229 = vadd.f32 %v2003, %v2199
        %v2230 = vadd.f32 %v2004, %v2202
        %v2231 = vadd.f32 %v2005, %v2213
        %v2232 = vadd.f32 %v2006, %v2216
        %v2233 = vld [vmem:[%s506] sm:$0xf]
        %v2234 = vld [vmem:[%s506 + $0x4] sm:$0xf]
        %v2235 = vld [vmem:[%s506 + $0x8] sm:$0x1]
        %v2236 = vld [vmem:[%s506 + $0xc] sm:$0xf]
        %v2237 = vld [vmem:[%s506 + $0x10] sm:$0xf]
        %v2238 = vld [vmem:[%s506 + $0x14] sm:$0x1]
        %v2239 = vld [vmem:[%s506 + $0x18] sm:$0xf]
        %v2240 = vld [vmem:[%s506 + $0x1c] sm:$0xf]
        %v2241 = vld [vmem:[%s506 + $0x20] sm:$0x1]
        %v2242 = vld [vmem:[%s506 + $0x24] sm:$0xf]
        %v2243 = vld [vmem:[%s506 + $0x28] sm:$0xf]
        %v2244 = vld [vmem:[%s506 + $0x2c] sm:$0x1]
        %v2245 = vld [vmem:[%s506 + $0x30] sm:$0xf]
        %v2246 = vld [vmem:[%s506 + $0x34] sm:$0xf]
        %v2247 = vld [vmem:[%s506 + $0x38] sm:$0x1]
        %v2248 = vld [vmem:[%s506 + $0x3c] sm:$0xf]
        %v2249 = vld [vmem:[%s506 + $0x40] sm:$0xf]
        %v2250 = vld [vmem:[%s506 + $0x44] sm:$0x1]
        %v2251 = vld [vmem:[%s506 + $0x48] sm:$0xf]
        %v2252 = vld [vmem:[%s506 + $0x4c] sm:$0xf]
        %v2253 = vld [vmem:[%s506 + $0x50] sm:$0x1]
        %v2254 = vld [vmem:[%s506 + $0x54] sm:$0xf]
        %v2255 = vld [vmem:[%s506 + $0x58] sm:$0xf]
        %v2256 = vld [vmem:[%s506 + $0x5c] sm:$0x1]
        %v2258 = vshrl.u32 %v2233, 16
        %v2260 = vrot.slane %v2258, 4
        %v2261 = vshll.u32 %v2233, 16
        %v2263 = vrot.slane %v2261, 5
        %v2264 = vor.u32 %v2260, %v2263
        %v2265 = vrot.slane %v2264, 4
        %v2267 = vshll.u32 %v2234, 16
        %v2269 = vrot.slane %v2267, 5
        %v2270 = vsel %vm1166, %v2265, %v2269
        %v2271 = vshrl.u32 %v2234, 16
        %v2273 = vrot.slane %v2271, 4
        %v2274 = vor.u32 %v2273, %v2269
        %v2275 = vrot.slane %v2274, 4
        %v2277 = vshll.u32 %v2235, 16
        %v2279 = vrot.slane %v2277, 5
        %v2280 = vsel %vm1166, %v2275, %v2279
        %v2282 = vshrl.u32 %v2236, 16
        %v2284 = vrot.slane %v2282, 4
        %v2285 = vshll.u32 %v2236, 16
        %v2287 = vrot.slane %v2285, 5
        %v2288 = vor.u32 %v2284, %v2287
        %v2289 = vrot.slane %v2288, 4
        %v2291 = vshll.u32 %v2237, 16
        %v2293 = vrot.slane %v2291, 5
        %v2294 = vsel %vm1166, %v2289, %v2293
        %v2295 = vshrl.u32 %v2237, 16
        %v2297 = vrot.slane %v2295, 4
        %v2298 = vor.u32 %v2297, %v2293
        %v2299 = vrot.slane %v2298, 4
        %v2301 = vshll.u32 %v2238, 16
        %v2303 = vrot.slane %v2301, 5
        %v2304 = vsel %vm1166, %v2299, %v2303
        %v2306 = vshrl.u32 %v2239, 16
        %v2308 = vrot.slane %v2306, 4
        %v2309 = vshll.u32 %v2239, 16
        %v2311 = vrot.slane %v2309, 5
        %v2312 = vor.u32 %v2308, %v2311
        %v2313 = vrot.slane %v2312, 4
        %v2315 = vshll.u32 %v2240, 16
        %v2317 = vrot.slane %v2315, 5
        %v2318 = vsel %vm1166, %v2313, %v2317
        %v2319 = vshrl.u32 %v2240, 16
        %v2321 = vrot.slane %v2319, 4
        %v2322 = vor.u32 %v2321, %v2317
        %v2323 = vrot.slane %v2322, 4
        %v2325 = vshll.u32 %v2241, 16
        %v2327 = vrot.slane %v2325, 5
        %v2328 = vsel %vm1166, %v2323, %v2327
        %v2330 = vshrl.u32 %v2242, 16
        %v2332 = vrot.slane %v2330, 4
        %v2333 = vshll.u32 %v2242, 16
        %v2335 = vrot.slane %v2333, 5
        %v2336 = vor.u32 %v2332, %v2335
        %v2337 = vrot.slane %v2336, 4
        %v2339 = vshll.u32 %v2243, 16
        %v2341 = vrot.slane %v2339, 5
        %v2342 = vsel %vm1166, %v2337, %v2341
        %v2343 = vshrl.u32 %v2243, 16
        %v2345 = vrot.slane %v2343, 4
        %v2346 = vor.u32 %v2345, %v2341
        %v2347 = vrot.slane %v2346, 4
        %v2349 = vshll.u32 %v2244, 16
        %v2351 = vrot.slane %v2349, 5
        %v2352 = vsel %vm1166, %v2347, %v2351
        %v2354 = vshrl.u32 %v2245, 16
        %v2356 = vrot.slane %v2354, 4
        %v2357 = vshll.u32 %v2245, 16
        %v2359 = vrot.slane %v2357, 5
        %v2360 = vor.u32 %v2356, %v2359
        %v2361 = vrot.slane %v2360, 4
        %v2363 = vshll.u32 %v2246, 16
        %v2365 = vrot.slane %v2363, 5
        %v2366 = vsel %vm1166, %v2361, %v2365
        %v2367 = vshrl.u32 %v2246, 16
        %v2369 = vrot.slane %v2367, 4
        %v2370 = vor.u32 %v2369, %v2365
        %v2371 = vrot.slane %v2370, 4
        %v2373 = vshll.u32 %v2247, 16
        %v2375 = vrot.slane %v2373, 5
        %v2376 = vsel %vm1166, %v2371, %v2375
        %v2378 = vshrl.u32 %v2248, 16
        %v2380 = vrot.slane %v2378, 4
        %v2381 = vshll.u32 %v2248, 16
        %v2383 = vrot.slane %v2381, 5
        %v2384 = vor.u32 %v2380, %v2383
        %v2385 = vrot.slane %v2384, 4
        %v2387 = vshll.u32 %v2249, 16
        %v2389 = vrot.slane %v2387, 5
        %v2390 = vsel %vm1166, %v2385, %v2389
        %v2391 = vshrl.u32 %v2249, 16
        %v2393 = vrot.slane %v2391, 4
        %v2394 = vor.u32 %v2393, %v2389
        %v2395 = vrot.slane %v2394, 4
        %v2397 = vshll.u32 %v2250, 16
        %v2399 = vrot.slane %v2397, 5
        %v2400 = vsel %vm1166, %v2395, %v2399
        %v2402 = vshrl.u32 %v2251, 16
        %v2404 = vrot.slane %v2402, 4
        %v2405 = vshll.u32 %v2251, 16
        %v2407 = vrot.slane %v2405, 5
        %v2408 = vor.u32 %v2404, %v2407
        %v2409 = vrot.slane %v2408, 4
        %v2411 = vshll.u32 %v2252, 16
        %v2413 = vrot.slane %v2411, 5
        %v2414 = vsel %vm1166, %v2409, %v2413
        %v2415 = vshrl.u32 %v2252, 16
        %v2417 = vrot.slane %v2415, 4
        %v2418 = vor.u32 %v2417, %v2413
        %v2419 = vrot.slane %v2418, 4
        %v2421 = vshll.u32 %v2253, 16
        %v2423 = vrot.slane %v2421, 5
        %v2424 = vsel %vm1166, %v2419, %v2423
        %v2426 = vshrl.u32 %v2254, 16
        %v2428 = vrot.slane %v2426, 4
        %v2429 = vshll.u32 %v2254, 16
        %v2431 = vrot.slane %v2429, 5
        %v2432 = vor.u32 %v2428, %v2431
        %v2433 = vrot.slane %v2432, 4
        %v2435 = vshll.u32 %v2255, 16
        %v2437 = vrot.slane %v2435, 5
        %v2438 = vsel %vm1166, %v2433, %v2437
        %v2439 = vshrl.u32 %v2255, 16
        %v2441 = vrot.slane %v2439, 4
        %v2442 = vor.u32 %v2441, %v2437
        %v2443 = vrot.slane %v2442, 4
        %v2445 = vshll.u32 %v2256, 16
        %v2447 = vrot.slane %v2445, 5
        %v2448 = vsel %vm1166, %v2443, %v2447
        %s2449 = scalar_lea.vmem [#allocation6], 256
        %v2450 = vld [vmem:[%s2449] sm:$0xf]
        %v2451 = vld [vmem:[%s2449 + $0x4] sm:$0xf]
        %v2452 = vld [vmem:[%s2449 + $0x8] sm:$0xf]
        %v2453 = vld [vmem:[%s2449 + $0xc] sm:$0xf]
        %v2454 = vld [vmem:[%s2449 + $0x10] sm:$0xf]
        %v2455 = vld [vmem:[%s2449 + $0x14] sm:$0xf]
        %v2456 = vld [vmem:[%s2449 + $0x18] sm:$0xf]
        %v2457 = vld [vmem:[%s2449 + $0x1c] sm:$0xf]
        %v2458 = vld [vmem:[%s2449 + $0x20] sm:$0xf]
        %v2459 = vld [vmem:[%s2449 + $0x24] sm:$0xf]
        %v2460 = vld [vmem:[%s2449 + $0x28] sm:$0xf]
        %v2461 = vld [vmem:[%s2449 + $0x2c] sm:$0xf]
        %v2462 = vld [vmem:[%s2449 + $0x30] sm:$0xf]
        %v2463 = vld [vmem:[%s2449 + $0x34] sm:$0xf]
        %v2464 = vld [vmem:[%s2449 + $0x38] sm:$0xf]
        %v2465 = vld [vmem:[%s2449 + $0x3c] sm:$0xf]
        %v2466 = vunpack.c.l.b16 %v2270
        %v2467 = vunpack.c.l.b16 %v2280
        %v2468 = vunpack.c.l.b16 %v2294
        %v2469 = vunpack.c.l.b16 %v2304
        %v2470 = vunpack.c.l.b16 %v2318
        %v2471 = vunpack.c.l.b16 %v2328
        %v2472 = vunpack.c.l.b16 %v2342
        %v2473 = vunpack.c.l.b16 %v2352
        %v2474 = vunpack.c.l.b16 %v2366
        %v2475 = vunpack.c.l.b16 %v2376
        %v2476 = vunpack.c.l.b16 %v2390
        %v2477 = vunpack.c.l.b16 %v2400
        %v2478 = vunpack.c.l.b16 %v2414
        %v2479 = vunpack.c.l.b16 %v2424
        %v2480 = vunpack.c.l.b16 %v2438
        %v2481 = vunpack.c.l.b16 %v2448
        %v2482 = vpack.c.b16 %v2467, %v2466
        %v2483 = vpack.c.b16 %v2469, %v2468
        %v2484 = vpack.c.b16 %v2471, %v2470
        %v2485 = vpack.c.b16 %v2473, %v2472
        %v2486 = vpack.c.b16 %v2475, %v2474
        %v2487 = vpack.c.b16 %v2477, %v2476
        %v2488 = vpack.c.b16 %v2479, %v2478
        %v2489 = vpack.c.b16 %v2481, %v2480
        %v2514 = vunpack.c.l.b16 %v2450
        %v2515 = vunpack.c.l.b16 %v2451
        %v2516 = vunpack.c.l.b16 %v2452
        %v2517 = vunpack.c.l.b16 %v2453
        %v2518 = vunpack.c.l.b16 %v2454
        %v2519 = vunpack.c.l.b16 %v2455
        %v2520 = vunpack.c.l.b16 %v2456
        %v2521 = vunpack.c.l.b16 %v2457
        %v2522 = vunpack.c.l.b16 %v2458
        %v2523 = vunpack.c.l.b16 %v2459
        %v2524 = vunpack.c.l.b16 %v2460
        %v2525 = vunpack.c.l.b16 %v2461
        %v2526 = vunpack.c.l.b16 %v2462
        %v2527 = vunpack.c.l.b16 %v2463
        %v2528 = vunpack.c.l.b16 %v2464
        %v2529 = vunpack.c.l.b16 %v2465
        %v2530 = vpack.c.b16 %v2515, %v2514
        %v2531 = vpack.c.b16 %v2517, %v2516
        %v2532 = vpack.c.b16 %v2519, %v2518
        %v2533 = vpack.c.b16 %v2521, %v2520
        %v2534 = vpack.c.b16 %v2523, %v2522
        %v2535 = vpack.c.b16 %v2525, %v2524
        %v2536 = vpack.c.b16 %v2527, %v2526
        %v2537 = vpack.c.b16 %v2529, %v2528
        %2546 = vmatprep.subr.bf16.mxu0 0
        %2547 = vmatpush1.bf16.msra.mxu0 %v2537
        %2548 = vmatprep.subr.bf16.mxu0 0
        %2549 = vmatpush1.bf16.msra.mxu0 %v2536
        %2550 = vmatprep.subr.bf16.mxu0 0
        %2551 = vmatpush1.bf16.msra.mxu0 %v2535
        %2552 = vmatprep.subr.bf16.mxu0 0
        %2553 = vmatpush1.bf16.msra.mxu0 %v2534
        %2554 = vmatprep.subr.bf16.mxu0 0
        %2555 = vmatpush1.bf16.msra.mxu0 %v2533
        %2556 = vmatprep.subr.bf16.mxu0 0
        %2557 = vmatpush1.bf16.msra.mxu0 %v2532
        %2558 = vmatprep.subr.bf16.mxu0 0
        %2559 = vmatpush1.bf16.msra.mxu0 %v2531
        %2560 = vmatprep.subr.bf16.mxu0 0
        %2561 = vmatpush1.bf16.msra.mxu0 %v2530
        %2562 = vmatprep.subr.bf16.mxu0 0
        %2563 = vmatpush2.bf16.msra.mxu0 0
        %2564 = vmatprep.subr.bf16.mxu0 0
        %2565 = vmatpush2.bf16.msra.mxu0 0
        %2566 = vmatprep.subr.bf16.mxu0 0
        %2567 = vmatpush2.bf16.msra.mxu0 0
        %2568 = vmatprep.subr.bf16.mxu0 0
        %2569 = vmatpush2.bf16.msra.mxu0 0
        %2570 = vmatprep.subr.bf16.mxu0 0
        %2571 = vmatpush2.bf16.msra.mxu0 0
        %2572 = vmatprep.subr.bf16.mxu0 0
        %2573 = vmatpush2.bf16.msra.mxu0 0
        %2574 = vmatprep.subr.bf16.mxu0 0
        %2575 = vmatpush2.bf16.msra.mxu0 0
        %2576 = vmatprep.subr.bf16.mxu0 0
        %2577 = vmatpush2.bf16.msra.mxu0 0
        %2578 = vmatprep.mubr.bf16.mxu0 0
        %2579 = vmatmul.mubr.bf16.gmra.mxu0 %v2482
        %v2580 = vpop.f32.mrf.mxu0
        %v2581 = vadd.f32 0.0, %v2580
        %v2582 = vpop.f32.mrf.mxu0
        %v2583 = vpop.f32.mrf.mxu0
        %v2584 = vadd.f32 0.0, %v2583
        %v2585 = vpop.f32.mrf.mxu0
        %2586 = vmatprep.mubr.bf16.mxu0 0
        %2587 = vmatmul.mubr.bf16.gmra.mxu0 %v2483
        %v2588 = vpop.f32.mrf.mxu0
        %v2589 = vpop.f32.mrf.mxu0
        %v2590 = vpop.f32.mrf.mxu0
        %v2591 = vpop.f32.mrf.mxu0
        %2592 = vmatprep.mubr.bf16.mxu0 0
        %2593 = vmatmul.mubr.bf16.gmra.mxu0 %v2484
        %v2594 = vpop.f32.mrf.mxu0
        %v2595 = vadd.f32 0.0, %v2594
        %v2596 = vpop.f32.mrf.mxu0
        %v2597 = vpop.f32.mrf.mxu0
        %v2598 = vadd.f32 0.0, %v2597
        %v2599 = vpop.f32.mrf.mxu0
        %2600 = vmatprep.mubr.bf16.mxu0 0
        %2601 = vmatmul.mubr.bf16.gmra.mxu0 %v2485
        %v2602 = vpop.f32.mrf.mxu0
        %v2603 = vpop.f32.mrf.mxu0
        %v2604 = vpop.f32.mrf.mxu0
        %v2605 = vpop.f32.mrf.mxu0
        %2606 = vmatprep.mubr.bf16.mxu0 0
        %2607 = vmatmul.mubr.bf16.gmra.mxu0 %v2486
        %v2608 = vpop.f32.mrf.mxu0
        %v2609 = vadd.f32 0.0, %v2608
        %v2610 = vpop.f32.mrf.mxu0
        %v2611 = vpop.f32.mrf.mxu0
        %v2612 = vadd.f32 0.0, %v2611
        %v2613 = vpop.f32.mrf.mxu0
        %2614 = vmatprep.mubr.bf16.mxu0 0
        %2615 = vmatmul.mubr.bf16.gmra.mxu0 %v2487
        %v2616 = vpop.f32.mrf.mxu0
        %v2617 = vpop.f32.mrf.mxu0
        %v2618 = vpop.f32.mrf.mxu0
        %v2619 = vpop.f32.mrf.mxu0
        %2620 = vmatprep.mubr.bf16.mxu0 0
        %2621 = vmatmul.mubr.bf16.gmra.mxu0 %v2488
        %v2622 = vpop.f32.mrf.mxu0
        %v2623 = vadd.f32 0.0, %v2622
        %v2624 = vpop.f32.mrf.mxu0
        %v2625 = vpop.f32.mrf.mxu0
        %v2626 = vadd.f32 0.0, %v2625
        %v2627 = vpop.f32.mrf.mxu0
        %2628 = vmatprep.mubr.bf16.mxu0 0
        %2629 = vmatmul.mubr.bf16.gmra.mxu0 %v2489
        %v2630 = vpop.f32.mrf.mxu0
        %v2631 = vpop.f32.mrf.mxu0
        %v2632 = vpop.f32.mrf.mxu0
        %v2633 = vpop.f32.mrf.mxu0
        %2634 = vdwg.mxu0
        %v2635 = vadd.f32 %v2225, %v2581
        %v2636 = vadd.f32 %v2226, %v2584
        %v2637 = vadd.f32 %v2227, %v2595
        %v2638 = vadd.f32 %v2228, %v2598
        %v2639 = vadd.f32 %v2229, %v2609
        %v2640 = vadd.f32 %v2230, %v2612
        %v2641 = vadd.f32 %v2231, %v2623
        %v2642 = vadd.f32 %v2232, %v2626
        %v2643 = vld [vmem:[%s506] sm:$0xe]
        %v2644 = vld [vmem:[%s506 + $0xc] sm:$0xe]
        %v2645 = vld [vmem:[%s506 + $0x18] sm:$0xe]
        %v2646 = vld [vmem:[%s506 + $0x24] sm:$0xe]
        %v2647 = vld [vmem:[%s506 + $0x30] sm:$0xe]
        %v2648 = vld [vmem:[%s506 + $0x3c] sm:$0xe]
        %v2649 = vld [vmem:[%s506 + $0x48] sm:$0xe]
        %v2650 = vld [vmem:[%s506 + $0x54] sm:$0xe]
        %v2675 = vrot.slane %v2643, 5
        %v2676 = vrot.slane %v2675, 4
        %v2677 = vrot.slane %v2234, 5
        %v2678 = vsel %vm1756, %v2676, %v2677
        %v2679 = vrot.slane %v2677, 4
        %v2680 = vrot.slane %v2235, 5
        %v2681 = vsel %vm1756, %v2679, %v2680
        %v2682 = vrot.slane %v2644, 5
        %v2683 = vrot.slane %v2682, 4
        %v2684 = vrot.slane %v2237, 5
        %v2685 = vsel %vm1756, %v2683, %v2684
        %v2686 = vrot.slane %v2684, 4
        %v2687 = vrot.slane %v2238, 5
        %v2688 = vsel %vm1756, %v2686, %v2687
        %v2689 = vrot.slane %v2645, 5
        %v2690 = vrot.slane %v2689, 4
        %v2691 = vrot.slane %v2240, 5
        %v2692 = vsel %vm1756, %v2690, %v2691
        %v2693 = vrot.slane %v2691, 4
        %v2694 = vrot.slane %v2241, 5
        %v2695 = vsel %vm1756, %v2693, %v2694
        %v2696 = vrot.slane %v2646, 5
        %v2697 = vrot.slane %v2696, 4
        %v2698 = vrot.slane %v2243, 5
        %v2699 = vsel %vm1756, %v2697, %v2698
        %v2700 = vrot.slane %v2698, 4
        %v2701 = vrot.slane %v2244, 5
        %v2702 = vsel %vm1756, %v2700, %v2701
        %v2703 = vrot.slane %v2647, 5
        %v2704 = vrot.slane %v2703, 4
        %v2705 = vrot.slane %v2246, 5
        %v2706 = vsel %vm1756, %v2704, %v2705
        %v2707 = vrot.slane %v2705, 4
        %v2708 = vrot.slane %v2247, 5
        %v2709 = vsel %vm1756, %v2707, %v2708
        %v2710 = vrot.slane %v2648, 5
        %v2711 = vrot.slane %v2710, 4
        %v2712 = vrot.slane %v2249, 5
        %v2713 = vsel %vm1756, %v2711, %v2712
        %v2714 = vrot.slane %v2712, 4
        %v2715 = vrot.slane %v2250, 5
        %v2716 = vsel %vm1756, %v2714, %v2715
        %v2717 = vrot.slane %v2649, 5
        %v2718 = vrot.slane %v2717, 4
        %v2719 = vrot.slane %v2252, 5
        %v2720 = vsel %vm1756, %v2718, %v2719
        %v2721 = vrot.slane %v2719, 4
        %v2722 = vrot.slane %v2253, 5
        %v2723 = vsel %vm1756, %v2721, %v2722
        %v2724 = vrot.slane %v2650, 5
        %v2725 = vrot.slane %v2724, 4
        %v2726 = vrot.slane %v2255, 5
        %v2727 = vsel %vm1756, %v2725, %v2726
        %v2728 = vrot.slane %v2726, 4
        %v2729 = vrot.slane %v2256, 5
        %v2730 = vsel %vm1756, %v2728, %v2729
        %s2731 = scalar_lea.vmem [#allocation6], 320
        %v2732 = vld [vmem:[%s2731] sm:$0xf]
        %v2733 = vld [vmem:[%s2731 + $0x4] sm:$0xf]
        %v2734 = vld [vmem:[%s2731 + $0x8] sm:$0xf]
        %v2735 = vld [vmem:[%s2731 + $0xc] sm:$0xf]
        %v2736 = vld [vmem:[%s2731 + $0x10] sm:$0xf]
        %v2737 = vld [vmem:[%s2731 + $0x14] sm:$0xf]
        %v2738 = vld [vmem:[%s2731 + $0x18] sm:$0xf]
        %v2739 = vld [vmem:[%s2731 + $0x1c] sm:$0xf]
        %v2740 = vld [vmem:[%s2731 + $0x20] sm:$0xf]
        %v2741 = vld [vmem:[%s2731 + $0x24] sm:$0xf]
        %v2742 = vld [vmem:[%s2731 + $0x28] sm:$0xf]
        %v2743 = vld [vmem:[%s2731 + $0x2c] sm:$0xf]
        %v2744 = vld [vmem:[%s2731 + $0x30] sm:$0xf]
        %v2745 = vld [vmem:[%s2731 + $0x34] sm:$0xf]
        %v2746 = vld [vmem:[%s2731 + $0x38] sm:$0xf]
        %v2747 = vld [vmem:[%s2731 + $0x3c] sm:$0xf]
        %v2748 = vunpack.c.l.b16 %v2678
        %v2749 = vunpack.c.l.b16 %v2681
        %v2750 = vunpack.c.l.b16 %v2685
        %v2751 = vunpack.c.l.b16 %v2688
        %v2752 = vunpack.c.l.b16 %v2692
        %v2753 = vunpack.c.l.b16 %v2695
        %v2754 = vunpack.c.l.b16 %v2699
        %v2755 = vunpack.c.l.b16 %v2702
        %v2756 = vunpack.c.l.b16 %v2706
        %v2757 = vunpack.c.l.b16 %v2709
        %v2758 = vunpack.c.l.b16 %v2713
        %v2759 = vunpack.c.l.b16 %v2716
        %v2760 = vunpack.c.l.b16 %v2720
        %v2761 = vunpack.c.l.b16 %v2723
        %v2762 = vunpack.c.l.b16 %v2727
        %v2763 = vunpack.c.l.b16 %v2730
        %v2764 = vpack.c.b16 %v2749, %v2748
        %v2765 = vpack.c.b16 %v2751, %v2750
        %v2766 = vpack.c.b16 %v2753, %v2752
        %v2767 = vpack.c.b16 %v2755, %v2754
        %v2768 = vpack.c.b16 %v2757, %v2756
        %v2769 = vpack.c.b16 %v2759, %v2758
        %v2770 = vpack.c.b16 %v2761, %v2760
        %v2771 = vpack.c.b16 %v2763, %v2762
        %v2796 = vunpack.c.l.b16 %v2732
        %v2797 = vunpack.c.l.b16 %v2733
        %v2798 = vunpack.c.l.b16 %v2734
        %v2799 = vunpack.c.l.b16 %v2735
        %v2800 = vunpack.c.l.b16 %v2736
        %v2801 = vunpack.c.l.b16 %v2737
        %v2802 = vunpack.c.l.b16 %v2738
        %v2803 = vunpack.c.l.b16 %v2739
        %v2804 = vunpack.c.l.b16 %v2740
        %v2805 = vunpack.c.l.b16 %v2741
        %v2806 = vunpack.c.l.b16 %v2742
        %v2807 = vunpack.c.l.b16 %v2743
        %v2808 = vunpack.c.l.b16 %v2744
        %v2809 = vunpack.c.l.b16 %v2745
        %v2810 = vunpack.c.l.b16 %v2746
        %v2811 = vunpack.c.l.b16 %v2747
        %v2812 = vpack.c.b16 %v2797, %v2796
        %v2813 = vpack.c.b16 %v2799, %v2798
        %v2814 = vpack.c.b16 %v2801, %v2800
        %v2815 = vpack.c.b16 %v2803, %v2802
        %v2816 = vpack.c.b16 %v2805, %v2804
        %v2817 = vpack.c.b16 %v2807, %v2806
        %v2818 = vpack.c.b16 %v2809, %v2808
        %v2819 = vpack.c.b16 %v2811, %v2810
        %2828 = vmatprep.subr.bf16.mxu0 0
        %2829 = vmatpush1.bf16.msra.mxu0 %v2819
        %2830 = vmatprep.subr.bf16.mxu0 0
        %2831 = vmatpush1.bf16.msra.mxu0 %v2818
        %2832 = vmatprep.subr.bf16.mxu0 0
        %2833 = vmatpush1.bf16.msra.mxu0 %v2817
        %2834 = vmatprep.subr.bf16.mxu0 0
        %2835 = vmatpush1.bf16.msra.mxu0 %v2816
        %2836 = vmatprep.subr.bf16.mxu0 0
        %2837 = vmatpush1.bf16.msra.mxu0 %v2815
        %2838 = vmatprep.subr.bf16.mxu0 0
        %2839 = vmatpush1.bf16.msra.mxu0 %v2814
        %2840 = vmatprep.subr.bf16.mxu0 0
        %2841 = vmatpush1.bf16.msra.mxu0 %v2813
        %2842 = vmatprep.subr.bf16.mxu0 0
        %2843 = vmatpush1.bf16.msra.mxu0 %v2812
        %2844 = vmatprep.subr.bf16.mxu0 0
        %2845 = vmatpush2.bf16.msra.mxu0 0
        %2846 = vmatprep.subr.bf16.mxu0 0
        %2847 = vmatpush2.bf16.msra.mxu0 0
        %2848 = vmatprep.subr.bf16.mxu0 0
        %2849 = vmatpush2.bf16.msra.mxu0 0
        %2850 = vmatprep.subr.bf16.mxu0 0
        %2851 = vmatpush2.bf16.msra.mxu0 0
        %2852 = vmatprep.subr.bf16.mxu0 0
        %2853 = vmatpush2.bf16.msra.mxu0 0
        %2854 = vmatprep.subr.bf16.mxu0 0
        %2855 = vmatpush2.bf16.msra.mxu0 0
        %2856 = vmatprep.subr.bf16.mxu0 0
        %2857 = vmatpush2.bf16.msra.mxu0 0
        %2858 = vmatprep.subr.bf16.mxu0 0
        %2859 = vmatpush2.bf16.msra.mxu0 0
        %2860 = vmatprep.mubr.bf16.mxu0 0
        %2861 = vmatmul.mubr.bf16.gmra.mxu0 %v2764
        %v2862 = vpop.f32.mrf.mxu0
        %v2863 = vadd.f32 0.0, %v2862
        %v2864 = vpop.f32.mrf.mxu0
        %v2865 = vpop.f32.mrf.mxu0
        %v2866 = vadd.f32 0.0, %v2865
        %v2867 = vpop.f32.mrf.mxu0
        %2868 = vmatprep.mubr.bf16.mxu0 0
        %2869 = vmatmul.mubr.bf16.gmra.mxu0 %v2765
        %v2870 = vpop.f32.mrf.mxu0
        %v2871 = vpop.f32.mrf.mxu0
        %v2872 = vpop.f32.mrf.mxu0
        %v2873 = vpop.f32.mrf.mxu0
        %2874 = vmatprep.mubr.bf16.mxu0 0
        %2875 = vmatmul.mubr.bf16.gmra.mxu0 %v2766
        %v2876 = vpop.f32.mrf.mxu0
        %v2877 = vadd.f32 0.0, %v2876
        %v2878 = vpop.f32.mrf.mxu0
        %v2879 = vpop.f32.mrf.mxu0
        %v2880 = vadd.f32 0.0, %v2879
        %v2881 = vpop.f32.mrf.mxu0
        %2882 = vmatprep.mubr.bf16.mxu0 0
        %2883 = vmatmul.mubr.bf16.gmra.mxu0 %v2767
        %v2884 = vpop.f32.mrf.mxu0
        %v2885 = vpop.f32.mrf.mxu0
        %v2886 = vpop.f32.mrf.mxu0
        %v2887 = vpop.f32.mrf.mxu0
        %2888 = vmatprep.mubr.bf16.mxu0 0
        %2889 = vmatmul.mubr.bf16.gmra.mxu0 %v2768
        %v2890 = vpop.f32.mrf.mxu0
        %v2891 = vadd.f32 0.0, %v2890
        %v2892 = vpop.f32.mrf.mxu0
        %v2893 = vpop.f32.mrf.mxu0
        %v2894 = vadd.f32 0.0, %v2893
        %v2895 = vpop.f32.mrf.mxu0
        %2896 = vmatprep.mubr.bf16.mxu0 0
        %2897 = vmatmul.mubr.bf16.gmra.mxu0 %v2769
        %v2898 = vpop.f32.mrf.mxu0
        %v2899 = vpop.f32.mrf.mxu0
        %v2900 = vpop.f32.mrf.mxu0
        %v2901 = vpop.f32.mrf.mxu0
        %2902 = vmatprep.mubr.bf16.mxu0 0
        %2903 = vmatmul.mubr.bf16.gmra.mxu0 %v2770
        %v2904 = vpop.f32.mrf.mxu0
        %v2905 = vadd.f32 0.0, %v2904
        %v2906 = vpop.f32.mrf.mxu0
        %v2907 = vpop.f32.mrf.mxu0
        %v2908 = vadd.f32 0.0, %v2907
        %v2909 = vpop.f32.mrf.mxu0
        %2910 = vmatprep.mubr.bf16.mxu0 0
        %2911 = vmatmul.mubr.bf16.gmra.mxu0 %v2771
        %v2912 = vpop.f32.mrf.mxu0
        %v2913 = vpop.f32.mrf.mxu0
        %v2914 = vpop.f32.mrf.mxu0
        %v2915 = vpop.f32.mrf.mxu0
        %2916 = vdwg.mxu0
        %v2917 = vadd.f32 %v2635, %v2863
        %v2918 = vadd.f32 %v2636, %v2866
        %v2919 = vadd.f32 %v2637, %v2877
        %v2920 = vadd.f32 %v2638, %v2880
        %v2921 = vadd.f32 %v2639, %v2891
        %v2922 = vadd.f32 %v2640, %v2894
        %v2923 = vadd.f32 %v2641, %v2905
        %v2924 = vadd.f32 %v2642, %v2908
        %s2925 = scalar_lea.vmem [#allocation2], 24
        %v2926 = vld [vmem:[%s2925] sm:$0xf]
        %v2927 = vld [vmem:[%s2925 + $0x4] sm:$0xf]
        %v2928 = vld [vmem:[%s2925 + $0xc] sm:$0xf]
        %v2929 = vld [vmem:[%s2925 + $0x10] sm:$0xf]
        %v2930 = vld [vmem:[%s2925 + $0x18] sm:$0xf]
        %v2931 = vld [vmem:[%s2925 + $0x1c] sm:$0xf]
        %v2932 = vld [vmem:[%s2925 + $0x24] sm:$0xf]
        %v2933 = vld [vmem:[%s2925 + $0x28] sm:$0xf]
        %v2934 = vld [vmem:[%s2925 + $0x30] sm:$0xf]
        %v2935 = vld [vmem:[%s2925 + $0x34] sm:$0xf]
        %v2936 = vld [vmem:[%s2925 + $0x3c] sm:$0xf]
        %v2937 = vld [vmem:[%s2925 + $0x40] sm:$0xf]
        %v2938 = vld [vmem:[%s2925 + $0x48] sm:$0xf]
        %v2939 = vld [vmem:[%s2925 + $0x4c] sm:$0xf]
        %v2940 = vld [vmem:[%s2925 + $0x54] sm:$0xf]
        %v2941 = vld [vmem:[%s2925 + $0x58] sm:$0xf]
        %s2942 = scalar_lea.vmem [#allocation6], 384
        %v2943 = vld [vmem:[%s2942] sm:$0xf]
        %v2944 = vld [vmem:[%s2942 + $0x4] sm:$0xf]
        %v2945 = vld [vmem:[%s2942 + $0x8] sm:$0xf]
        %v2946 = vld [vmem:[%s2942 + $0xc] sm:$0xf]
        %v2947 = vld [vmem:[%s2942 + $0x10] sm:$0xf]
        %v2948 = vld [vmem:[%s2942 + $0x14] sm:$0xf]
        %v2949 = vld [vmem:[%s2942 + $0x18] sm:$0xf]
        %v2950 = vld [vmem:[%s2942 + $0x1c] sm:$0xf]
        %v2951 = vld [vmem:[%s2942 + $0x20] sm:$0xf]
        %v2952 = vld [vmem:[%s2942 + $0x24] sm:$0xf]
        %v2953 = vld [vmem:[%s2942 + $0x28] sm:$0xf]
        %v2954 = vld [vmem:[%s2942 + $0x2c] sm:$0xf]
        %v2955 = vld [vmem:[%s2942 + $0x30] sm:$0xf]
        %v2956 = vld [vmem:[%s2942 + $0x34] sm:$0xf]
        %v2957 = vld [vmem:[%s2942 + $0x38] sm:$0xf]
        %v2958 = vld [vmem:[%s2942 + $0x3c] sm:$0xf]
        %v2975 = vunpack.c.l.b16 %v2926
        %v2976 = vunpack.c.l.b16 %v2927
        %v2977 = vunpack.c.l.b16 %v2928
        %v2978 = vunpack.c.l.b16 %v2929
        %v2979 = vunpack.c.l.b16 %v2930
        %v2980 = vunpack.c.l.b16 %v2931
        %v2981 = vunpack.c.l.b16 %v2932
        %v2982 = vunpack.c.l.b16 %v2933
        %v2983 = vunpack.c.l.b16 %v2934
        %v2984 = vunpack.c.l.b16 %v2935
        %v2985 = vunpack.c.l.b16 %v2936
        %v2986 = vunpack.c.l.b16 %v2937
        %v2987 = vunpack.c.l.b16 %v2938
        %v2988 = vunpack.c.l.b16 %v2939
        %v2989 = vunpack.c.l.b16 %v2940
        %v2990 = vunpack.c.l.b16 %v2941
        %v2991 = vpack.c.b16 %v2976, %v2975
        %v2992 = vpack.c.b16 %v2978, %v2977
        %v2993 = vpack.c.b16 %v2980, %v2979
        %v2994 = vpack.c.b16 %v2982, %v2981
        %v2995 = vpack.c.b16 %v2984, %v2983
        %v2996 = vpack.c.b16 %v2986, %v2985
        %v2997 = vpack.c.b16 %v2988, %v2987
        %v2998 = vpack.c.b16 %v2990, %v2989
        %v3023 = vunpack.c.l.b16 %v2943
        %v3024 = vunpack.c.l.b16 %v2944
        %v3025 = vunpack.c.l.b16 %v2945
        %v3026 = vunpack.c.l.b16 %v2946
        %v3027 = vunpack.c.l.b16 %v2947
        %v3028 = vunpack.c.l.b16 %v2948
        %v3029 = vunpack.c.l.b16 %v2949
        %v3030 = vunpack.c.l.b16 %v2950
        %v3031 = vunpack.c.l.b16 %v2951
        %v3032 = vunpack.c.l.b16 %v2952
        %v3033 = vunpack.c.l.b16 %v2953
        %v3034 = vunpack.c.l.b16 %v2954
        %v3035 = vunpack.c.l.b16 %v2955
        %v3036 = vunpack.c.l.b16 %v2956
        %v3037 = vunpack.c.l.b16 %v2957
        %v3038 = vunpack.c.l.b16 %v2958
        %v3039 = vpack.c.b16 %v3024, %v3023
        %v3040 = vpack.c.b16 %v3026, %v3025
        %v3041 = vpack.c.b16 %v3028, %v3027
        %v3042 = vpack.c.b16 %v3030, %v3029
        %v3043 = vpack.c.b16 %v3032, %v3031
        %v3044 = vpack.c.b16 %v3034, %v3033
        %v3045 = vpack.c.b16 %v3036, %v3035
        %v3046 = vpack.c.b16 %v3038, %v3037
        %3055 = vmatprep.subr.bf16.mxu0 0
        %3056 = vmatpush1.bf16.msra.mxu0 %v3046
        %3057 = vmatprep.subr.bf16.mxu0 0
        %3058 = vmatpush1.bf16.msra.mxu0 %v3045
        %3059 = vmatprep.subr.bf16.mxu0 0
        %3060 = vmatpush1.bf16.msra.mxu0 %v3044
        %3061 = vmatprep.subr.bf16.mxu0 0
        %3062 = vmatpush1.bf16.msra.mxu0 %v3043
        %3063 = vmatprep.subr.bf16.mxu0 0
        %3064 = vmatpush1.bf16.msra.mxu0 %v3042
        %3065 = vmatprep.subr.bf16.mxu0 0
        %3066 = vmatpush1.bf16.msra.mxu0 %v3041
        %3067 = vmatprep.subr.bf16.mxu0 0
        %3068 = vmatpush1.bf16.msra.mxu0 %v3040
        %3069 = vmatprep.subr.bf16.mxu0 0
        %3070 = vmatpush1.bf16.msra.mxu0 %v3039
        %3071 = vmatprep.subr.bf16.mxu0 0
        %3072 = vmatpush2.bf16.msra.mxu0 0
        %3073 = vmatprep.subr.bf16.mxu0 0
        %3074 = vmatpush2.bf16.msra.mxu0 0
        %3075 = vmatprep.subr.bf16.mxu0 0
        %3076 = vmatpush2.bf16.msra.mxu0 0
        %3077 = vmatprep.subr.bf16.mxu0 0
        %3078 = vmatpush2.bf16.msra.mxu0 0
        %3079 = vmatprep.subr.bf16.mxu0 0
        %3080 = vmatpush2.bf16.msra.mxu0 0
        %3081 = vmatprep.subr.bf16.mxu0 0
        %3082 = vmatpush2.bf16.msra.mxu0 0
        %3083 = vmatprep.subr.bf16.mxu0 0
        %3084 = vmatpush2.bf16.msra.mxu0 0
        %3085 = vmatprep.subr.bf16.mxu0 0
        %3086 = vmatpush2.bf16.msra.mxu0 0
        %3087 = vmatprep.mubr.bf16.mxu0 0
        %3088 = vmatmul.mubr.bf16.gmra.mxu0 %v2991
        %v3089 = vpop.f32.mrf.mxu0
        %v3090 = vadd.f32 0.0, %v3089
        %v3091 = vpop.f32.mrf.mxu0
        %v3092 = vpop.f32.mrf.mxu0
        %v3093 = vadd.f32 0.0, %v3092
        %v3094 = vpop.f32.mrf.mxu0
        %3095 = vmatprep.mubr.bf16.mxu0 0
        %3096 = vmatmul.mubr.bf16.gmra.mxu0 %v2992
        %v3097 = vpop.f32.mrf.mxu0
        %v3098 = vpop.f32.mrf.mxu0
        %v3099 = vpop.f32.mrf.mxu0
        %v3100 = vpop.f32.mrf.mxu0
        %3101 = vmatprep.mubr.bf16.mxu0 0
        %3102 = vmatmul.mubr.bf16.gmra.mxu0 %v2993
        %v3103 = vpop.f32.mrf.mxu0
        %v3104 = vadd.f32 0.0, %v3103
        %v3105 = vpop.f32.mrf.mxu0
        %v3106 = vpop.f32.mrf.mxu0
        %v3107 = vadd.f32 0.0, %v3106
        %v3108 = vpop.f32.mrf.mxu0
        %3109 = vmatprep.mubr.bf16.mxu0 0
        %3110 = vmatmul.mubr.bf16.gmra.mxu0 %v2994
        %v3111 = vpop.f32.mrf.mxu0
        %v3112 = vpop.f32.mrf.mxu0
        %v3113 = vpop.f32.mrf.mxu0
        %v3114 = vpop.f32.mrf.mxu0
        %3115 = vmatprep.mubr.bf16.mxu0 0
        %3116 = vmatmul.mubr.bf16.gmra.mxu0 %v2995
        %v3117 = vpop.f32.mrf.mxu0
        %v3118 = vadd.f32 0.0, %v3117
        %v3119 = vpop.f32.mrf.mxu0
        %v3120 = vpop.f32.mrf.mxu0
        %v3121 = vadd.f32 0.0, %v3120
        %v3122 = vpop.f32.mrf.mxu0
        %3123 = vmatprep.mubr.bf16.mxu0 0
        %3124 = vmatmul.mubr.bf16.gmra.mxu0 %v2996
        %v3125 = vpop.f32.mrf.mxu0
        %v3126 = vpop.f32.mrf.mxu0
        %v3127 = vpop.f32.mrf.mxu0
        %v3128 = vpop.f32.mrf.mxu0
        %3129 = vmatprep.mubr.bf16.mxu0 0
        %3130 = vmatmul.mubr.bf16.gmra.mxu0 %v2997
        %v3131 = vpop.f32.mrf.mxu0
        %v3132 = vadd.f32 0.0, %v3131
        %v3133 = vpop.f32.mrf.mxu0
        %v3134 = vpop.f32.mrf.mxu0
        %v3135 = vadd.f32 0.0, %v3134
        %v3136 = vpop.f32.mrf.mxu0
        %3137 = vmatprep.mubr.bf16.mxu0 0
        %3138 = vmatmul.mubr.bf16.gmra.mxu0 %v2998
        %v3139 = vpop.f32.mrf.mxu0
        %v3140 = vpop.f32.mrf.mxu0
        %v3141 = vpop.f32.mrf.mxu0
        %v3142 = vpop.f32.mrf.mxu0
        %3143 = vdwg.mxu0
        %v3144 = vadd.f32 %v2917, %v3090
        %v3145 = vadd.f32 %v2918, %v3093
        %v3146 = vadd.f32 %v2919, %v3104
        %v3147 = vadd.f32 %v2920, %v3107
        %v3148 = vadd.f32 %v2921, %v3118
        %v3149 = vadd.f32 %v2922, %v3121
        %v3150 = vadd.f32 %v2923, %v3132
        %v3151 = vadd.f32 %v2924, %v3135
        %v3152 = vld [vmem:[%s2925] sm:$0xf]
        %v3153 = vld [vmem:[%s2925 + $0x4] sm:$0xf]
        %v3154 = vld [vmem:[%s2925 + $0x8] sm:$0x1]
        %v3155 = vld [vmem:[%s2925 + $0xc] sm:$0xf]
        %v3156 = vld [vmem:[%s2925 + $0x10] sm:$0xf]
        %v3157 = vld [vmem:[%s2925 + $0x14] sm:$0x1]
        %v3158 = vld [vmem:[%s2925 + $0x18] sm:$0xf]
        %v3159 = vld [vmem:[%s2925 + $0x1c] sm:$0xf]
        %v3160 = vld [vmem:[%s2925 + $0x20] sm:$0x1]
        %v3161 = vld [vmem:[%s2925 + $0x24] sm:$0xf]
        %v3162 = vld [vmem:[%s2925 + $0x28] sm:$0xf]
        %v3163 = vld [vmem:[%s2925 + $0x2c] sm:$0x1]
        %v3164 = vld [vmem:[%s2925 + $0x30] sm:$0xf]
        %v3165 = vld [vmem:[%s2925 + $0x34] sm:$0xf]
        %v3166 = vld [vmem:[%s2925 + $0x38] sm:$0x1]
        %v3167 = vld [vmem:[%s2925 + $0x3c] sm:$0xf]
        %v3168 = vld [vmem:[%s2925 + $0x40] sm:$0xf]
        %v3169 = vld [vmem:[%s2925 + $0x44] sm:$0x1]
        %v3170 = vld [vmem:[%s2925 + $0x48] sm:$0xf]
        %v3171 = vld [vmem:[%s2925 + $0x4c] sm:$0xf]
        %v3172 = vld [vmem:[%s2925 + $0x50] sm:$0x1]
        %v3173 = vld [vmem:[%s2925 + $0x54] sm:$0xf]
        %v3174 = vld [vmem:[%s2925 + $0x58] sm:$0xf]
        %v3175 = vld [vmem:[%s2925 + $0x5c] sm:$0x1]
        %v3177 = vshrl.u32 %v3152, 16
        %v3179 = vrot.slane %v3177, 4
        %v3180 = vshll.u32 %v3152, 16
        %v3182 = vrot.slane %v3180, 5
        %v3183 = vor.u32 %v3179, %v3182
        %v3184 = vrot.slane %v3183, 4
        %v3186 = vshll.u32 %v3153, 16
        %v3188 = vrot.slane %v3186, 5
        %v3189 = vsel %vm1166, %v3184, %v3188
        %v3190 = vshrl.u32 %v3153, 16
        %v3192 = vrot.slane %v3190, 4
        %v3193 = vor.u32 %v3192, %v3188
        %v3194 = vrot.slane %v3193, 4
        %v3196 = vshll.u32 %v3154, 16
        %v3198 = vrot.slane %v3196, 5
        %v3199 = vsel %vm1166, %v3194, %v3198
        %v3201 = vshrl.u32 %v3155, 16
        %v3203 = vrot.slane %v3201, 4
        %v3204 = vshll.u32 %v3155, 16
        %v3206 = vrot.slane %v3204, 5
        %v3207 = vor.u32 %v3203, %v3206
        %v3208 = vrot.slane %v3207, 4
        %v3210 = vshll.u32 %v3156, 16
        %v3212 = vrot.slane %v3210, 5
        %v3213 = vsel %vm1166, %v3208, %v3212
        %v3214 = vshrl.u32 %v3156, 16
        %v3216 = vrot.slane %v3214, 4
        %v3217 = vor.u32 %v3216, %v3212
        %v3218 = vrot.slane %v3217, 4
        %v3220 = vshll.u32 %v3157, 16
        %v3222 = vrot.slane %v3220, 5
        %v3223 = vsel %vm1166, %v3218, %v3222
        %v3225 = vshrl.u32 %v3158, 16
        %v3227 = vrot.slane %v3225, 4
        %v3228 = vshll.u32 %v3158, 16
        %v3230 = vrot.slane %v3228, 5
        %v3231 = vor.u32 %v3227, %v3230
        %v3232 = vrot.slane %v3231, 4
        %v3234 = vshll.u32 %v3159, 16
        %v3236 = vrot.slane %v3234, 5
        %v3237 = vsel %vm1166, %v3232, %v3236
        %v3238 = vshrl.u32 %v3159, 16
        %v3240 = vrot.slane %v3238, 4
        %v3241 = vor.u32 %v3240, %v3236
        %v3242 = vrot.slane %v3241, 4
        %v3244 = vshll.u32 %v3160, 16
        %v3246 = vrot.slane %v3244, 5
        %v3247 = vsel %vm1166, %v3242, %v3246
        %v3249 = vshrl.u32 %v3161, 16
        %v3251 = vrot.slane %v3249, 4
        %v3252 = vshll.u32 %v3161, 16
        %v3254 = vrot.slane %v3252, 5
        %v3255 = vor.u32 %v3251, %v3254
        %v3256 = vrot.slane %v3255, 4
        %v3258 = vshll.u32 %v3162, 16
        %v3260 = vrot.slane %v3258, 5
        %v3261 = vsel %vm1166, %v3256, %v3260
        %v3262 = vshrl.u32 %v3162, 16
        %v3264 = vrot.slane %v3262, 4
        %v3265 = vor.u32 %v3264, %v3260
        %v3266 = vrot.slane %v3265, 4
        %v3268 = vshll.u32 %v3163, 16
        %v3270 = vrot.slane %v3268, 5
        %v3271 = vsel %vm1166, %v3266, %v3270
        %v3273 = vshrl.u32 %v3164, 16
        %v3275 = vrot.slane %v3273, 4
        %v3276 = vshll.u32 %v3164, 16
        %v3278 = vrot.slane %v3276, 5
        %v3279 = vor.u32 %v3275, %v3278
        %v3280 = vrot.slane %v3279, 4
        %v3282 = vshll.u32 %v3165, 16
        %v3284 = vrot.slane %v3282, 5
        %v3285 = vsel %vm1166, %v3280, %v3284
        %v3286 = vshrl.u32 %v3165, 16
        %v3288 = vrot.slane %v3286, 4
        %v3289 = vor.u32 %v3288, %v3284
        %v3290 = vrot.slane %v3289, 4
        %v3292 = vshll.u32 %v3166, 16
        %v3294 = vrot.slane %v3292, 5
        %v3295 = vsel %vm1166, %v3290, %v3294
        %v3297 = vshrl.u32 %v3167, 16
        %v3299 = vrot.slane %v3297, 4
        %v3300 = vshll.u32 %v3167, 16
        %v3302 = vrot.slane %v3300, 5
        %v3303 = vor.u32 %v3299, %v3302
        %v3304 = vrot.slane %v3303, 4
        %v3306 = vshll.u32 %v3168, 16
        %v3308 = vrot.slane %v3306, 5
        %v3309 = vsel %vm1166, %v3304, %v3308
        %v3310 = vshrl.u32 %v3168, 16
        %v3312 = vrot.slane %v3310, 4
        %v3313 = vor.u32 %v3312, %v3308
        %v3314 = vrot.slane %v3313, 4
        %v3316 = vshll.u32 %v3169, 16
        %v3318 = vrot.slane %v3316, 5
        %v3319 = vsel %vm1166, %v3314, %v3318
        %v3321 = vshrl.u32 %v3170, 16
        %v3323 = vrot.slane %v3321, 4
        %v3324 = vshll.u32 %v3170, 16
        %v3326 = vrot.slane %v3324, 5
        %v3327 = vor.u32 %v3323, %v3326
        %v3328 = vrot.slane %v3327, 4
        %v3330 = vshll.u32 %v3171, 16
        %v3332 = vrot.slane %v3330, 5
        %v3333 = vsel %vm1166, %v3328, %v3332
        %v3334 = vshrl.u32 %v3171, 16
        %v3336 = vrot.slane %v3334, 4
        %v3337 = vor.u32 %v3336, %v3332
        %v3338 = vrot.slane %v3337, 4
        %v3340 = vshll.u32 %v3172, 16
        %v3342 = vrot.slane %v3340, 5
        %v3343 = vsel %vm1166, %v3338, %v3342
        %v3345 = vshrl.u32 %v3173, 16
        %v3347 = vrot.slane %v3345, 4
        %v3348 = vshll.u32 %v3173, 16
        %v3350 = vrot.slane %v3348, 5
        %v3351 = vor.u32 %v3347, %v3350
        %v3352 = vrot.slane %v3351, 4
        %v3354 = vshll.u32 %v3174, 16
        %v3356 = vrot.slane %v3354, 5
        %v3357 = vsel %vm1166, %v3352, %v3356
        %v3358 = vshrl.u32 %v3174, 16
        %v3360 = vrot.slane %v3358, 4
        %v3361 = vor.u32 %v3360, %v3356
        %v3362 = vrot.slane %v3361, 4
        %v3364 = vshll.u32 %v3175, 16
        %v3366 = vrot.slane %v3364, 5
        %v3367 = vsel %vm1166, %v3362, %v3366
        %s3368 = scalar_lea.vmem [#allocation6], 448
        %v3369 = vld [vmem:[%s3368] sm:$0xf]
        %v3370 = vld [vmem:[%s3368 + $0x4] sm:$0xf]
        %v3371 = vld [vmem:[%s3368 + $0x8] sm:$0xf]
        %v3372 = vld [vmem:[%s3368 + $0xc] sm:$0xf]
        %v3373 = vld [vmem:[%s3368 + $0x10] sm:$0xf]
        %v3374 = vld [vmem:[%s3368 + $0x14] sm:$0xf]
        %v3375 = vld [vmem:[%s3368 + $0x18] sm:$0xf]
        %v3376 = vld [vmem:[%s3368 + $0x1c] sm:$0xf]
        %v3377 = vld [vmem:[%s3368 + $0x20] sm:$0xf]
        %v3378 = vld [vmem:[%s3368 + $0x24] sm:$0xf]
        %v3379 = vld [vmem:[%s3368 + $0x28] sm:$0xf]
        %v3380 = vld [vmem:[%s3368 + $0x2c] sm:$0xf]
        %v3381 = vld [vmem:[%s3368 + $0x30] sm:$0xf]
        %v3382 = vld [vmem:[%s3368 + $0x34] sm:$0xf]
        %v3383 = vld [vmem:[%s3368 + $0x38] sm:$0xf]
        %v3384 = vld [vmem:[%s3368 + $0x3c] sm:$0xf]
        %v3385 = vunpack.c.l.b16 %v3189
        %v3386 = vunpack.c.l.b16 %v3199
        %v3387 = vunpack.c.l.b16 %v3213
        %v3388 = vunpack.c.l.b16 %v3223
        %v3389 = vunpack.c.l.b16 %v3237
        %v3390 = vunpack.c.l.b16 %v3247
        %v3391 = vunpack.c.l.b16 %v3261
        %v3392 = vunpack.c.l.b16 %v3271
        %v3393 = vunpack.c.l.b16 %v3285
        %v3394 = vunpack.c.l.b16 %v3295
        %v3395 = vunpack.c.l.b16 %v3309
        %v3396 = vunpack.c.l.b16 %v3319
        %v3397 = vunpack.c.l.b16 %v3333
        %v3398 = vunpack.c.l.b16 %v3343
        %v3399 = vunpack.c.l.b16 %v3357
        %v3400 = vunpack.c.l.b16 %v3367
        %v3401 = vpack.c.b16 %v3386, %v3385
        %v3402 = vpack.c.b16 %v3388, %v3387
        %v3403 = vpack.c.b16 %v3390, %v3389
        %v3404 = vpack.c.b16 %v3392, %v3391
        %v3405 = vpack.c.b16 %v3394, %v3393
        %v3406 = vpack.c.b16 %v3396, %v3395
        %v3407 = vpack.c.b16 %v3398, %v3397
        %v3408 = vpack.c.b16 %v3400, %v3399
        %v3433 = vunpack.c.l.b16 %v3369
        %v3434 = vunpack.c.l.b16 %v3370
        %v3435 = vunpack.c.l.b16 %v3371
        %v3436 = vunpack.c.l.b16 %v3372
        %v3437 = vunpack.c.l.b16 %v3373
        %v3438 = vunpack.c.l.b16 %v3374
        %v3439 = vunpack.c.l.b16 %v3375
        %v3440 = vunpack.c.l.b16 %v3376
        %v3441 = vunpack.c.l.b16 %v3377
        %v3442 = vunpack.c.l.b16 %v3378
        %v3443 = vunpack.c.l.b16 %v3379
        %v3444 = vunpack.c.l.b16 %v3380
        %v3445 = vunpack.c.l.b16 %v3381
        %v3446 = vunpack.c.l.b16 %v3382
        %v3447 = vunpack.c.l.b16 %v3383
        %v3448 = vunpack.c.l.b16 %v3384
        %v3449 = vpack.c.b16 %v3434, %v3433
        %v3450 = vpack.c.b16 %v3436, %v3435
        %v3451 = vpack.c.b16 %v3438, %v3437
        %v3452 = vpack.c.b16 %v3440, %v3439
        %v3453 = vpack.c.b16 %v3442, %v3441
        %v3454 = vpack.c.b16 %v3444, %v3443
        %v3455 = vpack.c.b16 %v3446, %v3445
        %v3456 = vpack.c.b16 %v3448, %v3447
        %3465 = vmatprep.subr.bf16.mxu0 0
        %3466 = vmatpush1.bf16.msra.mxu0 %v3456
        %3467 = vmatprep.subr.bf16.mxu0 0
        %3468 = vmatpush1.bf16.msra.mxu0 %v3455
        %3469 = vmatprep.subr.bf16.mxu0 0
        %3470 = vmatpush1.bf16.msra.mxu0 %v3454
        %3471 = vmatprep.subr.bf16.mxu0 0
        %3472 = vmatpush1.bf16.msra.mxu0 %v3453
        %3473 = vmatprep.subr.bf16.mxu0 0
        %3474 = vmatpush1.bf16.msra.mxu0 %v3452
        %3475 = vmatprep.subr.bf16.mxu0 0
        %3476 = vmatpush1.bf16.msra.mxu0 %v3451
        %3477 = vmatprep.subr.bf16.mxu0 0
        %3478 = vmatpush1.bf16.msra.mxu0 %v3450
        %3479 = vmatprep.subr.bf16.mxu0 0
        %3480 = vmatpush1.bf16.msra.mxu0 %v3449
        %3481 = vmatprep.subr.bf16.mxu0 0
        %3482 = vmatpush2.bf16.msra.mxu0 0
        %3483 = vmatprep.subr.bf16.mxu0 0
        %3484 = vmatpush2.bf16.msra.mxu0 0
        %3485 = vmatprep.subr.bf16.mxu0 0
        %3486 = vmatpush2.bf16.msra.mxu0 0
        %3487 = vmatprep.subr.bf16.mxu0 0
        %3488 = vmatpush2.bf16.msra.mxu0 0
        %3489 = vmatprep.subr.bf16.mxu0 0
        %3490 = vmatpush2.bf16.msra.mxu0 0
        %3491 = vmatprep.subr.bf16.mxu0 0
        %3492 = vmatpush2.bf16.msra.mxu0 0
        %3493 = vmatprep.subr.bf16.mxu0 0
        %3494 = vmatpush2.bf16.msra.mxu0 0
        %3495 = vmatprep.subr.bf16.mxu0 0
        %3496 = vmatpush2.bf16.msra.mxu0 0
        %3497 = vmatprep.mubr.bf16.mxu0 0
        %3498 = vmatmul.mubr.bf16.gmra.mxu0 %v3401
        %v3499 = vpop.f32.mrf.mxu0
        %v3500 = vadd.f32 0.0, %v3499
        %v3501 = vpop.f32.mrf.mxu0
        %v3502 = vpop.f32.mrf.mxu0
        %v3503 = vadd.f32 0.0, %v3502
        %v3504 = vpop.f32.mrf.mxu0
        %3505 = vmatprep.mubr.bf16.mxu0 0
        %3506 = vmatmul.mubr.bf16.gmra.mxu0 %v3402
        %v3507 = vpop.f32.mrf.mxu0
        %v3508 = vpop.f32.mrf.mxu0
        %v3509 = vpop.f32.mrf.mxu0
        %v3510 = vpop.f32.mrf.mxu0
        %3511 = vmatprep.mubr.bf16.mxu0 0
        %3512 = vmatmul.mubr.bf16.gmra.mxu0 %v3403
        %v3513 = vpop.f32.mrf.mxu0
        %v3514 = vadd.f32 0.0, %v3513
        %v3515 = vpop.f32.mrf.mxu0
        %v3516 = vpop.f32.mrf.mxu0
        %v3517 = vadd.f32 0.0, %v3516
        %v3518 = vpop.f32.mrf.mxu0
        %3519 = vmatprep.mubr.bf16.mxu0 0
        %3520 = vmatmul.mubr.bf16.gmra.mxu0 %v3404
        %v3521 = vpop.f32.mrf.mxu0
        %v3522 = vpop.f32.mrf.mxu0
        %v3523 = vpop.f32.mrf.mxu0
        %v3524 = vpop.f32.mrf.mxu0
        %3525 = vmatprep.mubr.bf16.mxu0 0
        %3526 = vmatmul.mubr.bf16.gmra.mxu0 %v3405
        %v3527 = vpop.f32.mrf.mxu0
        %v3528 = vadd.f32 0.0, %v3527
        %v3529 = vpop.f32.mrf.mxu0
        %v3530 = vpop.f32.mrf.mxu0
        %v3531 = vadd.f32 0.0, %v3530
        %v3532 = vpop.f32.mrf.mxu0
        %3533 = vmatprep.mubr.bf16.mxu0 0
        %3534 = vmatmul.mubr.bf16.gmra.mxu0 %v3406
        %v3535 = vpop.f32.mrf.mxu0
        %v3536 = vpop.f32.mrf.mxu0
        %v3537 = vpop.f32.mrf.mxu0
        %v3538 = vpop.f32.mrf.mxu0
        %3539 = vmatprep.mubr.bf16.mxu0 0
        %3540 = vmatmul.mubr.bf16.gmra.mxu0 %v3407
        %v3541 = vpop.f32.mrf.mxu0
        %v3542 = vadd.f32 0.0, %v3541
        %v3543 = vpop.f32.mrf.mxu0
        %v3544 = vpop.f32.mrf.mxu0
        %v3545 = vadd.f32 0.0, %v3544
        %v3546 = vpop.f32.mrf.mxu0
        %3547 = vmatprep.mubr.bf16.mxu0 0
        %3548 = vmatmul.mubr.bf16.gmra.mxu0 %v3408
        %v3549 = vpop.f32.mrf.mxu0
        %v3550 = vpop.f32.mrf.mxu0
        %v3551 = vpop.f32.mrf.mxu0
        %v3552 = vpop.f32.mrf.mxu0
        %3553 = vdwg.mxu0
        %v3554 = vadd.f32 %v3144, %v3500
        %v3555 = vadd.f32 %v3145, %v3503
        %v3556 = vadd.f32 %v3146, %v3514
        %v3557 = vadd.f32 %v3147, %v3517
        %v3558 = vadd.f32 %v3148, %v3528
        %v3559 = vadd.f32 %v3149, %v3531
        %v3560 = vadd.f32 %v3150, %v3542
        %v3561 = vadd.f32 %v3151, %v3545
        %v3562 = vld [vmem:[%s2925] sm:$0xe]
        %v3563 = vld [vmem:[%s2925 + $0xc] sm:$0xe]
        %v3564 = vld [vmem:[%s2925 + $0x18] sm:$0xe]
        %v3565 = vld [vmem:[%s2925 + $0x24] sm:$0xe]
        %v3566 = vld [vmem:[%s2925 + $0x30] sm:$0xe]
        %v3567 = vld [vmem:[%s2925 + $0x3c] sm:$0xe]
        %v3568 = vld [vmem:[%s2925 + $0x48] sm:$0xe]
        %v3569 = vld [vmem:[%s2925 + $0x54] sm:$0xe]
        %v3594 = vrot.slane %v3562, 5
        %v3595 = vrot.slane %v3594, 4
        %v3596 = vrot.slane %v3153, 5
        %v3597 = vsel %vm1756, %v3595, %v3596
        %v3598 = vrot.slane %v3596, 4
        %v3599 = vrot.slane %v3154, 5
        %v3600 = vsel %vm1756, %v3598, %v3599
        %v3601 = vrot.slane %v3563, 5
        %v3602 = vrot.slane %v3601, 4
        %v3603 = vrot.slane %v3156, 5
        %v3604 = vsel %vm1756, %v3602, %v3603
        %v3605 = vrot.slane %v3603, 4
        %v3606 = vrot.slane %v3157, 5
        %v3607 = vsel %vm1756, %v3605, %v3606
        %v3608 = vrot.slane %v3564, 5
        %v3609 = vrot.slane %v3608, 4
        %v3610 = vrot.slane %v3159, 5
        %v3611 = vsel %vm1756, %v3609, %v3610
        %v3612 = vrot.slane %v3610, 4
        %v3613 = vrot.slane %v3160, 5
        %v3614 = vsel %vm1756, %v3612, %v3613
        %v3615 = vrot.slane %v3565, 5
        %v3616 = vrot.slane %v3615, 4
        %v3617 = vrot.slane %v3162, 5
        %v3618 = vsel %vm1756, %v3616, %v3617
        %v3619 = vrot.slane %v3617, 4
        %v3620 = vrot.slane %v3163, 5
        %v3621 = vsel %vm1756, %v3619, %v3620
        %v3622 = vrot.slane %v3566, 5
        %v3623 = vrot.slane %v3622, 4
        %v3624 = vrot.slane %v3165, 5
        %v3625 = vsel %vm1756, %v3623, %v3624
        %v3626 = vrot.slane %v3624, 4
        %v3627 = vrot.slane %v3166, 5
        %v3628 = vsel %vm1756, %v3626, %v3627
        %v3629 = vrot.slane %v3567, 5
        %v3630 = vrot.slane %v3629, 4
        %v3631 = vrot.slane %v3168, 5
        %v3632 = vsel %vm1756, %v3630, %v3631
        %v3633 = vrot.slane %v3631, 4
        %v3634 = vrot.slane %v3169, 5
        %v3635 = vsel %vm1756, %v3633, %v3634
        %v3636 = vrot.slane %v3568, 5
        %v3637 = vrot.slane %v3636, 4
        %v3638 = vrot.slane %v3171, 5
        %v3639 = vsel %vm1756, %v3637, %v3638
        %v3640 = vrot.slane %v3638, 4
        %v3641 = vrot.slane %v3172, 5
        %v3642 = vsel %vm1756, %v3640, %v3641
        %v3643 = vrot.slane %v3569, 5
        %v3644 = vrot.slane %v3643, 4
        %v3645 = vrot.slane %v3174, 5
        %v3646 = vsel %vm1756, %v3644, %v3645
        %v3647 = vrot.slane %v3645, 4
        %v3648 = vrot.slane %v3175, 5
        %v3649 = vsel %vm1756, %v3647, %v3648
        %s3650 = scalar_lea.vmem [#allocation6], 512
        %v3651 = vld [vmem:[%s3650] sm:$0xf]
        %v3652 = vld [vmem:[%s3650 + $0x4] sm:$0xf]
        %v3653 = vld [vmem:[%s3650 + $0x8] sm:$0xf]
        %v3654 = vld [vmem:[%s3650 + $0xc] sm:$0xf]
        %v3655 = vld [vmem:[%s3650 + $0x10] sm:$0xf]
        %v3656 = vld [vmem:[%s3650 + $0x14] sm:$0xf]
        %v3657 = vld [vmem:[%s3650 + $0x18] sm:$0xf]
        %v3658 = vld [vmem:[%s3650 + $0x1c] sm:$0xf]
        %v3659 = vld [vmem:[%s3650 + $0x20] sm:$0xf]
        %v3660 = vld [vmem:[%s3650 + $0x24] sm:$0xf]
        %v3661 = vld [vmem:[%s3650 + $0x28] sm:$0xf]
        %v3662 = vld [vmem:[%s3650 + $0x2c] sm:$0xf]
        %v3663 = vld [vmem:[%s3650 + $0x30] sm:$0xf]
        %v3664 = vld [vmem:[%s3650 + $0x34] sm:$0xf]
        %v3665 = vld [vmem:[%s3650 + $0x38] sm:$0xf]
        %v3666 = vld [vmem:[%s3650 + $0x3c] sm:$0xf]
        %v3667 = vunpack.c.l.b16 %v3597
        %v3668 = vunpack.c.l.b16 %v3600
        %v3669 = vunpack.c.l.b16 %v3604
        %v3670 = vunpack.c.l.b16 %v3607
        %v3671 = vunpack.c.l.b16 %v3611
        %v3672 = vunpack.c.l.b16 %v3614
        %v3673 = vunpack.c.l.b16 %v3618
        %v3674 = vunpack.c.l.b16 %v3621
        %v3675 = vunpack.c.l.b16 %v3625
        %v3676 = vunpack.c.l.b16 %v3628
        %v3677 = vunpack.c.l.b16 %v3632
        %v3678 = vunpack.c.l.b16 %v3635
        %v3679 = vunpack.c.l.b16 %v3639
        %v3680 = vunpack.c.l.b16 %v3642
        %v3681 = vunpack.c.l.b16 %v3646
        %v3682 = vunpack.c.l.b16 %v3649
        %v3683 = vpack.c.b16 %v3668, %v3667
        %v3684 = vpack.c.b16 %v3670, %v3669
        %v3685 = vpack.c.b16 %v3672, %v3671
        %v3686 = vpack.c.b16 %v3674, %v3673
        %v3687 = vpack.c.b16 %v3676, %v3675
        %v3688 = vpack.c.b16 %v3678, %v3677
        %v3689 = vpack.c.b16 %v3680, %v3679
        %v3690 = vpack.c.b16 %v3682, %v3681
        %v3715 = vunpack.c.l.b16 %v3651
        %v3716 = vunpack.c.l.b16 %v3652
        %v3717 = vunpack.c.l.b16 %v3653
        %v3718 = vunpack.c.l.b16 %v3654
        %v3719 = vunpack.c.l.b16 %v3655
        %v3720 = vunpack.c.l.b16 %v3656
        %v3721 = vunpack.c.l.b16 %v3657
        %v3722 = vunpack.c.l.b16 %v3658
        %v3723 = vunpack.c.l.b16 %v3659
        %v3724 = vunpack.c.l.b16 %v3660
        %v3725 = vunpack.c.l.b16 %v3661
        %v3726 = vunpack.c.l.b16 %v3662
        %v3727 = vunpack.c.l.b16 %v3663
        %v3728 = vunpack.c.l.b16 %v3664
        %v3729 = vunpack.c.l.b16 %v3665
        %v3730 = vunpack.c.l.b16 %v3666
        %v3731 = vpack.c.b16 %v3716, %v3715
        %v3732 = vpack.c.b16 %v3718, %v3717
        %v3733 = vpack.c.b16 %v3720, %v3719
        %v3734 = vpack.c.b16 %v3722, %v3721
        %v3735 = vpack.c.b16 %v3724, %v3723
        %v3736 = vpack.c.b16 %v3726, %v3725
        %v3737 = vpack.c.b16 %v3728, %v3727
        %v3738 = vpack.c.b16 %v3730, %v3729
        %3747 = vmatprep.subr.bf16.mxu0 0
        %3748 = vmatpush1.bf16.msra.mxu0 %v3738
        %3749 = vmatprep.subr.bf16.mxu0 0
        %3750 = vmatpush1.bf16.msra.mxu0 %v3737
        %3751 = vmatprep.subr.bf16.mxu0 0
        %3752 = vmatpush1.bf16.msra.mxu0 %v3736
        %3753 = vmatprep.subr.bf16.mxu0 0
        %3754 = vmatpush1.bf16.msra.mxu0 %v3735
        %3755 = vmatprep.subr.bf16.mxu0 0
        %3756 = vmatpush1.bf16.msra.mxu0 %v3734
        %3757 = vmatprep.subr.bf16.mxu0 0
        %3758 = vmatpush1.bf16.msra.mxu0 %v3733
        %3759 = vmatprep.subr.bf16.mxu0 0
        %3760 = vmatpush1.bf16.msra.mxu0 %v3732
        %3761 = vmatprep.subr.bf16.mxu0 0
        %3762 = vmatpush1.bf16.msra.mxu0 %v3731
        %3763 = vmatprep.subr.bf16.mxu0 0
        %3764 = vmatpush2.bf16.msra.mxu0 0
        %3765 = vmatprep.subr.bf16.mxu0 0
        %3766 = vmatpush2.bf16.msra.mxu0 0
        %3767 = vmatprep.subr.bf16.mxu0 0
        %3768 = vmatpush2.bf16.msra.mxu0 0
        %3769 = vmatprep.subr.bf16.mxu0 0
        %3770 = vmatpush2.bf16.msra.mxu0 0
        %3771 = vmatprep.subr.bf16.mxu0 0
        %3772 = vmatpush2.bf16.msra.mxu0 0
        %3773 = vmatprep.subr.bf16.mxu0 0
        %3774 = vmatpush2.bf16.msra.mxu0 0
        %3775 = vmatprep.subr.bf16.mxu0 0
        %3776 = vmatpush2.bf16.msra.mxu0 0
        %3777 = vmatprep.subr.bf16.mxu0 0
        %3778 = vmatpush2.bf16.msra.mxu0 0
        %3779 = vmatprep.mubr.bf16.mxu0 0
        %3780 = vmatmul.mubr.bf16.gmra.mxu0 %v3683
        %v3781 = vpop.f32.mrf.mxu0
        %v3782 = vadd.f32 0.0, %v3781
        %v3783 = vpop.f32.mrf.mxu0
        %v3784 = vpop.f32.mrf.mxu0
        %v3785 = vadd.f32 0.0, %v3784
        %v3786 = vpop.f32.mrf.mxu0
        %3787 = vmatprep.mubr.bf16.mxu0 0
        %3788 = vmatmul.mubr.bf16.gmra.mxu0 %v3684
        %v3789 = vpop.f32.mrf.mxu0
        %v3790 = vpop.f32.mrf.mxu0
        %v3791 = vpop.f32.mrf.mxu0
        %v3792 = vpop.f32.mrf.mxu0
        %3793 = vmatprep.mubr.bf16.mxu0 0
        %3794 = vmatmul.mubr.bf16.gmra.mxu0 %v3685
        %v3795 = vpop.f32.mrf.mxu0
        %v3796 = vadd.f32 0.0, %v3795
        %v3797 = vpop.f32.mrf.mxu0
        %v3798 = vpop.f32.mrf.mxu0
        %v3799 = vadd.f32 0.0, %v3798
        %v3800 = vpop.f32.mrf.mxu0
        %3801 = vmatprep.mubr.bf16.mxu0 0
        %3802 = vmatmul.mubr.bf16.gmra.mxu0 %v3686
        %v3803 = vpop.f32.mrf.mxu0
        %v3804 = vpop.f32.mrf.mxu0
        %v3805 = vpop.f32.mrf.mxu0
        %v3806 = vpop.f32.mrf.mxu0
        %3807 = vmatprep.mubr.bf16.mxu0 0
        %3808 = vmatmul.mubr.bf16.gmra.mxu0 %v3687
        %v3809 = vpop.f32.mrf.mxu0
        %v3810 = vadd.f32 0.0, %v3809
        %v3811 = vpop.f32.mrf.mxu0
        %v3812 = vpop.f32.mrf.mxu0
        %v3813 = vadd.f32 0.0, %v3812
        %v3814 = vpop.f32.mrf.mxu0
        %3815 = vmatprep.mubr.bf16.mxu0 0
        %3816 = vmatmul.mubr.bf16.gmra.mxu0 %v3688
        %v3817 = vpop.f32.mrf.mxu0
        %v3818 = vpop.f32.mrf.mxu0
        %v3819 = vpop.f32.mrf.mxu0
        %v3820 = vpop.f32.mrf.mxu0
        %3821 = vmatprep.mubr.bf16.mxu0 0
        %3822 = vmatmul.mubr.bf16.gmra.mxu0 %v3689
        %v3823 = vpop.f32.mrf.mxu0
        %v3824 = vadd.f32 0.0, %v3823
        %v3825 = vpop.f32.mrf.mxu0
        %v3826 = vpop.f32.mrf.mxu0
        %v3827 = vadd.f32 0.0, %v3826
        %v3828 = vpop.f32.mrf.mxu0
        %3829 = vmatprep.mubr.bf16.mxu0 0
        %3830 = vmatmul.mubr.bf16.gmra.mxu0 %v3690
        %v3831 = vpop.f32.mrf.mxu0
        %v3832 = vpop.f32.mrf.mxu0
        %v3833 = vpop.f32.mrf.mxu0
        %v3834 = vpop.f32.mrf.mxu0
        %3835 = vdwg.mxu0
        %v3836 = vadd.f32 %v3554, %v3782
        %v3837 = vadd.f32 %v3555, %v3785
        %v3838 = vadd.f32 %v3556, %v3796
        %v3839 = vadd.f32 %v3557, %v3799
        %v3840 = vadd.f32 %v3558, %v3810
        %v3841 = vadd.f32 %v3559, %v3813
        %v3842 = vadd.f32 %v3560, %v3824
        %v3843 = vadd.f32 %v3561, %v3827
        %v3852 = vcombine.high %v3836, %v3836
        %v3854 = vunpack.c.l.s4 1983009808
        %v3855 = vunpack.c.0.s8 %v3854
        %v3856 = vlaneseq
        %v3857 = vshrl.u32 %v3856, 7
        %v3858 = vsub.s32 %v3855, %v3857
        %v3859 = vrot.slane %v3836, %v3858
        %v3861 = vunpack.c.l.s4 1983009808
        %v3862 = vunpack.c.0.s8 %v3861
        %v3863 = vlaneseq
        %v3864 = vshrl.u32 %v3863, 7
        %v3865 = vsub.s32 %v3862, %v3864
        %v3866 = vrot.slane %v3852, %v3865
        %v3867 = vcombine.high %v3859, %v3859
        %v3868 = vcombine.high %v3866, %v3866
        %v3869 = vcombine.high %v3837, %v3837
        %v3871 = vunpack.c.l.s4 1983009808
        %v3872 = vunpack.c.0.s8 %v3871
        %v3873 = vlaneseq
        %v3874 = vshrl.u32 %v3873, 7
        %v3875 = vsub.s32 %v3872, %v3874
        %v3876 = vrot.slane %v3837, %v3875
        %v3878 = vunpack.c.l.s4 1983009808
        %v3879 = vunpack.c.0.s8 %v3878
        %v3880 = vlaneseq
        %v3881 = vshrl.u32 %v3880, 7
        %v3882 = vsub.s32 %v3879, %v3881
        %v3883 = vrot.slane %v3869, %v3882
        %v3884 = vcombine.high %v3876, %v3876
        %v3885 = vcombine.high %v3883, %v3883
        %v3886 = vcombine.high %v3838, %v3838
        %v3888 = vunpack.c.l.s4 1983009808
        %v3889 = vunpack.c.0.s8 %v3888
        %v3890 = vlaneseq
        %v3891 = vshrl.u32 %v3890, 7
        %v3892 = vsub.s32 %v3889, %v3891
        %v3893 = vrot.slane %v3838, %v3892
        %v3895 = vunpack.c.l.s4 1983009808
        %v3896 = vunpack.c.0.s8 %v3895
        %v3897 = vlaneseq
        %v3898 = vshrl.u32 %v3897, 7
        %v3899 = vsub.s32 %v3896, %v3898
        %v3900 = vrot.slane %v3886, %v3899
        %v3901 = vcombine.high %v3893, %v3893
        %v3902 = vcombine.high %v3900, %v3900
        %v3903 = vcombine.high %v3839, %v3839
        %v3905 = vunpack.c.l.s4 1983009808
        %v3906 = vunpack.c.0.s8 %v3905
        %v3907 = vlaneseq
        %v3908 = vshrl.u32 %v3907, 7
        %v3909 = vsub.s32 %v3906, %v3908
        %v3910 = vrot.slane %v3839, %v3909
        %v3912 = vunpack.c.l.s4 1983009808
        %v3913 = vunpack.c.0.s8 %v3912
        %v3914 = vlaneseq
        %v3915 = vshrl.u32 %v3914, 7
        %v3916 = vsub.s32 %v3913, %v3915
        %v3917 = vrot.slane %v3903, %v3916
        %v3918 = vcombine.high %v3910, %v3910
        %v3919 = vcombine.high %v3917, %v3917
        %v3920 = vcombine.high %v3840, %v3840
        %v3922 = vunpack.c.l.s4 1983009808
        %v3923 = vunpack.c.0.s8 %v3922
        %v3924 = vlaneseq
        %v3925 = vshrl.u32 %v3924, 7
        %v3926 = vsub.s32 %v3923, %v3925
        %v3927 = vrot.slane %v3840, %v3926
        %v3929 = vunpack.c.l.s4 1983009808
        %v3930 = vunpack.c.0.s8 %v3929
        %v3931 = vlaneseq
        %v3932 = vshrl.u32 %v3931, 7
        %v3933 = vsub.s32 %v3930, %v3932
        %v3934 = vrot.slane %v3920, %v3933
        %v3935 = vcombine.high %v3927, %v3927
        %v3936 = vcombine.high %v3934, %v3934
        %v3937 = vcombine.high %v3841, %v3841
        %v3939 = vunpack.c.l.s4 1983009808
        %v3940 = vunpack.c.0.s8 %v3939
        %v3941 = vlaneseq
        %v3942 = vshrl.u32 %v3941, 7
        %v3943 = vsub.s32 %v3940, %v3942
        %v3944 = vrot.slane %v3841, %v3943
        %v3946 = vunpack.c.l.s4 1983009808
        %v3947 = vunpack.c.0.s8 %v3946
        %v3948 = vlaneseq
        %v3949 = vshrl.u32 %v3948, 7
        %v3950 = vsub.s32 %v3947, %v3949
        %v3951 = vrot.slane %v3937, %v3950
        %v3952 = vcombine.high %v3944, %v3944
        %v3953 = vcombine.high %v3951, %v3951
        %v3954 = vcombine.high %v3842, %v3842
        %v3956 = vunpack.c.l.s4 1983009808
        %v3957 = vunpack.c.0.s8 %v3956
        %v3958 = vlaneseq
        %v3959 = vshrl.u32 %v3958, 7
        %v3960 = vsub.s32 %v3957, %v3959
        %v3961 = vrot.slane %v3842, %v3960
        %v3963 = vunpack.c.l.s4 1983009808
        %v3964 = vunpack.c.0.s8 %v3963
        %v3965 = vlaneseq
        %v3966 = vshrl.u32 %v3965, 7
        %v3967 = vsub.s32 %v3964, %v3966
        %v3968 = vrot.slane %v3954, %v3967
        %v3969 = vcombine.high %v3961, %v3961
        %v3970 = vcombine.high %v3968, %v3968
        %v3971 = vcombine.high %v3843, %v3843
        %v3973 = vunpack.c.l.s4 1983009808
        %v3974 = vunpack.c.0.s8 %v3973
        %v3975 = vlaneseq
        %v3976 = vshrl.u32 %v3975, 7
        %v3977 = vsub.s32 %v3974, %v3976
        %v3978 = vrot.slane %v3843, %v3977
        %v3980 = vunpack.c.l.s4 1983009808
        %v3981 = vunpack.c.0.s8 %v3980
        %v3982 = vlaneseq
        %v3983 = vshrl.u32 %v3982, 7
        %v3984 = vsub.s32 %v3981, %v3983
        %v3985 = vrot.slane %v3971, %v3984
        %v3986 = vcombine.high %v3978, %v3978
        %v3987 = vcombine.high %v3985, %v3985
        %v4020 = vpack.c.bf16 %v3859, %v3859
        %v4021 = vpack.c.bf16 %v3867, %v3867
        %v4022 = vpack.c.bf16 %v3866, %v3866
        %v4023 = vpack.c.bf16 %v3868, %v3868
        %v4024 = vpack.c.bf16 %v3876, %v3876
        %v4025 = vpack.c.bf16 %v3884, %v3884
        %v4026 = vpack.c.bf16 %v3883, %v3883
        %v4027 = vpack.c.bf16 %v3885, %v3885
        %v4028 = vpack.c.bf16 %v3893, %v3893
        %v4029 = vpack.c.bf16 %v3901, %v3901
        %v4030 = vpack.c.bf16 %v3900, %v3900
        %v4031 = vpack.c.bf16 %v3902, %v3902
        %v4032 = vpack.c.bf16 %v3910, %v3910
        %v4033 = vpack.c.bf16 %v3918, %v3918
        %v4034 = vpack.c.bf16 %v3917, %v3917
        %v4035 = vpack.c.bf16 %v3919, %v3919
        %v4036 = vpack.c.bf16 %v3927, %v3927
        %v4037 = vpack.c.bf16 %v3935, %v3935
        %v4038 = vpack.c.bf16 %v3934, %v3934
        %v4039 = vpack.c.bf16 %v3936, %v3936
        %v4040 = vpack.c.bf16 %v3944, %v3944
        %v4041 = vpack.c.bf16 %v3952, %v3952
        %v4042 = vpack.c.bf16 %v3951, %v3951
        %v4043 = vpack.c.bf16 %v3953, %v3953
        %v4044 = vpack.c.bf16 %v3961, %v3961
        %v4045 = vpack.c.bf16 %v3969, %v3969
        %v4046 = vpack.c.bf16 %v3968, %v3968
        %v4047 = vpack.c.bf16 %v3970, %v3970
        %v4048 = vpack.c.bf16 %v3978, %v3978
        %v4049 = vpack.c.bf16 %v3986, %v3986
        %v4050 = vpack.c.bf16 %v3985, %v3985
        %v4051 = vpack.c.bf16 %v3987, %v3987
        %v4084 = vunpack.c.l.b16 %v4020
        %v4085 = vunpack.c.l.b16 %v4021
        %v4086 = vunpack.c.l.b16 %v4022
        %v4087 = vunpack.c.l.b16 %v4023
        %v4088 = vunpack.c.l.b16 %v4024
        %v4089 = vunpack.c.l.b16 %v4025
        %v4090 = vunpack.c.l.b16 %v4026
        %v4091 = vunpack.c.l.b16 %v4027
        %v4092 = vunpack.c.l.b16 %v4028
        %v4093 = vunpack.c.l.b16 %v4029
        %v4094 = vunpack.c.l.b16 %v4030
        %v4095 = vunpack.c.l.b16 %v4031
        %v4096 = vunpack.c.l.b16 %v4032
        %v4097 = vunpack.c.l.b16 %v4033
        %v4098 = vunpack.c.l.b16 %v4034
        %v4099 = vunpack.c.l.b16 %v4035
        %v4100 = vunpack.c.l.b16 %v4036
        %v4101 = vunpack.c.l.b16 %v4037
        %v4102 = vunpack.c.l.b16 %v4038
        %v4103 = vunpack.c.l.b16 %v4039
        %v4104 = vunpack.c.l.b16 %v4040
        %v4105 = vunpack.c.l.b16 %v4041
        %v4106 = vunpack.c.l.b16 %v4042
        %v4107 = vunpack.c.l.b16 %v4043
        %v4108 = vunpack.c.l.b16 %v4044
        %v4109 = vunpack.c.l.b16 %v4045
        %v4110 = vunpack.c.l.b16 %v4046
        %v4111 = vunpack.c.l.b16 %v4047
        %v4112 = vunpack.c.l.b16 %v4048
        %v4113 = vunpack.c.l.b16 %v4049
        %v4114 = vunpack.c.l.b16 %v4050
        %v4115 = vunpack.c.l.b16 %v4051
        %v4116 = vpack.c.b16 %v4084, %v4084
        %v4117 = vpack.c.b16 %v4085, %v4085
        %v4118 = vpack.c.b16 %v4086, %v4086
        %v4119 = vpack.c.b16 %v4087, %v4087
        %v4120 = vpack.c.b16 %v4088, %v4088
        %v4121 = vpack.c.b16 %v4089, %v4089
        %v4122 = vpack.c.b16 %v4090, %v4090
        %v4123 = vpack.c.b16 %v4091, %v4091
        %v4124 = vpack.c.b16 %v4092, %v4092
        %v4125 = vpack.c.b16 %v4093, %v4093
        %v4126 = vpack.c.b16 %v4094, %v4094
        %v4127 = vpack.c.b16 %v4095, %v4095
        %v4128 = vpack.c.b16 %v4096, %v4096
        %v4129 = vpack.c.b16 %v4097, %v4097
        %v4130 = vpack.c.b16 %v4098, %v4098
        %v4131 = vpack.c.b16 %v4099, %v4099
        %v4132 = vpack.c.b16 %v4100, %v4100
        %v4133 = vpack.c.b16 %v4101, %v4101
        %v4134 = vpack.c.b16 %v4102, %v4102
        %v4135 = vpack.c.b16 %v4103, %v4103
        %v4136 = vpack.c.b16 %v4104, %v4104
        %v4137 = vpack.c.b16 %v4105, %v4105
        %v4138 = vpack.c.b16 %v4106, %v4106
        %v4139 = vpack.c.b16 %v4107, %v4107
        %v4140 = vpack.c.b16 %v4108, %v4108
        %v4141 = vpack.c.b16 %v4109, %v4109
        %v4142 = vpack.c.b16 %v4110, %v4110
        %v4143 = vpack.c.b16 %v4111, %v4111
        %v4144 = vpack.c.b16 %v4112, %v4112
        %v4145 = vpack.c.b16 %v4113, %v4113
        %v4146 = vpack.c.b16 %v4114, %v4114
        %v4147 = vpack.c.b16 %v4115, %v4115
        %v4148 = vunpack.c.l.b16 %v4116
        %v4149 = vunpack.c.l.b16 %v4117
        %v4150 = vunpack.c.l.b16 %v4118
        %v4151 = vunpack.c.l.b16 %v4119
        %v4152 = vunpack.c.l.b16 %v4120
        %v4153 = vunpack.c.l.b16 %v4121
        %v4154 = vunpack.c.l.b16 %v4122
        %v4155 = vunpack.c.l.b16 %v4123
        %v4156 = vunpack.c.l.b16 %v4124
        %v4157 = vunpack.c.l.b16 %v4125
        %v4158 = vunpack.c.l.b16 %v4126
        %v4159 = vunpack.c.l.b16 %v4127
        %v4160 = vunpack.c.l.b16 %v4128
        %v4161 = vunpack.c.l.b16 %v4129
        %v4162 = vunpack.c.l.b16 %v4130
        %v4163 = vunpack.c.l.b16 %v4131
        %v4164 = vunpack.c.l.b16 %v4132
        %v4165 = vunpack.c.l.b16 %v4133
        %v4166 = vunpack.c.l.b16 %v4134
        %v4167 = vunpack.c.l.b16 %v4135
        %v4168 = vunpack.c.l.b16 %v4136
        %v4169 = vunpack.c.l.b16 %v4137
        %v4170 = vunpack.c.l.b16 %v4138
        %v4171 = vunpack.c.l.b16 %v4139
        %v4172 = vunpack.c.l.b16 %v4140
        %v4173 = vunpack.c.l.b16 %v4141
        %v4174 = vunpack.c.l.b16 %v4142
        %v4175 = vunpack.c.l.b16 %v4143
        %v4176 = vunpack.c.l.b16 %v4144
        %v4177 = vunpack.c.l.b16 %v4145
        %v4178 = vunpack.c.l.b16 %v4146
        %v4179 = vunpack.c.l.b16 %v4147
        %v4180 = vrot.slane %v4149, 7
        %vm4181 = vcmask 1041409
        %v4182 = vsel %vm4181, %v4180, %v4148
        %v4183 = vrot.slane %v4150, 6
        %vm4184 = vcmask 1042434
        %v4185 = vsel %vm4184, %v4183, %v4182
        %v4186 = vrot.slane %v4151, 5
        %vm4187 = vcmask 1043459
        %v4188 = vsel %vm4187, %v4186, %v4185
        %v4189 = vrot.slane %v4152, 4
        %vm4190 = vcmask 1044484
        %v4191 = vsel %vm4190, %v4189, %v4188
        %v4192 = vrot.slane %v4153, 3
        %vm4193 = vcmask 1045509
        %v4194 = vsel %vm4193, %v4192, %v4191
        %v4195 = vrot.slane %v4154, 2
        %vm4196 = vcmask 1046534
        %v4197 = vsel %vm4196, %v4195, %v4194
        %v4198 = vrot.slane %v4155, 1
        %vm4199 = vcmask 1047559
        %v4200 = vsel %vm4199, %v4198, %v4197
        %v4201 = vrot.slane %v4157, 7
        %v4202 = vsel %vm4181, %v4201, %v4156
        %v4203 = vrot.slane %v4158, 6
        %v4204 = vsel %vm4184, %v4203, %v4202
        %v4205 = vrot.slane %v4159, 5
        %v4206 = vsel %vm4187, %v4205, %v4204
        %v4207 = vrot.slane %v4160, 4
        %v4208 = vsel %vm4190, %v4207, %v4206
        %v4209 = vrot.slane %v4161, 3
        %v4210 = vsel %vm4193, %v4209, %v4208
        %v4211 = vrot.slane %v4162, 2
        %v4212 = vsel %vm4196, %v4211, %v4210
        %v4213 = vrot.slane %v4163, 1
        %v4214 = vsel %vm4199, %v4213, %v4212
        %v4215 = vrot.slane %v4165, 7
        %v4216 = vsel %vm4181, %v4215, %v4164
        %v4217 = vrot.slane %v4166, 6
        %v4218 = vsel %vm4184, %v4217, %v4216
        %v4219 = vrot.slane %v4167, 5
        %v4220 = vsel %vm4187, %v4219, %v4218
        %v4221 = vrot.slane %v4168, 4
        %v4222 = vsel %vm4190, %v4221, %v4220
        %v4223 = vrot.slane %v4169, 3
        %v4224 = vsel %vm4193, %v4223, %v4222
        %v4225 = vrot.slane %v4170, 2
        %v4226 = vsel %vm4196, %v4225, %v4224
        %v4227 = vrot.slane %v4171, 1
        %v4228 = vsel %vm4199, %v4227, %v4226
        %v4229 = vrot.slane %v4173, 7
        %v4230 = vsel %vm4181, %v4229, %v4172
        %v4231 = vrot.slane %v4174, 6
        %v4232 = vsel %vm4184, %v4231, %v4230
        %v4233 = vrot.slane %v4175, 5
        %v4234 = vsel %vm4187, %v4233, %v4232
        %v4235 = vrot.slane %v4176, 4
        %v4236 = vsel %vm4190, %v4235, %v4234
        %v4237 = vrot.slane %v4177, 3
        %v4238 = vsel %vm4193, %v4237, %v4236
        %v4239 = vrot.slane %v4178, 2
        %v4240 = vsel %vm4196, %v4239, %v4238
        %v4241 = vrot.slane %v4179, 1
        %v4242 = vsel %vm4199, %v4241, %v4240
        %v4243 = vpack.c.b16 %v4200, %v4200
        %v4244 = vpack.c.b16 %v4214, %v4214
        %v4245 = vpack.c.b16 %v4228, %v4228
        %v4246 = vpack.c.b16 %v4242, %v4242
        %4251 = vst [vmem:[%s332] sm:$0xf] %v4243
        %4252 = vst [vmem:[%s332 + $0x4] sm:$0xf] %v4244
        %4253 = vst [vmem:[%s332 + $0x8] sm:$0xf] %v4245
        %4254 = vst [vmem:[%s332 + $0xc] sm:$0xf] %v4246
        %v4255 = vld [vmem:[%s506] sm:$0xf]
        %v4256 = vld [vmem:[%s506 + $0x4] sm:$0xf]
        %v4257 = vld [vmem:[%s506 + $0x8] sm:$0x1]
        %v4258 = vld [vmem:[%s506 + $0xc] sm:$0xf]
        %v4259 = vld [vmem:[%s506 + $0x10] sm:$0xf]
        %v4260 = vld [vmem:[%s506 + $0x14] sm:$0x1]
        %v4261 = vld [vmem:[%s506 + $0x18] sm:$0xf]
        %v4262 = vld [vmem:[%s506 + $0x1c] sm:$0xf]
        %v4263 = vld [vmem:[%s506 + $0x20] sm:$0x1]
        %v4264 = vld [vmem:[%s506 + $0x24] sm:$0xf]
        %v4265 = vld [vmem:[%s506 + $0x28] sm:$0xf]
        %v4266 = vld [vmem:[%s506 + $0x2c] sm:$0x1]
        %v4267 = vld [vmem:[%s506 + $0x30] sm:$0xf]
        %v4268 = vld [vmem:[%s506 + $0x34] sm:$0xf]
        %v4269 = vld [vmem:[%s506 + $0x38] sm:$0x1]
        %v4270 = vld [vmem:[%s506 + $0x3c] sm:$0xf]
        %v4271 = vld [vmem:[%s506 + $0x40] sm:$0xf]
        %v4272 = vld [vmem:[%s506 + $0x44] sm:$0x1]
        %v4273 = vld [vmem:[%s506 + $0x48] sm:$0xf]
        %v4274 = vld [vmem:[%s506 + $0x4c] sm:$0xf]
        %v4275 = vld [vmem:[%s506 + $0x50] sm:$0x1]
        %v4276 = vld [vmem:[%s506 + $0x54] sm:$0xf]
        %v4277 = vld [vmem:[%s506 + $0x58] sm:$0xf]
        %v4278 = vld [vmem:[%s506 + $0x5c] sm:$0x1]
        %v4280 = vshrl.u32 %v4255, 16
        %v4282 = vrot.slane %v4280, 4
        %v4283 = vshll.u32 %v4255, 16
        %v4285 = vrot.slane %v4283, 5
        %v4286 = vor.u32 %v4282, %v4285
        %v4287 = vrot.slane %v4286, 4
        %v4289 = vshll.u32 %v4256, 16
        %v4291 = vrot.slane %v4289, 5
        %v4292 = vsel %vm1166, %v4287, %v4291
        %v4293 = vshrl.u32 %v4256, 16
        %v4295 = vrot.slane %v4293, 4
        %v4296 = vor.u32 %v4295, %v4291
        %v4297 = vrot.slane %v4296, 4
        %v4299 = vshll.u32 %v4257, 16
        %v4301 = vrot.slane %v4299, 5
        %v4302 = vsel %vm1166, %v4297, %v4301
        %v4304 = vshrl.u32 %v4258, 16
        %v4306 = vrot.slane %v4304, 4
        %v4307 = vshll.u32 %v4258, 16
        %v4309 = vrot.slane %v4307, 5
        %v4310 = vor.u32 %v4306, %v4309
        %v4311 = vrot.slane %v4310, 4
        %v4313 = vshll.u32 %v4259, 16
        %v4315 = vrot.slane %v4313, 5
        %v4316 = vsel %vm1166, %v4311, %v4315
        %v4317 = vshrl.u32 %v4259, 16
        %v4319 = vrot.slane %v4317, 4
        %v4320 = vor.u32 %v4319, %v4315
        %v4321 = vrot.slane %v4320, 4
        %v4323 = vshll.u32 %v4260, 16
        %v4325 = vrot.slane %v4323, 5
        %v4326 = vsel %vm1166, %v4321, %v4325
        %v4328 = vshrl.u32 %v4261, 16
        %v4330 = vrot.slane %v4328, 4
        %v4331 = vshll.u32 %v4261, 16
        %v4333 = vrot.slane %v4331, 5
        %v4334 = vor.u32 %v4330, %v4333
        %v4335 = vrot.slane %v4334, 4
        %v4337 = vshll.u32 %v4262, 16
        %v4339 = vrot.slane %v4337, 5
        %v4340 = vsel %vm1166, %v4335, %v4339
        %v4341 = vshrl.u32 %v4262, 16
        %v4343 = vrot.slane %v4341, 4
        %v4344 = vor.u32 %v4343, %v4339
        %v4345 = vrot.slane %v4344, 4
        %v4347 = vshll.u32 %v4263, 16
        %v4349 = vrot.slane %v4347, 5
        %v4350 = vsel %vm1166, %v4345, %v4349
        %v4352 = vshrl.u32 %v4264, 16
        %v4354 = vrot.slane %v4352, 4
        %v4355 = vshll.u32 %v4264, 16
        %v4357 = vrot.slane %v4355, 5
        %v4358 = vor.u32 %v4354, %v4357
        %v4359 = vrot.slane %v4358, 4
        %v4361 = vshll.u32 %v4265, 16
        %v4363 = vrot.slane %v4361, 5
        %v4364 = vsel %vm1166, %v4359, %v4363
        %v4365 = vshrl.u32 %v4265, 16
        %v4367 = vrot.slane %v4365, 4
        %v4368 = vor.u32 %v4367, %v4363
        %v4369 = vrot.slane %v4368, 4
        %v4371 = vshll.u32 %v4266, 16
        %v4373 = vrot.slane %v4371, 5
        %v4374 = vsel %vm1166, %v4369, %v4373
        %v4376 = vshrl.u32 %v4267, 16
        %v4378 = vrot.slane %v4376, 4
        %v4379 = vshll.u32 %v4267, 16
        %v4381 = vrot.slane %v4379, 5
        %v4382 = vor.u32 %v4378, %v4381
        %v4383 = vrot.slane %v4382, 4
        %v4385 = vshll.u32 %v4268, 16
        %v4387 = vrot.slane %v4385, 5
        %v4388 = vsel %vm1166, %v4383, %v4387
        %v4389 = vshrl.u32 %v4268, 16
        %v4391 = vrot.slane %v4389, 4
        %v4392 = vor.u32 %v4391, %v4387
        %v4393 = vrot.slane %v4392, 4
        %v4395 = vshll.u32 %v4269, 16
        %v4397 = vrot.slane %v4395, 5
        %v4398 = vsel %vm1166, %v4393, %v4397
        %v4400 = vshrl.u32 %v4270, 16
        %v4402 = vrot.slane %v4400, 4
        %v4403 = vshll.u32 %v4270, 16
        %v4405 = vrot.slane %v4403, 5
        %v4406 = vor.u32 %v4402, %v4405
        %v4407 = vrot.slane %v4406, 4
        %v4409 = vshll.u32 %v4271, 16
        %v4411 = vrot.slane %v4409, 5
        %v4412 = vsel %vm1166, %v4407, %v4411
        %v4413 = vshrl.u32 %v4271, 16
        %v4415 = vrot.slane %v4413, 4
        %v4416 = vor.u32 %v4415, %v4411
        %v4417 = vrot.slane %v4416, 4
        %v4419 = vshll.u32 %v4272, 16
        %v4421 = vrot.slane %v4419, 5
        %v4422 = vsel %vm1166, %v4417, %v4421
        %v4424 = vshrl.u32 %v4273, 16
        %v4426 = vrot.slane %v4424, 4
        %v4427 = vshll.u32 %v4273, 16
        %v4429 = vrot.slane %v4427, 5
        %v4430 = vor.u32 %v4426, %v4429
        %v4431 = vrot.slane %v4430, 4
        %v4433 = vshll.u32 %v4274, 16
        %v4435 = vrot.slane %v4433, 5
        %v4436 = vsel %vm1166, %v4431, %v4435
        %v4437 = vshrl.u32 %v4274, 16
        %v4439 = vrot.slane %v4437, 4
        %v4440 = vor.u32 %v4439, %v4435
        %v4441 = vrot.slane %v4440, 4
        %v4443 = vshll.u32 %v4275, 16
        %v4445 = vrot.slane %v4443, 5
        %v4446 = vsel %vm1166, %v4441, %v4445
        %v4448 = vshrl.u32 %v4276, 16
        %v4450 = vrot.slane %v4448, 4
        %v4451 = vshll.u32 %v4276, 16
        %v4453 = vrot.slane %v4451, 5
        %v4454 = vor.u32 %v4450, %v4453
        %v4455 = vrot.slane %v4454, 4
        %v4457 = vshll.u32 %v4277, 16
        %v4459 = vrot.slane %v4457, 5
        %v4460 = vsel %vm1166, %v4455, %v4459
        %v4461 = vshrl.u32 %v4277, 16
        %v4463 = vrot.slane %v4461, 4
        %v4464 = vor.u32 %v4463, %v4459
        %v4465 = vrot.slane %v4464, 4
        %v4467 = vshll.u32 %v4278, 16
        %v4469 = vrot.slane %v4467, 5
        %v4470 = vsel %vm1166, %v4465, %v4469
        %v4471 = vld [vmem:[#allocation8] sm:$0xf]
        %v4472 = vld [vmem:[#allocation8 + $0x4] sm:$0xf]
        %v4473 = vld [vmem:[#allocation8 + $0x8] sm:$0xf]
        %v4474 = vld [vmem:[#allocation8 + $0xc] sm:$0xf]
        %v4475 = vld [vmem:[#allocation8 + $0x10] sm:$0xf]
        %v4476 = vld [vmem:[#allocation8 + $0x14] sm:$0xf]
        %v4477 = vld [vmem:[#allocation8 + $0x18] sm:$0xf]
        %v4478 = vld [vmem:[#allocation8 + $0x1c] sm:$0xf]
        %v4479 = vld [vmem:[#allocation8 + $0x20] sm:$0xf]
        %v4480 = vld [vmem:[#allocation8 + $0x24] sm:$0xf]
        %v4481 = vld [vmem:[#allocation8 + $0x28] sm:$0xf]
        %v4482 = vld [vmem:[#allocation8 + $0x2c] sm:$0xf]
        %v4483 = vld [vmem:[#allocation8 + $0x30] sm:$0xf]
        %v4484 = vld [vmem:[#allocation8 + $0x34] sm:$0xf]
        %v4485 = vld [vmem:[#allocation8 + $0x38] sm:$0xf]
        %v4486 = vld [vmem:[#allocation8 + $0x3c] sm:$0xf]
        %v4487 = vunpack.c.l.b16 %v4292
        %v4488 = vunpack.c.l.b16 %v4302
        %v4489 = vunpack.c.l.b16 %v4316
        %v4490 = vunpack.c.l.b16 %v4326
        %v4491 = vunpack.c.l.b16 %v4340
        %v4492 = vunpack.c.l.b16 %v4350
        %v4493 = vunpack.c.l.b16 %v4364
        %v4494 = vunpack.c.l.b16 %v4374
        %v4495 = vunpack.c.l.b16 %v4388
        %v4496 = vunpack.c.l.b16 %v4398
        %v4497 = vunpack.c.l.b16 %v4412
        %v4498 = vunpack.c.l.b16 %v4422
        %v4499 = vunpack.c.l.b16 %v4436
        %v4500 = vunpack.c.l.b16 %v4446
        %v4501 = vunpack.c.l.b16 %v4460
        %v4502 = vunpack.c.l.b16 %v4470
        %v4503 = vpack.c.b16 %v4488, %v4487
        %v4504 = vpack.c.b16 %v4490, %v4489
        %v4505 = vpack.c.b16 %v4492, %v4491
        %v4506 = vpack.c.b16 %v4494, %v4493
        %v4507 = vpack.c.b16 %v4496, %v4495
        %v4508 = vpack.c.b16 %v4498, %v4497
        %v4509 = vpack.c.b16 %v4500, %v4499
        %v4510 = vpack.c.b16 %v4502, %v4501
        %v4535 = vunpack.c.l.b16 %v4471
        %v4536 = vunpack.c.l.b16 %v4472
        %v4537 = vunpack.c.l.b16 %v4473
        %v4538 = vunpack.c.l.b16 %v4474
        %v4539 = vunpack.c.l.b16 %v4475
        %v4540 = vunpack.c.l.b16 %v4476
        %v4541 = vunpack.c.l.b16 %v4477
        %v4542 = vunpack.c.l.b16 %v4478
        %v4543 = vunpack.c.l.b16 %v4479
        %v4544 = vunpack.c.l.b16 %v4480
        %v4545 = vunpack.c.l.b16 %v4481
        %v4546 = vunpack.c.l.b16 %v4482
        %v4547 = vunpack.c.l.b16 %v4483
        %v4548 = vunpack.c.l.b16 %v4484
        %v4549 = vunpack.c.l.b16 %v4485
        %v4550 = vunpack.c.l.b16 %v4486
        %v4551 = vpack.c.b16 %v4536, %v4535
        %v4552 = vpack.c.b16 %v4538, %v4537
        %v4553 = vpack.c.b16 %v4540, %v4539
        %v4554 = vpack.c.b16 %v4542, %v4541
        %v4555 = vpack.c.b16 %v4544, %v4543
        %v4556 = vpack.c.b16 %v4546, %v4545
        %v4557 = vpack.c.b16 %v4548, %v4547
        %v4558 = vpack.c.b16 %v4550, %v4549
        %4567 = vmatprep.subr.bf16.mxu0 0
        %4568 = vmatpush1.bf16.msra.mxu0 %v4558
        %4569 = vmatprep.subr.bf16.mxu0 0
        %4570 = vmatpush1.bf16.msra.mxu0 %v4557
        %4571 = vmatprep.subr.bf16.mxu0 0
        %4572 = vmatpush1.bf16.msra.mxu0 %v4556
        %4573 = vmatprep.subr.bf16.mxu0 0
        %4574 = vmatpush1.bf16.msra.mxu0 %v4555
        %4575 = vmatprep.subr.bf16.mxu0 0
        %4576 = vmatpush1.bf16.msra.mxu0 %v4554
        %4577 = vmatprep.subr.bf16.mxu0 0
        %4578 = vmatpush1.bf16.msra.mxu0 %v4553
        %4579 = vmatprep.subr.bf16.mxu0 0
        %4580 = vmatpush1.bf16.msra.mxu0 %v4552
        %4581 = vmatprep.subr.bf16.mxu0 0
        %4582 = vmatpush1.bf16.msra.mxu0 %v4551
        %4583 = vmatprep.subr.bf16.mxu0 0
        %4584 = vmatpush2.bf16.msra.mxu0 0
        %4585 = vmatprep.subr.bf16.mxu0 0
        %4586 = vmatpush2.bf16.msra.mxu0 0
        %4587 = vmatprep.subr.bf16.mxu0 0
        %4588 = vmatpush2.bf16.msra.mxu0 0
        %4589 = vmatprep.subr.bf16.mxu0 0
        %4590 = vmatpush2.bf16.msra.mxu0 0
        %4591 = vmatprep.subr.bf16.mxu0 0
        %4592 = vmatpush2.bf16.msra.mxu0 0
        %4593 = vmatprep.subr.bf16.mxu0 0
        %4594 = vmatpush2.bf16.msra.mxu0 0
        %4595 = vmatprep.subr.bf16.mxu0 0
        %4596 = vmatpush2.bf16.msra.mxu0 0
        %4597 = vmatprep.subr.bf16.mxu0 0
        %4598 = vmatpush2.bf16.msra.mxu0 0
        %4599 = vmatprep.mubr.bf16.mxu0 0
        %4600 = vmatmul.mubr.bf16.gmra.mxu0 %v4503
        %v4601 = vpop.f32.mrf.mxu0
        %v4602 = vadd.f32 0.0, %v4601
        %v4603 = vpop.f32.mrf.mxu0
        %v4604 = vpop.f32.mrf.mxu0
        %v4605 = vadd.f32 0.0, %v4604
        %v4606 = vpop.f32.mrf.mxu0
        %4607 = vmatprep.mubr.bf16.mxu0 0
        %4608 = vmatmul.mubr.bf16.gmra.mxu0 %v4504
        %v4609 = vpop.f32.mrf.mxu0
        %v4610 = vpop.f32.mrf.mxu0
        %v4611 = vpop.f32.mrf.mxu0
        %v4612 = vpop.f32.mrf.mxu0
        %4613 = vmatprep.mubr.bf16.mxu0 0
        %4614 = vmatmul.mubr.bf16.gmra.mxu0 %v4505
        %v4615 = vpop.f32.mrf.mxu0
        %v4616 = vadd.f32 0.0, %v4615
        %v4617 = vpop.f32.mrf.mxu0
        %v4618 = vpop.f32.mrf.mxu0
        %v4619 = vadd.f32 0.0, %v4618
        %v4620 = vpop.f32.mrf.mxu0
        %4621 = vmatprep.mubr.bf16.mxu0 0
        %4622 = vmatmul.mubr.bf16.gmra.mxu0 %v4506
        %v4623 = vpop.f32.mrf.mxu0
        %v4624 = vpop.f32.mrf.mxu0
        %v4625 = vpop.f32.mrf.mxu0
        %v4626 = vpop.f32.mrf.mxu0
        %4627 = vmatprep.mubr.bf16.mxu0 0
        %4628 = vmatmul.mubr.bf16.gmra.mxu0 %v4507
        %v4629 = vpop.f32.mrf.mxu0
        %v4630 = vadd.f32 0.0, %v4629
        %v4631 = vpop.f32.mrf.mxu0
        %v4632 = vpop.f32.mrf.mxu0
        %v4633 = vadd.f32 0.0, %v4632
        %v4634 = vpop.f32.mrf.mxu0
        %4635 = vmatprep.mubr.bf16.mxu0 0
        %4636 = vmatmul.mubr.bf16.gmra.mxu0 %v4508
        %v4637 = vpop.f32.mrf.mxu0
        %v4638 = vpop.f32.mrf.mxu0
        %v4639 = vpop.f32.mrf.mxu0
        %v4640 = vpop.f32.mrf.mxu0
        %4641 = vmatprep.mubr.bf16.mxu0 0
        %4642 = vmatmul.mubr.bf16.gmra.mxu0 %v4509
        %v4643 = vpop.f32.mrf.mxu0
        %v4644 = vadd.f32 0.0, %v4643
        %v4645 = vpop.f32.mrf.mxu0
        %v4646 = vpop.f32.mrf.mxu0
        %v4647 = vadd.f32 0.0, %v4646
        %v4648 = vpop.f32.mrf.mxu0
        %4649 = vmatprep.mubr.bf16.mxu0 0
        %4650 = vmatmul.mubr.bf16.gmra.mxu0 %v4510
        %v4651 = vpop.f32.mrf.mxu0
        %v4652 = vpop.f32.mrf.mxu0
        %v4653 = vpop.f32.mrf.mxu0
        %v4654 = vpop.f32.mrf.mxu0
        %4655 = vdwg.mxu0
        %v4664 = vcombine.high %v4602, %v4602
        %v4666 = vunpack.c.l.s4 1983009808
        %v4667 = vunpack.c.0.s8 %v4666
        %v4668 = vlaneseq
        %v4669 = vshrl.u32 %v4668, 7
        %v4670 = vsub.s32 %v4667, %v4669
        %v4671 = vrot.slane %v4602, %v4670
        %v4673 = vunpack.c.l.s4 1983009808
        %v4674 = vunpack.c.0.s8 %v4673
        %v4675 = vlaneseq
        %v4676 = vshrl.u32 %v4675, 7
        %v4677 = vsub.s32 %v4674, %v4676
        %v4678 = vrot.slane %v4664, %v4677
        %v4679 = vcombine.high %v4671, %v4671
        %v4680 = vcombine.high %v4678, %v4678
        %v4681 = vcombine.high %v4605, %v4605
        %v4683 = vunpack.c.l.s4 1983009808
        %v4684 = vunpack.c.0.s8 %v4683
        %v4685 = vlaneseq
        %v4686 = vshrl.u32 %v4685, 7
        %v4687 = vsub.s32 %v4684, %v4686
        %v4688 = vrot.slane %v4605, %v4687
        %v4690 = vunpack.c.l.s4 1983009808
        %v4691 = vunpack.c.0.s8 %v4690
        %v4692 = vlaneseq
        %v4693 = vshrl.u32 %v4692, 7
        %v4694 = vsub.s32 %v4691, %v4693
        %v4695 = vrot.slane %v4681, %v4694
        %v4696 = vcombine.high %v4688, %v4688
        %v4697 = vcombine.high %v4695, %v4695
        %v4698 = vcombine.high %v4616, %v4616
        %v4700 = vunpack.c.l.s4 1983009808
        %v4701 = vunpack.c.0.s8 %v4700
        %v4702 = vlaneseq
        %v4703 = vshrl.u32 %v4702, 7
        %v4704 = vsub.s32 %v4701, %v4703
        %v4705 = vrot.slane %v4616, %v4704
        %v4707 = vunpack.c.l.s4 1983009808
        %v4708 = vunpack.c.0.s8 %v4707
        %v4709 = vlaneseq
        %v4710 = vshrl.u32 %v4709, 7
        %v4711 = vsub.s32 %v4708, %v4710
        %v4712 = vrot.slane %v4698, %v4711
        %v4713 = vcombine.high %v4705, %v4705
        %v4714 = vcombine.high %v4712, %v4712
        %v4715 = vcombine.high %v4619, %v4619
        %v4717 = vunpack.c.l.s4 1983009808
        %v4718 = vunpack.c.0.s8 %v4717
        %v4719 = vlaneseq
        %v4720 = vshrl.u32 %v4719, 7
        %v4721 = vsub.s32 %v4718, %v4720
        %v4722 = vrot.slane %v4619, %v4721
        %v4724 = vunpack.c.l.s4 1983009808
        %v4725 = vunpack.c.0.s8 %v4724
        %v4726 = vlaneseq
        %v4727 = vshrl.u32 %v4726, 7
        %v4728 = vsub.s32 %v4725, %v4727
        %v4729 = vrot.slane %v4715, %v4728
        %v4730 = vcombine.high %v4722, %v4722
        %v4731 = vcombine.high %v4729, %v4729
        %v4732 = vcombine.high %v4630, %v4630
        %v4734 = vunpack.c.l.s4 1983009808
        %v4735 = vunpack.c.0.s8 %v4734
        %v4736 = vlaneseq
        %v4737 = vshrl.u32 %v4736, 7
        %v4738 = vsub.s32 %v4735, %v4737
        %v4739 = vrot.slane %v4630, %v4738
        %v4741 = vunpack.c.l.s4 1983009808
        %v4742 = vunpack.c.0.s8 %v4741
        %v4743 = vlaneseq
        %v4744 = vshrl.u32 %v4743, 7
        %v4745 = vsub.s32 %v4742, %v4744
        %v4746 = vrot.slane %v4732, %v4745
        %v4747 = vcombine.high %v4739, %v4739
        %v4748 = vcombine.high %v4746, %v4746
        %v4749 = vcombine.high %v4633, %v4633
        %v4751 = vunpack.c.l.s4 1983009808
        %v4752 = vunpack.c.0.s8 %v4751
        %v4753 = vlaneseq
        %v4754 = vshrl.u32 %v4753, 7
        %v4755 = vsub.s32 %v4752, %v4754
        %v4756 = vrot.slane %v4633, %v4755
        %v4758 = vunpack.c.l.s4 1983009808
        %v4759 = vunpack.c.0.s8 %v4758
        %v4760 = vlaneseq
        %v4761 = vshrl.u32 %v4760, 7
        %v4762 = vsub.s32 %v4759, %v4761
        %v4763 = vrot.slane %v4749, %v4762
        %v4764 = vcombine.high %v4756, %v4756
        %v4765 = vcombine.high %v4763, %v4763
        %v4766 = vcombine.high %v4644, %v4644
        %v4768 = vunpack.c.l.s4 1983009808
        %v4769 = vunpack.c.0.s8 %v4768
        %v4770 = vlaneseq
        %v4771 = vshrl.u32 %v4770, 7
        %v4772 = vsub.s32 %v4769, %v4771
        %v4773 = vrot.slane %v4644, %v4772
        %v4775 = vunpack.c.l.s4 1983009808
        %v4776 = vunpack.c.0.s8 %v4775
        %v4777 = vlaneseq
        %v4778 = vshrl.u32 %v4777, 7
        %v4779 = vsub.s32 %v4776, %v4778
        %v4780 = vrot.slane %v4766, %v4779
        %v4781 = vcombine.high %v4773, %v4773
        %v4782 = vcombine.high %v4780, %v4780
        %v4783 = vcombine.high %v4647, %v4647
        %v4785 = vunpack.c.l.s4 1983009808
        %v4786 = vunpack.c.0.s8 %v4785
        %v4787 = vlaneseq
        %v4788 = vshrl.u32 %v4787, 7
        %v4789 = vsub.s32 %v4786, %v4788
        %v4790 = vrot.slane %v4647, %v4789
        %v4792 = vunpack.c.l.s4 1983009808
        %v4793 = vunpack.c.0.s8 %v4792
        %v4794 = vlaneseq
        %v4795 = vshrl.u32 %v4794, 7
        %v4796 = vsub.s32 %v4793, %v4795
        %v4797 = vrot.slane %v4783, %v4796
        %v4798 = vcombine.high %v4790, %v4790
        %v4799 = vcombine.high %v4797, %v4797
        %v4832 = vpack.c.bf16 %v4671, %v4671
        %v4833 = vpack.c.bf16 %v4679, %v4679
        %v4834 = vpack.c.bf16 %v4678, %v4678
        %v4835 = vpack.c.bf16 %v4680, %v4680
        %v4836 = vpack.c.bf16 %v4688, %v4688
        %v4837 = vpack.c.bf16 %v4696, %v4696
        %v4838 = vpack.c.bf16 %v4695, %v4695
        %v4839 = vpack.c.bf16 %v4697, %v4697
        %v4840 = vpack.c.bf16 %v4705, %v4705
        %v4841 = vpack.c.bf16 %v4713, %v4713
        %v4842 = vpack.c.bf16 %v4712, %v4712
        %v4843 = vpack.c.bf16 %v4714, %v4714
        %v4844 = vpack.c.bf16 %v4722, %v4722
        %v4845 = vpack.c.bf16 %v4730, %v4730
        %v4846 = vpack.c.bf16 %v4729, %v4729
        %v4847 = vpack.c.bf16 %v4731, %v4731
        %v4848 = vpack.c.bf16 %v4739, %v4739
        %v4849 = vpack.c.bf16 %v4747, %v4747
        %v4850 = vpack.c.bf16 %v4746, %v4746
        %v4851 = vpack.c.bf16 %v4748, %v4748
        %v4852 = vpack.c.bf16 %v4756, %v4756
        %v4853 = vpack.c.bf16 %v4764, %v4764
        %v4854 = vpack.c.bf16 %v4763, %v4763
        %v4855 = vpack.c.bf16 %v4765, %v4765
        %v4856 = vpack.c.bf16 %v4773, %v4773
        %v4857 = vpack.c.bf16 %v4781, %v4781
        %v4858 = vpack.c.bf16 %v4780, %v4780
        %v4859 = vpack.c.bf16 %v4782, %v4782
        %v4860 = vpack.c.bf16 %v4790, %v4790
        %v4861 = vpack.c.bf16 %v4798, %v4798
        %v4862 = vpack.c.bf16 %v4797, %v4797
        %v4863 = vpack.c.bf16 %v4799, %v4799
        %v4896 = vunpack.c.l.b16 %v4832
        %v4897 = vunpack.c.l.b16 %v4833
        %v4898 = vunpack.c.l.b16 %v4834
        %v4899 = vunpack.c.l.b16 %v4835
        %v4900 = vunpack.c.l.b16 %v4836
        %v4901 = vunpack.c.l.b16 %v4837
        %v4902 = vunpack.c.l.b16 %v4838
        %v4903 = vunpack.c.l.b16 %v4839
        %v4904 = vunpack.c.l.b16 %v4840
        %v4905 = vunpack.c.l.b16 %v4841
        %v4906 = vunpack.c.l.b16 %v4842
        %v4907 = vunpack.c.l.b16 %v4843
        %v4908 = vunpack.c.l.b16 %v4844
        %v4909 = vunpack.c.l.b16 %v4845
        %v4910 = vunpack.c.l.b16 %v4846
        %v4911 = vunpack.c.l.b16 %v4847
        %v4912 = vunpack.c.l.b16 %v4848
        %v4913 = vunpack.c.l.b16 %v4849
        %v4914 = vunpack.c.l.b16 %v4850
        %v4915 = vunpack.c.l.b16 %v4851
        %v4916 = vunpack.c.l.b16 %v4852
        %v4917 = vunpack.c.l.b16 %v4853
        %v4918 = vunpack.c.l.b16 %v4854
        %v4919 = vunpack.c.l.b16 %v4855
        %v4920 = vunpack.c.l.b16 %v4856
        %v4921 = vunpack.c.l.b16 %v4857
        %v4922 = vunpack.c.l.b16 %v4858
        %v4923 = vunpack.c.l.b16 %v4859
        %v4924 = vunpack.c.l.b16 %v4860
        %v4925 = vunpack.c.l.b16 %v4861
        %v4926 = vunpack.c.l.b16 %v4862
        %v4927 = vunpack.c.l.b16 %v4863
        %v4928 = vpack.c.b16 %v4896, %v4896
        %v4929 = vpack.c.b16 %v4897, %v4897
        %v4930 = vpack.c.b16 %v4898, %v4898
        %v4931 = vpack.c.b16 %v4899, %v4899
        %v4932 = vpack.c.b16 %v4900, %v4900
        %v4933 = vpack.c.b16 %v4901, %v4901
        %v4934 = vpack.c.b16 %v4902, %v4902
        %v4935 = vpack.c.b16 %v4903, %v4903
        %v4936 = vpack.c.b16 %v4904, %v4904
        %v4937 = vpack.c.b16 %v4905, %v4905
        %v4938 = vpack.c.b16 %v4906, %v4906
        %v4939 = vpack.c.b16 %v4907, %v4907
        %v4940 = vpack.c.b16 %v4908, %v4908
        %v4941 = vpack.c.b16 %v4909, %v4909
        %v4942 = vpack.c.b16 %v4910, %v4910
        %v4943 = vpack.c.b16 %v4911, %v4911
        %v4944 = vpack.c.b16 %v4912, %v4912
        %v4945 = vpack.c.b16 %v4913, %v4913
        %v4946 = vpack.c.b16 %v4914, %v4914
        %v4947 = vpack.c.b16 %v4915, %v4915
        %v4948 = vpack.c.b16 %v4916, %v4916
        %v4949 = vpack.c.b16 %v4917, %v4917
        %v4950 = vpack.c.b16 %v4918, %v4918
        %v4951 = vpack.c.b16 %v4919, %v4919
        %v4952 = vpack.c.b16 %v4920, %v4920
        %v4953 = vpack.c.b16 %v4921, %v4921
        %v4954 = vpack.c.b16 %v4922, %v4922
        %v4955 = vpack.c.b16 %v4923, %v4923
        %v4956 = vpack.c.b16 %v4924, %v4924
        %v4957 = vpack.c.b16 %v4925, %v4925
        %v4958 = vpack.c.b16 %v4926, %v4926
        %v4959 = vpack.c.b16 %v4927, %v4927
        %v4960 = vunpack.c.l.b16 %v4928
        %v4961 = vunpack.c.l.b16 %v4929
        %v4962 = vunpack.c.l.b16 %v4930
        %v4963 = vunpack.c.l.b16 %v4931
        %v4964 = vunpack.c.l.b16 %v4932
        %v4965 = vunpack.c.l.b16 %v4933
        %v4966 = vunpack.c.l.b16 %v4934
        %v4967 = vunpack.c.l.b16 %v4935
        %v4968 = vunpack.c.l.b16 %v4936
        %v4969 = vunpack.c.l.b16 %v4937
        %v4970 = vunpack.c.l.b16 %v4938
        %v4971 = vunpack.c.l.b16 %v4939
        %v4972 = vunpack.c.l.b16 %v4940
        %v4973 = vunpack.c.l.b16 %v4941
        %v4974 = vunpack.c.l.b16 %v4942
        %v4975 = vunpack.c.l.b16 %v4943
        %v4976 = vunpack.c.l.b16 %v4944
        %v4977 = vunpack.c.l.b16 %v4945
        %v4978 = vunpack.c.l.b16 %v4946
        %v4979 = vunpack.c.l.b16 %v4947
        %v4980 = vunpack.c.l.b16 %v4948
        %v4981 = vunpack.c.l.b16 %v4949
        %v4982 = vunpack.c.l.b16 %v4950
        %v4983 = vunpack.c.l.b16 %v4951
        %v4984 = vunpack.c.l.b16 %v4952
        %v4985 = vunpack.c.l.b16 %v4953
        %v4986 = vunpack.c.l.b16 %v4954
        %v4987 = vunpack.c.l.b16 %v4955
        %v4988 = vunpack.c.l.b16 %v4956
        %v4989 = vunpack.c.l.b16 %v4957
        %v4990 = vunpack.c.l.b16 %v4958
        %v4991 = vunpack.c.l.b16 %v4959
        %v4992 = vrot.slane %v4961, 7
        %v4993 = vsel %vm4181, %v4992, %v4960
        %v4994 = vrot.slane %v4962, 6
        %v4995 = vsel %vm4184, %v4994, %v4993
        %v4996 = vrot.slane %v4963, 5
        %v4997 = vsel %vm4187, %v4996, %v4995
        %v4998 = vrot.slane %v4964, 4
        %v4999 = vsel %vm4190, %v4998, %v4997
        %v5000 = vrot.slane %v4965, 3
        %v5001 = vsel %vm4193, %v5000, %v4999
        %v5002 = vrot.slane %v4966, 2
        %v5003 = vsel %vm4196, %v5002, %v5001
        %v5004 = vrot.slane %v4967, 1
        %v5005 = vsel %vm4199, %v5004, %v5003
        %v5006 = vrot.slane %v4969, 7
        %v5007 = vsel %vm4181, %v5006, %v4968
        %v5008 = vrot.slane %v4970, 6
        %v5009 = vsel %vm4184, %v5008, %v5007
        %v5010 = vrot.slane %v4971, 5
        %v5011 = vsel %vm4187, %v5010, %v5009
        %v5012 = vrot.slane %v4972, 4
        %v5013 = vsel %vm4190, %v5012, %v5011
        %v5014 = vrot.slane %v4973, 3
        %v5015 = vsel %vm4193, %v5014, %v5013
        %v5016 = vrot.slane %v4974, 2
        %v5017 = vsel %vm4196, %v5016, %v5015
        %v5018 = vrot.slane %v4975, 1
        %v5019 = vsel %vm4199, %v5018, %v5017
        %v5020 = vrot.slane %v4977, 7
        %v5021 = vsel %vm4181, %v5020, %v4976
        %v5022 = vrot.slane %v4978, 6
        %v5023 = vsel %vm4184, %v5022, %v5021
        %v5024 = vrot.slane %v4979, 5
        %v5025 = vsel %vm4187, %v5024, %v5023
        %v5026 = vrot.slane %v4980, 4
        %v5027 = vsel %vm4190, %v5026, %v5025
        %v5028 = vrot.slane %v4981, 3
        %v5029 = vsel %vm4193, %v5028, %v5027
        %v5030 = vrot.slane %v4982, 2
        %v5031 = vsel %vm4196, %v5030, %v5029
        %v5032 = vrot.slane %v4983, 1
        %v5033 = vsel %vm4199, %v5032, %v5031
        %v5034 = vrot.slane %v4985, 7
        %v5035 = vsel %vm4181, %v5034, %v4984
        %v5036 = vrot.slane %v4986, 6
        %v5037 = vsel %vm4184, %v5036, %v5035
        %v5038 = vrot.slane %v4987, 5
        %v5039 = vsel %vm4187, %v5038, %v5037
        %v5040 = vrot.slane %v4988, 4
        %v5041 = vsel %vm4190, %v5040, %v5039
        %v5042 = vrot.slane %v4989, 3
        %v5043 = vsel %vm4193, %v5042, %v5041
        %v5044 = vrot.slane %v4990, 2
        %v5045 = vsel %vm4196, %v5044, %v5043
        %v5046 = vrot.slane %v4991, 1
        %v5047 = vsel %vm4199, %v5046, %v5045
        %v5048 = vpack.c.b16 %v5005, %v5005
        %v5049 = vpack.c.b16 %v5019, %v5019
        %v5050 = vpack.c.b16 %v5033, %v5033
        %v5051 = vpack.c.b16 %v5047, %v5047
        %5056 = vst [vmem:[%s339] sm:$0xf] %v5048
        %5057 = vst [vmem:[%s339 + $0x4] sm:$0xf] %v5049
        %5058 = vst [vmem:[%s339 + $0x8] sm:$0xf] %v5050
        %5059 = vst [vmem:[%s339 + $0xc] sm:$0xf] %v5051
        %s5060 = scalar_lea.vmem [#allocation2], 96
        %v5061 = vld [vmem:[%s5060] sm:$0xf]
        %v5062 = vld [vmem:[%s5060 + $0x4] sm:$0xf]
        %v5063 = vld [vmem:[%s5060 + $0xc] sm:$0xf]
        %v5064 = vld [vmem:[%s5060 + $0x10] sm:$0xf]
        %v5065 = vld [vmem:[%s5060 + $0x18] sm:$0xf]
        %v5066 = vld [vmem:[%s5060 + $0x1c] sm:$0xf]
        %v5067 = vld [vmem:[%s5060 + $0x24] sm:$0xf]
        %v5068 = vld [vmem:[%s5060 + $0x28] sm:$0xf]
        %v5069 = vld [vmem:[%s5060 + $0x30] sm:$0xf]
        %v5070 = vld [vmem:[%s5060 + $0x34] sm:$0xf]
        %v5071 = vld [vmem:[%s5060 + $0x3c] sm:$0xf]
        %v5072 = vld [vmem:[%s5060 + $0x40] sm:$0xf]
        %v5073 = vld [vmem:[%s5060 + $0x48] sm:$0xf]
        %v5074 = vld [vmem:[%s5060 + $0x4c] sm:$0xf]
        %v5075 = vld [vmem:[%s5060 + $0x54] sm:$0xf]
        %v5076 = vld [vmem:[%s5060 + $0x58] sm:$0xf]
        %v5077 = vld [vmem:[#allocation6] sm:$0xf]
        %v5078 = vld [vmem:[#allocation6 + $0x4] sm:$0xf]
        %v5079 = vld [vmem:[#allocation6 + $0x8] sm:$0xf]
        %v5080 = vld [vmem:[#allocation6 + $0xc] sm:$0xf]
        %v5081 = vld [vmem:[#allocation6 + $0x10] sm:$0xf]
        %v5082 = vld [vmem:[#allocation6 + $0x14] sm:$0xf]
        %v5083 = vld [vmem:[#allocation6 + $0x18] sm:$0xf]
        %v5084 = vld [vmem:[#allocation6 + $0x1c] sm:$0xf]
        %v5085 = vld [vmem:[#allocation6 + $0x20] sm:$0xf]
        %v5086 = vld [vmem:[#allocation6 + $0x24] sm:$0xf]
        %v5087 = vld [vmem:[#allocation6 + $0x28] sm:$0xf]
        %v5088 = vld [vmem:[#allocation6 + $0x2c] sm:$0xf]
        %v5089 = vld [vmem:[#allocation6 + $0x30] sm:$0xf]
        %v5090 = vld [vmem:[#allocation6 + $0x34] sm:$0xf]
        %v5091 = vld [vmem:[#allocation6 + $0x38] sm:$0xf]
        %v5092 = vld [vmem:[#allocation6 + $0x3c] sm:$0xf]
        %v5093 = vld [vmem:[%s5060 + $0x8] sm:$0x1]
        %v5094 = vld [vmem:[%s5060 + $0x14] sm:$0x1]
        %v5095 = vld [vmem:[%s5060 + $0x20] sm:$0x1]
        %v5096 = vld [vmem:[%s5060 + $0x2c] sm:$0x1]
        %v5097 = vld [vmem:[%s5060 + $0x38] sm:$0x1]
        %v5098 = vld [vmem:[%s5060 + $0x44] sm:$0x1]
        %v5099 = vld [vmem:[%s5060 + $0x50] sm:$0x1]
        %v5100 = vld [vmem:[%s5060 + $0x5c] sm:$0x1]
        %v5102 = vshrl.u32 %v5061, 16
        %v5104 = vrot.slane %v5102, 4
        %v5105 = vshll.u32 %v5061, 16
        %v5107 = vrot.slane %v5105, 5
        %v5108 = vor.u32 %v5104, %v5107
        %v5109 = vrot.slane %v5108, 4
        %v5111 = vshll.u32 %v5062, 16
        %v5113 = vrot.slane %v5111, 5
        %v5114 = vsel %vm1166, %v5109, %v5113
        %v5115 = vshrl.u32 %v5062, 16
        %v5117 = vrot.slane %v5115, 4
        %v5118 = vor.u32 %v5117, %v5113
        %v5119 = vrot.slane %v5118, 4
        %v5121 = vshll.u32 %v5093, 16
        %v5123 = vrot.slane %v5121, 5
        %v5124 = vsel %vm1166, %v5119, %v5123
        %v5126 = vshrl.u32 %v5063, 16
        %v5128 = vrot.slane %v5126, 4
        %v5129 = vshll.u32 %v5063, 16
        %v5131 = vrot.slane %v5129, 5
        %v5132 = vor.u32 %v5128, %v5131
        %v5133 = vrot.slane %v5132, 4
        %v5135 = vshll.u32 %v5064, 16
        %v5137 = vrot.slane %v5135, 5
        %v5138 = vsel %vm1166, %v5133, %v5137
        %v5139 = vshrl.u32 %v5064, 16
        %v5141 = vrot.slane %v5139, 4
        %v5142 = vor.u32 %v5141, %v5137
        %v5143 = vrot.slane %v5142, 4
        %v5145 = vshll.u32 %v5094, 16
        %v5147 = vrot.slane %v5145, 5
        %v5148 = vsel %vm1166, %v5143, %v5147
        %v5150 = vshrl.u32 %v5065, 16
        %v5152 = vrot.slane %v5150, 4
        %v5153 = vshll.u32 %v5065, 16
        %v5155 = vrot.slane %v5153, 5
        %v5156 = vor.u32 %v5152, %v5155
        %v5157 = vrot.slane %v5156, 4
        %v5159 = vshll.u32 %v5066, 16
        %v5161 = vrot.slane %v5159, 5
        %v5162 = vsel %vm1166, %v5157, %v5161
        %v5163 = vshrl.u32 %v5066, 16
        %v5165 = vrot.slane %v5163, 4
        %v5166 = vor.u32 %v5165, %v5161
        %v5167 = vrot.slane %v5166, 4
        %v5169 = vshll.u32 %v5095, 16
        %v5171 = vrot.slane %v5169, 5
        %v5172 = vsel %vm1166, %v5167, %v5171
        %v5174 = vshrl.u32 %v5067, 16
        %v5176 = vrot.slane %v5174, 4
        %v5177 = vshll.u32 %v5067, 16
        %v5179 = vrot.slane %v5177, 5
        %v5180 = vor.u32 %v5176, %v5179
        %v5181 = vrot.slane %v5180, 4
        %v5183 = vshll.u32 %v5068, 16
        %v5185 = vrot.slane %v5183, 5
        %v5186 = vsel %vm1166, %v5181, %v5185
        %v5187 = vshrl.u32 %v5068, 16
        %v5189 = vrot.slane %v5187, 4
        %v5190 = vor.u32 %v5189, %v5185
        %v5191 = vrot.slane %v5190, 4
        %v5193 = vshll.u32 %v5096, 16
        %v5195 = vrot.slane %v5193, 5
        %v5196 = vsel %vm1166, %v5191, %v5195
        %v5198 = vshrl.u32 %v5069, 16
        %v5200 = vrot.slane %v5198, 4
        %v5201 = vshll.u32 %v5069, 16
        %v5203 = vrot.slane %v5201, 5
        %v5204 = vor.u32 %v5200, %v5203
        %v5205 = vrot.slane %v5204, 4
        %v5207 = vshll.u32 %v5070, 16
        %v5209 = vrot.slane %v5207, 5
        %v5210 = vsel %vm1166, %v5205, %v5209
        %v5211 = vshrl.u32 %v5070, 16
        %v5213 = vrot.slane %v5211, 4
        %v5214 = vor.u32 %v5213, %v5209
        %v5215 = vrot.slane %v5214, 4
        %v5217 = vshll.u32 %v5097, 16
        %v5219 = vrot.slane %v5217, 5
        %v5220 = vsel %vm1166, %v5215, %v5219
        %v5222 = vshrl.u32 %v5071, 16
        %v5224 = vrot.slane %v5222, 4
        %v5225 = vshll.u32 %v5071, 16
        %v5227 = vrot.slane %v5225, 5
        %v5228 = vor.u32 %v5224, %v5227
        %v5229 = vrot.slane %v5228, 4
        %v5231 = vshll.u32 %v5072, 16
        %v5233 = vrot.slane %v5231, 5
        %v5234 = vsel %vm1166, %v5229, %v5233
        %v5235 = vshrl.u32 %v5072, 16
        %v5237 = vrot.slane %v5235, 4
        %v5238 = vor.u32 %v5237, %v5233
        %v5239 = vrot.slane %v5238, 4
        %v5241 = vshll.u32 %v5098, 16
        %v5243 = vrot.slane %v5241, 5
        %v5244 = vsel %vm1166, %v5239, %v5243
        %v5246 = vshrl.u32 %v5073, 16
        %v5248 = vrot.slane %v5246, 4
        %v5249 = vshll.u32 %v5073, 16
        %v5251 = vrot.slane %v5249, 5
        %v5252 = vor.u32 %v5248, %v5251
        %v5253 = vrot.slane %v5252, 4
        %v5255 = vshll.u32 %v5074, 16
        %v5257 = vrot.slane %v5255, 5
        %v5258 = vsel %vm1166, %v5253, %v5257
        %v5259 = vshrl.u32 %v5074, 16
        %v5261 = vrot.slane %v5259, 4
        %v5262 = vor.u32 %v5261, %v5257
        %v5263 = vrot.slane %v5262, 4
        %v5265 = vshll.u32 %v5099, 16
        %v5267 = vrot.slane %v5265, 5
        %v5268 = vsel %vm1166, %v5263, %v5267
        %v5270 = vshrl.u32 %v5075, 16
        %v5272 = vrot.slane %v5270, 4
        %v5273 = vshll.u32 %v5075, 16
        %v5275 = vrot.slane %v5273, 5
        %v5276 = vor.u32 %v5272, %v5275
        %v5277 = vrot.slane %v5276, 4
        %v5279 = vshll.u32 %v5076, 16
        %v5281 = vrot.slane %v5279, 5
        %v5282 = vsel %vm1166, %v5277, %v5281
        %v5283 = vshrl.u32 %v5076, 16
        %v5285 = vrot.slane %v5283, 4
        %v5286 = vor.u32 %v5285, %v5281
        %v5287 = vrot.slane %v5286, 4
        %v5289 = vshll.u32 %v5100, 16
        %v5291 = vrot.slane %v5289, 5
        %v5292 = vsel %vm1166, %v5287, %v5291
        %v5293 = vld [vmem:[%s1359] sm:$0xf]
        %v5294 = vld [vmem:[%s1359 + $0x4] sm:$0xf]
        %v5295 = vld [vmem:[%s1359 + $0x8] sm:$0xf]
        %v5296 = vld [vmem:[%s1359 + $0xc] sm:$0xf]
        %v5297 = vld [vmem:[%s1359 + $0x10] sm:$0xf]
        %v5298 = vld [vmem:[%s1359 + $0x14] sm:$0xf]
        %v5299 = vld [vmem:[%s1359 + $0x18] sm:$0xf]
        %v5300 = vld [vmem:[%s1359 + $0x1c] sm:$0xf]
        %v5301 = vld [vmem:[%s1359 + $0x20] sm:$0xf]
        %v5302 = vld [vmem:[%s1359 + $0x24] sm:$0xf]
        %v5303 = vld [vmem:[%s1359 + $0x28] sm:$0xf]
        %v5304 = vld [vmem:[%s1359 + $0x2c] sm:$0xf]
        %v5305 = vld [vmem:[%s1359 + $0x30] sm:$0xf]
        %v5306 = vld [vmem:[%s1359 + $0x34] sm:$0xf]
        %v5307 = vld [vmem:[%s1359 + $0x38] sm:$0xf]
        %v5308 = vld [vmem:[%s1359 + $0x3c] sm:$0xf]
        %v5309 = vunpack.c.l.b16 %v5114
        %v5310 = vunpack.c.l.b16 %v5124
        %v5311 = vunpack.c.l.b16 %v5138
        %v5312 = vunpack.c.l.b16 %v5148
        %v5313 = vunpack.c.l.b16 %v5162
        %v5314 = vunpack.c.l.b16 %v5172
        %v5315 = vunpack.c.l.b16 %v5186
        %v5316 = vunpack.c.l.b16 %v5196
        %v5317 = vunpack.c.l.b16 %v5210
        %v5318 = vunpack.c.l.b16 %v5220
        %v5319 = vunpack.c.l.b16 %v5234
        %v5320 = vunpack.c.l.b16 %v5244
        %v5321 = vunpack.c.l.b16 %v5258
        %v5322 = vunpack.c.l.b16 %v5268
        %v5323 = vunpack.c.l.b16 %v5282
        %v5324 = vunpack.c.l.b16 %v5292
        %v5325 = vpack.c.b16 %v5310, %v5309
        %v5326 = vpack.c.b16 %v5312, %v5311
        %v5327 = vpack.c.b16 %v5314, %v5313
        %v5328 = vpack.c.b16 %v5316, %v5315
        %v5329 = vpack.c.b16 %v5318, %v5317
        %v5330 = vpack.c.b16 %v5320, %v5319
        %v5331 = vpack.c.b16 %v5322, %v5321
        %v5332 = vpack.c.b16 %v5324, %v5323
        %v5357 = vunpack.c.l.b16 %v5293
        %v5358 = vunpack.c.l.b16 %v5294
        %v5359 = vunpack.c.l.b16 %v5295
        %v5360 = vunpack.c.l.b16 %v5296
        %v5361 = vunpack.c.l.b16 %v5297
        %v5362 = vunpack.c.l.b16 %v5298
        %v5363 = vunpack.c.l.b16 %v5299
        %v5364 = vunpack.c.l.b16 %v5300
        %v5365 = vunpack.c.l.b16 %v5301
        %v5366 = vunpack.c.l.b16 %v5302
        %v5367 = vunpack.c.l.b16 %v5303
        %v5368 = vunpack.c.l.b16 %v5304
        %v5369 = vunpack.c.l.b16 %v5305
        %v5370 = vunpack.c.l.b16 %v5306
        %v5371 = vunpack.c.l.b16 %v5307
        %v5372 = vunpack.c.l.b16 %v5308
        %v5373 = vpack.c.b16 %v5358, %v5357
        %v5374 = vpack.c.b16 %v5360, %v5359
        %v5375 = vpack.c.b16 %v5362, %v5361
        %v5376 = vpack.c.b16 %v5364, %v5363
        %v5377 = vpack.c.b16 %v5366, %v5365
        %v5378 = vpack.c.b16 %v5368, %v5367
        %v5379 = vpack.c.b16 %v5370, %v5369
        %v5380 = vpack.c.b16 %v5372, %v5371
        %5389 = vmatprep.subr.bf16.mxu0 0
        %5390 = vmatpush1.bf16.msra.mxu0 %v5380
        %5391 = vmatprep.subr.bf16.mxu0 0
        %5392 = vmatpush1.bf16.msra.mxu0 %v5379
        %5393 = vmatprep.subr.bf16.mxu0 0
        %5394 = vmatpush1.bf16.msra.mxu0 %v5378
        %5395 = vmatprep.subr.bf16.mxu0 0
        %5396 = vmatpush1.bf16.msra.mxu0 %v5377
        %5397 = vmatprep.subr.bf16.mxu0 0
        %5398 = vmatpush1.bf16.msra.mxu0 %v5376
        %5399 = vmatprep.subr.bf16.mxu0 0
        %5400 = vmatpush1.bf16.msra.mxu0 %v5375
        %5401 = vmatprep.subr.bf16.mxu0 0
        %5402 = vmatpush1.bf16.msra.mxu0 %v5374
        %5403 = vmatprep.subr.bf16.mxu0 0
        %5404 = vmatpush1.bf16.msra.mxu0 %v5373
        %5405 = vmatprep.subr.bf16.mxu0 0
        %5406 = vmatpush2.bf16.msra.mxu0 0
        %5407 = vmatprep.subr.bf16.mxu0 0
        %5408 = vmatpush2.bf16.msra.mxu0 0
        %5409 = vmatprep.subr.bf16.mxu0 0
        %5410 = vmatpush2.bf16.msra.mxu0 0
        %5411 = vmatprep.subr.bf16.mxu0 0
        %5412 = vmatpush2.bf16.msra.mxu0 0
        %5413 = vmatprep.subr.bf16.mxu0 0
        %5414 = vmatpush2.bf16.msra.mxu0 0
        %5415 = vmatprep.subr.bf16.mxu0 0
        %5416 = vmatpush2.bf16.msra.mxu0 0
        %5417 = vmatprep.subr.bf16.mxu0 0
        %5418 = vmatpush2.bf16.msra.mxu0 0
        %5419 = vmatprep.subr.bf16.mxu0 0
        %5420 = vmatpush2.bf16.msra.mxu0 0
        %5421 = vmatprep.mubr.bf16.mxu0 0
        %5422 = vmatmul.mubr.bf16.gmra.mxu0 %v5325
        %v5423 = vpop.f32.mrf.mxu0
        %v5424 = vadd.f32 0.0, %v5423
        %v5425 = vpop.f32.mrf.mxu0
        %v5426 = vpop.f32.mrf.mxu0
        %v5427 = vadd.f32 0.0, %v5426
        %v5428 = vpop.f32.mrf.mxu0
        %5429 = vmatprep.mubr.bf16.mxu0 0
        %5430 = vmatmul.mubr.bf16.gmra.mxu0 %v5326
        %v5431 = vpop.f32.mrf.mxu0
        %v5432 = vpop.f32.mrf.mxu0
        %v5433 = vpop.f32.mrf.mxu0
        %v5434 = vpop.f32.mrf.mxu0
        %5435 = vmatprep.mubr.bf16.mxu0 0
        %5436 = vmatmul.mubr.bf16.gmra.mxu0 %v5327
        %v5437 = vpop.f32.mrf.mxu0
        %v5438 = vadd.f32 0.0, %v5437
        %v5439 = vpop.f32.mrf.mxu0
        %v5440 = vpop.f32.mrf.mxu0
        %v5441 = vadd.f32 0.0, %v5440
        %v5442 = vpop.f32.mrf.mxu0
        %5443 = vmatprep.mubr.bf16.mxu0 0
        %5444 = vmatmul.mubr.bf16.gmra.mxu0 %v5328
        %v5445 = vpop.f32.mrf.mxu0
        %v5446 = vpop.f32.mrf.mxu0
        %v5447 = vpop.f32.mrf.mxu0
        %v5448 = vpop.f32.mrf.mxu0
        %5449 = vmatprep.mubr.bf16.mxu0 0
        %5450 = vmatmul.mubr.bf16.gmra.mxu0 %v5329
        %v5451 = vpop.f32.mrf.mxu0
        %v5452 = vadd.f32 0.0, %v5451
        %v5453 = vpop.f32.mrf.mxu0
        %v5454 = vpop.f32.mrf.mxu0
        %v5455 = vadd.f32 0.0, %v5454
        %v5456 = vpop.f32.mrf.mxu0
        %5457 = vmatprep.mubr.bf16.mxu0 0
        %5458 = vmatmul.mubr.bf16.gmra.mxu0 %v5330
        %v5459 = vpop.f32.mrf.mxu0
        %v5460 = vpop.f32.mrf.mxu0
        %v5461 = vpop.f32.mrf.mxu0
        %v5462 = vpop.f32.mrf.mxu0
        %5463 = vmatprep.mubr.bf16.mxu0 0
        %5464 = vmatmul.mubr.bf16.gmra.mxu0 %v5331
        %v5465 = vpop.f32.mrf.mxu0
        %v5466 = vadd.f32 0.0, %v5465
        %v5467 = vpop.f32.mrf.mxu0
        %v5468 = vpop.f32.mrf.mxu0
        %v5469 = vadd.f32 0.0, %v5468
        %v5470 = vpop.f32.mrf.mxu0
        %5471 = vmatprep.mubr.bf16.mxu0 0
        %5472 = vmatmul.mubr.bf16.gmra.mxu0 %v5332
        %v5473 = vpop.f32.mrf.mxu0
        %v5474 = vpop.f32.mrf.mxu0
        %v5475 = vpop.f32.mrf.mxu0
        %v5476 = vpop.f32.mrf.mxu0
        %5477 = vdwg.mxu0
        %v5494 = vunpack.c.l.b16 %v5061
        %v5495 = vunpack.c.l.b16 %v5062
        %v5496 = vunpack.c.l.b16 %v5063
        %v5497 = vunpack.c.l.b16 %v5064
        %v5498 = vunpack.c.l.b16 %v5065
        %v5499 = vunpack.c.l.b16 %v5066
        %v5500 = vunpack.c.l.b16 %v5067
        %v5501 = vunpack.c.l.b16 %v5068
        %v5502 = vunpack.c.l.b16 %v5069
        %v5503 = vunpack.c.l.b16 %v5070
        %v5504 = vunpack.c.l.b16 %v5071
        %v5505 = vunpack.c.l.b16 %v5072
        %v5506 = vunpack.c.l.b16 %v5073
        %v5507 = vunpack.c.l.b16 %v5074
        %v5508 = vunpack.c.l.b16 %v5075
        %v5509 = vunpack.c.l.b16 %v5076
        %v5510 = vpack.c.b16 %v5495, %v5494
        %v5511 = vpack.c.b16 %v5497, %v5496
        %v5512 = vpack.c.b16 %v5499, %v5498
        %v5513 = vpack.c.b16 %v5501, %v5500
        %v5514 = vpack.c.b16 %v5503, %v5502
        %v5515 = vpack.c.b16 %v5505, %v5504
        %v5516 = vpack.c.b16 %v5507, %v5506
        %v5517 = vpack.c.b16 %v5509, %v5508
        %v5542 = vunpack.c.l.b16 %v5077
        %v5543 = vunpack.c.l.b16 %v5078
        %v5544 = vunpack.c.l.b16 %v5079
        %v5545 = vunpack.c.l.b16 %v5080
        %v5546 = vunpack.c.l.b16 %v5081
        %v5547 = vunpack.c.l.b16 %v5082
        %v5548 = vunpack.c.l.b16 %v5083
        %v5549 = vunpack.c.l.b16 %v5084
        %v5550 = vunpack.c.l.b16 %v5085
        %v5551 = vunpack.c.l.b16 %v5086
        %v5552 = vunpack.c.l.b16 %v5087
        %v5553 = vunpack.c.l.b16 %v5088
        %v5554 = vunpack.c.l.b16 %v5089
        %v5555 = vunpack.c.l.b16 %v5090
        %v5556 = vunpack.c.l.b16 %v5091
        %v5557 = vunpack.c.l.b16 %v5092
        %v5558 = vpack.c.b16 %v5543, %v5542
        %v5559 = vpack.c.b16 %v5545, %v5544
        %v5560 = vpack.c.b16 %v5547, %v5546
        %v5561 = vpack.c.b16 %v5549, %v5548
        %v5562 = vpack.c.b16 %v5551, %v5550
        %v5563 = vpack.c.b16 %v5553, %v5552
        %v5564 = vpack.c.b16 %v5555, %v5554
        %v5565 = vpack.c.b16 %v5557, %v5556
        %5574 = vmatprep.subr.bf16.mxu0 0
        %5575 = vmatpush1.bf16.msra.mxu0 %v5565
        %5576 = vmatprep.subr.bf16.mxu0 0
        %5577 = vmatpush1.bf16.msra.mxu0 %v5564
        %5578 = vmatprep.subr.bf16.mxu0 0
        %5579 = vmatpush1.bf16.msra.mxu0 %v5563
        %5580 = vmatprep.subr.bf16.mxu0 0
        %5581 = vmatpush1.bf16.msra.mxu0 %v5562
        %5582 = vmatprep.subr.bf16.mxu0 0
        %5583 = vmatpush1.bf16.msra.mxu0 %v5561
        %5584 = vmatprep.subr.bf16.mxu0 0
        %5585 = vmatpush1.bf16.msra.mxu0 %v5560
        %5586 = vmatprep.subr.bf16.mxu0 0
        %5587 = vmatpush1.bf16.msra.mxu0 %v5559
        %5588 = vmatprep.subr.bf16.mxu0 0
        %5589 = vmatpush1.bf16.msra.mxu0 %v5558
        %5590 = vmatprep.subr.bf16.mxu0 0
        %5591 = vmatpush2.bf16.msra.mxu0 0
        %5592 = vmatprep.subr.bf16.mxu0 0
        %5593 = vmatpush2.bf16.msra.mxu0 0
        %5594 = vmatprep.subr.bf16.mxu0 0
        %5595 = vmatpush2.bf16.msra.mxu0 0
        %5596 = vmatprep.subr.bf16.mxu0 0
        %5597 = vmatpush2.bf16.msra.mxu0 0
        %5598 = vmatprep.subr.bf16.mxu0 0
        %5599 = vmatpush2.bf16.msra.mxu0 0
        %5600 = vmatprep.subr.bf16.mxu0 0
        %5601 = vmatpush2.bf16.msra.mxu0 0
        %5602 = vmatprep.subr.bf16.mxu0 0
        %5603 = vmatpush2.bf16.msra.mxu0 0
        %5604 = vmatprep.subr.bf16.mxu0 0
        %5605 = vmatpush2.bf16.msra.mxu0 0
        %5606 = vmatprep.mubr.bf16.mxu0 0
        %5607 = vmatmul.mubr.bf16.gmra.mxu0 %v5510
        %v5608 = vpop.f32.mrf.mxu0
        %v5609 = vadd.f32 %v5424, %v5608
        %v5610 = vpop.f32.mrf.mxu0
        %v5611 = vpop.f32.mrf.mxu0
        %v5612 = vadd.f32 %v5427, %v5611
        %v5613 = vpop.f32.mrf.mxu0
        %5614 = vmatprep.mubr.bf16.mxu0 0
        %5615 = vmatmul.mubr.bf16.gmra.mxu0 %v5511
        %v5616 = vpop.f32.mrf.mxu0
        %v5617 = vpop.f32.mrf.mxu0
        %v5618 = vpop.f32.mrf.mxu0
        %v5619 = vpop.f32.mrf.mxu0
        %5620 = vmatprep.mubr.bf16.mxu0 0
        %5621 = vmatmul.mubr.bf16.gmra.mxu0 %v5512
        %v5622 = vpop.f32.mrf.mxu0
        %v5623 = vadd.f32 %v5438, %v5622
        %v5624 = vpop.f32.mrf.mxu0
        %v5625 = vpop.f32.mrf.mxu0
        %v5626 = vadd.f32 %v5441, %v5625
        %v5627 = vpop.f32.mrf.mxu0
        %5628 = vmatprep.mubr.bf16.mxu0 0
        %5629 = vmatmul.mubr.bf16.gmra.mxu0 %v5513
        %v5630 = vpop.f32.mrf.mxu0
        %v5631 = vpop.f32.mrf.mxu0
        %v5632 = vpop.f32.mrf.mxu0
        %v5633 = vpop.f32.mrf.mxu0
        %5634 = vmatprep.mubr.bf16.mxu0 0
        %5635 = vmatmul.mubr.bf16.gmra.mxu0 %v5514
        %v5636 = vpop.f32.mrf.mxu0
        %v5637 = vadd.f32 %v5452, %v5636
        %v5638 = vpop.f32.mrf.mxu0
        %v5639 = vpop.f32.mrf.mxu0
        %v5640 = vadd.f32 %v5455, %v5639
        %v5641 = vpop.f32.mrf.mxu0
        %5642 = vmatprep.mubr.bf16.mxu0 0
        %5643 = vmatmul.mubr.bf16.gmra.mxu0 %v5515
        %v5644 = vpop.f32.mrf.mxu0
        %v5645 = vpop.f32.mrf.mxu0
        %v5646 = vpop.f32.mrf.mxu0
        %v5647 = vpop.f32.mrf.mxu0
        %5648 = vmatprep.mubr.bf16.mxu0 0
        %5649 = vmatmul.mubr.bf16.gmra.mxu0 %v5516
        %v5650 = vpop.f32.mrf.mxu0
        %v5651 = vadd.f32 %v5466, %v5650
        %v5652 = vpop.f32.mrf.mxu0
        %v5653 = vpop.f32.mrf.mxu0
        %v5654 = vadd.f32 %v5469, %v5653
        %v5655 = vpop.f32.mrf.mxu0
        %5656 = vmatprep.mubr.bf16.mxu0 0
        %5657 = vmatmul.mubr.bf16.gmra.mxu0 %v5517
        %v5658 = vpop.f32.mrf.mxu0
        %v5659 = vpop.f32.mrf.mxu0
        %v5660 = vpop.f32.mrf.mxu0
        %v5661 = vpop.f32.mrf.mxu0
        %5662 = vdwg.mxu0
        %v5663 = vld [vmem:[%s5060] sm:$0xe]
        %v5664 = vld [vmem:[%s5060 + $0xc] sm:$0xe]
        %v5665 = vld [vmem:[%s5060 + $0x18] sm:$0xe]
        %v5666 = vld [vmem:[%s5060 + $0x24] sm:$0xe]
        %v5667 = vld [vmem:[%s5060 + $0x30] sm:$0xe]
        %v5668 = vld [vmem:[%s5060 + $0x3c] sm:$0xe]
        %v5669 = vld [vmem:[%s5060 + $0x48] sm:$0xe]
        %v5670 = vld [vmem:[%s5060 + $0x54] sm:$0xe]
        %v5687 = vrot.slane %v5663, 5
        %v5688 = vrot.slane %v5687, 4
        %v5689 = vrot.slane %v5062, 5
        %v5690 = vsel %vm1756, %v5688, %v5689
        %v5691 = vrot.slane %v5689, 4
        %v5692 = vrot.slane %v5093, 5
        %v5693 = vsel %vm1756, %v5691, %v5692
        %v5694 = vrot.slane %v5664, 5
        %v5695 = vrot.slane %v5694, 4
        %v5696 = vrot.slane %v5064, 5
        %v5697 = vsel %vm1756, %v5695, %v5696
        %v5698 = vrot.slane %v5696, 4
        %v5699 = vrot.slane %v5094, 5
        %v5700 = vsel %vm1756, %v5698, %v5699
        %v5701 = vrot.slane %v5665, 5
        %v5702 = vrot.slane %v5701, 4
        %v5703 = vrot.slane %v5066, 5
        %v5704 = vsel %vm1756, %v5702, %v5703
        %v5705 = vrot.slane %v5703, 4
        %v5706 = vrot.slane %v5095, 5
        %v5707 = vsel %vm1756, %v5705, %v5706
        %v5708 = vrot.slane %v5666, 5
        %v5709 = vrot.slane %v5708, 4
        %v5710 = vrot.slane %v5068, 5
        %v5711 = vsel %vm1756, %v5709, %v5710
        %v5712 = vrot.slane %v5710, 4
        %v5713 = vrot.slane %v5096, 5
        %v5714 = vsel %vm1756, %v5712, %v5713
        %v5715 = vrot.slane %v5667, 5
        %v5716 = vrot.slane %v5715, 4
        %v5717 = vrot.slane %v5070, 5
        %v5718 = vsel %vm1756, %v5716, %v5717
        %v5719 = vrot.slane %v5717, 4
        %v5720 = vrot.slane %v5097, 5
        %v5721 = vsel %vm1756, %v5719, %v5720
        %v5722 = vrot.slane %v5668, 5
        %v5723 = vrot.slane %v5722, 4
        %v5724 = vrot.slane %v5072, 5
        %v5725 = vsel %vm1756, %v5723, %v5724
        %v5726 = vrot.slane %v5724, 4
        %v5727 = vrot.slane %v5098, 5
        %v5728 = vsel %vm1756, %v5726, %v5727
        %v5729 = vrot.slane %v5669, 5
        %v5730 = vrot.slane %v5729, 4
        %v5731 = vrot.slane %v5074, 5
        %v5732 = vsel %vm1756, %v5730, %v5731
        %v5733 = vrot.slane %v5731, 4
        %v5734 = vrot.slane %v5099, 5
        %v5735 = vsel %vm1756, %v5733, %v5734
        %v5736 = vrot.slane %v5670, 5
        %v5737 = vrot.slane %v5736, 4
        %v5738 = vrot.slane %v5076, 5
        %v5739 = vsel %vm1756, %v5737, %v5738
        %v5740 = vrot.slane %v5738, 4
        %v5741 = vrot.slane %v5100, 5
        %v5742 = vsel %vm1756, %v5740, %v5741
        %v5743 = vld [vmem:[%s1813] sm:$0xf]
        %v5744 = vld [vmem:[%s1813 + $0x4] sm:$0xf]
        %v5745 = vld [vmem:[%s1813 + $0x8] sm:$0xf]
        %v5746 = vld [vmem:[%s1813 + $0xc] sm:$0xf]
        %v5747 = vld [vmem:[%s1813 + $0x10] sm:$0xf]
        %v5748 = vld [vmem:[%s1813 + $0x14] sm:$0xf]
        %v5749 = vld [vmem:[%s1813 + $0x18] sm:$0xf]
        %v5750 = vld [vmem:[%s1813 + $0x1c] sm:$0xf]
        %v5751 = vld [vmem:[%s1813 + $0x20] sm:$0xf]
        %v5752 = vld [vmem:[%s1813 + $0x24] sm:$0xf]
        %v5753 = vld [vmem:[%s1813 + $0x28] sm:$0xf]
        %v5754 = vld [vmem:[%s1813 + $0x2c] sm:$0xf]
        %v5755 = vld [vmem:[%s1813 + $0x30] sm:$0xf]
        %v5756 = vld [vmem:[%s1813 + $0x34] sm:$0xf]
        %v5757 = vld [vmem:[%s1813 + $0x38] sm:$0xf]
        %v5758 = vld [vmem:[%s1813 + $0x3c] sm:$0xf]
        %v5759 = vunpack.c.l.b16 %v5690
        %v5760 = vunpack.c.l.b16 %v5693
        %v5761 = vunpack.c.l.b16 %v5697
        %v5762 = vunpack.c.l.b16 %v5700
        %v5763 = vunpack.c.l.b16 %v5704
        %v5764 = vunpack.c.l.b16 %v5707
        %v5765 = vunpack.c.l.b16 %v5711
        %v5766 = vunpack.c.l.b16 %v5714
        %v5767 = vunpack.c.l.b16 %v5718
        %v5768 = vunpack.c.l.b16 %v5721
        %v5769 = vunpack.c.l.b16 %v5725
        %v5770 = vunpack.c.l.b16 %v5728
        %v5771 = vunpack.c.l.b16 %v5732
        %v5772 = vunpack.c.l.b16 %v5735
        %v5773 = vunpack.c.l.b16 %v5739
        %v5774 = vunpack.c.l.b16 %v5742
        %v5775 = vpack.c.b16 %v5760, %v5759
        %v5776 = vpack.c.b16 %v5762, %v5761
        %v5777 = vpack.c.b16 %v5764, %v5763
        %v5778 = vpack.c.b16 %v5766, %v5765
        %v5779 = vpack.c.b16 %v5768, %v5767
        %v5780 = vpack.c.b16 %v5770, %v5769
        %v5781 = vpack.c.b16 %v5772, %v5771
        %v5782 = vpack.c.b16 %v5774, %v5773
        %v5807 = vunpack.c.l.b16 %v5743
        %v5808 = vunpack.c.l.b16 %v5744
        %v5809 = vunpack.c.l.b16 %v5745
        %v5810 = vunpack.c.l.b16 %v5746
        %v5811 = vunpack.c.l.b16 %v5747
        %v5812 = vunpack.c.l.b16 %v5748
        %v5813 = vunpack.c.l.b16 %v5749
        %v5814 = vunpack.c.l.b16 %v5750
        %v5815 = vunpack.c.l.b16 %v5751
        %v5816 = vunpack.c.l.b16 %v5752
        %v5817 = vunpack.c.l.b16 %v5753
        %v5818 = vunpack.c.l.b16 %v5754
        %v5819 = vunpack.c.l.b16 %v5755
        %v5820 = vunpack.c.l.b16 %v5756
        %v5821 = vunpack.c.l.b16 %v5757
        %v5822 = vunpack.c.l.b16 %v5758
        %v5823 = vpack.c.b16 %v5808, %v5807
        %v5824 = vpack.c.b16 %v5810, %v5809
        %v5825 = vpack.c.b16 %v5812, %v5811
        %v5826 = vpack.c.b16 %v5814, %v5813
        %v5827 = vpack.c.b16 %v5816, %v5815
        %v5828 = vpack.c.b16 %v5818, %v5817
        %v5829 = vpack.c.b16 %v5820, %v5819
        %v5830 = vpack.c.b16 %v5822, %v5821
        %5839 = vmatprep.subr.bf16.mxu0 0
        %5840 = vmatpush1.bf16.msra.mxu0 %v5830
        %5841 = vmatprep.subr.bf16.mxu0 0
        %5842 = vmatpush1.bf16.msra.mxu0 %v5829
        %5843 = vmatprep.subr.bf16.mxu0 0
        %5844 = vmatpush1.bf16.msra.mxu0 %v5828
        %5845 = vmatprep.subr.bf16.mxu0 0
        %5846 = vmatpush1.bf16.msra.mxu0 %v5827
        %5847 = vmatprep.subr.bf16.mxu0 0
        %5848 = vmatpush1.bf16.msra.mxu0 %v5826
        %5849 = vmatprep.subr.bf16.mxu0 0
        %5850 = vmatpush1.bf16.msra.mxu0 %v5825
        %5851 = vmatprep.subr.bf16.mxu0 0
        %5852 = vmatpush1.bf16.msra.mxu0 %v5824
        %5853 = vmatprep.subr.bf16.mxu0 0
        %5854 = vmatpush1.bf16.msra.mxu0 %v5823
        %5855 = vmatprep.subr.bf16.mxu0 0
        %5856 = vmatpush2.bf16.msra.mxu0 0
        %5857 = vmatprep.subr.bf16.mxu0 0
        %5858 = vmatpush2.bf16.msra.mxu0 0
        %5859 = vmatprep.subr.bf16.mxu0 0
        %5860 = vmatpush2.bf16.msra.mxu0 0
        %5861 = vmatprep.subr.bf16.mxu0 0
        %5862 = vmatpush2.bf16.msra.mxu0 0
        %5863 = vmatprep.subr.bf16.mxu0 0
        %5864 = vmatpush2.bf16.msra.mxu0 0
        %5865 = vmatprep.subr.bf16.mxu0 0
        %5866 = vmatpush2.bf16.msra.mxu0 0
        %5867 = vmatprep.subr.bf16.mxu0 0
        %5868 = vmatpush2.bf16.msra.mxu0 0
        %5869 = vmatprep.subr.bf16.mxu0 0
        %5870 = vmatpush2.bf16.msra.mxu0 0
        %5871 = vmatprep.mubr.bf16.mxu0 0
        %5872 = vmatmul.mubr.bf16.gmra.mxu0 %v5775
        %v5873 = vpop.f32.mrf.mxu0
        %v5874 = vadd.f32 0.0, %v5873
        %v5875 = vpop.f32.mrf.mxu0
        %v5876 = vpop.f32.mrf.mxu0
        %v5877 = vadd.f32 0.0, %v5876
        %v5878 = vpop.f32.mrf.mxu0
        %5879 = vmatprep.mubr.bf16.mxu0 0
        %5880 = vmatmul.mubr.bf16.gmra.mxu0 %v5776
        %v5881 = vpop.f32.mrf.mxu0
        %v5882 = vpop.f32.mrf.mxu0
        %v5883 = vpop.f32.mrf.mxu0
        %v5884 = vpop.f32.mrf.mxu0
        %5885 = vmatprep.mubr.bf16.mxu0 0
        %5886 = vmatmul.mubr.bf16.gmra.mxu0 %v5777
        %v5887 = vpop.f32.mrf.mxu0
        %v5888 = vadd.f32 0.0, %v5887
        %v5889 = vpop.f32.mrf.mxu0
        %v5890 = vpop.f32.mrf.mxu0
        %v5891 = vadd.f32 0.0, %v5890
        %v5892 = vpop.f32.mrf.mxu0
        %5893 = vmatprep.mubr.bf16.mxu0 0
        %5894 = vmatmul.mubr.bf16.gmra.mxu0 %v5778
        %v5895 = vpop.f32.mrf.mxu0
        %v5896 = vpop.f32.mrf.mxu0
        %v5897 = vpop.f32.mrf.mxu0
        %v5898 = vpop.f32.mrf.mxu0
        %5899 = vmatprep.mubr.bf16.mxu0 0
        %5900 = vmatmul.mubr.bf16.gmra.mxu0 %v5779
        %v5901 = vpop.f32.mrf.mxu0
        %v5902 = vadd.f32 0.0, %v5901
        %v5903 = vpop.f32.mrf.mxu0
        %v5904 = vpop.f32.mrf.mxu0
        %v5905 = vadd.f32 0.0, %v5904
        %v5906 = vpop.f32.mrf.mxu0
        %5907 = vmatprep.mubr.bf16.mxu0 0
        %5908 = vmatmul.mubr.bf16.gmra.mxu0 %v5780
        %v5909 = vpop.f32.mrf.mxu0
        %v5910 = vpop.f32.mrf.mxu0
        %v5911 = vpop.f32.mrf.mxu0
        %v5912 = vpop.f32.mrf.mxu0
        %5913 = vmatprep.mubr.bf16.mxu0 0
        %5914 = vmatmul.mubr.bf16.gmra.mxu0 %v5781
        %v5915 = vpop.f32.mrf.mxu0
        %v5916 = vadd.f32 0.0, %v5915
        %v5917 = vpop.f32.mrf.mxu0
        %v5918 = vpop.f32.mrf.mxu0
        %v5919 = vadd.f32 0.0, %v5918
        %v5920 = vpop.f32.mrf.mxu0
        %5921 = vmatprep.mubr.bf16.mxu0 0
        %5922 = vmatmul.mubr.bf16.gmra.mxu0 %v5782
        %v5923 = vpop.f32.mrf.mxu0
        %v5924 = vpop.f32.mrf.mxu0
        %v5925 = vpop.f32.mrf.mxu0
        %v5926 = vpop.f32.mrf.mxu0
        %5927 = vdwg.mxu0
        %v5928 = vadd.f32 %v5609, %v5874
        %v5929 = vadd.f32 %v5612, %v5877
        %v5930 = vadd.f32 %v5623, %v5888
        %v5931 = vadd.f32 %v5626, %v5891
        %v5932 = vadd.f32 %v5637, %v5902
        %v5933 = vadd.f32 %v5640, %v5905
        %v5934 = vadd.f32 %v5651, %v5916
        %v5935 = vadd.f32 %v5654, %v5919
        %s5936 = scalar_lea.vmem [#allocation2], 108
        %v5937 = vld [vmem:[%s5936] sm:$0xf]
        %v5938 = vld [vmem:[%s5936 + $0x4] sm:$0xf]
        %v5939 = vld [vmem:[%s5936 + $0xc] sm:$0xf]
        %v5940 = vld [vmem:[%s5936 + $0x10] sm:$0xf]
        %v5941 = vld [vmem:[%s5936 + $0x18] sm:$0xf]
        %v5942 = vld [vmem:[%s5936 + $0x1c] sm:$0xf]
        %v5943 = vld [vmem:[%s5936 + $0x24] sm:$0xf]
        %v5944 = vld [vmem:[%s5936 + $0x28] sm:$0xf]
        %v5945 = vld [vmem:[%s5936 + $0x30] sm:$0xf]
        %v5946 = vld [vmem:[%s5936 + $0x34] sm:$0xf]
        %v5947 = vld [vmem:[%s5936 + $0x3c] sm:$0xf]
        %v5948 = vld [vmem:[%s5936 + $0x40] sm:$0xf]
        %v5949 = vld [vmem:[%s5936 + $0x48] sm:$0xf]
        %v5950 = vld [vmem:[%s5936 + $0x4c] sm:$0xf]
        %v5951 = vld [vmem:[%s5936 + $0x54] sm:$0xf]
        %v5952 = vld [vmem:[%s5936 + $0x58] sm:$0xf]
        %v5953 = vld [vmem:[%s2023] sm:$0xf]
        %v5954 = vld [vmem:[%s2023 + $0x4] sm:$0xf]
        %v5955 = vld [vmem:[%s2023 + $0x8] sm:$0xf]
        %v5956 = vld [vmem:[%s2023 + $0xc] sm:$0xf]
        %v5957 = vld [vmem:[%s2023 + $0x10] sm:$0xf]
        %v5958 = vld [vmem:[%s2023 + $0x14] sm:$0xf]
        %v5959 = vld [vmem:[%s2023 + $0x18] sm:$0xf]
        %v5960 = vld [vmem:[%s2023 + $0x1c] sm:$0xf]
        %v5961 = vld [vmem:[%s2023 + $0x20] sm:$0xf]
        %v5962 = vld [vmem:[%s2023 + $0x24] sm:$0xf]
        %v5963 = vld [vmem:[%s2023 + $0x28] sm:$0xf]
        %v5964 = vld [vmem:[%s2023 + $0x2c] sm:$0xf]
        %v5965 = vld [vmem:[%s2023 + $0x30] sm:$0xf]
        %v5966 = vld [vmem:[%s2023 + $0x34] sm:$0xf]
        %v5967 = vld [vmem:[%s2023 + $0x38] sm:$0xf]
        %v5968 = vld [vmem:[%s2023 + $0x3c] sm:$0xf]
        %v5985 = vunpack.c.l.b16 %v5937
        %v5986 = vunpack.c.l.b16 %v5938
        %v5987 = vunpack.c.l.b16 %v5939
        %v5988 = vunpack.c.l.b16 %v5940
        %v5989 = vunpack.c.l.b16 %v5941
        %v5990 = vunpack.c.l.b16 %v5942
        %v5991 = vunpack.c.l.b16 %v5943
        %v5992 = vunpack.c.l.b16 %v5944
        %v5993 = vunpack.c.l.b16 %v5945
        %v5994 = vunpack.c.l.b16 %v5946
        %v5995 = vunpack.c.l.b16 %v5947
        %v5996 = vunpack.c.l.b16 %v5948
        %v5997 = vunpack.c.l.b16 %v5949
        %v5998 = vunpack.c.l.b16 %v5950
        %v5999 = vunpack.c.l.b16 %v5951
        %v6000 = vunpack.c.l.b16 %v5952
        %v6001 = vpack.c.b16 %v5986, %v5985
        %v6002 = vpack.c.b16 %v5988, %v5987
        %v6003 = vpack.c.b16 %v5990, %v5989
        %v6004 = vpack.c.b16 %v5992, %v5991
        %v6005 = vpack.c.b16 %v5994, %v5993
        %v6006 = vpack.c.b16 %v5996, %v5995
        %v6007 = vpack.c.b16 %v5998, %v5997
        %v6008 = vpack.c.b16 %v6000, %v5999
        %v6033 = vunpack.c.l.b16 %v5953
        %v6034 = vunpack.c.l.b16 %v5954
        %v6035 = vunpack.c.l.b16 %v5955
        %v6036 = vunpack.c.l.b16 %v5956
        %v6037 = vunpack.c.l.b16 %v5957
        %v6038 = vunpack.c.l.b16 %v5958
        %v6039 = vunpack.c.l.b16 %v5959
        %v6040 = vunpack.c.l.b16 %v5960
        %v6041 = vunpack.c.l.b16 %v5961
        %v6042 = vunpack.c.l.b16 %v5962
        %v6043 = vunpack.c.l.b16 %v5963
        %v6044 = vunpack.c.l.b16 %v5964
        %v6045 = vunpack.c.l.b16 %v5965
        %v6046 = vunpack.c.l.b16 %v5966
        %v6047 = vunpack.c.l.b16 %v5967
        %v6048 = vunpack.c.l.b16 %v5968
        %v6049 = vpack.c.b16 %v6034, %v6033
        %v6050 = vpack.c.b16 %v6036, %v6035
        %v6051 = vpack.c.b16 %v6038, %v6037
        %v6052 = vpack.c.b16 %v6040, %v6039
        %v6053 = vpack.c.b16 %v6042, %v6041
        %v6054 = vpack.c.b16 %v6044, %v6043
        %v6055 = vpack.c.b16 %v6046, %v6045
        %v6056 = vpack.c.b16 %v6048, %v6047
        %6065 = vmatprep.subr.bf16.mxu0 0
        %6066 = vmatpush1.bf16.msra.mxu0 %v6056
        %6067 = vmatprep.subr.bf16.mxu0 0
        %6068 = vmatpush1.bf16.msra.mxu0 %v6055
        %6069 = vmatprep.subr.bf16.mxu0 0
        %6070 = vmatpush1.bf16.msra.mxu0 %v6054
        %6071 = vmatprep.subr.bf16.mxu0 0
        %6072 = vmatpush1.bf16.msra.mxu0 %v6053
        %6073 = vmatprep.subr.bf16.mxu0 0
        %6074 = vmatpush1.bf16.msra.mxu0 %v6052
        %6075 = vmatprep.subr.bf16.mxu0 0
        %6076 = vmatpush1.bf16.msra.mxu0 %v6051
        %6077 = vmatprep.subr.bf16.mxu0 0
        %6078 = vmatpush1.bf16.msra.mxu0 %v6050
        %6079 = vmatprep.subr.bf16.mxu0 0
        %6080 = vmatpush1.bf16.msra.mxu0 %v6049
        %6081 = vmatprep.subr.bf16.mxu0 0
        %6082 = vmatpush2.bf16.msra.mxu0 0
        %6083 = vmatprep.subr.bf16.mxu0 0
        %6084 = vmatpush2.bf16.msra.mxu0 0
        %6085 = vmatprep.subr.bf16.mxu0 0
        %6086 = vmatpush2.bf16.msra.mxu0 0
        %6087 = vmatprep.subr.bf16.mxu0 0
        %6088 = vmatpush2.bf16.msra.mxu0 0
        %6089 = vmatprep.subr.bf16.mxu0 0
        %6090 = vmatpush2.bf16.msra.mxu0 0
        %6091 = vmatprep.subr.bf16.mxu0 0
        %6092 = vmatpush2.bf16.msra.mxu0 0
        %6093 = vmatprep.subr.bf16.mxu0 0
        %6094 = vmatpush2.bf16.msra.mxu0 0
        %6095 = vmatprep.subr.bf16.mxu0 0
        %6096 = vmatpush2.bf16.msra.mxu0 0
        %6097 = vmatprep.mubr.bf16.mxu0 0
        %6098 = vmatmul.mubr.bf16.gmra.mxu0 %v6001
        %v6099 = vpop.f32.mrf.mxu0
        %v6100 = vadd.f32 0.0, %v6099
        %v6101 = vpop.f32.mrf.mxu0
        %v6102 = vpop.f32.mrf.mxu0
        %v6103 = vadd.f32 0.0, %v6102
        %v6104 = vpop.f32.mrf.mxu0
        %6105 = vmatprep.mubr.bf16.mxu0 0
        %6106 = vmatmul.mubr.bf16.gmra.mxu0 %v6002
        %v6107 = vpop.f32.mrf.mxu0
        %v6108 = vpop.f32.mrf.mxu0
        %v6109 = vpop.f32.mrf.mxu0
        %v6110 = vpop.f32.mrf.mxu0
        %6111 = vmatprep.mubr.bf16.mxu0 0
        %6112 = vmatmul.mubr.bf16.gmra.mxu0 %v6003
        %v6113 = vpop.f32.mrf.mxu0
        %v6114 = vadd.f32 0.0, %v6113
        %v6115 = vpop.f32.mrf.mxu0
        %v6116 = vpop.f32.mrf.mxu0
        %v6117 = vadd.f32 0.0, %v6116
        %v6118 = vpop.f32.mrf.mxu0
        %6119 = vmatprep.mubr.bf16.mxu0 0
        %6120 = vmatmul.mubr.bf16.gmra.mxu0 %v6004
        %v6121 = vpop.f32.mrf.mxu0
        %v6122 = vpop.f32.mrf.mxu0
        %v6123 = vpop.f32.mrf.mxu0
        %v6124 = vpop.f32.mrf.mxu0
        %6125 = vmatprep.mubr.bf16.mxu0 0
        %6126 = vmatmul.mubr.bf16.gmra.mxu0 %v6005
        %v6127 = vpop.f32.mrf.mxu0
        %v6128 = vadd.f32 0.0, %v6127
        %v6129 = vpop.f32.mrf.mxu0
        %v6130 = vpop.f32.mrf.mxu0
        %v6131 = vadd.f32 0.0, %v6130
        %v6132 = vpop.f32.mrf.mxu0
        %6133 = vmatprep.mubr.bf16.mxu0 0
        %6134 = vmatmul.mubr.bf16.gmra.mxu0 %v6006
        %v6135 = vpop.f32.mrf.mxu0
        %v6136 = vpop.f32.mrf.mxu0
        %v6137 = vpop.f32.mrf.mxu0
        %v6138 = vpop.f32.mrf.mxu0
        %6139 = vmatprep.mubr.bf16.mxu0 0
        %6140 = vmatmul.mubr.bf16.gmra.mxu0 %v6007
        %v6141 = vpop.f32.mrf.mxu0
        %v6142 = vadd.f32 0.0, %v6141
        %v6143 = vpop.f32.mrf.mxu0
        %v6144 = vpop.f32.mrf.mxu0
        %v6145 = vadd.f32 0.0, %v6144
        %v6146 = vpop.f32.mrf.mxu0
        %6147 = vmatprep.mubr.bf16.mxu0 0
        %6148 = vmatmul.mubr.bf16.gmra.mxu0 %v6008
        %v6149 = vpop.f32.mrf.mxu0
        %v6150 = vpop.f32.mrf.mxu0
        %v6151 = vpop.f32.mrf.mxu0
        %v6152 = vpop.f32.mrf.mxu0
        %6153 = vdwg.mxu0
        %v6154 = vadd.f32 %v5928, %v6100
        %v6155 = vadd.f32 %v5929, %v6103
        %v6156 = vadd.f32 %v5930, %v6114
        %v6157 = vadd.f32 %v5931, %v6117
        %v6158 = vadd.f32 %v5932, %v6128
        %v6159 = vadd.f32 %v5933, %v6131
        %v6160 = vadd.f32 %v5934, %v6142
        %v6161 = vadd.f32 %v5935, %v6145
        %v6162 = vld [vmem:[%s5936] sm:$0xf]
        %v6163 = vld [vmem:[%s5936 + $0x4] sm:$0xf]
        %v6164 = vld [vmem:[%s5936 + $0x8] sm:$0x1]
        %v6165 = vld [vmem:[%s5936 + $0xc] sm:$0xf]
        %v6166 = vld [vmem:[%s5936 + $0x10] sm:$0xf]
        %v6167 = vld [vmem:[%s5936 + $0x14] sm:$0x1]
        %v6168 = vld [vmem:[%s5936 + $0x18] sm:$0xf]
        %v6169 = vld [vmem:[%s5936 + $0x1c] sm:$0xf]
        %v6170 = vld [vmem:[%s5936 + $0x20] sm:$0x1]
        %v6171 = vld [vmem:[%s5936 + $0x24] sm:$0xf]
        %v6172 = vld [vmem:[%s5936 + $0x28] sm:$0xf]
        %v6173 = vld [vmem:[%s5936 + $0x2c] sm:$0x1]
        %v6174 = vld [vmem:[%s5936 + $0x30] sm:$0xf]
        %v6175 = vld [vmem:[%s5936 + $0x34] sm:$0xf]
        %v6176 = vld [vmem:[%s5936 + $0x38] sm:$0x1]
        %v6177 = vld [vmem:[%s5936 + $0x3c] sm:$0xf]
        %v6178 = vld [vmem:[%s5936 + $0x40] sm:$0xf]
        %v6179 = vld [vmem:[%s5936 + $0x44] sm:$0x1]
        %v6180 = vld [vmem:[%s5936 + $0x48] sm:$0xf]
        %v6181 = vld [vmem:[%s5936 + $0x4c] sm:$0xf]
        %v6182 = vld [vmem:[%s5936 + $0x50] sm:$0x1]
        %v6183 = vld [vmem:[%s5936 + $0x54] sm:$0xf]
        %v6184 = vld [vmem:[%s5936 + $0x58] sm:$0xf]
        %v6185 = vld [vmem:[%s5936 + $0x5c] sm:$0x1]
        %v6187 = vshrl.u32 %v6162, 16
        %v6189 = vrot.slane %v6187, 4
        %v6190 = vshll.u32 %v6162, 16
        %v6192 = vrot.slane %v6190, 5
        %v6193 = vor.u32 %v6189, %v6192
        %v6194 = vrot.slane %v6193, 4
        %v6196 = vshll.u32 %v6163, 16
        %v6198 = vrot.slane %v6196, 5
        %v6199 = vsel %vm1166, %v6194, %v6198
        %v6200 = vshrl.u32 %v6163, 16
        %v6202 = vrot.slane %v6200, 4
        %v6203 = vor.u32 %v6202, %v6198
        %v6204 = vrot.slane %v6203, 4
        %v6206 = vshll.u32 %v6164, 16
        %v6208 = vrot.slane %v6206, 5
        %v6209 = vsel %vm1166, %v6204, %v6208
        %v6211 = vshrl.u32 %v6165, 16
        %v6213 = vrot.slane %v6211, 4
        %v6214 = vshll.u32 %v6165, 16
        %v6216 = vrot.slane %v6214, 5
        %v6217 = vor.u32 %v6213, %v6216
        %v6218 = vrot.slane %v6217, 4
        %v6220 = vshll.u32 %v6166, 16
        %v6222 = vrot.slane %v6220, 5
        %v6223 = vsel %vm1166, %v6218, %v6222
        %v6224 = vshrl.u32 %v6166, 16
        %v6226 = vrot.slane %v6224, 4
        %v6227 = vor.u32 %v6226, %v6222
        %v6228 = vrot.slane %v6227, 4
        %v6230 = vshll.u32 %v6167, 16
        %v6232 = vrot.slane %v6230, 5
        %v6233 = vsel %vm1166, %v6228, %v6232
        %v6235 = vshrl.u32 %v6168, 16
        %v6237 = vrot.slane %v6235, 4
        %v6238 = vshll.u32 %v6168, 16
        %v6240 = vrot.slane %v6238, 5
        %v6241 = vor.u32 %v6237, %v6240
        %v6242 = vrot.slane %v6241, 4
        %v6244 = vshll.u32 %v6169, 16
        %v6246 = vrot.slane %v6244, 5
        %v6247 = vsel %vm1166, %v6242, %v6246
        %v6248 = vshrl.u32 %v6169, 16
        %v6250 = vrot.slane %v6248, 4
        %v6251 = vor.u32 %v6250, %v6246
        %v6252 = vrot.slane %v6251, 4
        %v6254 = vshll.u32 %v6170, 16
        %v6256 = vrot.slane %v6254, 5
        %v6257 = vsel %vm1166, %v6252, %v6256
        %v6259 = vshrl.u32 %v6171, 16
        %v6261 = vrot.slane %v6259, 4
        %v6262 = vshll.u32 %v6171, 16
        %v6264 = vrot.slane %v6262, 5
        %v6265 = vor.u32 %v6261, %v6264
        %v6266 = vrot.slane %v6265, 4
        %v6268 = vshll.u32 %v6172, 16
        %v6270 = vrot.slane %v6268, 5
        %v6271 = vsel %vm1166, %v6266, %v6270
        %v6272 = vshrl.u32 %v6172, 16
        %v6274 = vrot.slane %v6272, 4
        %v6275 = vor.u32 %v6274, %v6270
        %v6276 = vrot.slane %v6275, 4
        %v6278 = vshll.u32 %v6173, 16
        %v6280 = vrot.slane %v6278, 5
        %v6281 = vsel %vm1166, %v6276, %v6280
        %v6283 = vshrl.u32 %v6174, 16
        %v6285 = vrot.slane %v6283, 4
        %v6286 = vshll.u32 %v6174, 16
        %v6288 = vrot.slane %v6286, 5
        %v6289 = vor.u32 %v6285, %v6288
        %v6290 = vrot.slane %v6289, 4
        %v6292 = vshll.u32 %v6175, 16
        %v6294 = vrot.slane %v6292, 5
        %v6295 = vsel %vm1166, %v6290, %v6294
        %v6296 = vshrl.u32 %v6175, 16
        %v6298 = vrot.slane %v6296, 4
        %v6299 = vor.u32 %v6298, %v6294
        %v6300 = vrot.slane %v6299, 4
        %v6302 = vshll.u32 %v6176, 16
        %v6304 = vrot.slane %v6302, 5
        %v6305 = vsel %vm1166, %v6300, %v6304
        %v6307 = vshrl.u32 %v6177, 16
        %v6309 = vrot.slane %v6307, 4
        %v6310 = vshll.u32 %v6177, 16
        %v6312 = vrot.slane %v6310, 5
        %v6313 = vor.u32 %v6309, %v6312
        %v6314 = vrot.slane %v6313, 4
        %v6316 = vshll.u32 %v6178, 16
        %v6318 = vrot.slane %v6316, 5
        %v6319 = vsel %vm1166, %v6314, %v6318
        %v6320 = vshrl.u32 %v6178, 16
        %v6322 = vrot.slane %v6320, 4
        %v6323 = vor.u32 %v6322, %v6318
        %v6324 = vrot.slane %v6323, 4
        %v6326 = vshll.u32 %v6179, 16
        %v6328 = vrot.slane %v6326, 5
        %v6329 = vsel %vm1166, %v6324, %v6328
        %v6331 = vshrl.u32 %v6180, 16
        %v6333 = vrot.slane %v6331, 4
        %v6334 = vshll.u32 %v6180, 16
        %v6336 = vrot.slane %v6334, 5
        %v6337 = vor.u32 %v6333, %v6336
        %v6338 = vrot.slane %v6337, 4
        %v6340 = vshll.u32 %v6181, 16
        %v6342 = vrot.slane %v6340, 5
        %v6343 = vsel %vm1166, %v6338, %v6342
        %v6344 = vshrl.u32 %v6181, 16
        %v6346 = vrot.slane %v6344, 4
        %v6347 = vor.u32 %v6346, %v6342
        %v6348 = vrot.slane %v6347, 4
        %v6350 = vshll.u32 %v6182, 16
        %v6352 = vrot.slane %v6350, 5
        %v6353 = vsel %vm1166, %v6348, %v6352
        %v6355 = vshrl.u32 %v6183, 16
        %v6357 = vrot.slane %v6355, 4
        %v6358 = vshll.u32 %v6183, 16
        %v6360 = vrot.slane %v6358, 5
        %v6361 = vor.u32 %v6357, %v6360
        %v6362 = vrot.slane %v6361, 4
        %v6364 = vshll.u32 %v6184, 16
        %v6366 = vrot.slane %v6364, 5
        %v6367 = vsel %vm1166, %v6362, %v6366
        %v6368 = vshrl.u32 %v6184, 16
        %v6370 = vrot.slane %v6368, 4
        %v6371 = vor.u32 %v6370, %v6366
        %v6372 = vrot.slane %v6371, 4
        %v6374 = vshll.u32 %v6185, 16
        %v6376 = vrot.slane %v6374, 5
        %v6377 = vsel %vm1166, %v6372, %v6376
        %v6378 = vld [vmem:[%s2449] sm:$0xf]
        %v6379 = vld [vmem:[%s2449 + $0x4] sm:$0xf]
        %v6380 = vld [vmem:[%s2449 + $0x8] sm:$0xf]
        %v6381 = vld [vmem:[%s2449 + $0xc] sm:$0xf]
        %v6382 = vld [vmem:[%s2449 + $0x10] sm:$0xf]
        %v6383 = vld [vmem:[%s2449 + $0x14] sm:$0xf]
        %v6384 = vld [vmem:[%s2449 + $0x18] sm:$0xf]
        %v6385 = vld [vmem:[%s2449 + $0x1c] sm:$0xf]
        %v6386 = vld [vmem:[%s2449 + $0x20] sm:$0xf]
        %v6387 = vld [vmem:[%s2449 + $0x24] sm:$0xf]
        %v6388 = vld [vmem:[%s2449 + $0x28] sm:$0xf]
        %v6389 = vld [vmem:[%s2449 + $0x2c] sm:$0xf]
        %v6390 = vld [vmem:[%s2449 + $0x30] sm:$0xf]
        %v6391 = vld [vmem:[%s2449 + $0x34] sm:$0xf]
        %v6392 = vld [vmem:[%s2449 + $0x38] sm:$0xf]
        %v6393 = vld [vmem:[%s2449 + $0x3c] sm:$0xf]
        %v6394 = vunpack.c.l.b16 %v6199
        %v6395 = vunpack.c.l.b16 %v6209
        %v6396 = vunpack.c.l.b16 %v6223
        %v6397 = vunpack.c.l.b16 %v6233
        %v6398 = vunpack.c.l.b16 %v6247
        %v6399 = vunpack.c.l.b16 %v6257
        %v6400 = vunpack.c.l.b16 %v6271
        %v6401 = vunpack.c.l.b16 %v6281
        %v6402 = vunpack.c.l.b16 %v6295
        %v6403 = vunpack.c.l.b16 %v6305
        %v6404 = vunpack.c.l.b16 %v6319
        %v6405 = vunpack.c.l.b16 %v6329
        %v6406 = vunpack.c.l.b16 %v6343
        %v6407 = vunpack.c.l.b16 %v6353
        %v6408 = vunpack.c.l.b16 %v6367
        %v6409 = vunpack.c.l.b16 %v6377
        %v6410 = vpack.c.b16 %v6395, %v6394
        %v6411 = vpack.c.b16 %v6397, %v6396
        %v6412 = vpack.c.b16 %v6399, %v6398
        %v6413 = vpack.c.b16 %v6401, %v6400
        %v6414 = vpack.c.b16 %v6403, %v6402
        %v6415 = vpack.c.b16 %v6405, %v6404
        %v6416 = vpack.c.b16 %v6407, %v6406
        %v6417 = vpack.c.b16 %v6409, %v6408
        %v6442 = vunpack.c.l.b16 %v6378
        %v6443 = vunpack.c.l.b16 %v6379
        %v6444 = vunpack.c.l.b16 %v6380
        %v6445 = vunpack.c.l.b16 %v6381
        %v6446 = vunpack.c.l.b16 %v6382
        %v6447 = vunpack.c.l.b16 %v6383
        %v6448 = vunpack.c.l.b16 %v6384
        %v6449 = vunpack.c.l.b16 %v6385
        %v6450 = vunpack.c.l.b16 %v6386
        %v6451 = vunpack.c.l.b16 %v6387
        %v6452 = vunpack.c.l.b16 %v6388
        %v6453 = vunpack.c.l.b16 %v6389
        %v6454 = vunpack.c.l.b16 %v6390
        %v6455 = vunpack.c.l.b16 %v6391
        %v6456 = vunpack.c.l.b16 %v6392
        %v6457 = vunpack.c.l.b16 %v6393
        %v6458 = vpack.c.b16 %v6443, %v6442
        %v6459 = vpack.c.b16 %v6445, %v6444
        %v6460 = vpack.c.b16 %v6447, %v6446
        %v6461 = vpack.c.b16 %v6449, %v6448
        %v6462 = vpack.c.b16 %v6451, %v6450
        %v6463 = vpack.c.b16 %v6453, %v6452
        %v6464 = vpack.c.b16 %v6455, %v6454
        %v6465 = vpack.c.b16 %v6457, %v6456
        %6474 = vmatprep.subr.bf16.mxu0 0
        %6475 = vmatpush1.bf16.msra.mxu0 %v6465
        %6476 = vmatprep.subr.bf16.mxu0 0
        %6477 = vmatpush1.bf16.msra.mxu0 %v6464
        %6478 = vmatprep.subr.bf16.mxu0 0
        %6479 = vmatpush1.bf16.msra.mxu0 %v6463
        %6480 = vmatprep.subr.bf16.mxu0 0
        %6481 = vmatpush1.bf16.msra.mxu0 %v6462
        %6482 = vmatprep.subr.bf16.mxu0 0
        %6483 = vmatpush1.bf16.msra.mxu0 %v6461
        %6484 = vmatprep.subr.bf16.mxu0 0
        %6485 = vmatpush1.bf16.msra.mxu0 %v6460
        %6486 = vmatprep.subr.bf16.mxu0 0
        %6487 = vmatpush1.bf16.msra.mxu0 %v6459
        %6488 = vmatprep.subr.bf16.mxu0 0
        %6489 = vmatpush1.bf16.msra.mxu0 %v6458
        %6490 = vmatprep.subr.bf16.mxu0 0
        %6491 = vmatpush2.bf16.msra.mxu0 0
        %6492 = vmatprep.subr.bf16.mxu0 0
        %6493 = vmatpush2.bf16.msra.mxu0 0
        %6494 = vmatprep.subr.bf16.mxu0 0
        %6495 = vmatpush2.bf16.msra.mxu0 0
        %6496 = vmatprep.subr.bf16.mxu0 0
        %6497 = vmatpush2.bf16.msra.mxu0 0
        %6498 = vmatprep.subr.bf16.mxu0 0
        %6499 = vmatpush2.bf16.msra.mxu0 0
        %6500 = vmatprep.subr.bf16.mxu0 0
        %6501 = vmatpush2.bf16.msra.mxu0 0
        %6502 = vmatprep.subr.bf16.mxu0 0
        %6503 = vmatpush2.bf16.msra.mxu0 0
        %6504 = vmatprep.subr.bf16.mxu0 0
        %6505 = vmatpush2.bf16.msra.mxu0 0
        %6506 = vmatprep.mubr.bf16.mxu0 0
        %6507 = vmatmul.mubr.bf16.gmra.mxu0 %v6410
        %v6508 = vpop.f32.mrf.mxu0
        %v6509 = vadd.f32 0.0, %v6508
        %v6510 = vpop.f32.mrf.mxu0
        %v6511 = vpop.f32.mrf.mxu0
        %v6512 = vadd.f32 0.0, %v6511
        %v6513 = vpop.f32.mrf.mxu0
        %6514 = vmatprep.mubr.bf16.mxu0 0
        %6515 = vmatmul.mubr.bf16.gmra.mxu0 %v6411
        %v6516 = vpop.f32.mrf.mxu0
        %v6517 = vpop.f32.mrf.mxu0
        %v6518 = vpop.f32.mrf.mxu0
        %v6519 = vpop.f32.mrf.mxu0
        %6520 = vmatprep.mubr.bf16.mxu0 0
        %6521 = vmatmul.mubr.bf16.gmra.mxu0 %v6412
        %v6522 = vpop.f32.mrf.mxu0
        %v6523 = vadd.f32 0.0, %v6522
        %v6524 = vpop.f32.mrf.mxu0
        %v6525 = vpop.f32.mrf.mxu0
        %v6526 = vadd.f32 0.0, %v6525
        %v6527 = vpop.f32.mrf.mxu0
        %6528 = vmatprep.mubr.bf16.mxu0 0
        %6529 = vmatmul.mubr.bf16.gmra.mxu0 %v6413
        %v6530 = vpop.f32.mrf.mxu0
        %v6531 = vpop.f32.mrf.mxu0
        %v6532 = vpop.f32.mrf.mxu0
        %v6533 = vpop.f32.mrf.mxu0
        %6534 = vmatprep.mubr.bf16.mxu0 0
        %6535 = vmatmul.mubr.bf16.gmra.mxu0 %v6414
        %v6536 = vpop.f32.mrf.mxu0
        %v6537 = vadd.f32 0.0, %v6536
        %v6538 = vpop.f32.mrf.mxu0
        %v6539 = vpop.f32.mrf.mxu0
        %v6540 = vadd.f32 0.0, %v6539
        %v6541 = vpop.f32.mrf.mxu0
        %6542 = vmatprep.mubr.bf16.mxu0 0
        %6543 = vmatmul.mubr.bf16.gmra.mxu0 %v6415
        %v6544 = vpop.f32.mrf.mxu0
        %v6545 = vpop.f32.mrf.mxu0
        %v6546 = vpop.f32.mrf.mxu0
        %v6547 = vpop.f32.mrf.mxu0
        %6548 = vmatprep.mubr.bf16.mxu0 0
        %6549 = vmatmul.mubr.bf16.gmra.mxu0 %v6416
        %v6550 = vpop.f32.mrf.mxu0
        %v6551 = vadd.f32 0.0, %v6550
        %v6552 = vpop.f32.mrf.mxu0
        %v6553 = vpop.f32.mrf.mxu0
        %v6554 = vadd.f32 0.0, %v6553
        %v6555 = vpop.f32.mrf.mxu0
        %6556 = vmatprep.mubr.bf16.mxu0 0
        %6557 = vmatmul.mubr.bf16.gmra.mxu0 %v6417
        %v6558 = vpop.f32.mrf.mxu0
        %v6559 = vpop.f32.mrf.mxu0
        %v6560 = vpop.f32.mrf.mxu0
        %v6561 = vpop.f32.mrf.mxu0
        %6562 = vdwg.mxu0
        %v6563 = vadd.f32 %v6154, %v6509
        %v6564 = vadd.f32 %v6155, %v6512
        %v6565 = vadd.f32 %v6156, %v6523
        %v6566 = vadd.f32 %v6157, %v6526
        %v6567 = vadd.f32 %v6158, %v6537
        %v6568 = vadd.f32 %v6159, %v6540
        %v6569 = vadd.f32 %v6160, %v6551
        %v6570 = vadd.f32 %v6161, %v6554
        %v6571 = vld [vmem:[%s5936] sm:$0xe]
        %v6572 = vld [vmem:[%s5936 + $0xc] sm:$0xe]
        %v6573 = vld [vmem:[%s5936 + $0x18] sm:$0xe]
        %v6574 = vld [vmem:[%s5936 + $0x24] sm:$0xe]
        %v6575 = vld [vmem:[%s5936 + $0x30] sm:$0xe]
        %v6576 = vld [vmem:[%s5936 + $0x3c] sm:$0xe]
        %v6577 = vld [vmem:[%s5936 + $0x48] sm:$0xe]
        %v6578 = vld [vmem:[%s5936 + $0x54] sm:$0xe]
        %v6603 = vrot.slane %v6571, 5
        %v6604 = vrot.slane %v6603, 4
        %v6605 = vrot.slane %v6163, 5
        %v6606 = vsel %vm1756, %v6604, %v6605
        %v6607 = vrot.slane %v6605, 4
        %v6608 = vrot.slane %v6164, 5
        %v6609 = vsel %vm1756, %v6607, %v6608
        %v6610 = vrot.slane %v6572, 5
        %v6611 = vrot.slane %v6610, 4
        %v6612 = vrot.slane %v6166, 5
        %v6613 = vsel %vm1756, %v6611, %v6612
        %v6614 = vrot.slane %v6612, 4
        %v6615 = vrot.slane %v6167, 5
        %v6616 = vsel %vm1756, %v6614, %v6615
        %v6617 = vrot.slane %v6573, 5
        %v6618 = vrot.slane %v6617, 4
        %v6619 = vrot.slane %v6169, 5
        %v6620 = vsel %vm1756, %v6618, %v6619
        %v6621 = vrot.slane %v6619, 4
        %v6622 = vrot.slane %v6170, 5
        %v6623 = vsel %vm1756, %v6621, %v6622
        %v6624 = vrot.slane %v6574, 5
        %v6625 = vrot.slane %v6624, 4
        %v6626 = vrot.slane %v6172, 5
        %v6627 = vsel %vm1756, %v6625, %v6626
        %v6628 = vrot.slane %v6626, 4
        %v6629 = vrot.slane %v6173, 5
        %v6630 = vsel %vm1756, %v6628, %v6629
        %v6631 = vrot.slane %v6575, 5
        %v6632 = vrot.slane %v6631, 4
        %v6633 = vrot.slane %v6175, 5
        %v6634 = vsel %vm1756, %v6632, %v6633
        %v6635 = vrot.slane %v6633, 4
        %v6636 = vrot.slane %v6176, 5
        %v6637 = vsel %vm1756, %v6635, %v6636
        %v6638 = vrot.slane %v6576, 5
        %v6639 = vrot.slane %v6638, 4
        %v6640 = vrot.slane %v6178, 5
        %v6641 = vsel %vm1756, %v6639, %v6640
        %v6642 = vrot.slane %v6640, 4
        %v6643 = vrot.slane %v6179, 5
        %v6644 = vsel %vm1756, %v6642, %v6643
        %v6645 = vrot.slane %v6577, 5
        %v6646 = vrot.slane %v6645, 4
        %v6647 = vrot.slane %v6181, 5
        %v6648 = vsel %vm1756, %v6646, %v6647
        %v6649 = vrot.slane %v6647, 4
        %v6650 = vrot.slane %v6182, 5
        %v6651 = vsel %vm1756, %v6649, %v6650
        %v6652 = vrot.slane %v6578, 5
        %v6653 = vrot.slane %v6652, 4
        %v6654 = vrot.slane %v6184, 5
        %v6655 = vsel %vm1756, %v6653, %v6654
        %v6656 = vrot.slane %v6654, 4
        %v6657 = vrot.slane %v6185, 5
        %v6658 = vsel %vm1756, %v6656, %v6657
        %v6659 = vld [vmem:[%s2731] sm:$0xf]
        %v6660 = vld [vmem:[%s2731 + $0x4] sm:$0xf]
        %v6661 = vld [vmem:[%s2731 + $0x8] sm:$0xf]
        %v6662 = vld [vmem:[%s2731 + $0xc] sm:$0xf]
        %v6663 = vld [vmem:[%s2731 + $0x10] sm:$0xf]
        %v6664 = vld [vmem:[%s2731 + $0x14] sm:$0xf]
        %v6665 = vld [vmem:[%s2731 + $0x18] sm:$0xf]
        %v6666 = vld [vmem:[%s2731 + $0x1c] sm:$0xf]
        %v6667 = vld [vmem:[%s2731 + $0x20] sm:$0xf]
        %v6668 = vld [vmem:[%s2731 + $0x24] sm:$0xf]
        %v6669 = vld [vmem:[%s2731 + $0x28] sm:$0xf]
        %v6670 = vld [vmem:[%s2731 + $0x2c] sm:$0xf]
        %v6671 = vld [vmem:[%s2731 + $0x30] sm:$0xf]
        %v6672 = vld [vmem:[%s2731 + $0x34] sm:$0xf]
        %v6673 = vld [vmem:[%s2731 + $0x38] sm:$0xf]
        %v6674 = vld [vmem:[%s2731 + $0x3c] sm:$0xf]
        %v6675 = vunpack.c.l.b16 %v6606
        %v6676 = vunpack.c.l.b16 %v6609
        %v6677 = vunpack.c.l.b16 %v6613
        %v6678 = vunpack.c.l.b16 %v6616
        %v6679 = vunpack.c.l.b16 %v6620
        %v6680 = vunpack.c.l.b16 %v6623
        %v6681 = vunpack.c.l.b16 %v6627
        %v6682 = vunpack.c.l.b16 %v6630
        %v6683 = vunpack.c.l.b16 %v6634
        %v6684 = vunpack.c.l.b16 %v6637
        %v6685 = vunpack.c.l.b16 %v6641
        %v6686 = vunpack.c.l.b16 %v6644
        %v6687 = vunpack.c.l.b16 %v6648
        %v6688 = vunpack.c.l.b16 %v6651
        %v6689 = vunpack.c.l.b16 %v6655
        %v6690 = vunpack.c.l.b16 %v6658
        %v6691 = vpack.c.b16 %v6676, %v6675
        %v6692 = vpack.c.b16 %v6678, %v6677
        %v6693 = vpack.c.b16 %v6680, %v6679
        %v6694 = vpack.c.b16 %v6682, %v6681
        %v6695 = vpack.c.b16 %v6684, %v6683
        %v6696 = vpack.c.b16 %v6686, %v6685
        %v6697 = vpack.c.b16 %v6688, %v6687
        %v6698 = vpack.c.b16 %v6690, %v6689
        %v6723 = vunpack.c.l.b16 %v6659
        %v6724 = vunpack.c.l.b16 %v6660
        %v6725 = vunpack.c.l.b16 %v6661
        %v6726 = vunpack.c.l.b16 %v6662
        %v6727 = vunpack.c.l.b16 %v6663
        %v6728 = vunpack.c.l.b16 %v6664
        %v6729 = vunpack.c.l.b16 %v6665
        %v6730 = vunpack.c.l.b16 %v6666
        %v6731 = vunpack.c.l.b16 %v6667
        %v6732 = vunpack.c.l.b16 %v6668
        %v6733 = vunpack.c.l.b16 %v6669
        %v6734 = vunpack.c.l.b16 %v6670
        %v6735 = vunpack.c.l.b16 %v6671
        %v6736 = vunpack.c.l.b16 %v6672
        %v6737 = vunpack.c.l.b16 %v6673
        %v6738 = vunpack.c.l.b16 %v6674
        %v6739 = vpack.c.b16 %v6724, %v6723
        %v6740 = vpack.c.b16 %v6726, %v6725
        %v6741 = vpack.c.b16 %v6728, %v6727
        %v6742 = vpack.c.b16 %v6730, %v6729
        %v6743 = vpack.c.b16 %v6732, %v6731
        %v6744 = vpack.c.b16 %v6734, %v6733
        %v6745 = vpack.c.b16 %v6736, %v6735
        %v6746 = vpack.c.b16 %v6738, %v6737
        %6755 = vmatprep.subr.bf16.mxu0 0
        %6756 = vmatpush1.bf16.msra.mxu0 %v6746
        %6757 = vmatprep.subr.bf16.mxu0 0
        %6758 = vmatpush1.bf16.msra.mxu0 %v6745
        %6759 = vmatprep.subr.bf16.mxu0 0
        %6760 = vmatpush1.bf16.msra.mxu0 %v6744
        %6761 = vmatprep.subr.bf16.mxu0 0
        %6762 = vmatpush1.bf16.msra.mxu0 %v6743
        %6763 = vmatprep.subr.bf16.mxu0 0
        %6764 = vmatpush1.bf16.msra.mxu0 %v6742
        %6765 = vmatprep.subr.bf16.mxu0 0
        %6766 = vmatpush1.bf16.msra.mxu0 %v6741
        %6767 = vmatprep.subr.bf16.mxu0 0
        %6768 = vmatpush1.bf16.msra.mxu0 %v6740
        %6769 = vmatprep.subr.bf16.mxu0 0
        %6770 = vmatpush1.bf16.msra.mxu0 %v6739
        %6771 = vmatprep.subr.bf16.mxu0 0
        %6772 = vmatpush2.bf16.msra.mxu0 0
        %6773 = vmatprep.subr.bf16.mxu0 0
        %6774 = vmatpush2.bf16.msra.mxu0 0
        %6775 = vmatprep.subr.bf16.mxu0 0
        %6776 = vmatpush2.bf16.msra.mxu0 0
        %6777 = vmatprep.subr.bf16.mxu0 0
        %6778 = vmatpush2.bf16.msra.mxu0 0
        %6779 = vmatprep.subr.bf16.mxu0 0
        %6780 = vmatpush2.bf16.msra.mxu0 0
        %6781 = vmatprep.subr.bf16.mxu0 0
        %6782 = vmatpush2.bf16.msra.mxu0 0
        %6783 = vmatprep.subr.bf16.mxu0 0
        %6784 = vmatpush2.bf16.msra.mxu0 0
        %6785 = vmatprep.subr.bf16.mxu0 0
        %6786 = vmatpush2.bf16.msra.mxu0 0
        %6787 = vmatprep.mubr.bf16.mxu0 0
        %6788 = vmatmul.mubr.bf16.gmra.mxu0 %v6691
        %v6789 = vpop.f32.mrf.mxu0
        %v6790 = vadd.f32 0.0, %v6789
        %v6791 = vpop.f32.mrf.mxu0
        %v6792 = vpop.f32.mrf.mxu0
        %v6793 = vadd.f32 0.0, %v6792
        %v6794 = vpop.f32.mrf.mxu0
        %6795 = vmatprep.mubr.bf16.mxu0 0
        %6796 = vmatmul.mubr.bf16.gmra.mxu0 %v6692
        %v6797 = vpop.f32.mrf.mxu0
        %v6798 = vpop.f32.mrf.mxu0
        %v6799 = vpop.f32.mrf.mxu0
        %v6800 = vpop.f32.mrf.mxu0
        %6801 = vmatprep.mubr.bf16.mxu0 0
        %6802 = vmatmul.mubr.bf16.gmra.mxu0 %v6693
        %v6803 = vpop.f32.mrf.mxu0
        %v6804 = vadd.f32 0.0, %v6803
        %v6805 = vpop.f32.mrf.mxu0
        %v6806 = vpop.f32.mrf.mxu0
        %v6807 = vadd.f32 0.0, %v6806
        %v6808 = vpop.f32.mrf.mxu0
        %6809 = vmatprep.mubr.bf16.mxu0 0
        %6810 = vmatmul.mubr.bf16.gmra.mxu0 %v6694
        %v6811 = vpop.f32.mrf.mxu0
        %v6812 = vpop.f32.mrf.mxu0
        %v6813 = vpop.f32.mrf.mxu0
        %v6814 = vpop.f32.mrf.mxu0
        %6815 = vmatprep.mubr.bf16.mxu0 0
        %6816 = vmatmul.mubr.bf16.gmra.mxu0 %v6695
        %v6817 = vpop.f32.mrf.mxu0
        %v6818 = vadd.f32 0.0, %v6817
        %v6819 = vpop.f32.mrf.mxu0
        %v6820 = vpop.f32.mrf.mxu0
        %v6821 = vadd.f32 0.0, %v6820
        %v6822 = vpop.f32.mrf.mxu0
        %6823 = vmatprep.mubr.bf16.mxu0 0
        %6824 = vmatmul.mubr.bf16.gmra.mxu0 %v6696
        %v6825 = vpop.f32.mrf.mxu0
        %v6826 = vpop.f32.mrf.mxu0
        %v6827 = vpop.f32.mrf.mxu0
        %v6828 = vpop.f32.mrf.mxu0
        %6829 = vmatprep.mubr.bf16.mxu0 0
        %6830 = vmatmul.mubr.bf16.gmra.mxu0 %v6697
        %v6831 = vpop.f32.mrf.mxu0
        %v6832 = vadd.f32 0.0, %v6831
        %v6833 = vpop.f32.mrf.mxu0
        %v6834 = vpop.f32.mrf.mxu0
        %v6835 = vadd.f32 0.0, %v6834
        %v6836 = vpop.f32.mrf.mxu0
        %6837 = vmatprep.mubr.bf16.mxu0 0
        %6838 = vmatmul.mubr.bf16.gmra.mxu0 %v6698
        %v6839 = vpop.f32.mrf.mxu0
        %v6840 = vpop.f32.mrf.mxu0
        %v6841 = vpop.f32.mrf.mxu0
        %v6842 = vpop.f32.mrf.mxu0
        %6843 = vdwg.mxu0
        %v6844 = vadd.f32 %v6563, %v6790
        %v6845 = vadd.f32 %v6564, %v6793
        %v6846 = vadd.f32 %v6565, %v6804
        %v6847 = vadd.f32 %v6566, %v6807
        %v6848 = vadd.f32 %v6567, %v6818
        %v6849 = vadd.f32 %v6568, %v6821
        %v6850 = vadd.f32 %v6569, %v6832
        %v6851 = vadd.f32 %v6570, %v6835
        %s6852 = scalar_lea.vmem [#allocation2], 120
        %v6853 = vld [vmem:[%s6852] sm:$0xf]
        %v6854 = vld [vmem:[%s6852 + $0x4] sm:$0xf]
        %v6855 = vld [vmem:[%s6852 + $0xc] sm:$0xf]
        %v6856 = vld [vmem:[%s6852 + $0x10] sm:$0xf]
        %v6857 = vld [vmem:[%s6852 + $0x18] sm:$0xf]
        %v6858 = vld [vmem:[%s6852 + $0x1c] sm:$0xf]
        %v6859 = vld [vmem:[%s6852 + $0x24] sm:$0xf]
        %v6860 = vld [vmem:[%s6852 + $0x28] sm:$0xf]
        %v6861 = vld [vmem:[%s6852 + $0x30] sm:$0xf]
        %v6862 = vld [vmem:[%s6852 + $0x34] sm:$0xf]
        %v6863 = vld [vmem:[%s6852 + $0x3c] sm:$0xf]
        %v6864 = vld [vmem:[%s6852 + $0x40] sm:$0xf]
        %v6865 = vld [vmem:[%s6852 + $0x48] sm:$0xf]
        %v6866 = vld [vmem:[%s6852 + $0x4c] sm:$0xf]
        %v6867 = vld [vmem:[%s6852 + $0x54] sm:$0xf]
        %v6868 = vld [vmem:[%s6852 + $0x58] sm:$0xf]
        %v6869 = vld [vmem:[%s2942] sm:$0xf]
        %v6870 = vld [vmem:[%s2942 + $0x4] sm:$0xf]
        %v6871 = vld [vmem:[%s2942 + $0x8] sm:$0xf]
        %v6872 = vld [vmem:[%s2942 + $0xc] sm:$0xf]
        %v6873 = vld [vmem:[%s2942 + $0x10] sm:$0xf]
        %v6874 = vld [vmem:[%s2942 + $0x14] sm:$0xf]
        %v6875 = vld [vmem:[%s2942 + $0x18] sm:$0xf]
        %v6876 = vld [vmem:[%s2942 + $0x1c] sm:$0xf]
        %v6877 = vld [vmem:[%s2942 + $0x20] sm:$0xf]
        %v6878 = vld [vmem:[%s2942 + $0x24] sm:$0xf]
        %v6879 = vld [vmem:[%s2942 + $0x28] sm:$0xf]
        %v6880 = vld [vmem:[%s2942 + $0x2c] sm:$0xf]
        %v6881 = vld [vmem:[%s2942 + $0x30] sm:$0xf]
        %v6882 = vld [vmem:[%s2942 + $0x34] sm:$0xf]
        %v6883 = vld [vmem:[%s2942 + $0x38] sm:$0xf]
        %v6884 = vld [vmem:[%s2942 + $0x3c] sm:$0xf]
        %v6901 = vunpack.c.l.b16 %v6853
        %v6902 = vunpack.c.l.b16 %v6854
        %v6903 = vunpack.c.l.b16 %v6855
        %v6904 = vunpack.c.l.b16 %v6856
        %v6905 = vunpack.c.l.b16 %v6857
        %v6906 = vunpack.c.l.b16 %v6858
        %v6907 = vunpack.c.l.b16 %v6859
        %v6908 = vunpack.c.l.b16 %v6860
        %v6909 = vunpack.c.l.b16 %v6861
        %v6910 = vunpack.c.l.b16 %v6862
        %v6911 = vunpack.c.l.b16 %v6863
        %v6912 = vunpack.c.l.b16 %v6864
        %v6913 = vunpack.c.l.b16 %v6865
        %v6914 = vunpack.c.l.b16 %v6866
        %v6915 = vunpack.c.l.b16 %v6867
        %v6916 = vunpack.c.l.b16 %v6868
        %v6917 = vpack.c.b16 %v6902, %v6901
        %v6918 = vpack.c.b16 %v6904, %v6903
        %v6919 = vpack.c.b16 %v6906, %v6905
        %v6920 = vpack.c.b16 %v6908, %v6907
        %v6921 = vpack.c.b16 %v6910, %v6909
        %v6922 = vpack.c.b16 %v6912, %v6911
        %v6923 = vpack.c.b16 %v6914, %v6913
        %v6924 = vpack.c.b16 %v6916, %v6915
        %v6949 = vunpack.c.l.b16 %v6869
        %v6950 = vunpack.c.l.b16 %v6870
        %v6951 = vunpack.c.l.b16 %v6871
        %v6952 = vunpack.c.l.b16 %v6872
        %v6953 = vunpack.c.l.b16 %v6873
        %v6954 = vunpack.c.l.b16 %v6874
        %v6955 = vunpack.c.l.b16 %v6875
        %v6956 = vunpack.c.l.b16 %v6876
        %v6957 = vunpack.c.l.b16 %v6877
        %v6958 = vunpack.c.l.b16 %v6878
        %v6959 = vunpack.c.l.b16 %v6879
        %v6960 = vunpack.c.l.b16 %v6880
        %v6961 = vunpack.c.l.b16 %v6881
        %v6962 = vunpack.c.l.b16 %v6882
        %v6963 = vunpack.c.l.b16 %v6883
        %v6964 = vunpack.c.l.b16 %v6884
        %v6965 = vpack.c.b16 %v6950, %v6949
        %v6966 = vpack.c.b16 %v6952, %v6951
        %v6967 = vpack.c.b16 %v6954, %v6953
        %v6968 = vpack.c.b16 %v6956, %v6955
        %v6969 = vpack.c.b16 %v6958, %v6957
        %v6970 = vpack.c.b16 %v6960, %v6959
        %v6971 = vpack.c.b16 %v6962, %v6961
        %v6972 = vpack.c.b16 %v6964, %v6963
        %6981 = vmatprep.subr.bf16.mxu0 0
        %6982 = vmatpush1.bf16.msra.mxu0 %v6972
        %6983 = vmatprep.subr.bf16.mxu0 0
        %6984 = vmatpush1.bf16.msra.mxu0 %v6971
        %6985 = vmatprep.subr.bf16.mxu0 0
        %6986 = vmatpush1.bf16.msra.mxu0 %v6970
        %6987 = vmatprep.subr.bf16.mxu0 0
        %6988 = vmatpush1.bf16.msra.mxu0 %v6969
        %6989 = vmatprep.subr.bf16.mxu0 0
        %6990 = vmatpush1.bf16.msra.mxu0 %v6968
        %6991 = vmatprep.subr.bf16.mxu0 0
        %6992 = vmatpush1.bf16.msra.mxu0 %v6967
        %6993 = vmatprep.subr.bf16.mxu0 0
        %6994 = vmatpush1.bf16.msra.mxu0 %v6966
        %6995 = vmatprep.subr.bf16.mxu0 0
        %6996 = vmatpush1.bf16.msra.mxu0 %v6965
        %6997 = vmatprep.subr.bf16.mxu0 0
        %6998 = vmatpush2.bf16.msra.mxu0 0
        %6999 = vmatprep.subr.bf16.mxu0 0
        %7000 = vmatpush2.bf16.msra.mxu0 0
        %7001 = vmatprep.subr.bf16.mxu0 0
        %7002 = vmatpush2.bf16.msra.mxu0 0
        %7003 = vmatprep.subr.bf16.mxu0 0
        %7004 = vmatpush2.bf16.msra.mxu0 0
        %7005 = vmatprep.subr.bf16.mxu0 0
        %7006 = vmatpush2.bf16.msra.mxu0 0
        %7007 = vmatprep.subr.bf16.mxu0 0
        %7008 = vmatpush2.bf16.msra.mxu0 0
        %7009 = vmatprep.subr.bf16.mxu0 0
        %7010 = vmatpush2.bf16.msra.mxu0 0
        %7011 = vmatprep.subr.bf16.mxu0 0
        %7012 = vmatpush2.bf16.msra.mxu0 0
        %7013 = vmatprep.mubr.bf16.mxu0 0
        %7014 = vmatmul.mubr.bf16.gmra.mxu0 %v6917
        %v7015 = vpop.f32.mrf.mxu0
        %v7016 = vadd.f32 0.0, %v7015
        %v7017 = vpop.f32.mrf.mxu0
        %v7018 = vpop.f32.mrf.mxu0
        %v7019 = vadd.f32 0.0, %v7018
        %v7020 = vpop.f32.mrf.mxu0
        %7021 = vmatprep.mubr.bf16.mxu0 0
        %7022 = vmatmul.mubr.bf16.gmra.mxu0 %v6918
        %v7023 = vpop.f32.mrf.mxu0
        %v7024 = vpop.f32.mrf.mxu0
        %v7025 = vpop.f32.mrf.mxu0
        %v7026 = vpop.f32.mrf.mxu0
        %7027 = vmatprep.mubr.bf16.mxu0 0
        %7028 = vmatmul.mubr.bf16.gmra.mxu0 %v6919
        %v7029 = vpop.f32.mrf.mxu0
        %v7030 = vadd.f32 0.0, %v7029
        %v7031 = vpop.f32.mrf.mxu0
        %v7032 = vpop.f32.mrf.mxu0
        %v7033 = vadd.f32 0.0, %v7032
        %v7034 = vpop.f32.mrf.mxu0
        %7035 = vmatprep.mubr.bf16.mxu0 0
        %7036 = vmatmul.mubr.bf16.gmra.mxu0 %v6920
        %v7037 = vpop.f32.mrf.mxu0
        %v7038 = vpop.f32.mrf.mxu0
        %v7039 = vpop.f32.mrf.mxu0
        %v7040 = vpop.f32.mrf.mxu0
        %7041 = vmatprep.mubr.bf16.mxu0 0
        %7042 = vmatmul.mubr.bf16.gmra.mxu0 %v6921
        %v7043 = vpop.f32.mrf.mxu0
        %v7044 = vadd.f32 0.0, %v7043
        %v7045 = vpop.f32.mrf.mxu0
        %v7046 = vpop.f32.mrf.mxu0
        %v7047 = vadd.f32 0.0, %v7046
        %v7048 = vpop.f32.mrf.mxu0
        %7049 = vmatprep.mubr.bf16.mxu0 0
        %7050 = vmatmul.mubr.bf16.gmra.mxu0 %v6922
        %v7051 = vpop.f32.mrf.mxu0
        %v7052 = vpop.f32.mrf.mxu0
        %v7053 = vpop.f32.mrf.mxu0
        %v7054 = vpop.f32.mrf.mxu0
        %7055 = vmatprep.mubr.bf16.mxu0 0
        %7056 = vmatmul.mubr.bf16.gmra.mxu0 %v6923
        %v7057 = vpop.f32.mrf.mxu0
        %v7058 = vadd.f32 0.0, %v7057
        %v7059 = vpop.f32.mrf.mxu0
        %v7060 = vpop.f32.mrf.mxu0
        %v7061 = vadd.f32 0.0, %v7060
        %v7062 = vpop.f32.mrf.mxu0
        %7063 = vmatprep.mubr.bf16.mxu0 0
        %7064 = vmatmul.mubr.bf16.gmra.mxu0 %v6924
        %v7065 = vpop.f32.mrf.mxu0
        %v7066 = vpop.f32.mrf.mxu0
        %v7067 = vpop.f32.mrf.mxu0
        %v7068 = vpop.f32.mrf.mxu0
        %7069 = vdwg.mxu0
        %v7070 = vadd.f32 %v6844, %v7016
        %v7071 = vadd.f32 %v6845, %v7019
        %v7072 = vadd.f32 %v6846, %v7030
        %v7073 = vadd.f32 %v6847, %v7033
        %v7074 = vadd.f32 %v6848, %v7044
        %v7075 = vadd.f32 %v6849, %v7047
        %v7076 = vadd.f32 %v6850, %v7058
        %v7077 = vadd.f32 %v6851, %v7061
        %v7078 = vld [vmem:[%s6852] sm:$0xf]
        %v7079 = vld [vmem:[%s6852 + $0x4] sm:$0xf]
        %v7080 = vld [vmem:[%s6852 + $0x8] sm:$0x1]
        %v7081 = vld [vmem:[%s6852 + $0xc] sm:$0xf]
        %v7082 = vld [vmem:[%s6852 + $0x10] sm:$0xf]
        %v7083 = vld [vmem:[%s6852 + $0x14] sm:$0x1]
        %v7084 = vld [vmem:[%s6852 + $0x18] sm:$0xf]
        %v7085 = vld [vmem:[%s6852 + $0x1c] sm:$0xf]
        %v7086 = vld [vmem:[%s6852 + $0x20] sm:$0x1]
        %v7087 = vld [vmem:[%s6852 + $0x24] sm:$0xf]
        %v7088 = vld [vmem:[%s6852 + $0x28] sm:$0xf]
        %v7089 = vld [vmem:[%s6852 + $0x2c] sm:$0x1]
        %v7090 = vld [vmem:[%s6852 + $0x30] sm:$0xf]
        %v7091 = vld [vmem:[%s6852 + $0x34] sm:$0xf]
        %v7092 = vld [vmem:[%s6852 + $0x38] sm:$0x1]
        %v7093 = vld [vmem:[%s6852 + $0x3c] sm:$0xf]
        %v7094 = vld [vmem:[%s6852 + $0x40] sm:$0xf]
        %v7095 = vld [vmem:[%s6852 + $0x44] sm:$0x1]
        %v7096 = vld [vmem:[%s6852 + $0x48] sm:$0xf]
        %v7097 = vld [vmem:[%s6852 + $0x4c] sm:$0xf]
        %v7098 = vld [vmem:[%s6852 + $0x50] sm:$0x1]
        %v7099 = vld [vmem:[%s6852 + $0x54] sm:$0xf]
        %v7100 = vld [vmem:[%s6852 + $0x58] sm:$0xf]
        %v7101 = vld [vmem:[%s6852 + $0x5c] sm:$0x1]
        %v7103 = vshrl.u32 %v7078, 16
        %v7105 = vrot.slane %v7103, 4
        %v7106 = vshll.u32 %v7078, 16
        %v7108 = vrot.slane %v7106, 5
        %v7109 = vor.u32 %v7105, %v7108
        %v7110 = vrot.slane %v7109, 4
        %v7112 = vshll.u32 %v7079, 16
        %v7114 = vrot.slane %v7112, 5
        %v7115 = vsel %vm1166, %v7110, %v7114
        %v7116 = vshrl.u32 %v7079, 16
        %v7118 = vrot.slane %v7116, 4
        %v7119 = vor.u32 %v7118, %v7114
        %v7120 = vrot.slane %v7119, 4
        %v7122 = vshll.u32 %v7080, 16
        %v7124 = vrot.slane %v7122, 5
        %v7125 = vsel %vm1166, %v7120, %v7124
        %v7127 = vshrl.u32 %v7081, 16
        %v7129 = vrot.slane %v7127, 4
        %v7130 = vshll.u32 %v7081, 16
        %v7132 = vrot.slane %v7130, 5
        %v7133 = vor.u32 %v7129, %v7132
        %v7134 = vrot.slane %v7133, 4
        %v7136 = vshll.u32 %v7082, 16
        %v7138 = vrot.slane %v7136, 5
        %v7139 = vsel %vm1166, %v7134, %v7138
        %v7140 = vshrl.u32 %v7082, 16
        %v7142 = vrot.slane %v7140, 4
        %v7143 = vor.u32 %v7142, %v7138
        %v7144 = vrot.slane %v7143, 4
        %v7146 = vshll.u32 %v7083, 16
        %v7148 = vrot.slane %v7146, 5
        %v7149 = vsel %vm1166, %v7144, %v7148
        %v7151 = vshrl.u32 %v7084, 16
        %v7153 = vrot.slane %v7151, 4
        %v7154 = vshll.u32 %v7084, 16
        %v7156 = vrot.slane %v7154, 5
        %v7157 = vor.u32 %v7153, %v7156
        %v7158 = vrot.slane %v7157, 4
        %v7160 = vshll.u32 %v7085, 16
        %v7162 = vrot.slane %v7160, 5
        %v7163 = vsel %vm1166, %v7158, %v7162
        %v7164 = vshrl.u32 %v7085, 16
        %v7166 = vrot.slane %v7164, 4
        %v7167 = vor.u32 %v7166, %v7162
        %v7168 = vrot.slane %v7167, 4
        %v7170 = vshll.u32 %v7086, 16
        %v7172 = vrot.slane %v7170, 5
        %v7173 = vsel %vm1166, %v7168, %v7172
        %v7175 = vshrl.u32 %v7087, 16
        %v7177 = vrot.slane %v7175, 4
        %v7178 = vshll.u32 %v7087, 16
        %v7180 = vrot.slane %v7178, 5
        %v7181 = vor.u32 %v7177, %v7180
        %v7182 = vrot.slane %v7181, 4
        %v7184 = vshll.u32 %v7088, 16
        %v7186 = vrot.slane %v7184, 5
        %v7187 = vsel %vm1166, %v7182, %v7186
        %v7188 = vshrl.u32 %v7088, 16
        %v7190 = vrot.slane %v7188, 4
        %v7191 = vor.u32 %v7190, %v7186
        %v7192 = vrot.slane %v7191, 4
        %v7194 = vshll.u32 %v7089, 16
        %v7196 = vrot.slane %v7194, 5
        %v7197 = vsel %vm1166, %v7192, %v7196
        %v7199 = vshrl.u32 %v7090, 16
        %v7201 = vrot.slane %v7199, 4
        %v7202 = vshll.u32 %v7090, 16
        %v7204 = vrot.slane %v7202, 5
        %v7205 = vor.u32 %v7201, %v7204
        %v7206 = vrot.slane %v7205, 4
        %v7208 = vshll.u32 %v7091, 16
        %v7210 = vrot.slane %v7208, 5
        %v7211 = vsel %vm1166, %v7206, %v7210
        %v7212 = vshrl.u32 %v7091, 16
        %v7214 = vrot.slane %v7212, 4
        %v7215 = vor.u32 %v7214, %v7210
        %v7216 = vrot.slane %v7215, 4
        %v7218 = vshll.u32 %v7092, 16
        %v7220 = vrot.slane %v7218, 5
        %v7221 = vsel %vm1166, %v7216, %v7220
        %v7223 = vshrl.u32 %v7093, 16
        %v7225 = vrot.slane %v7223, 4
        %v7226 = vshll.u32 %v7093, 16
        %v7228 = vrot.slane %v7226, 5
        %v7229 = vor.u32 %v7225, %v7228
        %v7230 = vrot.slane %v7229, 4
        %v7232 = vshll.u32 %v7094, 16
        %v7234 = vrot.slane %v7232, 5
        %v7235 = vsel %vm1166, %v7230, %v7234
        %v7236 = vshrl.u32 %v7094, 16
        %v7238 = vrot.slane %v7236, 4
        %v7239 = vor.u32 %v7238, %v7234
        %v7240 = vrot.slane %v7239, 4
        %v7242 = vshll.u32 %v7095, 16
        %v7244 = vrot.slane %v7242, 5
        %v7245 = vsel %vm1166, %v7240, %v7244
        %v7247 = vshrl.u32 %v7096, 16
        %v7249 = vrot.slane %v7247, 4
        %v7250 = vshll.u32 %v7096, 16
        %v7252 = vrot.slane %v7250, 5
        %v7253 = vor.u32 %v7249, %v7252
        %v7254 = vrot.slane %v7253, 4
        %v7256 = vshll.u32 %v7097, 16
        %v7258 = vrot.slane %v7256, 5
        %v7259 = vsel %vm1166, %v7254, %v7258
        %v7260 = vshrl.u32 %v7097, 16
        %v7262 = vrot.slane %v7260, 4
        %v7263 = vor.u32 %v7262, %v7258
        %v7264 = vrot.slane %v7263, 4
        %v7266 = vshll.u32 %v7098, 16
        %v7268 = vrot.slane %v7266, 5
        %v7269 = vsel %vm1166, %v7264, %v7268
        %v7271 = vshrl.u32 %v7099, 16
        %v7273 = vrot.slane %v7271, 4
        %v7274 = vshll.u32 %v7099, 16
        %v7276 = vrot.slane %v7274, 5
        %v7277 = vor.u32 %v7273, %v7276
        %v7278 = vrot.slane %v7277, 4
        %v7280 = vshll.u32 %v7100, 16
        %v7282 = vrot.slane %v7280, 5
        %v7283 = vsel %vm1166, %v7278, %v7282
        %v7284 = vshrl.u32 %v7100, 16
        %v7286 = vrot.slane %v7284, 4
        %v7287 = vor.u32 %v7286, %v7282
        %v7288 = vrot.slane %v7287, 4
        %v7290 = vshll.u32 %v7101, 16
        %v7292 = vrot.slane %v7290, 5
        %v7293 = vsel %vm1166, %v7288, %v7292
        %v7294 = vld [vmem:[%s3368] sm:$0xf]
        %v7295 = vld [vmem:[%s3368 + $0x4] sm:$0xf]
        %v7296 = vld [vmem:[%s3368 + $0x8] sm:$0xf]
        %v7297 = vld [vmem:[%s3368 + $0xc] sm:$0xf]
        %v7298 = vld [vmem:[%s3368 + $0x10] sm:$0xf]
        %v7299 = vld [vmem:[%s3368 + $0x14] sm:$0xf]
        %v7300 = vld [vmem:[%s3368 + $0x18] sm:$0xf]
        %v7301 = vld [vmem:[%s3368 + $0x1c] sm:$0xf]
        %v7302 = vld [vmem:[%s3368 + $0x20] sm:$0xf]
        %v7303 = vld [vmem:[%s3368 + $0x24] sm:$0xf]
        %v7304 = vld [vmem:[%s3368 + $0x28] sm:$0xf]
        %v7305 = vld [vmem:[%s3368 + $0x2c] sm:$0xf]
        %v7306 = vld [vmem:[%s3368 + $0x30] sm:$0xf]
        %v7307 = vld [vmem:[%s3368 + $0x34] sm:$0xf]
        %v7308 = vld [vmem:[%s3368 + $0x38] sm:$0xf]
        %v7309 = vld [vmem:[%s3368 + $0x3c] sm:$0xf]
        %v7310 = vunpack.c.l.b16 %v7115
        %v7311 = vunpack.c.l.b16 %v7125
        %v7312 = vunpack.c.l.b16 %v7139
        %v7313 = vunpack.c.l.b16 %v7149
        %v7314 = vunpack.c.l.b16 %v7163
        %v7315 = vunpack.c.l.b16 %v7173
        %v7316 = vunpack.c.l.b16 %v7187
        %v7317 = vunpack.c.l.b16 %v7197
        %v7318 = vunpack.c.l.b16 %v7211
        %v7319 = vunpack.c.l.b16 %v7221
        %v7320 = vunpack.c.l.b16 %v7235
        %v7321 = vunpack.c.l.b16 %v7245
        %v7322 = vunpack.c.l.b16 %v7259
        %v7323 = vunpack.c.l.b16 %v7269
        %v7324 = vunpack.c.l.b16 %v7283
        %v7325 = vunpack.c.l.b16 %v7293
        %v7326 = vpack.c.b16 %v7311, %v7310
        %v7327 = vpack.c.b16 %v7313, %v7312
        %v7328 = vpack.c.b16 %v7315, %v7314
        %v7329 = vpack.c.b16 %v7317, %v7316
        %v7330 = vpack.c.b16 %v7319, %v7318
        %v7331 = vpack.c.b16 %v7321, %v7320
        %v7332 = vpack.c.b16 %v7323, %v7322
        %v7333 = vpack.c.b16 %v7325, %v7324
        %v7358 = vunpack.c.l.b16 %v7294
        %v7359 = vunpack.c.l.b16 %v7295
        %v7360 = vunpack.c.l.b16 %v7296
        %v7361 = vunpack.c.l.b16 %v7297
        %v7362 = vunpack.c.l.b16 %v7298
        %v7363 = vunpack.c.l.b16 %v7299
        %v7364 = vunpack.c.l.b16 %v7300
        %v7365 = vunpack.c.l.b16 %v7301
        %v7366 = vunpack.c.l.b16 %v7302
        %v7367 = vunpack.c.l.b16 %v7303
        %v7368 = vunpack.c.l.b16 %v7304
        %v7369 = vunpack.c.l.b16 %v7305
        %v7370 = vunpack.c.l.b16 %v7306
        %v7371 = vunpack.c.l.b16 %v7307
        %v7372 = vunpack.c.l.b16 %v7308
        %v7373 = vunpack.c.l.b16 %v7309
        %v7374 = vpack.c.b16 %v7359, %v7358
        %v7375 = vpack.c.b16 %v7361, %v7360
        %v7376 = vpack.c.b16 %v7363, %v7362
        %v7377 = vpack.c.b16 %v7365, %v7364
        %v7378 = vpack.c.b16 %v7367, %v7366
        %v7379 = vpack.c.b16 %v7369, %v7368
        %v7380 = vpack.c.b16 %v7371, %v7370
        %v7381 = vpack.c.b16 %v7373, %v7372
        %7390 = vmatprep.subr.bf16.mxu0 0
        %7391 = vmatpush1.bf16.msra.mxu0 %v7381
        %7392 = vmatprep.subr.bf16.mxu0 0
        %7393 = vmatpush1.bf16.msra.mxu0 %v7380
        %7394 = vmatprep.subr.bf16.mxu0 0
        %7395 = vmatpush1.bf16.msra.mxu0 %v7379
        %7396 = vmatprep.subr.bf16.mxu0 0
        %7397 = vmatpush1.bf16.msra.mxu0 %v7378
        %7398 = vmatprep.subr.bf16.mxu0 0
        %7399 = vmatpush1.bf16.msra.mxu0 %v7377
        %7400 = vmatprep.subr.bf16.mxu0 0
        %7401 = vmatpush1.bf16.msra.mxu0 %v7376
        %7402 = vmatprep.subr.bf16.mxu0 0
        %7403 = vmatpush1.bf16.msra.mxu0 %v7375
        %7404 = vmatprep.subr.bf16.mxu0 0
        %7405 = vmatpush1.bf16.msra.mxu0 %v7374
        %7406 = vmatprep.subr.bf16.mxu0 0
        %7407 = vmatpush2.bf16.msra.mxu0 0
        %7408 = vmatprep.subr.bf16.mxu0 0
        %7409 = vmatpush2.bf16.msra.mxu0 0
        %7410 = vmatprep.subr.bf16.mxu0 0
        %7411 = vmatpush2.bf16.msra.mxu0 0
        %7412 = vmatprep.subr.bf16.mxu0 0
        %7413 = vmatpush2.bf16.msra.mxu0 0
        %7414 = vmatprep.subr.bf16.mxu0 0
        %7415 = vmatpush2.bf16.msra.mxu0 0
        %7416 = vmatprep.subr.bf16.mxu0 0
        %7417 = vmatpush2.bf16.msra.mxu0 0
        %7418 = vmatprep.subr.bf16.mxu0 0
        %7419 = vmatpush2.bf16.msra.mxu0 0
        %7420 = vmatprep.subr.bf16.mxu0 0
        %7421 = vmatpush2.bf16.msra.mxu0 0
        %7422 = vmatprep.mubr.bf16.mxu0 0
        %7423 = vmatmul.mubr.bf16.gmra.mxu0 %v7326
        %v7424 = vpop.f32.mrf.mxu0
        %v7425 = vadd.f32 0.0, %v7424
        %v7426 = vpop.f32.mrf.mxu0
        %v7427 = vpop.f32.mrf.mxu0
        %v7428 = vadd.f32 0.0, %v7427
        %v7429 = vpop.f32.mrf.mxu0
        %7430 = vmatprep.mubr.bf16.mxu0 0
        %7431 = vmatmul.mubr.bf16.gmra.mxu0 %v7327
        %v7432 = vpop.f32.mrf.mxu0
        %v7433 = vpop.f32.mrf.mxu0
        %v7434 = vpop.f32.mrf.mxu0
        %v7435 = vpop.f32.mrf.mxu0
        %7436 = vmatprep.mubr.bf16.mxu0 0
        %7437 = vmatmul.mubr.bf16.gmra.mxu0 %v7328
        %v7438 = vpop.f32.mrf.mxu0
        %v7439 = vadd.f32 0.0, %v7438
        %v7440 = vpop.f32.mrf.mxu0
        %v7441 = vpop.f32.mrf.mxu0
        %v7442 = vadd.f32 0.0, %v7441
        %v7443 = vpop.f32.mrf.mxu0
        %7444 = vmatprep.mubr.bf16.mxu0 0
        %7445 = vmatmul.mubr.bf16.gmra.mxu0 %v7329
        %v7446 = vpop.f32.mrf.mxu0
        %v7447 = vpop.f32.mrf.mxu0
        %v7448 = vpop.f32.mrf.mxu0
        %v7449 = vpop.f32.mrf.mxu0
        %7450 = vmatprep.mubr.bf16.mxu0 0
        %7451 = vmatmul.mubr.bf16.gmra.mxu0 %v7330
        %v7452 = vpop.f32.mrf.mxu0
        %v7453 = vadd.f32 0.0, %v7452
        %v7454 = vpop.f32.mrf.mxu0
        %v7455 = vpop.f32.mrf.mxu0
        %v7456 = vadd.f32 0.0, %v7455
        %v7457 = vpop.f32.mrf.mxu0
        %7458 = vmatprep.mubr.bf16.mxu0 0
        %7459 = vmatmul.mubr.bf16.gmra.mxu0 %v7331
        %v7460 = vpop.f32.mrf.mxu0
        %v7461 = vpop.f32.mrf.mxu0
        %v7462 = vpop.f32.mrf.mxu0
        %v7463 = vpop.f32.mrf.mxu0
        %7464 = vmatprep.mubr.bf16.mxu0 0
        %7465 = vmatmul.mubr.bf16.gmra.mxu0 %v7332
        %v7466 = vpop.f32.mrf.mxu0
        %v7467 = vadd.f32 0.0, %v7466
        %v7468 = vpop.f32.mrf.mxu0
        %v7469 = vpop.f32.mrf.mxu0
        %v7470 = vadd.f32 0.0, %v7469
        %v7471 = vpop.f32.mrf.mxu0
        %7472 = vmatprep.mubr.bf16.mxu0 0
        %7473 = vmatmul.mubr.bf16.gmra.mxu0 %v7333
        %v7474 = vpop.f32.mrf.mxu0
        %v7475 = vpop.f32.mrf.mxu0
        %v7476 = vpop.f32.mrf.mxu0
        %v7477 = vpop.f32.mrf.mxu0
        %7478 = vdwg.mxu0
        %v7479 = vadd.f32 %v7070, %v7425
        %v7480 = vadd.f32 %v7071, %v7428
        %v7481 = vadd.f32 %v7072, %v7439
        %v7482 = vadd.f32 %v7073, %v7442
        %v7483 = vadd.f32 %v7074, %v7453
        %v7484 = vadd.f32 %v7075, %v7456
        %v7485 = vadd.f32 %v7076, %v7467
        %v7486 = vadd.f32 %v7077, %v7470
        %v7487 = vld [vmem:[%s6852] sm:$0xe]
        %v7488 = vld [vmem:[%s6852 + $0xc] sm:$0xe]
        %v7489 = vld [vmem:[%s6852 + $0x18] sm:$0xe]
        %v7490 = vld [vmem:[%s6852 + $0x24] sm:$0xe]
        %v7491 = vld [vmem:[%s6852 + $0x30] sm:$0xe]
        %v7492 = vld [vmem:[%s6852 + $0x3c] sm:$0xe]
        %v7493 = vld [vmem:[%s6852 + $0x48] sm:$0xe]
        %v7494 = vld [vmem:[%s6852 + $0x54] sm:$0xe]
        %v7519 = vrot.slane %v7487, 5
        %v7520 = vrot.slane %v7519, 4
        %v7521 = vrot.slane %v7079, 5
        %v7522 = vsel %vm1756, %v7520, %v7521
        %v7523 = vrot.slane %v7521, 4
        %v7524 = vrot.slane %v7080, 5
        %v7525 = vsel %vm1756, %v7523, %v7524
        %v7526 = vrot.slane %v7488, 5
        %v7527 = vrot.slane %v7526, 4
        %v7528 = vrot.slane %v7082, 5
        %v7529 = vsel %vm1756, %v7527, %v7528
        %v7530 = vrot.slane %v7528, 4
        %v7531 = vrot.slane %v7083, 5
        %v7532 = vsel %vm1756, %v7530, %v7531
        %v7533 = vrot.slane %v7489, 5
        %v7534 = vrot.slane %v7533, 4
        %v7535 = vrot.slane %v7085, 5
        %v7536 = vsel %vm1756, %v7534, %v7535
        %v7537 = vrot.slane %v7535, 4
        %v7538 = vrot.slane %v7086, 5
        %v7539 = vsel %vm1756, %v7537, %v7538
        %v7540 = vrot.slane %v7490, 5
        %v7541 = vrot.slane %v7540, 4
        %v7542 = vrot.slane %v7088, 5
        %v7543 = vsel %vm1756, %v7541, %v7542
        %v7544 = vrot.slane %v7542, 4
        %v7545 = vrot.slane %v7089, 5
        %v7546 = vsel %vm1756, %v7544, %v7545
        %v7547 = vrot.slane %v7491, 5
        %v7548 = vrot.slane %v7547, 4
        %v7549 = vrot.slane %v7091, 5
        %v7550 = vsel %vm1756, %v7548, %v7549
        %v7551 = vrot.slane %v7549, 4
        %v7552 = vrot.slane %v7092, 5
        %v7553 = vsel %vm1756, %v7551, %v7552
        %v7554 = vrot.slane %v7492, 5
        %v7555 = vrot.slane %v7554, 4
        %v7556 = vrot.slane %v7094, 5
        %v7557 = vsel %vm1756, %v7555, %v7556
        %v7558 = vrot.slane %v7556, 4
        %v7559 = vrot.slane %v7095, 5
        %v7560 = vsel %vm1756, %v7558, %v7559
        %v7561 = vrot.slane %v7493, 5
        %v7562 = vrot.slane %v7561, 4
        %v7563 = vrot.slane %v7097, 5
        %v7564 = vsel %vm1756, %v7562, %v7563
        %v7565 = vrot.slane %v7563, 4
        %v7566 = vrot.slane %v7098, 5
        %v7567 = vsel %vm1756, %v7565, %v7566
        %v7568 = vrot.slane %v7494, 5
        %v7569 = vrot.slane %v7568, 4
        %v7570 = vrot.slane %v7100, 5
        %v7571 = vsel %vm1756, %v7569, %v7570
        %v7572 = vrot.slane %v7570, 4
        %v7573 = vrot.slane %v7101, 5
        %v7574 = vsel %vm1756, %v7572, %v7573
        %v7575 = vld [vmem:[%s3650] sm:$0xf]
        %v7576 = vld [vmem:[%s3650 + $0x4] sm:$0xf]
        %v7577 = vld [vmem:[%s3650 + $0x8] sm:$0xf]
        %v7578 = vld [vmem:[%s3650 + $0xc] sm:$0xf]
        %v7579 = vld [vmem:[%s3650 + $0x10] sm:$0xf]
        %v7580 = vld [vmem:[%s3650 + $0x14] sm:$0xf]
        %v7581 = vld [vmem:[%s3650 + $0x18] sm:$0xf]
        %v7582 = vld [vmem:[%s3650 + $0x1c] sm:$0xf]
        %v7583 = vld [vmem:[%s3650 + $0x20] sm:$0xf]
        %v7584 = vld [vmem:[%s3650 + $0x24] sm:$0xf]
        %v7585 = vld [vmem:[%s3650 + $0x28] sm:$0xf]
        %v7586 = vld [vmem:[%s3650 + $0x2c] sm:$0xf]
        %v7587 = vld [vmem:[%s3650 + $0x30] sm:$0xf]
        %v7588 = vld [vmem:[%s3650 + $0x34] sm:$0xf]
        %v7589 = vld [vmem:[%s3650 + $0x38] sm:$0xf]
        %v7590 = vld [vmem:[%s3650 + $0x3c] sm:$0xf]
        %v7591 = vunpack.c.l.b16 %v7522
        %v7592 = vunpack.c.l.b16 %v7525
        %v7593 = vunpack.c.l.b16 %v7529
        %v7594 = vunpack.c.l.b16 %v7532
        %v7595 = vunpack.c.l.b16 %v7536
        %v7596 = vunpack.c.l.b16 %v7539
        %v7597 = vunpack.c.l.b16 %v7543
        %v7598 = vunpack.c.l.b16 %v7546
        %v7599 = vunpack.c.l.b16 %v7550
        %v7600 = vunpack.c.l.b16 %v7553
        %v7601 = vunpack.c.l.b16 %v7557
        %v7602 = vunpack.c.l.b16 %v7560
        %v7603 = vunpack.c.l.b16 %v7564
        %v7604 = vunpack.c.l.b16 %v7567
        %v7605 = vunpack.c.l.b16 %v7571
        %v7606 = vunpack.c.l.b16 %v7574
        %v7607 = vpack.c.b16 %v7592, %v7591
        %v7608 = vpack.c.b16 %v7594, %v7593
        %v7609 = vpack.c.b16 %v7596, %v7595
        %v7610 = vpack.c.b16 %v7598, %v7597
        %v7611 = vpack.c.b16 %v7600, %v7599
        %v7612 = vpack.c.b16 %v7602, %v7601
        %v7613 = vpack.c.b16 %v7604, %v7603
        %v7614 = vpack.c.b16 %v7606, %v7605
        %v7639 = vunpack.c.l.b16 %v7575
        %v7640 = vunpack.c.l.b16 %v7576
        %v7641 = vunpack.c.l.b16 %v7577
        %v7642 = vunpack.c.l.b16 %v7578
        %v7643 = vunpack.c.l.b16 %v7579
        %v7644 = vunpack.c.l.b16 %v7580
        %v7645 = vunpack.c.l.b16 %v7581
        %v7646 = vunpack.c.l.b16 %v7582
        %v7647 = vunpack.c.l.b16 %v7583
        %v7648 = vunpack.c.l.b16 %v7584
        %v7649 = vunpack.c.l.b16 %v7585
        %v7650 = vunpack.c.l.b16 %v7586
        %v7651 = vunpack.c.l.b16 %v7587
        %v7652 = vunpack.c.l.b16 %v7588
        %v7653 = vunpack.c.l.b16 %v7589
        %v7654 = vunpack.c.l.b16 %v7590
        %v7655 = vpack.c.b16 %v7640, %v7639
        %v7656 = vpack.c.b16 %v7642, %v7641
        %v7657 = vpack.c.b16 %v7644, %v7643
        %v7658 = vpack.c.b16 %v7646, %v7645
        %v7659 = vpack.c.b16 %v7648, %v7647
        %v7660 = vpack.c.b16 %v7650, %v7649
        %v7661 = vpack.c.b16 %v7652, %v7651
        %v7662 = vpack.c.b16 %v7654, %v7653
        %7671 = vmatprep.subr.bf16.mxu0 0
        %7672 = vmatpush1.bf16.msra.mxu0 %v7662
        %7673 = vmatprep.subr.bf16.mxu0 0
        %7674 = vmatpush1.bf16.msra.mxu0 %v7661
        %7675 = vmatprep.subr.bf16.mxu0 0
        %7676 = vmatpush1.bf16.msra.mxu0 %v7660
        %7677 = vmatprep.subr.bf16.mxu0 0
        %7678 = vmatpush1.bf16.msra.mxu0 %v7659
        %7679 = vmatprep.subr.bf16.mxu0 0
        %7680 = vmatpush1.bf16.msra.mxu0 %v7658
        %7681 = vmatprep.subr.bf16.mxu0 0
        %7682 = vmatpush1.bf16.msra.mxu0 %v7657
        %7683 = vmatprep.subr.bf16.mxu0 0
        %7684 = vmatpush1.bf16.msra.mxu0 %v7656
        %7685 = vmatprep.subr.bf16.mxu0 0
        %7686 = vmatpush1.bf16.msra.mxu0 %v7655
        %7687 = vmatprep.subr.bf16.mxu0 0
        %7688 = vmatpush2.bf16.msra.mxu0 0
        %7689 = vmatprep.subr.bf16.mxu0 0
        %7690 = vmatpush2.bf16.msra.mxu0 0
        %7691 = vmatprep.subr.bf16.mxu0 0
        %7692 = vmatpush2.bf16.msra.mxu0 0
        %7693 = vmatprep.subr.bf16.mxu0 0
        %7694 = vmatpush2.bf16.msra.mxu0 0
        %7695 = vmatprep.subr.bf16.mxu0 0
        %7696 = vmatpush2.bf16.msra.mxu0 0
        %7697 = vmatprep.subr.bf16.mxu0 0
        %7698 = vmatpush2.bf16.msra.mxu0 0
        %7699 = vmatprep.subr.bf16.mxu0 0
        %7700 = vmatpush2.bf16.msra.mxu0 0
        %7701 = vmatprep.subr.bf16.mxu0 0
        %7702 = vmatpush2.bf16.msra.mxu0 0
        %7703 = vmatprep.mubr.bf16.mxu0 0
        %7704 = vmatmul.mubr.bf16.gmra.mxu0 %v7607
        %v7705 = vpop.f32.mrf.mxu0
        %v7706 = vadd.f32 0.0, %v7705
        %v7707 = vpop.f32.mrf.mxu0
        %v7708 = vpop.f32.mrf.mxu0
        %v7709 = vadd.f32 0.0, %v7708
        %v7710 = vpop.f32.mrf.mxu0
        %7711 = vmatprep.mubr.bf16.mxu0 0
        %7712 = vmatmul.mubr.bf16.gmra.mxu0 %v7608
        %v7713 = vpop.f32.mrf.mxu0
        %v7714 = vpop.f32.mrf.mxu0
        %v7715 = vpop.f32.mrf.mxu0
        %v7716 = vpop.f32.mrf.mxu0
        %7717 = vmatprep.mubr.bf16.mxu0 0
        %7718 = vmatmul.mubr.bf16.gmra.mxu0 %v7609
        %v7719 = vpop.f32.mrf.mxu0
        %v7720 = vadd.f32 0.0, %v7719
        %v7721 = vpop.f32.mrf.mxu0
        %v7722 = vpop.f32.mrf.mxu0
        %v7723 = vadd.f32 0.0, %v7722
        %v7724 = vpop.f32.mrf.mxu0
        %7725 = vmatprep.mubr.bf16.mxu0 0
        %7726 = vmatmul.mubr.bf16.gmra.mxu0 %v7610
        %v7727 = vpop.f32.mrf.mxu0
        %v7728 = vpop.f32.mrf.mxu0
        %v7729 = vpop.f32.mrf.mxu0
        %v7730 = vpop.f32.mrf.mxu0
        %7731 = vmatprep.mubr.bf16.mxu0 0
        %7732 = vmatmul.mubr.bf16.gmra.mxu0 %v7611
        %v7733 = vpop.f32.mrf.mxu0
        %v7734 = vadd.f32 0.0, %v7733
        %v7735 = vpop.f32.mrf.mxu0
        %v7736 = vpop.f32.mrf.mxu0
        %v7737 = vadd.f32 0.0, %v7736
        %v7738 = vpop.f32.mrf.mxu0
        %7739 = vmatprep.mubr.bf16.mxu0 0
        %7740 = vmatmul.mubr.bf16.gmra.mxu0 %v7612
        %v7741 = vpop.f32.mrf.mxu0
        %v7742 = vpop.f32.mrf.mxu0
        %v7743 = vpop.f32.mrf.mxu0
        %v7744 = vpop.f32.mrf.mxu0
        %7745 = vmatprep.mubr.bf16.mxu0 0
        %7746 = vmatmul.mubr.bf16.gmra.mxu0 %v7613
        %v7747 = vpop.f32.mrf.mxu0
        %v7748 = vadd.f32 0.0, %v7747
        %v7749 = vpop.f32.mrf.mxu0
        %v7750 = vpop.f32.mrf.mxu0
        %v7751 = vadd.f32 0.0, %v7750
        %v7752 = vpop.f32.mrf.mxu0
        %7753 = vmatprep.mubr.bf16.mxu0 0
        %7754 = vmatmul.mubr.bf16.gmra.mxu0 %v7614
        %v7755 = vpop.f32.mrf.mxu0
        %v7756 = vpop.f32.mrf.mxu0
        %v7757 = vpop.f32.mrf.mxu0
        %v7758 = vpop.f32.mrf.mxu0
        %7759 = vdwg.mxu0
        %v7760 = vadd.f32 %v7479, %v7706
        %v7761 = vadd.f32 %v7480, %v7709
        %v7762 = vadd.f32 %v7481, %v7720
        %v7763 = vadd.f32 %v7482, %v7723
        %v7764 = vadd.f32 %v7483, %v7734
        %v7765 = vadd.f32 %v7484, %v7737
        %v7766 = vadd.f32 %v7485, %v7748
        %v7767 = vadd.f32 %v7486, %v7751
        %v7776 = vcombine.high %v7760, %v7760
        %v7778 = vunpack.c.l.s4 1983009808
        %v7779 = vunpack.c.0.s8 %v7778
        %v7780 = vlaneseq
        %v7781 = vshrl.u32 %v7780, 7
        %v7782 = vsub.s32 %v7779, %v7781
        %v7783 = vrot.slane %v7760, %v7782
        %v7785 = vunpack.c.l.s4 1983009808
        %v7786 = vunpack.c.0.s8 %v7785
        %v7787 = vlaneseq
        %v7788 = vshrl.u32 %v7787, 7
        %v7789 = vsub.s32 %v7786, %v7788
        %v7790 = vrot.slane %v7776, %v7789
        %v7791 = vcombine.high %v7783, %v7783
        %v7792 = vcombine.high %v7790, %v7790
        %v7793 = vcombine.high %v7761, %v7761
        %v7795 = vunpack.c.l.s4 1983009808
        %v7796 = vunpack.c.0.s8 %v7795
        %v7797 = vlaneseq
        %v7798 = vshrl.u32 %v7797, 7
        %v7799 = vsub.s32 %v7796, %v7798
        %v7800 = vrot.slane %v7761, %v7799
        %v7802 = vunpack.c.l.s4 1983009808
        %v7803 = vunpack.c.0.s8 %v7802
        %v7804 = vlaneseq
        %v7805 = vshrl.u32 %v7804, 7
        %v7806 = vsub.s32 %v7803, %v7805
        %v7807 = vrot.slane %v7793, %v7806
        %v7808 = vcombine.high %v7800, %v7800
        %v7809 = vcombine.high %v7807, %v7807
        %v7810 = vcombine.high %v7762, %v7762
        %v7812 = vunpack.c.l.s4 1983009808
        %v7813 = vunpack.c.0.s8 %v7812
        %v7814 = vlaneseq
        %v7815 = vshrl.u32 %v7814, 7
        %v7816 = vsub.s32 %v7813, %v7815
        %v7817 = vrot.slane %v7762, %v7816
        %v7819 = vunpack.c.l.s4 1983009808
        %v7820 = vunpack.c.0.s8 %v7819
        %v7821 = vlaneseq
        %v7822 = vshrl.u32 %v7821, 7
        %v7823 = vsub.s32 %v7820, %v7822
        %v7824 = vrot.slane %v7810, %v7823
        %v7825 = vcombine.high %v7817, %v7817
        %v7826 = vcombine.high %v7824, %v7824
        %v7827 = vcombine.high %v7763, %v7763
        %v7829 = vunpack.c.l.s4 1983009808
        %v7830 = vunpack.c.0.s8 %v7829
        %v7831 = vlaneseq
        %v7832 = vshrl.u32 %v7831, 7
        %v7833 = vsub.s32 %v7830, %v7832
        %v7834 = vrot.slane %v7763, %v7833
        %v7836 = vunpack.c.l.s4 1983009808
        %v7837 = vunpack.c.0.s8 %v7836
        %v7838 = vlaneseq
        %v7839 = vshrl.u32 %v7838, 7
        %v7840 = vsub.s32 %v7837, %v7839
        %v7841 = vrot.slane %v7827, %v7840
        %v7842 = vcombine.high %v7834, %v7834
        %v7843 = vcombine.high %v7841, %v7841
        %v7844 = vcombine.high %v7764, %v7764
        %v7846 = vunpack.c.l.s4 1983009808
        %v7847 = vunpack.c.0.s8 %v7846
        %v7848 = vlaneseq
        %v7849 = vshrl.u32 %v7848, 7
        %v7850 = vsub.s32 %v7847, %v7849
        %v7851 = vrot.slane %v7764, %v7850
        %v7853 = vunpack.c.l.s4 1983009808
        %v7854 = vunpack.c.0.s8 %v7853
        %v7855 = vlaneseq
        %v7856 = vshrl.u32 %v7855, 7
        %v7857 = vsub.s32 %v7854, %v7856
        %v7858 = vrot.slane %v7844, %v7857
        %v7859 = vcombine.high %v7851, %v7851
        %v7860 = vcombine.high %v7858, %v7858
        %v7861 = vcombine.high %v7765, %v7765
        %v7863 = vunpack.c.l.s4 1983009808
        %v7864 = vunpack.c.0.s8 %v7863
        %v7865 = vlaneseq
        %v7866 = vshrl.u32 %v7865, 7
        %v7867 = vsub.s32 %v7864, %v7866
        %v7868 = vrot.slane %v7765, %v7867
        %v7870 = vunpack.c.l.s4 1983009808
        %v7871 = vunpack.c.0.s8 %v7870
        %v7872 = vlaneseq
        %v7873 = vshrl.u32 %v7872, 7
        %v7874 = vsub.s32 %v7871, %v7873
        %v7875 = vrot.slane %v7861, %v7874
        %v7876 = vcombine.high %v7868, %v7868
        %v7877 = vcombine.high %v7875, %v7875
        %v7878 = vcombine.high %v7766, %v7766
        %v7880 = vunpack.c.l.s4 1983009808
        %v7881 = vunpack.c.0.s8 %v7880
        %v7882 = vlaneseq
        %v7883 = vshrl.u32 %v7882, 7
        %v7884 = vsub.s32 %v7881, %v7883
        %v7885 = vrot.slane %v7766, %v7884
        %v7887 = vunpack.c.l.s4 1983009808
        %v7888 = vunpack.c.0.s8 %v7887
        %v7889 = vlaneseq
        %v7890 = vshrl.u32 %v7889, 7
        %v7891 = vsub.s32 %v7888, %v7890
        %v7892 = vrot.slane %v7878, %v7891
        %v7893 = vcombine.high %v7885, %v7885
        %v7894 = vcombine.high %v7892, %v7892
        %v7895 = vcombine.high %v7767, %v7767
        %v7897 = vunpack.c.l.s4 1983009808
        %v7898 = vunpack.c.0.s8 %v7897
        %v7899 = vlaneseq
        %v7900 = vshrl.u32 %v7899, 7
        %v7901 = vsub.s32 %v7898, %v7900
        %v7902 = vrot.slane %v7767, %v7901
        %v7904 = vunpack.c.l.s4 1983009808
        %v7905 = vunpack.c.0.s8 %v7904
        %v7906 = vlaneseq
        %v7907 = vshrl.u32 %v7906, 7
        %v7908 = vsub.s32 %v7905, %v7907
        %v7909 = vrot.slane %v7895, %v7908
        %v7910 = vcombine.high %v7902, %v7902
        %v7911 = vcombine.high %v7909, %v7909
        %v7944 = vpack.c.bf16 %v7783, %v7783
        %v7945 = vpack.c.bf16 %v7791, %v7791
        %v7946 = vpack.c.bf16 %v7790, %v7790
        %v7947 = vpack.c.bf16 %v7792, %v7792
        %v7948 = vpack.c.bf16 %v7800, %v7800
        %v7949 = vpack.c.bf16 %v7808, %v7808
        %v7950 = vpack.c.bf16 %v7807, %v7807
        %v7951 = vpack.c.bf16 %v7809, %v7809
        %v7952 = vpack.c.bf16 %v7817, %v7817
        %v7953 = vpack.c.bf16 %v7825, %v7825
        %v7954 = vpack.c.bf16 %v7824, %v7824
        %v7955 = vpack.c.bf16 %v7826, %v7826
        %v7956 = vpack.c.bf16 %v7834, %v7834
        %v7957 = vpack.c.bf16 %v7842, %v7842
        %v7958 = vpack.c.bf16 %v7841, %v7841
        %v7959 = vpack.c.bf16 %v7843, %v7843
        %v7960 = vpack.c.bf16 %v7851, %v7851
        %v7961 = vpack.c.bf16 %v7859, %v7859
        %v7962 = vpack.c.bf16 %v7858, %v7858
        %v7963 = vpack.c.bf16 %v7860, %v7860
        %v7964 = vpack.c.bf16 %v7868, %v7868
        %v7965 = vpack.c.bf16 %v7876, %v7876
        %v7966 = vpack.c.bf16 %v7875, %v7875
        %v7967 = vpack.c.bf16 %v7877, %v7877
        %v7968 = vpack.c.bf16 %v7885, %v7885
        %v7969 = vpack.c.bf16 %v7893, %v7893
        %v7970 = vpack.c.bf16 %v7892, %v7892
        %v7971 = vpack.c.bf16 %v7894, %v7894
        %v7972 = vpack.c.bf16 %v7902, %v7902
        %v7973 = vpack.c.bf16 %v7910, %v7910
        %v7974 = vpack.c.bf16 %v7909, %v7909
        %v7975 = vpack.c.bf16 %v7911, %v7911
        %v8008 = vunpack.c.l.b16 %v7944
        %v8009 = vunpack.c.l.b16 %v7945
        %v8010 = vunpack.c.l.b16 %v7946
        %v8011 = vunpack.c.l.b16 %v7947
        %v8012 = vunpack.c.l.b16 %v7948
        %v8013 = vunpack.c.l.b16 %v7949
        %v8014 = vunpack.c.l.b16 %v7950
        %v8015 = vunpack.c.l.b16 %v7951
        %v8016 = vunpack.c.l.b16 %v7952
        %v8017 = vunpack.c.l.b16 %v7953
        %v8018 = vunpack.c.l.b16 %v7954
        %v8019 = vunpack.c.l.b16 %v7955
        %v8020 = vunpack.c.l.b16 %v7956
        %v8021 = vunpack.c.l.b16 %v7957
        %v8022 = vunpack.c.l.b16 %v7958
        %v8023 = vunpack.c.l.b16 %v7959
        %v8024 = vunpack.c.l.b16 %v7960
        %v8025 = vunpack.c.l.b16 %v7961
        %v8026 = vunpack.c.l.b16 %v7962
        %v8027 = vunpack.c.l.b16 %v7963
        %v8028 = vunpack.c.l.b16 %v7964
        %v8029 = vunpack.c.l.b16 %v7965
        %v8030 = vunpack.c.l.b16 %v7966
        %v8031 = vunpack.c.l.b16 %v7967
        %v8032 = vunpack.c.l.b16 %v7968
        %v8033 = vunpack.c.l.b16 %v7969
        %v8034 = vunpack.c.l.b16 %v7970
        %v8035 = vunpack.c.l.b16 %v7971
        %v8036 = vunpack.c.l.b16 %v7972
        %v8037 = vunpack.c.l.b16 %v7973
        %v8038 = vunpack.c.l.b16 %v7974
        %v8039 = vunpack.c.l.b16 %v7975
        %v8040 = vpack.c.b16 %v8008, %v8008
        %v8041 = vpack.c.b16 %v8009, %v8009
        %v8042 = vpack.c.b16 %v8010, %v8010
        %v8043 = vpack.c.b16 %v8011, %v8011
        %v8044 = vpack.c.b16 %v8012, %v8012
        %v8045 = vpack.c.b16 %v8013, %v8013
        %v8046 = vpack.c.b16 %v8014, %v8014
        %v8047 = vpack.c.b16 %v8015, %v8015
        %v8048 = vpack.c.b16 %v8016, %v8016
        %v8049 = vpack.c.b16 %v8017, %v8017
        %v8050 = vpack.c.b16 %v8018, %v8018
        %v8051 = vpack.c.b16 %v8019, %v8019
        %v8052 = vpack.c.b16 %v8020, %v8020
        %v8053 = vpack.c.b16 %v8021, %v8021
        %v8054 = vpack.c.b16 %v8022, %v8022
        %v8055 = vpack.c.b16 %v8023, %v8023
        %v8056 = vpack.c.b16 %v8024, %v8024
        %v8057 = vpack.c.b16 %v8025, %v8025
        %v8058 = vpack.c.b16 %v8026, %v8026
        %v8059 = vpack.c.b16 %v8027, %v8027
        %v8060 = vpack.c.b16 %v8028, %v8028
        %v8061 = vpack.c.b16 %v8029, %v8029
        %v8062 = vpack.c.b16 %v8030, %v8030
        %v8063 = vpack.c.b16 %v8031, %v8031
        %v8064 = vpack.c.b16 %v8032, %v8032
        %v8065 = vpack.c.b16 %v8033, %v8033
        %v8066 = vpack.c.b16 %v8034, %v8034
        %v8067 = vpack.c.b16 %v8035, %v8035
        %v8068 = vpack.c.b16 %v8036, %v8036
        %v8069 = vpack.c.b16 %v8037, %v8037
        %v8070 = vpack.c.b16 %v8038, %v8038
        %v8071 = vpack.c.b16 %v8039, %v8039
        %v8072 = vunpack.c.l.b16 %v8040
        %v8073 = vunpack.c.l.b16 %v8041
        %v8074 = vunpack.c.l.b16 %v8042
        %v8075 = vunpack.c.l.b16 %v8043
        %v8076 = vunpack.c.l.b16 %v8044
        %v8077 = vunpack.c.l.b16 %v8045
        %v8078 = vunpack.c.l.b16 %v8046
        %v8079 = vunpack.c.l.b16 %v8047
        %v8080 = vunpack.c.l.b16 %v8048
        %v8081 = vunpack.c.l.b16 %v8049
        %v8082 = vunpack.c.l.b16 %v8050
        %v8083 = vunpack.c.l.b16 %v8051
        %v8084 = vunpack.c.l.b16 %v8052
        %v8085 = vunpack.c.l.b16 %v8053
        %v8086 = vunpack.c.l.b16 %v8054
        %v8087 = vunpack.c.l.b16 %v8055
        %v8088 = vunpack.c.l.b16 %v8056
        %v8089 = vunpack.c.l.b16 %v8057
        %v8090 = vunpack.c.l.b16 %v8058
        %v8091 = vunpack.c.l.b16 %v8059
        %v8092 = vunpack.c.l.b16 %v8060
        %v8093 = vunpack.c.l.b16 %v8061
        %v8094 = vunpack.c.l.b16 %v8062
        %v8095 = vunpack.c.l.b16 %v8063
        %v8096 = vunpack.c.l.b16 %v8064
        %v8097 = vunpack.c.l.b16 %v8065
        %v8098 = vunpack.c.l.b16 %v8066
        %v8099 = vunpack.c.l.b16 %v8067
        %v8100 = vunpack.c.l.b16 %v8068
        %v8101 = vunpack.c.l.b16 %v8069
        %v8102 = vunpack.c.l.b16 %v8070
        %v8103 = vunpack.c.l.b16 %v8071
        %v8104 = vrot.slane %v8073, 7
        %v8105 = vsel %vm4181, %v8104, %v8072
        %v8106 = vrot.slane %v8074, 6
        %v8107 = vsel %vm4184, %v8106, %v8105
        %v8108 = vrot.slane %v8075, 5
        %v8109 = vsel %vm4187, %v8108, %v8107
        %v8110 = vrot.slane %v8076, 4
        %v8111 = vsel %vm4190, %v8110, %v8109
        %v8112 = vrot.slane %v8077, 3
        %v8113 = vsel %vm4193, %v8112, %v8111
        %v8114 = vrot.slane %v8078, 2
        %v8115 = vsel %vm4196, %v8114, %v8113
        %v8116 = vrot.slane %v8079, 1
        %v8117 = vsel %vm4199, %v8116, %v8115
        %v8118 = vrot.slane %v8081, 7
        %v8119 = vsel %vm4181, %v8118, %v8080
        %v8120 = vrot.slane %v8082, 6
        %v8121 = vsel %vm4184, %v8120, %v8119
        %v8122 = vrot.slane %v8083, 5
        %v8123 = vsel %vm4187, %v8122, %v8121
        %v8124 = vrot.slane %v8084, 4
        %v8125 = vsel %vm4190, %v8124, %v8123
        %v8126 = vrot.slane %v8085, 3
        %v8127 = vsel %vm4193, %v8126, %v8125
        %v8128 = vrot.slane %v8086, 2
        %v8129 = vsel %vm4196, %v8128, %v8127
        %v8130 = vrot.slane %v8087, 1
        %v8131 = vsel %vm4199, %v8130, %v8129
        %v8132 = vrot.slane %v8089, 7
        %v8133 = vsel %vm4181, %v8132, %v8088
        %v8134 = vrot.slane %v8090, 6
        %v8135 = vsel %vm4184, %v8134, %v8133
        %v8136 = vrot.slane %v8091, 5
        %v8137 = vsel %vm4187, %v8136, %v8135
        %v8138 = vrot.slane %v8092, 4
        %v8139 = vsel %vm4190, %v8138, %v8137
        %v8140 = vrot.slane %v8093, 3
        %v8141 = vsel %vm4193, %v8140, %v8139
        %v8142 = vrot.slane %v8094, 2
        %v8143 = vsel %vm4196, %v8142, %v8141
        %v8144 = vrot.slane %v8095, 1
        %v8145 = vsel %vm4199, %v8144, %v8143
        %v8146 = vrot.slane %v8097, 7
        %v8147 = vsel %vm4181, %v8146, %v8096
        %v8148 = vrot.slane %v8098, 6
        %v8149 = vsel %vm4184, %v8148, %v8147
        %v8150 = vrot.slane %v8099, 5
        %v8151 = vsel %vm4187, %v8150, %v8149
        %v8152 = vrot.slane %v8100, 4
        %v8153 = vsel %vm4190, %v8152, %v8151
        %v8154 = vrot.slane %v8101, 3
        %v8155 = vsel %vm4193, %v8154, %v8153
        %v8156 = vrot.slane %v8102, 2
        %v8157 = vsel %vm4196, %v8156, %v8155
        %v8158 = vrot.slane %v8103, 1
        %v8159 = vsel %vm4199, %v8158, %v8157
        %v8160 = vpack.c.b16 %v8117, %v8117
        %v8161 = vpack.c.b16 %v8131, %v8131
        %v8162 = vpack.c.b16 %v8145, %v8145
        %v8163 = vpack.c.b16 %v8159, %v8159
        %s8168 = scalar_lea.vmem %s332, 16 [#allocation9]
        %8169 = vst [vmem:[%s8168] sm:$0xf] %v8160
        %8170 = vst [vmem:[%s8168 + $0x4] sm:$0xf] %v8161
        %8171 = vst [vmem:[%s8168 + $0x8] sm:$0xf] %v8162
        %8172 = vst [vmem:[%s8168 + $0xc] sm:$0xf] %v8163
        %v8173 = vld [vmem:[%s5936] sm:$0xf]
        %v8174 = vld [vmem:[%s5936 + $0x4] sm:$0xf]
        %v8175 = vld [vmem:[%s5936 + $0x8] sm:$0x1]
        %v8176 = vld [vmem:[%s5936 + $0xc] sm:$0xf]
        %v8177 = vld [vmem:[%s5936 + $0x10] sm:$0xf]
        %v8178 = vld [vmem:[%s5936 + $0x14] sm:$0x1]
        %v8179 = vld [vmem:[%s5936 + $0x18] sm:$0xf]
        %v8180 = vld [vmem:[%s5936 + $0x1c] sm:$0xf]
        %v8181 = vld [vmem:[%s5936 + $0x20] sm:$0x1]
        %v8182 = vld [vmem:[%s5936 + $0x24] sm:$0xf]
        %v8183 = vld [vmem:[%s5936 + $0x28] sm:$0xf]
        %v8184 = vld [vmem:[%s5936 + $0x2c] sm:$0x1]
        %v8185 = vld [vmem:[%s5936 + $0x30] sm:$0xf]
        %v8186 = vld [vmem:[%s5936 + $0x34] sm:$0xf]
        %v8187 = vld [vmem:[%s5936 + $0x38] sm:$0x1]
        %v8188 = vld [vmem:[%s5936 + $0x3c] sm:$0xf]
        %v8189 = vld [vmem:[%s5936 + $0x40] sm:$0xf]
        %v8190 = vld [vmem:[%s5936 + $0x44] sm:$0x1]
        %v8191 = vld [vmem:[%s5936 + $0x48] sm:$0xf]
        %v8192 = vld [vmem:[%s5936 + $0x4c] sm:$0xf]
        %v8193 = vld [vmem:[%s5936 + $0x50] sm:$0x1]
        %v8194 = vld [vmem:[%s5936 + $0x54] sm:$0xf]
        %v8195 = vld [vmem:[%s5936 + $0x58] sm:$0xf]
        %v8196 = vld [vmem:[%s5936 + $0x5c] sm:$0x1]
        %v8198 = vshrl.u32 %v8173, 16
        %v8200 = vrot.slane %v8198, 4
        %v8201 = vshll.u32 %v8173, 16
        %v8203 = vrot.slane %v8201, 5
        %v8204 = vor.u32 %v8200, %v8203
        %v8205 = vrot.slane %v8204, 4
        %v8207 = vshll.u32 %v8174, 16
        %v8209 = vrot.slane %v8207, 5
        %v8210 = vsel %vm1166, %v8205, %v8209
        %v8211 = vshrl.u32 %v8174, 16
        %v8213 = vrot.slane %v8211, 4
        %v8214 = vor.u32 %v8213, %v8209
        %v8215 = vrot.slane %v8214, 4
        %v8217 = vshll.u32 %v8175, 16
        %v8219 = vrot.slane %v8217, 5
        %v8220 = vsel %vm1166, %v8215, %v8219
        %v8222 = vshrl.u32 %v8176, 16
        %v8224 = vrot.slane %v8222, 4
        %v8225 = vshll.u32 %v8176, 16
        %v8227 = vrot.slane %v8225, 5
        %v8228 = vor.u32 %v8224, %v8227
        %v8229 = vrot.slane %v8228, 4
        %v8231 = vshll.u32 %v8177, 16
        %v8233 = vrot.slane %v8231, 5
        %v8234 = vsel %vm1166, %v8229, %v8233
        %v8235 = vshrl.u32 %v8177, 16
        %v8237 = vrot.slane %v8235, 4
        %v8238 = vor.u32 %v8237, %v8233
        %v8239 = vrot.slane %v8238, 4
        %v8241 = vshll.u32 %v8178, 16
        %v8243 = vrot.slane %v8241, 5
        %v8244 = vsel %vm1166, %v8239, %v8243
        %v8246 = vshrl.u32 %v8179, 16
        %v8248 = vrot.slane %v8246, 4
        %v8249 = vshll.u32 %v8179, 16
        %v8251 = vrot.slane %v8249, 5
        %v8252 = vor.u32 %v8248, %v8251
        %v8253 = vrot.slane %v8252, 4
        %v8255 = vshll.u32 %v8180, 16
        %v8257 = vrot.slane %v8255, 5
        %v8258 = vsel %vm1166, %v8253, %v8257
        %v8259 = vshrl.u32 %v8180, 16
        %v8261 = vrot.slane %v8259, 4
        %v8262 = vor.u32 %v8261, %v8257
        %v8263 = vrot.slane %v8262, 4
        %v8265 = vshll.u32 %v8181, 16
        %v8267 = vrot.slane %v8265, 5
        %v8268 = vsel %vm1166, %v8263, %v8267
        %v8270 = vshrl.u32 %v8182, 16
        %v8272 = vrot.slane %v8270, 4
        %v8273 = vshll.u32 %v8182, 16
        %v8275 = vrot.slane %v8273, 5
        %v8276 = vor.u32 %v8272, %v8275
        %v8277 = vrot.slane %v8276, 4
        %v8279 = vshll.u32 %v8183, 16
        %v8281 = vrot.slane %v8279, 5
        %v8282 = vsel %vm1166, %v8277, %v8281
        %v8283 = vshrl.u32 %v8183, 16
        %v8285 = vrot.slane %v8283, 4
        %v8286 = vor.u32 %v8285, %v8281
        %v8287 = vrot.slane %v8286, 4
        %v8289 = vshll.u32 %v8184, 16
        %v8291 = vrot.slane %v8289, 5
        %v8292 = vsel %vm1166, %v8287, %v8291
        %v8294 = vshrl.u32 %v8185, 16
        %v8296 = vrot.slane %v8294, 4
        %v8297 = vshll.u32 %v8185, 16
        %v8299 = vrot.slane %v8297, 5
        %v8300 = vor.u32 %v8296, %v8299
        %v8301 = vrot.slane %v8300, 4
        %v8303 = vshll.u32 %v8186, 16
        %v8305 = vrot.slane %v8303, 5
        %v8306 = vsel %vm1166, %v8301, %v8305
        %v8307 = vshrl.u32 %v8186, 16
        %v8309 = vrot.slane %v8307, 4
        %v8310 = vor.u32 %v8309, %v8305
        %v8311 = vrot.slane %v8310, 4
        %v8313 = vshll.u32 %v8187, 16
        %v8315 = vrot.slane %v8313, 5
        %v8316 = vsel %vm1166, %v8311, %v8315
        %v8318 = vshrl.u32 %v8188, 16
        %v8320 = vrot.slane %v8318, 4
        %v8321 = vshll.u32 %v8188, 16
        %v8323 = vrot.slane %v8321, 5
        %v8324 = vor.u32 %v8320, %v8323
        %v8325 = vrot.slane %v8324, 4
        %v8327 = vshll.u32 %v8189, 16
        %v8329 = vrot.slane %v8327, 5
        %v8330 = vsel %vm1166, %v8325, %v8329
        %v8331 = vshrl.u32 %v8189, 16
        %v8333 = vrot.slane %v8331, 4
        %v8334 = vor.u32 %v8333, %v8329
        %v8335 = vrot.slane %v8334, 4
        %v8337 = vshll.u32 %v8190, 16
        %v8339 = vrot.slane %v8337, 5
        %v8340 = vsel %vm1166, %v8335, %v8339
        %v8342 = vshrl.u32 %v8191, 16
        %v8344 = vrot.slane %v8342, 4
        %v8345 = vshll.u32 %v8191, 16
        %v8347 = vrot.slane %v8345, 5
        %v8348 = vor.u32 %v8344, %v8347
        %v8349 = vrot.slane %v8348, 4
        %v8351 = vshll.u32 %v8192, 16
        %v8353 = vrot.slane %v8351, 5
        %v8354 = vsel %vm1166, %v8349, %v8353
        %v8355 = vshrl.u32 %v8192, 16
        %v8357 = vrot.slane %v8355, 4
        %v8358 = vor.u32 %v8357, %v8353
        %v8359 = vrot.slane %v8358, 4
        %v8361 = vshll.u32 %v8193, 16
        %v8363 = vrot.slane %v8361, 5
        %v8364 = vsel %vm1166, %v8359, %v8363
        %v8366 = vshrl.u32 %v8194, 16
        %v8368 = vrot.slane %v8366, 4
        %v8369 = vshll.u32 %v8194, 16
        %v8371 = vrot.slane %v8369, 5
        %v8372 = vor.u32 %v8368, %v8371
        %v8373 = vrot.slane %v8372, 4
        %v8375 = vshll.u32 %v8195, 16
        %v8377 = vrot.slane %v8375, 5
        %v8378 = vsel %vm1166, %v8373, %v8377
        %v8379 = vshrl.u32 %v8195, 16
        %v8381 = vrot.slane %v8379, 4
        %v8382 = vor.u32 %v8381, %v8377
        %v8383 = vrot.slane %v8382, 4
        %v8385 = vshll.u32 %v8196, 16
        %v8387 = vrot.slane %v8385, 5
        %v8388 = vsel %vm1166, %v8383, %v8387
        %v8389 = vld [vmem:[#allocation8] sm:$0xf]
        %v8390 = vld [vmem:[#allocation8 + $0x4] sm:$0xf]
        %v8391 = vld [vmem:[#allocation8 + $0x8] sm:$0xf]
        %v8392 = vld [vmem:[#allocation8 + $0xc] sm:$0xf]
        %v8393 = vld [vmem:[#allocation8 + $0x10] sm:$0xf]
        %v8394 = vld [vmem:[#allocation8 + $0x14] sm:$0xf]
        %v8395 = vld [vmem:[#allocation8 + $0x18] sm:$0xf]
        %v8396 = vld [vmem:[#allocation8 + $0x1c] sm:$0xf]
        %v8397 = vld [vmem:[#allocation8 + $0x20] sm:$0xf]
        %v8398 = vld [vmem:[#allocation8 + $0x24] sm:$0xf]
        %v8399 = vld [vmem:[#allocation8 + $0x28] sm:$0xf]
        %v8400 = vld [vmem:[#allocation8 + $0x2c] sm:$0xf]
        %v8401 = vld [vmem:[#allocation8 + $0x30] sm:$0xf]
        %v8402 = vld [vmem:[#allocation8 + $0x34] sm:$0xf]
        %v8403 = vld [vmem:[#allocation8 + $0x38] sm:$0xf]
        %v8404 = vld [vmem:[#allocation8 + $0x3c] sm:$0xf]
        %v8405 = vunpack.c.l.b16 %v8210
        %v8406 = vunpack.c.l.b16 %v8220
        %v8407 = vunpack.c.l.b16 %v8234
        %v8408 = vunpack.c.l.b16 %v8244
        %v8409 = vunpack.c.l.b16 %v8258
        %v8410 = vunpack.c.l.b16 %v8268
        %v8411 = vunpack.c.l.b16 %v8282
        %v8412 = vunpack.c.l.b16 %v8292
        %v8413 = vunpack.c.l.b16 %v8306
        %v8414 = vunpack.c.l.b16 %v8316
        %v8415 = vunpack.c.l.b16 %v8330
        %v8416 = vunpack.c.l.b16 %v8340
        %v8417 = vunpack.c.l.b16 %v8354
        %v8418 = vunpack.c.l.b16 %v8364
        %v8419 = vunpack.c.l.b16 %v8378
        %v8420 = vunpack.c.l.b16 %v8388
        %v8421 = vpack.c.b16 %v8406, %v8405
        %v8422 = vpack.c.b16 %v8408, %v8407
        %v8423 = vpack.c.b16 %v8410, %v8409
        %v8424 = vpack.c.b16 %v8412, %v8411
        %v8425 = vpack.c.b16 %v8414, %v8413
        %v8426 = vpack.c.b16 %v8416, %v8415
        %v8427 = vpack.c.b16 %v8418, %v8417
        %v8428 = vpack.c.b16 %v8420, %v8419
        %v8453 = vunpack.c.l.b16 %v8389
        %v8454 = vunpack.c.l.b16 %v8390
        %v8455 = vunpack.c.l.b16 %v8391
        %v8456 = vunpack.c.l.b16 %v8392
        %v8457 = vunpack.c.l.b16 %v8393
        %v8458 = vunpack.c.l.b16 %v8394
        %v8459 = vunpack.c.l.b16 %v8395
        %v8460 = vunpack.c.l.b16 %v8396
        %v8461 = vunpack.c.l.b16 %v8397
        %v8462 = vunpack.c.l.b16 %v8398
        %v8463 = vunpack.c.l.b16 %v8399
        %v8464 = vunpack.c.l.b16 %v8400
        %v8465 = vunpack.c.l.b16 %v8401
        %v8466 = vunpack.c.l.b16 %v8402
        %v8467 = vunpack.c.l.b16 %v8403
        %v8468 = vunpack.c.l.b16 %v8404
        %v8469 = vpack.c.b16 %v8454, %v8453
        %v8470 = vpack.c.b16 %v8456, %v8455
        %v8471 = vpack.c.b16 %v8458, %v8457
        %v8472 = vpack.c.b16 %v8460, %v8459
        %v8473 = vpack.c.b16 %v8462, %v8461
        %v8474 = vpack.c.b16 %v8464, %v8463
        %v8475 = vpack.c.b16 %v8466, %v8465
        %v8476 = vpack.c.b16 %v8468, %v8467
        %8485 = vmatprep.subr.bf16.mxu0 0
        %8486 = vmatpush1.bf16.msra.mxu0 %v8476
        %8487 = vmatprep.subr.bf16.mxu0 0
        %8488 = vmatpush1.bf16.msra.mxu0 %v8475
        %8489 = vmatprep.subr.bf16.mxu0 0
        %8490 = vmatpush1.bf16.msra.mxu0 %v8474
        %8491 = vmatprep.subr.bf16.mxu0 0
        %8492 = vmatpush1.bf16.msra.mxu0 %v8473
        %8493 = vmatprep.subr.bf16.mxu0 0
        %8494 = vmatpush1.bf16.msra.mxu0 %v8472
        %8495 = vmatprep.subr.bf16.mxu0 0
        %8496 = vmatpush1.bf16.msra.mxu0 %v8471
        %8497 = vmatprep.subr.bf16.mxu0 0
        %8498 = vmatpush1.bf16.msra.mxu0 %v8470
        %8499 = vmatprep.subr.bf16.mxu0 0
        %8500 = vmatpush1.bf16.msra.mxu0 %v8469
        %8501 = vmatprep.subr.bf16.mxu0 0
        %8502 = vmatpush2.bf16.msra.mxu0 0
        %8503 = vmatprep.subr.bf16.mxu0 0
        %8504 = vmatpush2.bf16.msra.mxu0 0
        %8505 = vmatprep.subr.bf16.mxu0 0
        %8506 = vmatpush2.bf16.msra.mxu0 0
        %8507 = vmatprep.subr.bf16.mxu0 0
        %8508 = vmatpush2.bf16.msra.mxu0 0
        %8509 = vmatprep.subr.bf16.mxu0 0
        %8510 = vmatpush2.bf16.msra.mxu0 0
        %8511 = vmatprep.subr.bf16.mxu0 0
        %8512 = vmatpush2.bf16.msra.mxu0 0
        %8513 = vmatprep.subr.bf16.mxu0 0
        %8514 = vmatpush2.bf16.msra.mxu0 0
        %8515 = vmatprep.subr.bf16.mxu0 0
        %8516 = vmatpush2.bf16.msra.mxu0 0
        %8517 = vmatprep.mubr.bf16.mxu0 0
        %8518 = vmatmul.mubr.bf16.gmra.mxu0 %v8421
        %v8519 = vpop.f32.mrf.mxu0
        %v8520 = vadd.f32 0.0, %v8519
        %v8521 = vpop.f32.mrf.mxu0
        %v8522 = vpop.f32.mrf.mxu0
        %v8523 = vadd.f32 0.0, %v8522
        %v8524 = vpop.f32.mrf.mxu0
        %8525 = vmatprep.mubr.bf16.mxu0 0
        %8526 = vmatmul.mubr.bf16.gmra.mxu0 %v8422
        %v8527 = vpop.f32.mrf.mxu0
        %v8528 = vpop.f32.mrf.mxu0
        %v8529 = vpop.f32.mrf.mxu0
        %v8530 = vpop.f32.mrf.mxu0
        %8531 = vmatprep.mubr.bf16.mxu0 0
        %8532 = vmatmul.mubr.bf16.gmra.mxu0 %v8423
        %v8533 = vpop.f32.mrf.mxu0
        %v8534 = vadd.f32 0.0, %v8533
        %v8535 = vpop.f32.mrf.mxu0
        %v8536 = vpop.f32.mrf.mxu0
        %v8537 = vadd.f32 0.0, %v8536
        %v8538 = vpop.f32.mrf.mxu0
        %8539 = vmatprep.mubr.bf16.mxu0 0
        %8540 = vmatmul.mubr.bf16.gmra.mxu0 %v8424
        %v8541 = vpop.f32.mrf.mxu0
        %v8542 = vpop.f32.mrf.mxu0
        %v8543 = vpop.f32.mrf.mxu0
        %v8544 = vpop.f32.mrf.mxu0
        %8545 = vmatprep.mubr.bf16.mxu0 0
        %8546 = vmatmul.mubr.bf16.gmra.mxu0 %v8425
        %v8547 = vpop.f32.mrf.mxu0
        %v8548 = vadd.f32 0.0, %v8547
        %v8549 = vpop.f32.mrf.mxu0
        %v8550 = vpop.f32.mrf.mxu0
        %v8551 = vadd.f32 0.0, %v8550
        %v8552 = vpop.f32.mrf.mxu0
        %8553 = vmatprep.mubr.bf16.mxu0 0
        %8554 = vmatmul.mubr.bf16.gmra.mxu0 %v8426
        %v8555 = vpop.f32.mrf.mxu0
        %v8556 = vpop.f32.mrf.mxu0
        %v8557 = vpop.f32.mrf.mxu0
        %v8558 = vpop.f32.mrf.mxu0
        %8559 = vmatprep.mubr.bf16.mxu0 0
        %8560 = vmatmul.mubr.bf16.gmra.mxu0 %v8427
        %v8561 = vpop.f32.mrf.mxu0
        %v8562 = vadd.f32 0.0, %v8561
        %v8563 = vpop.f32.mrf.mxu0
        %v8564 = vpop.f32.mrf.mxu0
        %v8565 = vadd.f32 0.0, %v8564
        %v8566 = vpop.f32.mrf.mxu0
        %8567 = vmatprep.mubr.bf16.mxu0 0
        %8568 = vmatmul.mubr.bf16.gmra.mxu0 %v8428
        %v8569 = vpop.f32.mrf.mxu0
        %v8570 = vpop.f32.mrf.mxu0
        %v8571 = vpop.f32.mrf.mxu0
        %v8572 = vpop.f32.mrf.mxu0
        %8573 = vdwg.mxu0
        %v8582 = vcombine.high %v8520, %v8520
        %v8584 = vunpack.c.l.s4 1983009808
        %v8585 = vunpack.c.0.s8 %v8584
        %v8586 = vlaneseq
        %v8587 = vshrl.u32 %v8586, 7
        %v8588 = vsub.s32 %v8585, %v8587
        %v8589 = vrot.slane %v8520, %v8588
        %v8591 = vunpack.c.l.s4 1983009808
        %v8592 = vunpack.c.0.s8 %v8591
        %v8593 = vlaneseq
        %v8594 = vshrl.u32 %v8593, 7
        %v8595 = vsub.s32 %v8592, %v8594
        %v8596 = vrot.slane %v8582, %v8595
        %v8597 = vcombine.high %v8589, %v8589
        %v8598 = vcombine.high %v8596, %v8596
        %v8599 = vcombine.high %v8523, %v8523
        %v8601 = vunpack.c.l.s4 1983009808
        %v8602 = vunpack.c.0.s8 %v8601
        %v8603 = vlaneseq
        %v8604 = vshrl.u32 %v8603, 7
        %v8605 = vsub.s32 %v8602, %v8604
        %v8606 = vrot.slane %v8523, %v8605
        %v8608 = vunpack.c.l.s4 1983009808
        %v8609 = vunpack.c.0.s8 %v8608
        %v8610 = vlaneseq
        %v8611 = vshrl.u32 %v8610, 7
        %v8612 = vsub.s32 %v8609, %v8611
        %v8613 = vrot.slane %v8599, %v8612
        %v8614 = vcombine.high %v8606, %v8606
        %v8615 = vcombine.high %v8613, %v8613
        %v8616 = vcombine.high %v8534, %v8534
        %v8618 = vunpack.c.l.s4 1983009808
        %v8619 = vunpack.c.0.s8 %v8618
        %v8620 = vlaneseq
        %v8621 = vshrl.u32 %v8620, 7
        %v8622 = vsub.s32 %v8619, %v8621
        %v8623 = vrot.slane %v8534, %v8622
        %v8625 = vunpack.c.l.s4 1983009808
        %v8626 = vunpack.c.0.s8 %v8625
        %v8627 = vlaneseq
        %v8628 = vshrl.u32 %v8627, 7
        %v8629 = vsub.s32 %v8626, %v8628
        %v8630 = vrot.slane %v8616, %v8629
        %v8631 = vcombine.high %v8623, %v8623
        %v8632 = vcombine.high %v8630, %v8630
        %v8633 = vcombine.high %v8537, %v8537
        %v8635 = vunpack.c.l.s4 1983009808
        %v8636 = vunpack.c.0.s8 %v8635
        %v8637 = vlaneseq
        %v8638 = vshrl.u32 %v8637, 7
        %v8639 = vsub.s32 %v8636, %v8638
        %v8640 = vrot.slane %v8537, %v8639
        %v8642 = vunpack.c.l.s4 1983009808
        %v8643 = vunpack.c.0.s8 %v8642
        %v8644 = vlaneseq
        %v8645 = vshrl.u32 %v8644, 7
        %v8646 = vsub.s32 %v8643, %v8645
        %v8647 = vrot.slane %v8633, %v8646
        %v8648 = vcombine.high %v8640, %v8640
        %v8649 = vcombine.high %v8647, %v8647
        %v8650 = vcombine.high %v8548, %v8548
        %v8652 = vunpack.c.l.s4 1983009808
        %v8653 = vunpack.c.0.s8 %v8652
        %v8654 = vlaneseq
        %v8655 = vshrl.u32 %v8654, 7
        %v8656 = vsub.s32 %v8653, %v8655
        %v8657 = vrot.slane %v8548, %v8656
        %v8659 = vunpack.c.l.s4 1983009808
        %v8660 = vunpack.c.0.s8 %v8659
        %v8661 = vlaneseq
        %v8662 = vshrl.u32 %v8661, 7
        %v8663 = vsub.s32 %v8660, %v8662
        %v8664 = vrot.slane %v8650, %v8663
        %v8665 = vcombine.high %v8657, %v8657
        %v8666 = vcombine.high %v8664, %v8664
        %v8667 = vcombine.high %v8551, %v8551
        %v8669 = vunpack.c.l.s4 1983009808
        %v8670 = vunpack.c.0.s8 %v8669
        %v8671 = vlaneseq
        %v8672 = vshrl.u32 %v8671, 7
        %v8673 = vsub.s32 %v8670, %v8672
        %v8674 = vrot.slane %v8551, %v8673
        %v8676 = vunpack.c.l.s4 1983009808
        %v8677 = vunpack.c.0.s8 %v8676
        %v8678 = vlaneseq
        %v8679 = vshrl.u32 %v8678, 7
        %v8680 = vsub.s32 %v8677, %v8679
        %v8681 = vrot.slane %v8667, %v8680
        %v8682 = vcombine.high %v8674, %v8674
        %v8683 = vcombine.high %v8681, %v8681
        %v8684 = vcombine.high %v8562, %v8562
        %v8686 = vunpack.c.l.s4 1983009808
        %v8687 = vunpack.c.0.s8 %v8686
        %v8688 = vlaneseq
        %v8689 = vshrl.u32 %v8688, 7
        %v8690 = vsub.s32 %v8687, %v8689
        %v8691 = vrot.slane %v8562, %v8690
        %v8693 = vunpack.c.l.s4 1983009808
        %v8694 = vunpack.c.0.s8 %v8693
        %v8695 = vlaneseq
        %v8696 = vshrl.u32 %v8695, 7
        %v8697 = vsub.s32 %v8694, %v8696
        %v8698 = vrot.slane %v8684, %v8697
        %v8699 = vcombine.high %v8691, %v8691
        %v8700 = vcombine.high %v8698, %v8698
        %v8701 = vcombine.high %v8565, %v8565
        %v8703 = vunpack.c.l.s4 1983009808
        %v8704 = vunpack.c.0.s8 %v8703
        %v8705 = vlaneseq
        %v8706 = vshrl.u32 %v8705, 7
        %v8707 = vsub.s32 %v8704, %v8706
        %v8708 = vrot.slane %v8565, %v8707
        %v8710 = vunpack.c.l.s4 1983009808
        %v8711 = vunpack.c.0.s8 %v8710
        %v8712 = vlaneseq
        %v8713 = vshrl.u32 %v8712, 7
        %v8714 = vsub.s32 %v8711, %v8713
        %v8715 = vrot.slane %v8701, %v8714
        %v8716 = vcombine.high %v8708, %v8708
        %v8717 = vcombine.high %v8715, %v8715
        %v8750 = vpack.c.bf16 %v8589, %v8589
        %v8751 = vpack.c.bf16 %v8597, %v8597
        %v8752 = vpack.c.bf16 %v8596, %v8596
        %v8753 = vpack.c.bf16 %v8598, %v8598
        %v8754 = vpack.c.bf16 %v8606, %v8606
        %v8755 = vpack.c.bf16 %v8614, %v8614
        %v8756 = vpack.c.bf16 %v8613, %v8613
        %v8757 = vpack.c.bf16 %v8615, %v8615
        %v8758 = vpack.c.bf16 %v8623, %v8623
        %v8759 = vpack.c.bf16 %v8631, %v8631
        %v8760 = vpack.c.bf16 %v8630, %v8630
        %v8761 = vpack.c.bf16 %v8632, %v8632
        %v8762 = vpack.c.bf16 %v8640, %v8640
        %v8763 = vpack.c.bf16 %v8648, %v8648
        %v8764 = vpack.c.bf16 %v8647, %v8647
        %v8765 = vpack.c.bf16 %v8649, %v8649
        %v8766 = vpack.c.bf16 %v8657, %v8657
        %v8767 = vpack.c.bf16 %v8665, %v8665
        %v8768 = vpack.c.bf16 %v8664, %v8664
        %v8769 = vpack.c.bf16 %v8666, %v8666
        %v8770 = vpack.c.bf16 %v8674, %v8674
        %v8771 = vpack.c.bf16 %v8682, %v8682
        %v8772 = vpack.c.bf16 %v8681, %v8681
        %v8773 = vpack.c.bf16 %v8683, %v8683
        %v8774 = vpack.c.bf16 %v8691, %v8691
        %v8775 = vpack.c.bf16 %v8699, %v8699
        %v8776 = vpack.c.bf16 %v8698, %v8698
        %v8777 = vpack.c.bf16 %v8700, %v8700
        %v8778 = vpack.c.bf16 %v8708, %v8708
        %v8779 = vpack.c.bf16 %v8716, %v8716
        %v8780 = vpack.c.bf16 %v8715, %v8715
        %v8781 = vpack.c.bf16 %v8717, %v8717
        %v8814 = vunpack.c.l.b16 %v8750
        %v8815 = vunpack.c.l.b16 %v8751
        %v8816 = vunpack.c.l.b16 %v8752
        %v8817 = vunpack.c.l.b16 %v8753
        %v8818 = vunpack.c.l.b16 %v8754
        %v8819 = vunpack.c.l.b16 %v8755
        %v8820 = vunpack.c.l.b16 %v8756
        %v8821 = vunpack.c.l.b16 %v8757
        %v8822 = vunpack.c.l.b16 %v8758
        %v8823 = vunpack.c.l.b16 %v8759
        %v8824 = vunpack.c.l.b16 %v8760
        %v8825 = vunpack.c.l.b16 %v8761
        %v8826 = vunpack.c.l.b16 %v8762
        %v8827 = vunpack.c.l.b16 %v8763
        %v8828 = vunpack.c.l.b16 %v8764
        %v8829 = vunpack.c.l.b16 %v8765
        %v8830 = vunpack.c.l.b16 %v8766
        %v8831 = vunpack.c.l.b16 %v8767
        %v8832 = vunpack.c.l.b16 %v8768
        %v8833 = vunpack.c.l.b16 %v8769
        %v8834 = vunpack.c.l.b16 %v8770
        %v8835 = vunpack.c.l.b16 %v8771
        %v8836 = vunpack.c.l.b16 %v8772
        %v8837 = vunpack.c.l.b16 %v8773
        %v8838 = vunpack.c.l.b16 %v8774
        %v8839 = vunpack.c.l.b16 %v8775
        %v8840 = vunpack.c.l.b16 %v8776
        %v8841 = vunpack.c.l.b16 %v8777
        %v8842 = vunpack.c.l.b16 %v8778
        %v8843 = vunpack.c.l.b16 %v8779
        %v8844 = vunpack.c.l.b16 %v8780
        %v8845 = vunpack.c.l.b16 %v8781
        %v8846 = vpack.c.b16 %v8814, %v8814
        %v8847 = vpack.c.b16 %v8815, %v8815
        %v8848 = vpack.c.b16 %v8816, %v8816
        %v8849 = vpack.c.b16 %v8817, %v8817
        %v8850 = vpack.c.b16 %v8818, %v8818
        %v8851 = vpack.c.b16 %v8819, %v8819
        %v8852 = vpack.c.b16 %v8820, %v8820
        %v8853 = vpack.c.b16 %v8821, %v8821
        %v8854 = vpack.c.b16 %v8822, %v8822
        %v8855 = vpack.c.b16 %v8823, %v8823
        %v8856 = vpack.c.b16 %v8824, %v8824
        %v8857 = vpack.c.b16 %v8825, %v8825
        %v8858 = vpack.c.b16 %v8826, %v8826
        %v8859 = vpack.c.b16 %v8827, %v8827
        %v8860 = vpack.c.b16 %v8828, %v8828
        %v8861 = vpack.c.b16 %v8829, %v8829
        %v8862 = vpack.c.b16 %v8830, %v8830
        %v8863 = vpack.c.b16 %v8831, %v8831
        %v8864 = vpack.c.b16 %v8832, %v8832
        %v8865 = vpack.c.b16 %v8833, %v8833
        %v8866 = vpack.c.b16 %v8834, %v8834
        %v8867 = vpack.c.b16 %v8835, %v8835
        %v8868 = vpack.c.b16 %v8836, %v8836
        %v8869 = vpack.c.b16 %v8837, %v8837
        %v8870 = vpack.c.b16 %v8838, %v8838
        %v8871 = vpack.c.b16 %v8839, %v8839
        %v8872 = vpack.c.b16 %v8840, %v8840
        %v8873 = vpack.c.b16 %v8841, %v8841
        %v8874 = vpack.c.b16 %v8842, %v8842
        %v8875 = vpack.c.b16 %v8843, %v8843
        %v8876 = vpack.c.b16 %v8844, %v8844
        %v8877 = vpack.c.b16 %v8845, %v8845
        %v8878 = vunpack.c.l.b16 %v8846
        %v8879 = vunpack.c.l.b16 %v8847
        %v8880 = vunpack.c.l.b16 %v8848
        %v8881 = vunpack.c.l.b16 %v8849
        %v8882 = vunpack.c.l.b16 %v8850
        %v8883 = vunpack.c.l.b16 %v8851
        %v8884 = vunpack.c.l.b16 %v8852
        %v8885 = vunpack.c.l.b16 %v8853
        %v8886 = vunpack.c.l.b16 %v8854
        %v8887 = vunpack.c.l.b16 %v8855
        %v8888 = vunpack.c.l.b16 %v8856
        %v8889 = vunpack.c.l.b16 %v8857
        %v8890 = vunpack.c.l.b16 %v8858
        %v8891 = vunpack.c.l.b16 %v8859
        %v8892 = vunpack.c.l.b16 %v8860
        %v8893 = vunpack.c.l.b16 %v8861
        %v8894 = vunpack.c.l.b16 %v8862
        %v8895 = vunpack.c.l.b16 %v8863
        %v8896 = vunpack.c.l.b16 %v8864
        %v8897 = vunpack.c.l.b16 %v8865
        %v8898 = vunpack.c.l.b16 %v8866
        %v8899 = vunpack.c.l.b16 %v8867
        %v8900 = vunpack.c.l.b16 %v8868
        %v8901 = vunpack.c.l.b16 %v8869
        %v8902 = vunpack.c.l.b16 %v8870
        %v8903 = vunpack.c.l.b16 %v8871
        %v8904 = vunpack.c.l.b16 %v8872
        %v8905 = vunpack.c.l.b16 %v8873
        %v8906 = vunpack.c.l.b16 %v8874
        %v8907 = vunpack.c.l.b16 %v8875
        %v8908 = vunpack.c.l.b16 %v8876
        %v8909 = vunpack.c.l.b16 %v8877
        %v8910 = vrot.slane %v8879, 7
        %v8911 = vsel %vm4181, %v8910, %v8878
        %v8912 = vrot.slane %v8880, 6
        %v8913 = vsel %vm4184, %v8912, %v8911
        %v8914 = vrot.slane %v8881, 5
        %v8915 = vsel %vm4187, %v8914, %v8913
        %v8916 = vrot.slane %v8882, 4
        %v8917 = vsel %vm4190, %v8916, %v8915
        %v8918 = vrot.slane %v8883, 3
        %v8919 = vsel %vm4193, %v8918, %v8917
        %v8920 = vrot.slane %v8884, 2
        %v8921 = vsel %vm4196, %v8920, %v8919
        %v8922 = vrot.slane %v8885, 1
        %v8923 = vsel %vm4199, %v8922, %v8921
        %v8924 = vrot.slane %v8887, 7
        %v8925 = vsel %vm4181, %v8924, %v8886
        %v8926 = vrot.slane %v8888, 6
        %v8927 = vsel %vm4184, %v8926, %v8925
        %v8928 = vrot.slane %v8889, 5
        %v8929 = vsel %vm4187, %v8928, %v8927
        %v8930 = vrot.slane %v8890, 4
        %v8931 = vsel %vm4190, %v8930, %v8929
        %v8932 = vrot.slane %v8891, 3
        %v8933 = vsel %vm4193, %v8932, %v8931
        %v8934 = vrot.slane %v8892, 2
        %v8935 = vsel %vm4196, %v8934, %v8933
        %v8936 = vrot.slane %v8893, 1
        %v8937 = vsel %vm4199, %v8936, %v8935
        %v8938 = vrot.slane %v8895, 7
        %v8939 = vsel %vm4181, %v8938, %v8894
        %v8940 = vrot.slane %v8896, 6
        %v8941 = vsel %vm4184, %v8940, %v8939
        %v8942 = vrot.slane %v8897, 5
        %v8943 = vsel %vm4187, %v8942, %v8941
        %v8944 = vrot.slane %v8898, 4
        %v8945 = vsel %vm4190, %v8944, %v8943
        %v8946 = vrot.slane %v8899, 3
        %v8947 = vsel %vm4193, %v8946, %v8945
        %v8948 = vrot.slane %v8900, 2
        %v8949 = vsel %vm4196, %v8948, %v8947
        %v8950 = vrot.slane %v8901, 1
        %v8951 = vsel %vm4199, %v8950, %v8949
        %v8952 = vrot.slane %v8903, 7
        %v8953 = vsel %vm4181, %v8952, %v8902
        %v8954 = vrot.slane %v8904, 6
        %v8955 = vsel %vm4184, %v8954, %v8953
        %v8956 = vrot.slane %v8905, 5
        %v8957 = vsel %vm4187, %v8956, %v8955
        %v8958 = vrot.slane %v8906, 4
        %v8959 = vsel %vm4190, %v8958, %v8957
        %v8960 = vrot.slane %v8907, 3
        %v8961 = vsel %vm4193, %v8960, %v8959
        %v8962 = vrot.slane %v8908, 2
        %v8963 = vsel %vm4196, %v8962, %v8961
        %v8964 = vrot.slane %v8909, 1
        %v8965 = vsel %vm4199, %v8964, %v8963
        %v8966 = vpack.c.b16 %v8923, %v8923
        %v8967 = vpack.c.b16 %v8937, %v8937
        %v8968 = vpack.c.b16 %v8951, %v8951
        %v8969 = vpack.c.b16 %v8965, %v8965
        %s8974 = scalar_lea.vmem %s339, 16 [#allocation10]
        %8975 = vst [vmem:[%s8974] sm:$0xf] %v8966
        %8976 = vst [vmem:[%s8974 + $0x4] sm:$0xf] %v8967
        %8977 = vst [vmem:[%s8974 + $0x8] sm:$0xf] %v8968
        %8978 = vst [vmem:[%s8974 + $0xc] sm:$0xf] %v8969
        %s8979 = sand.u32 %s170, 1
        %s8980 = scalar_lea.sflag [#allocation5], %s8979
        %s8981 = sand.u32 %s170, 1
        %s8982 = smul.addr %s8981, 32
        %s8983 = scalar_lea.vmem [#allocation9], %s8982
        %s8984 = sand.u32 %s198, 1
        %s8985 = scalar_lea.sflag [#allocation11], %s8984
        %s8986 = sand.u32 %s198, 1
        %s8987 = smul.addr %s8986, 32
        %s8988 = scalar_lea.vmem [#allocation10], %s8987
        // Predicated region
        $region53: #{tpu_custom_call.1} parent=39 // pred_check
          %p8989 = pneg %p180
        $region54: #{tpu_custom_call.1} parent=39 // pred_check_branch
          %8991 = sbr.rel (%p8989) target = $region56
        $region55: #{tpu_custom_call.1} parent=39 // pred_region
          %s8993 = ssub.s32 512, 512
          %8994 = vsyncadd %s8980, %s8993
          %s8995 = smul.addr %s33, 8
          %s8996 = sadd.s32 %s32, %s8995
          %s8997 = smul.addr %s8996, 64
          %s8998 = scalar_lea.hbm %s5, %s8997
          %s8999 = sshll.u32 %s8983, 4
          %s9000 = int_to_ptr.vmem [resolvable:$true] %s8999
          %9005 = dma.vmem_to_hbm [thread:$0]  %s9000, 512, %s8998, %s8980, 64, 64, 4
        $region56: #{tpu_custom_call.1} parent=39 // pred_fallthru
          _
        // Predicated region
        $region57: #{tpu_custom_call.1} parent=39 // pred_check
          %p9006 = pneg %p208
        $region58: #{tpu_custom_call.1} parent=39 // pred_check_branch
          %9008 = sbr.rel (%p9006) target = $region60
        $region59: #{tpu_custom_call.1} parent=39 // pred_region
          %s9010 = ssub.s32 512, 512
          %9011 = vsyncadd %s8985, %s9010
          %s9012 = smul.addr %s33, 8
          %s9013 = sadd.s32 %s32, %s9012
          %s9014 = smul.addr %s9013, 64
          %s9015 = scalar_lea.hbm %s6, %s9014
          %s9016 = sshll.u32 %s8988, 4
          %s9017 = int_to_ptr.vmem [resolvable:$true] %s9016
          %9022 = dma.vmem_to_hbm [thread:$0]  %s9017, 512, %s9015, %s8985, 64, 64, 4
        $region60: #{tpu_custom_call.1} parent=39 // pred_fallthru
          _
      $region40: #{tpu_custom_call.1} parent=5 // pred_fallthru
        _
      %p9023 = scmp.le.s32.totalorder 2, %s23
      // Predicated region
      $region61: #{tpu_custom_call.1} parent=5 // pred_check
        %p9024 = pneg %p9023
      $region62: #{tpu_custom_call.1} parent=5 // pred_check_branch
        %9026 = sbr.rel (%p9024) target = $region64
      $region63: #{tpu_custom_call.1} parent=5 // pred_region
        %s9027 = ssub.s32 %s23, 2
        // Predicated region
        $region65: #{tpu_custom_call.1} parent=63 // pred_check
          %p9028 = pneg %p186
        $region66: #{tpu_custom_call.1} parent=63 // pred_check_branch
          %9030 = sbr.rel (%p9028) target = $region68
        $region67: #{tpu_custom_call.1} parent=63 // pred_region
          %s9031 = sand.u32 %s171, 1
          %s9032 = scalar_lea.sflag [#allocation5], %s9031
          %s9033 = sand.u32 %s171, 1
          %s9034 = smul.addr %s9033, 32
          %s9035 = scalar_lea.vmem [#allocation9], %s9034
          %9036 = dma.done %s9032, 512
        $region68: #{tpu_custom_call.1} parent=63 // pred_fallthru
          _
        // Predicated region
        $region69: #{tpu_custom_call.1} parent=63 // pred_check
          %p9037 = pneg %p214
        $region70: #{tpu_custom_call.1} parent=63 // pred_check_branch
          %9039 = sbr.rel (%p9037) target = $region72
        $region71: #{tpu_custom_call.1} parent=63 // pred_region
          %s9040 = sand.u32 %s199, 1
          %s9041 = scalar_lea.sflag [#allocation11], %s9040
          %s9042 = sand.u32 %s199, 1
          %s9043 = smul.addr %s9042, 32
          %s9044 = scalar_lea.vmem [#allocation10], %s9043
          %9045 = dma.done %s9041, 512
        $region72: #{tpu_custom_call.1} parent=63 // pred_fallthru
          _
      $region64: #{tpu_custom_call.1} parent=5 // pred_fallthru
        _
    $region6: #{tpu_custom_call.1} parent=1 // loop_footer
      %s27 = sadd.s32 1, %s23
    $region7: #{tpu_custom_call.1} parent=1 // loop_footer_branch
      %22 = sbr.rel target = $region3
    $region8: #{tpu_custom_call.1} parent=1 // loop_exit
      _
    %9046 = vsyncpa [#allocation4], 1
    %s9047 = scalar_lea.sflag [#allocation4], 1
    %9048 = vsyncpa %s9047, 1
    %9049 = vsyncpa [#allocation7], 1
    %9050 = vsyncpa [#allocation5], 1
    %s9051 = scalar_lea.sflag [#allocation5], 1
    %9052 = vsyncpa %s9051, 1
    %9053 = vsyncpa [#allocation11], 1
    %s9054 = scalar_lea.sflag [#allocation11], 1
    %9055 = vsyncpa %s9054, 1

</llo_original>
